<compile_context>
chip_gen: v7x
topology: tpu7x:2x2x1
jax: 0.10.0
libtpu: 0.0.40
codegen_flags: <defaults>
</compile_context>

<pallas_src>
import functools

import jax
import jax.numpy as jnp
from jax import lax
from jax.experimental import pallas as pl
from jax.experimental.pallas import tpu as pltpu

H = 64            # LSTM_UNITS (module default)
HP = 128          # per-gate lane width: fwd dir in lanes 0..63, bwd in 64..127
G = 4 * HP        # packed gate width (both directions share the lanes)


# ----------------------------- Pallas kernel -----------------------------

def hemo_kernel(x_ref,
                wx1_ref, b1_ref, whh1_ref,
                wx2_ref, b2_ref, whh2_ref,
                wl1_ref, bl1_ref, wl2_ref, bl2_ref,
                wout_ref, bout_ref,
                out_ref,
                xg1_ref, xg2_ref, h1a_ref, h1b_ref, h2a_ref, h2b_ref,
                *, seq_len, batch):
    f32 = jnp.float32
    bf16 = jnp.bfloat16
    TB = seq_len * batch

    # ---- layer-1 input projection: ONE bf16 MXU matmul, bias folded in ----
    xg1_ref[...] = (jnp.dot(x_ref[...].astype(bf16), wx1_ref[...],
                            preferred_element_type=f32) + b1_ref[...])

    # lane selector: lanes 0..H-1 carry the forward direction, H..2H-1 backward
    fwd_lane = lax.broadcasted_iota(jnp.int32, (TB, HP), 1) < H

    def run_layer(xg_ref, whh_ref, ha_ref, hb_ref):
        """Bidirectional layer; both directions share one dot + one gate_math.

        Step s advances the forward direction at t=s and the backward
        direction at t=T-1-s simultaneously.  Gate order [i, f, g, o], each
        gate 128 lanes wide (fwd in lanes 0..63, bwd in lanes 64..127), so all
        slices are lane-aligned and the combined carry needs no masking.
        """
        h = jnp.zeros((batch, HP), f32)
        c = jnp.zeros((batch, HP), f32)
        for s in range(seq_len):                 # static unroll (T is small)
            tf, tb = s, seq_len - 1 - s
            g = (xg_ref[tf * batch:(tf + 1) * batch, :G]
                 + xg_ref[tb * batch:(tb + 1) * batch, G:]
                 + jnp.dot(h.astype(bf16), whh_ref[...],
                           preferred_element_type=f32))
            i_g = jax.nn.sigmoid(g[:, 0 * HP:1 * HP])
            f_g = jax.nn.sigmoid(g[:, 1 * HP:2 * HP])
            g_g = jnp.tanh(g[:, 2 * HP:3 * HP])
            o_g = jax.nn.sigmoid(g[:, 3 * HP:4 * HP])
            c = f_g * c + i_g * g_g
            h = o_g * jnp.tanh(c)
            ha_ref[tf * batch:(tf + 1) * batch, :] = h   # fwd lanes valid @ tf
            hb_ref[tb * batch:(tb + 1) * batch, :] = h   # bwd lanes valid @ tb

    # ---- LSTM layer 1 ----
    run_layer(xg1_ref, whh1_ref, h1a_ref, h1b_ref)
    h1 = jnp.where(fwd_lane, h1a_ref[...], h1b_ref[...])   # (T*B, 2H) concat

    # ---- layer-2 input projection (bf16 MXU matmul, bias folded in) ----
    xg2_ref[...] = (jnp.dot(h1.astype(bf16), wx2_ref[...],
                            preferred_element_type=f32) + b2_ref[...])

    # ---- LSTM layer 2 ----
    run_layer(xg2_ref, whh2_ref, h2a_ref, h2b_ref)
    h2 = jnp.where(fwd_lane, h2a_ref[...], h2b_ref[...])

    # ---- dense head (tiny, kept f32) over all T*B tokens; lane-dense out ----
    lin1 = jnp.maximum(
        jnp.dot(h1, wl1_ref[...], preferred_element_type=f32) + bl1_ref[...], 0.0)
    lin2 = jnp.maximum(
        jnp.dot(h2, wl2_ref[...], preferred_element_type=f32) + bl2_ref[...], 0.0)
    hidden = h1 + h2 + lin1 + lin2
    out_ref[...] = (jnp.dot(hidden, wout_ref[...], preferred_element_type=f32)
                    + bout_ref[...])                     # n_classes padded to 128


# ------------------------------- Wrapper ---------------------------------

@functools.partial(jax.jit, static_argnames=("n_classes",))
def hemo_forward(x_bte, p, n_classes, lengths=None):
    """x_bte: (B, T, E) float32 -> (B, T, n_classes) float32.

    `lengths` is accepted for API parity with the PyTorch module but is
    intentionally ignored (the reference module never uses it).
    """
    del lengths
    B, T, E = x_bte.shape
    x2d = jnp.transpose(x_bte, (1, 0, 2)).reshape(T * B, E)   # time-major slab

    ordered = [
        x2d,
        p["wx1"], p["b1"], p["whh1"],
        p["wx2"], p["b2"], p["whh2"],
        p["wl1"], p["bl1"], p["wl2"], p["bl2"],
        p["wout"], p["bout"],
    ]

    out2d = pl.pallas_call(
        functools.partial(hemo_kernel, seq_len=T, batch=B),
        out_shape=jax.ShapeDtypeStruct((T * B, HP), jnp.float32),
        in_specs=[pl.BlockSpec(memory_space=pltpu.MemorySpace.VMEM)] * len(ordered),
        out_specs=pl.BlockSpec(memory_space=pltpu.MemorySpace.VMEM),
        scratch_shapes=[
            pltpu.VMEM((T * B, 2 * G), jnp.float32),   # layer-1 precomputed gates
            pltpu.VMEM((T * B, 2 * G), jnp.float32),   # layer-2 precomputed gates
            pltpu.VMEM((T * B, HP), jnp.float32),      # layer-1 fwd-time-keyed h
            pltpu.VMEM((T * B, HP), jnp.float32),      # layer-1 bwd-time-keyed h
            pltpu.VMEM((T * B, HP), jnp.float32),      # layer-2 fwd-time-keyed h
            pltpu.VMEM((T * B, HP), jnp.float32),      # layer-2 bwd-time-keyed h
        ],
    )(*ordered)

    out = out2d.reshape(T, B, HP)[:, :, :n_classes]
    return jnp.transpose(out, (1, 0, 2))


# --------------------- parameter packing (one-time) -----------------------

def pack_params(raw):
    """PyTorch-layout params -> lane-packed kernel layout.

    Each of the 4 gates [i, f, g, o] gets one 128-lane block; the forward
    direction's H values sit in lanes 0..H-1 of its block, the backward
    direction's in lanes H..2H-1.  Whh_f and Whh_b have disjoint nonzero
    rows/lanes, so they are summed into a single combined recurrent matrix.
    Biases (b_ih + b_hh) are folded into the input projection.  Matmul weights
    are stored in bfloat16 (zeros stay exactly zero, so the block structure
    that makes the direction merge exact is preserved).
    """

    def pack_dir(w_ih, w_hh, b_ih, b_hh, lane_off):
        in_dim = w_ih.shape[1]
        wx = jnp.zeros((in_dim, G), jnp.float32)
        whh = jnp.zeros((HP, G), jnp.float32)
        b = jnp.zeros((G,), jnp.float32)
        wiht = w_ih.T                      # (in, 4H)
        whht = w_hh.T                      # (H, 4H)
        bsum = b_ih + b_hh
        for k in range(4):
            c0 = k * HP + lane_off
            wx = wx.at[:, c0:c0 + H].set(wiht[:, k * H:(k + 1) * H])
            whh = whh.at[lane_off:lane_off + H, c0:c0 + H].set(
                whht[:, k * H:(k + 1) * H])
            b = b.at[c0:c0 + H].set(bsum[k * H:(k + 1) * H])
        return wx, whh, b

    p = {}
    wx1f, whh1f, b1f = pack_dir(raw["w_ih1f"], raw["w_hh1f"],
                                raw["b_ih1f"], raw["b_hh1f"], 0)
    wx1b, whh1b, b1b = pack_dir(raw["w_ih1b"], raw["w_hh1b"],
                                raw["b_ih1b"], raw["b_hh1b"], H)
    p["wx1"] = jnp.concatenate([wx1f, wx1b], axis=1).astype(jnp.bfloat16)  # (E, 2G)
    p["b1"] = jnp.concatenate([b1f, b1b])[None, :]                         # (1, 2G)
    p["whh1"] = (whh1f + whh1b).astype(jnp.bfloat16)                       # (HP, G)

    wx2f, whh2f, b2f = pack_dir(raw["w_ih2f"], raw["w_hh2f"],
                                raw["b_ih2f"], raw["b_hh2f"], 0)
    wx2b, whh2b, b2b = pack_dir(raw["w_ih2b"], raw["w_hh2b"],
                                raw["b_ih2b"], raw["b_hh2b"], H)
    p["wx2"] = jnp.concatenate([wx2f, wx2b], axis=1).astype(jnp.bfloat16)  # (2H, 2G)
    p["b2"] = jnp.concatenate([b2f, b2b])[None, :]
    p["whh2"] = (whh2f + whh2b).astype(jnp.bfloat16)

    p["wl1"] = raw["w_l1"].T                             # (2H, 2H) f32 head
    p["bl1"] = raw["b_l1"][None, :]
    p["wl2"] = raw["w_l2"].T
    p["bl2"] = raw["b_l2"][None, :]

    nc = raw["w_out"].shape[0]
    p["wout"] = jnp.zeros((2 * H, HP), jnp.float32).at[:, :nc].set(raw["w_out"].T)
    p["bout"] = jnp.zeros((1, HP), jnp.float32).at[0, :nc].set(raw["b_out"])
    return p


# ----------------------- deterministic parameter init --------------------

def init_raw_params(key, embed_size, n_classes):
    keys = iter(jax.random.split(key, 40))

    def uni(shape, k):
        return jax.random.uniform(next(keys), shape, jnp.float32, -k, k)

    kl = 1.0 / float(H) ** 0.5
    raw = {}

    def lstm_dir(tag, in_dim):
        raw[f"w_ih{tag}"] = uni((4 * H, in_dim), kl)
        raw[f"w_hh{tag}"] = uni((4 * H, H), kl)
        raw[f"b_ih{tag}"] = uni((4 * H,), kl)
        raw[f"b_hh{tag}"] = uni((4 * H,), kl)

    lstm_dir("1f", embed_size)
    lstm_dir("1b", embed_size)
    lstm_dir("2f", 2 * H)
    lstm_dir("2b", 2 * H)

    klin = 1.0 / float(2 * H) ** 0.5
    raw["w_l1"] = uni((2 * H, 2 * H), klin)
    raw["b_l1"] = uni((2 * H,), klin)
    raw["w_l2"] = uni((2 * H, 2 * H), klin)
    raw["b_l2"] = uni((2 * H,), klin)
    raw["w_out"] = uni((n_classes, 2 * H), klin)
    raw["b_out"] = uni((n_classes,), klin)
    return raw


# --------------------------- pure-JAX reference ---------------------------

def _lstm_dir_ref(x_tbe, w_ih, w_hh, b_ih, b_hh, reverse):
    T, B, _ = x_tbe.shape
    wih = w_ih.T
    whh = w_hh.T
    b = (b_ih + b_hh)[None, :]
    xs = x_tbe[::-1] if reverse else x_tbe

    def step(carry, xt):
        h, c = carry
        gates = xt @ wih + h @ whh + b
        i_g = jax.nn.sigmoid(gates[:, 0 * H:1 * H])
        f_g = jax.nn.sigmoid(gates[:, 1 * H:2 * H])
        g_g = jnp.tanh(gates[:, 2 * H:3 * H])
        o_g = jax.nn.sigmoid(gates[:, 3 * H:4 * H])
        c_new = f_g * c + i_g * g_g
        h_new = o_g * jnp.tanh(c_new)
        return (h_new, c_new), h_new

    init = (jnp.zeros((B, H), jnp.float32), jnp.zeros((B, H), jnp.float32))
    _, hs = lax.scan(step, init, xs)
    return hs[::-1] if reverse else hs


def hemo_forward_ref(x_bte, raw):
    x = jnp.transpose(x_bte, (1, 0, 2))
    h1 = jnp.concatenate(
        [_lstm_dir_ref(x, raw["w_ih1f"], raw["w_hh1f"], raw["b_ih1f"], raw["b_hh1f"], False),
         _lstm_dir_ref(x, raw["w_ih1b"], raw["w_hh1b"], raw["b_ih1b"], raw["b_hh1b"], True)],
        axis=-1)
    h2 = jnp.concatenate(
        [_lstm_dir_ref(h1, raw["w_ih2f"], raw["w_hh2f"], raw["b_ih2f"], raw["b_hh2f"], False),
         _lstm_dir_ref(h1, raw["w_ih2b"], raw["w_hh2b"], raw["b_ih2b"], raw["b_hh2b"], True)],
        axis=-1)
    l1 = jnp.maximum(h1 @ raw["w_l1"].T + raw["b_l1"], 0.0)
    l2 = jnp.maximum(h2 @ raw["w_l2"].T + raw["b_l2"], 0.0)
    hidden = h1 + h2 + l1 + l2
    out = hidden @ raw["w_out"].T + raw["b_out"]
    return jnp.transpose(out, (1, 0, 2))


# --------------------------------- main -----------------------------------

if __name__ == "__main__":
    B, T, E, NC = 2, 8, 128, 5    # small shapes consistent with the module (H=64)

    key = jax.random.PRNGKey(0)
    k_x, k_p = jax.random.split(key)
    x = jax.random.normal(k_x, (B, T, E), jnp.float32)

    raw = init_raw_params(k_p, E, NC)
    packed = pack_params(raw)

    out = hemo_forward(x, packed, n_classes=NC)
    out = jax.block_until_ready(out)
    assert out.shape == (B, T, NC), out.shape

    ref = hemo_forward_ref(x, raw)
    # Kernel uses bf16 matmul operands (f32 accumulation, f32 gate math), so
    # compare at a slightly looser tolerance than a pure-f32 kernel would need.
    max_err = float(jnp.max(jnp.abs(out - ref)))
    assert jnp.allclose(out, ref, rtol=2e-2, atol=2e-2), max_err

    print("KERNEL_OK")
</pallas_src>

<mosaic_0001>
module attributes {stable_mosaic.version = 11 : i64} {
  func.func @hemo_kernel(%arg0: memref<16x128xf32, #tpu.memory_space<vmem>>, %arg1: memref<128x1024xbf16, #tpu.memory_space<vmem>>, %arg2: memref<1x1024xf32, #tpu.memory_space<vmem>>, %arg3: memref<128x512xbf16, #tpu.memory_space<vmem>>, %arg4: memref<128x1024xbf16, #tpu.memory_space<vmem>>, %arg5: memref<1x1024xf32, #tpu.memory_space<vmem>>, %arg6: memref<128x512xbf16, #tpu.memory_space<vmem>>, %arg7: memref<128x128xf32, #tpu.memory_space<vmem>>, %arg8: memref<1x128xf32, #tpu.memory_space<vmem>>, %arg9: memref<128x128xf32, #tpu.memory_space<vmem>>, %arg10: memref<1x128xf32, #tpu.memory_space<vmem>>, %arg11: memref<128x128xf32, #tpu.memory_space<vmem>>, %arg12: memref<1x128xf32, #tpu.memory_space<vmem>>, %arg13: memref<16x128xf32, #tpu.memory_space<vmem>>, %arg14: memref<16x1024xf32, #tpu.memory_space<vmem>>, %arg15: memref<16x1024xf32, #tpu.memory_space<vmem>>, %arg16: memref<16x128xf32, #tpu.memory_space<vmem>>, %arg17: memref<16x128xf32, #tpu.memory_space<vmem>>, %arg18: memref<16x128xf32, #tpu.memory_space<vmem>>, %arg19: memref<16x128xf32, #tpu.memory_space<vmem>>) attributes {dimension_semantics = [], scalar_prefetch = 0 : i64, scratch_operands = 6 : i64, tpu.core_type = #tpu.core_type<tc>} {
    %c0 = arith.constant 0 : index
    %c0_0 = arith.constant 0 : index
    %0 = vector.load %arg0[%c0, %c0_0] : memref<16x128xf32, #tpu.memory_space<vmem>>, vector<16x128xf32>
    %1 = arith.truncf %0 : vector<16x128xf32> to vector<16x128xbf16>
    %c0_1 = arith.constant 0 : index
    %c0_2 = arith.constant 0 : index
    %2 = vector.load %arg1[%c0_1, %c0_2] : memref<128x1024xbf16, #tpu.memory_space<vmem>>, vector<128x1024xbf16>
    %cst = arith.constant dense<0.000000e+00> : vector<16x1024xf32>
    %3 = tpu.matmul %1, %2, %cst {dimension_numbers = #tpu.dot_dimension_numbers<[1], [0], [0], [1], [0, 0, 1, 1], [], []>} : vector<16x128xbf16>, vector<128x1024xbf16>, vector<16x1024xf32> -> vector<16x1024xf32>
    %c0_3 = arith.constant 0 : index
    %c0_4 = arith.constant 0 : index
    %4 = vector.load %arg2[%c0_3, %c0_4] : memref<1x1024xf32, #tpu.memory_space<vmem>>, vector<1x1024xf32>
    %5 = vector.broadcast %4 : vector<1x1024xf32> to vector<16x1024xf32>
    %6 = arith.addf %3, %5 : vector<16x1024xf32>
    %c0_5 = arith.constant 0 : index
    %c0_6 = arith.constant 0 : index
    %7 = vector.load %arg14[%c0_5, %c0_6] : memref<16x1024xf32, #tpu.memory_space<vmem>>, vector<16x1024xf32>
    tpu.vector_store %arg14[%c0_5, %c0_6], %6 {strides = array<i32>} : memref<16x1024xf32, #tpu.memory_space<vmem>>, vector<16x1024xf32>,
    %8 = tpu.iota {dimensions = array<i32: 1>} : vector<16x128xi32>
    %c64_i32 = arith.constant 64 : i32
    %9 = vector.broadcast %c64_i32 : i32 to vector<16x128xi32>
    %10 = arith.cmpi slt, %8, %9 : vector<16x128xi32>
    %cst_7 = arith.constant 0.000000e+00 : f32
    %11 = vector.broadcast %cst_7 : f32 to vector<2x128xf32>
    %cst_8 = arith.constant 0.000000e+00 : f32
    %12 = vector.broadcast %cst_8 : f32 to vector<2x128xf32>
    %c0_9 = arith.constant 0 : index
    %c0_10 = arith.constant 0 : index
    %13 = vector.load %arg14[%c0_9, %c0_10] : memref<16x1024xf32, #tpu.memory_space<vmem>>, vector<2x512xf32>
    %c14 = arith.constant 14 : index
    %c512 = arith.constant 512 : index
    %14 = vector.load %arg14[%c14, %c512] : memref<16x1024xf32, #tpu.memory_space<vmem>>, vector<2x512xf32>
    %15 = arith.addf %13, %14 : vector<2x512xf32>
    %16 = arith.truncf %11 : vector<2x128xf32> to vector<2x128xbf16>
    %c0_11 = arith.constant 0 : index
    %c0_12 = arith.constant 0 : index
    %17 = vector.load %arg3[%c0_11, %c0_12] : memref<128x512xbf16, #tpu.memory_space<vmem>>, vector<128x512xbf16>
    %cst_13 = arith.constant dense<0.000000e+00> : vector<2x512xf32>
    %18 = tpu.matmul %16, %17, %cst_13 {dimension_numbers = #tpu.dot_dimension_numbers<[1], [0], [0], [1], [0, 0, 1, 1], [], []>} : vector<2x128xbf16>, vector<128x512xbf16>, vector<2x512xf32> -> vector<2x512xf32>
    %19 = arith.addf %15, %18 : vector<2x512xf32>
    %20 = vector.extract_strided_slice %19 {offsets = [0, 0], sizes = [2, 128], strides = [1, 1]} : vector<2x512xf32> to vector<2x128xf32>
    %21 = arith.negf %20 : vector<2x128xf32>
    %22 = math.exp %21 : vector<2x128xf32>
    %cst_14 = arith.constant 1.000000e+00 : f32
    %23 = vector.broadcast %cst_14 : f32 to vector<2x128xf32>
    %24 = arith.addf %23, %22 : vector<2x128xf32>
    %25 = arith.divf %23, %24 : vector<2x128xf32>
    %26 = vector.extract_strided_slice %19 {offsets = [0, 128], sizes = [2, 128], strides = [1, 1]} : vector<2x512xf32> to vector<2x128xf32>
    %27 = arith.negf %26 : vector<2x128xf32>
    %28 = math.exp %27 : vector<2x128xf32>
    %cst_15 = arith.constant 1.000000e+00 : f32
    %29 = vector.broadcast %cst_15 : f32 to vector<2x128xf32>
    %30 = arith.addf %29, %28 : vector<2x128xf32>
    %31 = arith.divf %29, %30 : vector<2x128xf32>
    %32 = vector.extract_strided_slice %19 {offsets = [0, 256], sizes = [2, 128], strides = [1, 1]} : vector<2x512xf32> to vector<2x128xf32>
    %33 = math.tanh %32 : vector<2x128xf32>
    %34 = vector.extract_strided_slice %19 {offsets = [0, 384], sizes = [2, 128], strides = [1, 1]} : vector<2x512xf32> to vector<2x128xf32>
    %35 = arith.negf %34 : vector<2x128xf32>
    %36 = math.exp %35 : vector<2x128xf32>
    %cst_16 = arith.constant 1.000000e+00 : f32
    %37 = vector.broadcast %cst_16 : f32 to vector<2x128xf32>
    %38 = arith.addf %37, %36 : vector<2x128xf32>
    %39 = arith.divf %37, %38 : vector<2x128xf32>
    %40 = arith.mulf %31, %12 : vector<2x128xf32>
    %41 = arith.mulf %25, %33 : vector<2x128xf32>
    %42 = arith.addf %40, %41 : vector<2x128xf32>
    %43 = math.tanh %42 : vector<2x128xf32>
    %44 = arith.mulf %39, %43 : vector<2x128xf32>
    %c0_17 = arith.constant 0 : index
    %c0_18 = arith.constant 0 : index
    %45 = vector.load %arg16[%c0_17, %c0_18] : memref<16x128xf32, #tpu.memory_space<vmem>>, vector<2x128xf32>
    tpu.vector_store %arg16[%c0_17, %c0_18], %44 {strides = array<i32>} : memref<16x128xf32, #tpu.memory_space<vmem>>, vector<2x128xf32>,
    %c14_19 = arith.constant 14 : index
    %c0_20 = arith.constant 0 : index
    %46 = vector.load %arg17[%c14_19, %c0_20] : memref<16x128xf32, #tpu.memory_space<vmem>>, vector<2x128xf32>
    tpu.vector_store %arg17[%c14_19, %c0_20], %44 {strides = array<i32>} : memref<16x128xf32, #tpu.memory_space<vmem>>, vector<2x128xf32>,
    %c2 = arith.constant 2 : index
    %c0_21 = arith.constant 0 : index
    %47 = vector.load %arg14[%c2, %c0_21] : memref<16x1024xf32, #tpu.memory_space<vmem>>, vector<2x512xf32>
    %c12 = arith.constant 12 : index
    %c512_22 = arith.constant 512 : index
    %48 = vector.load %arg14[%c12, %c512_22] : memref<16x1024xf32, #tpu.memory_space<vmem>>, vector<2x512xf32>
    %49 = arith.addf %47, %48 : vector<2x512xf32>
    %50 = arith.truncf %44 : vector<2x128xf32> to vector<2x128xbf16>
    %c0_23 = arith.constant 0 : index
    %c0_24 = arith.constant 0 : index
    %51 = vector.load %arg3[%c0_23, %c0_24] : memref<128x512xbf16, #tpu.memory_space<vmem>>, vector<128x512xbf16>
    %cst_25 = arith.constant dense<0.000000e+00> : vector<2x512xf32>
    %52 = tpu.matmul %50, %51, %cst_25 {dimension_numbers = #tpu.dot_dimension_numbers<[1], [0], [0], [1], [0, 0, 1, 1], [], []>} : vector<2x128xbf16>, vector<128x512xbf16>, vector<2x512xf32> -> vector<2x512xf32>
    %53 = arith.addf %49, %52 : vector<2x512xf32>
    %54 = vector.extract_strided_slice %53 {offsets = [0, 0], sizes = [2, 128], strides = [1, 1]} : vector<2x512xf32> to vector<2x128xf32>
    %55 = arith.negf %54 : vector<2x128xf32>
    %56 = math.exp %55 : vector<2x128xf32>
    %cst_26 = arith.constant 1.000000e+00 : f32
    %57 = vector.broadcast %cst_26 : f32 to vector<2x128xf32>
    %58 = arith.addf %57, %56 : vector<2x128xf32>
    %59 = arith.divf %57, %58 : vector<2x128xf32>
    %60 = vector.extract_strided_slice %53 {offsets = [0, 128], sizes = [2, 128], strides = [1, 1]} : vector<2x512xf32> to vector<2x128xf32>
    %61 = arith.negf %60 : vector<2x128xf32>
    %62 = math.exp %61 : vector<2x128xf32>
    %cst_27 = arith.constant 1.000000e+00 : f32
    %63 = vector.broadcast %cst_27 : f32 to vector<2x128xf32>
    %64 = arith.addf %63, %62 : vector<2x128xf32>
    %65 = arith.divf %63, %64 : vector<2x128xf32>
    %66 = vector.extract_strided_slice %53 {offsets = [0, 256], sizes = [2, 128], strides = [1, 1]} : vector<2x512xf32> to vector<2x128xf32>
    %67 = math.tanh %66 : vector<2x128xf32>
    %68 = vector.extract_strided_slice %53 {offsets = [0, 384], sizes = [2, 128], strides = [1, 1]} : vector<2x512xf32> to vector<2x128xf32>
    %69 = arith.negf %68 : vector<2x128xf32>
    %70 = math.exp %69 : vector<2x128xf32>
    %cst_28 = arith.constant 1.000000e+00 : f32
    %71 = vector.broadcast %cst_28 : f32 to vector<2x128xf32>
    %72 = arith.addf %71, %70 : vector<2x128xf32>
    %73 = arith.divf %71, %72 : vector<2x128xf32>
    %74 = arith.mulf %65, %42 : vector<2x128xf32>
    %75 = arith.mulf %59, %67 : vector<2x128xf32>
    %76 = arith.addf %74, %75 : vector<2x128xf32>
    %77 = math.tanh %76 : vector<2x128xf32>
    %78 = arith.mulf %73, %77 : vector<2x128xf32>
    %c2_29 = arith.constant 2 : index
    %c0_30 = arith.constant 0 : index
    %79 = vector.load %arg16[%c2_29, %c0_30] : memref<16x128xf32, #tpu.memory_space<vmem>>, vector<2x128xf32>
    tpu.vector_store %arg16[%c2_29, %c0_30], %78 {strides = array<i32>} : memref<16x128xf32, #tpu.memory_space<vmem>>, vector<2x128xf32>,
    %c12_31 = arith.constant 12 : index
    %c0_32 = arith.constant 0 : index
    %80 = vector.load %arg17[%c12_31, %c0_32] : memref<16x128xf32, #tpu.memory_space<vmem>>, vector<2x128xf32>
    tpu.vector_store %arg17[%c12_31, %c0_32], %78 {strides = array<i32>} : memref<16x128xf32, #tpu.memory_space<vmem>>, vector<2x128xf32>,
    %c4 = arith.constant 4 : index
    %c0_33 = arith.constant 0 : index
    %81 = vector.load %arg14[%c4, %c0_33] : memref<16x1024xf32, #tpu.memory_space<vmem>>, vector<2x512xf32>
    %c10 = arith.constant 10 : index
    %c512_34 = arith.constant 512 : index
    %82 = vector.load %arg14[%c10, %c512_34] : memref<16x1024xf32, #tpu.memory_space<vmem>>, vector<2x512xf32>
    %83 = arith.addf %81, %82 : vector<2x512xf32>
    %84 = arith.truncf %78 : vector<2x128xf32> to vector<2x128xbf16>
    %c0_35 = arith.constant 0 : index
    %c0_36 = arith.constant 0 : index
    %85 = vector.load %arg3[%c0_35, %c0_36] : memref<128x512xbf16, #tpu.memory_space<vmem>>, vector<128x512xbf16>
    %cst_37 = arith.constant dense<0.000000e+00> : vector<2x512xf32>
    %86 = tpu.matmul %84, %85, %cst_37 {dimension_numbers = #tpu.dot_dimension_numbers<[1], [0], [0], [1], [0, 0, 1, 1], [], []>} : vector<2x128xbf16>, vector<128x512xbf16>, vector<2x512xf32> -> vector<2x512xf32>
    %87 = arith.addf %83, %86 : vector<2x512xf32>
    %88 = vector.extract_strided_slice %87 {offsets = [0, 0], sizes = [2, 128], strides = [1, 1]} : vector<2x512xf32> to vector<2x128xf32>
    %89 = arith.negf %88 : vector<2x128xf32>
    %90 = math.exp %89 : vector<2x128xf32>
    %cst_38 = arith.constant 1.000000e+00 : f32
    %91 = vector.broadcast %cst_38 : f32 to vector<2x128xf32>
    %92 = arith.addf %91, %90 : vector<2x128xf32>
    %93 = arith.divf %91, %92 : vector<2x128xf32>
    %94 = vector.extract_strided_slice %87 {offsets = [0, 128], sizes = [2, 128], strides = [1, 1]} : vector<2x512xf32> to vector<2x128xf32>
    %95 = arith.negf %94 : vector<2x128xf32>
    %96 = math.exp %95 : vector<2x128xf32>
    %cst_39 = arith.constant 1.000000e+00 : f32
    %97 = vector.broadcast %cst_39 : f32 to vector<2x128xf32>
    %98 = arith.addf %97, %96 : vector<2x128xf32>
    %99 = arith.divf %97, %98 : vector<2x128xf32>
    %100 = vector.extract_strided_slice %87 {offsets = [0, 256], sizes = [2, 128], strides = [1, 1]} : vector<2x512xf32> to vector<2x128xf32>
    %101 = math.tanh %100 : vector<2x128xf32>
    %102 = vector.extract_strided_slice %87 {offsets = [0, 384], sizes = [2, 128], strides = [1, 1]} : vector<2x512xf32> to vector<2x128xf32>
    %103 = arith.negf %102 : vector<2x128xf32>
    %104 = math.exp %103 : vector<2x128xf32>
    %cst_40 = arith.constant 1.000000e+00 : f32
    %105 = vector.broadcast %cst_40 : f32 to vector<2x128xf32>
    %106 = arith.addf %105, %104 : vector<2x128xf32>
    %107 = arith.divf %105, %106 : vector<2x128xf32>
    %108 = arith.mulf %99, %76 : vector<2x128xf32>
    %109 = arith.mulf %93, %101 : vector<2x128xf32>
    %110 = arith.addf %108, %109 : vector<2x128xf32>
    %111 = math.tanh %110 : vector<2x128xf32>
    %112 = arith.mulf %107, %111 : vector<2x128xf32>
    %c4_41 = arith.constant 4 : index
    %c0_42 = arith.constant 0 : index
    %113 = vector.load %arg16[%c4_41, %c0_42] : memref<16x128xf32, #tpu.memory_space<vmem>>, vector<2x128xf32>
    tpu.vector_store %arg16[%c4_41, %c0_42], %112 {strides = array<i32>} : memref<16x128xf32, #tpu.memory_space<vmem>>, vector<2x128xf32>,
    %c10_43 = arith.constant 10 : index
    %c0_44 = arith.constant 0 : index
    %114 = vector.load %arg17[%c10_43, %c0_44] : memref<16x128xf32, #tpu.memory_space<vmem>>, vector<2x128xf32>
    tpu.vector_store %arg17[%c10_43, %c0_44], %112 {strides = array<i32>} : memref<16x128xf32, #tpu.memory_space<vmem>>, vector<2x128xf32>,
    %c6 = arith.constant 6 : index
    %c0_45 = arith.constant 0 : index
    %115 = vector.load %arg14[%c6, %c0_45] : memref<16x1024xf32, #tpu.memory_space<vmem>>, vector<2x512xf32>
    %c8 = arith.constant 8 : index
    %c512_46 = arith.constant 512 : index
    %116 = vector.load %arg14[%c8, %c512_46] : memref<16x1024xf32, #tpu.memory_space<vmem>>, vector<2x512xf32>
    %117 = arith.addf %115, %116 : vector<2x512xf32>
    %118 = arith.truncf %112 : vector<2x128xf32> to vector<2x128xbf16>
    %c0_47 = arith.constant 0 : index
    %c0_48 = arith.constant 0 : index
    %119 = vector.load %arg3[%c0_47, %c0_48] : memref<128x512xbf16, #tpu.memory_space<vmem>>, vector<128x512xbf16>
    %cst_49 = arith.constant dense<0.000000e+00> : vector<2x512xf32>
    %120 = tpu.matmul %118, %119, %cst_49 {dimension_numbers = #tpu.dot_dimension_numbers<[1], [0], [0], [1], [0, 0, 1, 1], [], []>} : vector<2x128xbf16>, vector<128x512xbf16>, vector<2x512xf32> -> vector<2x512xf32>
    %121 = arith.addf %117, %120 : vector<2x512xf32>
    %122 = vector.extract_strided_slice %121 {offsets = [0, 0], sizes = [2, 128], strides = [1, 1]} : vector<2x512xf32> to vector<2x128xf32>
    %123 = arith.negf %122 : vector<2x128xf32>
    %124 = math.exp %123 : vector<2x128xf32>
    %cst_50 = arith.constant 1.000000e+00 : f32
    %125 = vector.broadcast %cst_50 : f32 to vector<2x128xf32>
    %126 = arith.addf %125, %124 : vector<2x128xf32>
    %127 = arith.divf %125, %126 : vector<2x128xf32>
    %128 = vector.extract_strided_slice %121 {offsets = [0, 128], sizes = [2, 128], strides = [1, 1]} : vector<2x512xf32> to vector<2x128xf32>
    %129 = arith.negf %128 : vector<2x128xf32>
    %130 = math.exp %129 : vector<2x128xf32>
    %cst_51 = arith.constant 1.000000e+00 : f32
    %131 = vector.broadcast %cst_51 : f32 to vector<2x128xf32>
    %132 = arith.addf %131, %130 : vector<2x128xf32>
    %133 = arith.divf %131, %132 : vector<2x128xf32>
    %134 = vector.extract_strided_slice %121 {offsets = [0, 256], sizes = [2, 128], strides = [1, 1]} : vector<2x512xf32> to vector<2x128xf32>
    %135 = math.tanh %134 : vector<2x128xf32>
    %136 = vector.extract_strided_slice %121 {offsets = [0, 384], sizes = [2, 128], strides = [1, 1]} : vector<2x512xf32> to vector<2x128xf32>
    %137 = arith.negf %136 : vector<2x128xf32>
    %138 = math.exp %137 : vector<2x128xf32>
    %cst_52 = arith.constant 1.000000e+00 : f32
    %139 = vector.broadcast %cst_52 : f32 to vector<2x128xf32>
    %140 = arith.addf %139, %138 : vector<2x128xf32>
    %141 = arith.divf %139, %140 : vector<2x128xf32>
    %142 = arith.mulf %133, %110 : vector<2x128xf32>
    %143 = arith.mulf %127, %135 : vector<2x128xf32>
    %144 = arith.addf %142, %143 : vector<2x128xf32>
    %145 = math.tanh %144 : vector<2x128xf32>
    %146 = arith.mulf %141, %145 : vector<2x128xf32>
    %c6_53 = arith.constant 6 : index
    %c0_54 = arith.constant 0 : index
    %147 = vector.load %arg16[%c6_53, %c0_54] : memref<16x128xf32, #tpu.memory_space<vmem>>, vector<2x128xf32>
    tpu.vector_store %arg16[%c6_53, %c0_54], %146 {strides = array<i32>} : memref<16x128xf32, #tpu.memory_space<vmem>>, vector<2x128xf32>,
    %c8_55 = arith.constant 8 : index
    %c0_56 = arith.constant 0 : index
    %148 = vector.load %arg17[%c8_55, %c0_56] : memref<16x128xf32, #tpu.memory_space<vmem>>, vector<2x128xf32>
    tpu.vector_store %arg17[%c8_55, %c0_56], %146 {strides = array<i32>} : memref<16x128xf32, #tpu.memory_space<vmem>>, vector<2x128xf32>,
    %c8_57 = arith.constant 8 : index
    %c0_58 = arith.constant 0 : index
    %149 = vector.load %arg14[%c8_57, %c0_58] : memref<16x1024xf32, #tpu.memory_space<vmem>>, vector<2x512xf32>
    %c6_59 = arith.constant 6 : index
    %c512_60 = arith.constant 512 : index
    %150 = vector.load %arg14[%c6_59, %c512_60] : memref<16x1024xf32, #tpu.memory_space<vmem>>, vector<2x512xf32>
    %151 = arith.addf %149, %150 : vector<2x512xf32>
    %152 = arith.truncf %146 : vector<2x128xf32> to vector<2x128xbf16>
    %c0_61 = arith.constant 0 : index
    %c0_62 = arith.constant 0 : index
    %153 = vector.load %arg3[%c0_61, %c0_62] : memref<128x512xbf16, #tpu.memory_space<vmem>>, vector<128x512xbf16>
    %cst_63 = arith.constant dense<0.000000e+00> : vector<2x512xf32>
    %154 = tpu.matmul %152, %153, %cst_63 {dimension_numbers = #tpu.dot_dimension_numbers<[1], [0], [0], [1], [0, 0, 1, 1], [], []>} : vector<2x128xbf16>, vector<128x512xbf16>, vector<2x512xf32> -> vector<2x512xf32>
    %155 = arith.addf %151, %154 : vector<2x512xf32>
    %156 = vector.extract_strided_slice %155 {offsets = [0, 0], sizes = [2, 128], strides = [1, 1]} : vector<2x512xf32> to vector<2x128xf32>
    %157 = arith.negf %156 : vector<2x128xf32>
    %158 = math.exp %157 : vector<2x128xf32>
    %cst_64 = arith.constant 1.000000e+00 : f32
    %159 = vector.broadcast %cst_64 : f32 to vector<2x128xf32>
    %160 = arith.addf %159, %158 : vector<2x128xf32>
    %161 = arith.divf %159, %160 : vector<2x128xf32>
    %162 = vector.extract_strided_slice %155 {offsets = [0, 128], sizes = [2, 128], strides = [1, 1]} : vector<2x512xf32> to vector<2x128xf32>
    %163 = arith.negf %162 : vector<2x128xf32>
    %164 = math.exp %163 : vector<2x128xf32>
    %cst_65 = arith.constant 1.000000e+00 : f32
    %165 = vector.broadcast %cst_65 : f32 to vector<2x128xf32>
    %166 = arith.addf %165, %164 : vector<2x128xf32>
    %167 = arith.divf %165, %166 : vector<2x128xf32>
    %168 = vector.extract_strided_slice %155 {offsets = [0, 256], sizes = [2, 128], strides = [1, 1]} : vector<2x512xf32> to vector<2x128xf32>
    %169 = math.tanh %168 : vector<2x128xf32>
    %170 = vector.extract_strided_slice %155 {offsets = [0, 384], sizes = [2, 128], strides = [1, 1]} : vector<2x512xf32> to vector<2x128xf32>
    %171 = arith.negf %170 : vector<2x128xf32>
    %172 = math.exp %171 : vector<2x128xf32>
    %cst_66 = arith.constant 1.000000e+00 : f32
    %173 = vector.broadcast %cst_66 : f32 to vector<2x128xf32>
    %174 = arith.addf %173, %172 : vector<2x128xf32>
    %175 = arith.divf %173, %174 : vector<2x128xf32>
    %176 = arith.mulf %167, %144 : vector<2x128xf32>
    %177 = arith.mulf %161, %169 : vector<2x128xf32>
    %178 = arith.addf %176, %177 : vector<2x128xf32>
    %179 = math.tanh %178 : vector<2x128xf32>
    %180 = arith.mulf %175, %179 : vector<2x128xf32>
    %c8_67 = arith.constant 8 : index
    %c0_68 = arith.constant 0 : index
    %181 = vector.load %arg16[%c8_67, %c0_68] : memref<16x128xf32, #tpu.memory_space<vmem>>, vector<2x128xf32>
    tpu.vector_store %arg16[%c8_67, %c0_68], %180 {strides = array<i32>} : memref<16x128xf32, #tpu.memory_space<vmem>>, vector<2x128xf32>,
    %c6_69 = arith.constant 6 : index
    %c0_70 = arith.constant 0 : index
    %182 = vector.load %arg17[%c6_69, %c0_70] : memref<16x128xf32, #tpu.memory_space<vmem>>, vector<2x128xf32>
    tpu.vector_store %arg17[%c6_69, %c0_70], %180 {strides = array<i32>} : memref<16x128xf32, #tpu.memory_space<vmem>>, vector<2x128xf32>,
    %c10_71 = arith.constant 10 : index
    %c0_72 = arith.constant 0 : index
    %183 = vector.load %arg14[%c10_71, %c0_72] : memref<16x1024xf32, #tpu.memory_space<vmem>>, vector<2x512xf32>
    %c4_73 = arith.constant 4 : index
    %c512_74 = arith.constant 512 : index
    %184 = vector.load %arg14[%c4_73, %c512_74] : memref<16x1024xf32, #tpu.memory_space<vmem>>, vector<2x512xf32>
    %185 = arith.addf %183, %184 : vector<2x512xf32>
    %186 = arith.truncf %180 : vector<2x128xf32> to vector<2x128xbf16>
    %c0_75 = arith.constant 0 : index
    %c0_76 = arith.constant 0 : index
    %187 = vector.load %arg3[%c0_75, %c0_76] : memref<128x512xbf16, #tpu.memory_space<vmem>>, vector<128x512xbf16>
    %cst_77 = arith.constant dense<0.000000e+00> : vector<2x512xf32>
    %188 = tpu.matmul %186, %187, %cst_77 {dimension_numbers = #tpu.dot_dimension_numbers<[1], [0], [0], [1], [0, 0, 1, 1], [], []>} : vector<2x128xbf16>, vector<128x512xbf16>, vector<2x512xf32> -> vector<2x512xf32>
    %189 = arith.addf %185, %188 : vector<2x512xf32>
    %190 = vector.extract_strided_slice %189 {offsets = [0, 0], sizes = [2, 128], strides = [1, 1]} : vector<2x512xf32> to vector<2x128xf32>
    %191 = arith.negf %190 : vector<2x128xf32>
    %192 = math.exp %191 : vector<2x128xf32>
    %cst_78 = arith.constant 1.000000e+00 : f32
    %193 = vector.broadcast %cst_78 : f32 to vector<2x128xf32>
    %194 = arith.addf %193, %192 : vector<2x128xf32>
    %195 = arith.divf %193, %194 : vector<2x128xf32>
    %196 = vector.extract_strided_slice %189 {offsets = [0, 128], sizes = [2, 128], strides = [1, 1]} : vector<2x512xf32> to vector<2x128xf32>
    %197 = arith.negf %196 : vector<2x128xf32>
    %198 = math.exp %197 : vector<2x128xf32>
    %cst_79 = arith.constant 1.000000e+00 : f32
    %199 = vector.broadcast %cst_79 : f32 to vector<2x128xf32>
    %200 = arith.addf %199, %198 : vector<2x128xf32>
    %201 = arith.divf %199, %200 : vector<2x128xf32>
    %202 = vector.extract_strided_slice %189 {offsets = [0, 256], sizes = [2, 128], strides = [1, 1]} : vector<2x512xf32> to vector<2x128xf32>
    %203 = math.tanh %202 : vector<2x128xf32>
    %204 = vector.extract_strided_slice %189 {offsets = [0, 384], sizes = [2, 128], strides = [1, 1]} : vector<2x512xf32> to vector<2x128xf32>
    %205 = arith.negf %204 : vector<2x128xf32>
    %206 = math.exp %205 : vector<2x128xf32>
    %cst_80 = arith.constant 1.000000e+00 : f32
    %207 = vector.broadcast %cst_80 : f32 to vector<2x128xf32>
    %208 = arith.addf %207, %206 : vector<2x128xf32>
    %209 = arith.divf %207, %208 : vector<2x128xf32>
    %210 = arith.mulf %201, %178 : vector<2x128xf32>
    %211 = arith.mulf %195, %203 : vector<2x128xf32>
    %212 = arith.addf %210, %211 : vector<2x128xf32>
    %213 = math.tanh %212 : vector<2x128xf32>
    %214 = arith.mulf %209, %213 : vector<2x128xf32>
    %c10_81 = arith.constant 10 : index
    %c0_82 = arith.constant 0 : index
    %215 = vector.load %arg16[%c10_81, %c0_82] : memref<16x128xf32, #tpu.memory_space<vmem>>, vector<2x128xf32>
    tpu.vector_store %arg16[%c10_81, %c0_82], %214 {strides = array<i32>} : memref<16x128xf32, #tpu.memory_space<vmem>>, vector<2x128xf32>,
    %c4_83 = arith.constant 4 : index
    %c0_84 = arith.constant 0 : index
    %216 = vector.load %arg17[%c4_83, %c0_84] : memref<16x128xf32, #tpu.memory_space<vmem>>, vector<2x128xf32>
    tpu.vector_store %arg17[%c4_83, %c0_84], %214 {strides = array<i32>} : memref<16x128xf32, #tpu.memory_space<vmem>>, vector<2x128xf32>,
    %c12_85 = arith.constant 12 : index
    %c0_86 = arith.constant 0 : index
    %217 = vector.load %arg14[%c12_85, %c0_86] : memref<16x1024xf32, #tpu.memory_space<vmem>>, vector<2x512xf32>
    %c2_87 = arith.constant 2 : index
    %c512_88 = arith.constant 512 : index
    %218 = vector.load %arg14[%c2_87, %c512_88] : memref<16x1024xf32, #tpu.memory_space<vmem>>, vector<2x512xf32>
    %219 = arith.addf %217, %218 : vector<2x512xf32>
    %220 = arith.truncf %214 : vector<2x128xf32> to vector<2x128xbf16>
    %c0_89 = arith.constant 0 : index
    %c0_90 = arith.constant 0 : index
    %221 = vector.load %arg3[%c0_89, %c0_90] : memref<128x512xbf16, #tpu.memory_space<vmem>>, vector<128x512xbf16>
    %cst_91 = arith.constant dense<0.000000e+00> : vector<2x512xf32>
    %222 = tpu.matmul %220, %221, %cst_91 {dimension_numbers = #tpu.dot_dimension_numbers<[1], [0], [0], [1], [0, 0, 1, 1], [], []>} : vector<2x128xbf16>, vector<128x512xbf16>, vector<2x512xf32> -> vector<2x512xf32>
    %223 = arith.addf %219, %222 : vector<2x512xf32>
    %224 = vector.extract_strided_slice %223 {offsets = [0, 0], sizes = [2, 128], strides = [1, 1]} : vector<2x512xf32> to vector<2x128xf32>
    %225 = arith.negf %224 : vector<2x128xf32>
    %226 = math.exp %225 : vector<2x128xf32>
    %cst_92 = arith.constant 1.000000e+00 : f32
    %227 = vector.broadcast %cst_92 : f32 to vector<2x128xf32>
    %228 = arith.addf %227, %226 : vector<2x128xf32>
    %229 = arith.divf %227, %228 : vector<2x128xf32>
    %230 = vector.extract_strided_slice %223 {offsets = [0, 128], sizes = [2, 128], strides = [1, 1]} : vector<2x512xf32> to vector<2x128xf32>
    %231 = arith.negf %230 : vector<2x128xf32>
    %232 = math.exp %231 : vector<2x128xf32>
    %cst_93 = arith.constant 1.000000e+00 : f32
    %233 = vector.broadcast %cst_93 : f32 to vector<2x128xf32>
    %234 = arith.addf %233, %232 : vector<2x128xf32>
    %235 = arith.divf %233, %234 : vector<2x128xf32>
    %236 = vector.extract_strided_slice %223 {offsets = [0, 256], sizes = [2, 128], strides = [1, 1]} : vector<2x512xf32> to vector<2x128xf32>
    %237 = math.tanh %236 : vector<2x128xf32>
    %238 = vector.extract_strided_slice %223 {offsets = [0, 384], sizes = [2, 128], strides = [1, 1]} : vector<2x512xf32> to vector<2x128xf32>
    %239 = arith.negf %238 : vector<2x128xf32>
    %240 = math.exp %239 : vector<2x128xf32>
    %cst_94 = arith.constant 1.000000e+00 : f32
    %241 = vector.broadcast %cst_94 : f32 to vector<2x128xf32>
    %242 = arith.addf %241, %240 : vector<2x128xf32>
    %243 = arith.divf %241, %242 : vector<2x128xf32>
    %244 = arith.mulf %235, %212 : vector<2x128xf32>
    %245 = arith.mulf %229, %237 : vector<2x128xf32>
    %246 = arith.addf %244, %245 : vector<2x128xf32>
    %247 = math.tanh %246 : vector<2x128xf32>
    %248 = arith.mulf %243, %247 : vector<2x128xf32>
    %c12_95 = arith.constant 12 : index
    %c0_96 = arith.constant 0 : index
    %249 = vector.load %arg16[%c12_95, %c0_96] : memref<16x128xf32, #tpu.memory_space<vmem>>, vector<2x128xf32>
    tpu.vector_store %arg16[%c12_95, %c0_96], %248 {strides = array<i32>} : memref<16x128xf32, #tpu.memory_space<vmem>>, vector<2x128xf32>,
    %c2_97 = arith.constant 2 : index
    %c0_98 = arith.constant 0 : index
    %250 = vector.load %arg17[%c2_97, %c0_98] : memref<16x128xf32, #tpu.memory_space<vmem>>, vector<2x128xf32>
    tpu.vector_store %arg17[%c2_97, %c0_98], %248 {strides = array<i32>} : memref<16x128xf32, #tpu.memory_space<vmem>>, vector<2x128xf32>,
    %c14_99 = arith.constant 14 : index
    %c0_100 = arith.constant 0 : index
    %251 = vector.load %arg14[%c14_99, %c0_100] : memref<16x1024xf32, #tpu.memory_space<vmem>>, vector<2x512xf32>
    %c0_101 = arith.constant 0 : index
    %c512_102 = arith.constant 512 : index
    %252 = vector.load %arg14[%c0_101, %c512_102] : memref<16x1024xf32, #tpu.memory_space<vmem>>, vector<2x512xf32>
    %253 = arith.addf %251, %252 : vector<2x512xf32>
    %254 = arith.truncf %248 : vector<2x128xf32> to vector<2x128xbf16>
    %c0_103 = arith.constant 0 : index
    %c0_104 = arith.constant 0 : index
    %255 = vector.load %arg3[%c0_103, %c0_104] : memref<128x512xbf16, #tpu.memory_space<vmem>>, vector<128x512xbf16>
    %cst_105 = arith.constant dense<0.000000e+00> : vector<2x512xf32>
    %256 = tpu.matmul %254, %255, %cst_105 {dimension_numbers = #tpu.dot_dimension_numbers<[1], [0], [0], [1], [0, 0, 1, 1], [], []>} : vector<2x128xbf16>, vector<128x512xbf16>, vector<2x512xf32> -> vector<2x512xf32>
    %257 = arith.addf %253, %256 : vector<2x512xf32>
    %258 = vector.extract_strided_slice %257 {offsets = [0, 0], sizes = [2, 128], strides = [1, 1]} : vector<2x512xf32> to vector<2x128xf32>
    %259 = arith.negf %258 : vector<2x128xf32>
    %260 = math.exp %259 : vector<2x128xf32>
    %cst_106 = arith.constant 1.000000e+00 : f32
    %261 = vector.broadcast %cst_106 : f32 to vector<2x128xf32>
    %262 = arith.addf %261, %260 : vector<2x128xf32>
    %263 = arith.divf %261, %262 : vector<2x128xf32>
    %264 = vector.extract_strided_slice %257 {offsets = [0, 128], sizes = [2, 128], strides = [1, 1]} : vector<2x512xf32> to vector<2x128xf32>
    %265 = arith.negf %264 : vector<2x128xf32>
    %266 = math.exp %265 : vector<2x128xf32>
    %cst_107 = arith.constant 1.000000e+00 : f32
    %267 = vector.broadcast %cst_107 : f32 to vector<2x128xf32>
    %268 = arith.addf %267, %266 : vector<2x128xf32>
    %269 = arith.divf %267, %268 : vector<2x128xf32>
    %270 = vector.extract_strided_slice %257 {offsets = [0, 256], sizes = [2, 128], strides = [1, 1]} : vector<2x512xf32> to vector<2x128xf32>
    %271 = math.tanh %270 : vector<2x128xf32>
    %272 = vector.extract_strided_slice %257 {offsets = [0, 384], sizes = [2, 128], strides = [1, 1]} : vector<2x512xf32> to vector<2x128xf32>
    %273 = arith.negf %272 : vector<2x128xf32>
    %274 = math.exp %273 : vector<2x128xf32>
    %cst_108 = arith.constant 1.000000e+00 : f32
    %275 = vector.broadcast %cst_108 : f32 to vector<2x128xf32>
    %276 = arith.addf %275, %274 : vector<2x128xf32>
    %277 = arith.divf %275, %276 : vector<2x128xf32>
    %278 = arith.mulf %269, %246 : vector<2x128xf32>
    %279 = arith.mulf %263, %271 : vector<2x128xf32>
    %280 = arith.addf %278, %279 : vector<2x128xf32>
    %281 = math.tanh %280 : vector<2x128xf32>
    %282 = arith.mulf %277, %281 : vector<2x128xf32>
    %c14_109 = arith.constant 14 : index
    %c0_110 = arith.constant 0 : index
    %283 = vector.load %arg16[%c14_109, %c0_110] : memref<16x128xf32, #tpu.memory_space<vmem>>, vector<2x128xf32>
    tpu.vector_store %arg16[%c14_109, %c0_110], %282 {strides = array<i32>} : memref<16x128xf32, #tpu.memory_space<vmem>>, vector<2x128xf32>,
    %c0_111 = arith.constant 0 : index
    %c0_112 = arith.constant 0 : index
    %284 = vector.load %arg17[%c0_111, %c0_112] : memref<16x128xf32, #tpu.memory_space<vmem>>, vector<2x128xf32>
    tpu.vector_store %arg17[%c0_111, %c0_112], %282 {strides = array<i32>} : memref<16x128xf32, #tpu.memory_space<vmem>>, vector<2x128xf32>,
    %c0_113 = arith.constant 0 : index
    %c0_114 = arith.constant 0 : index
    %285 = vector.load %arg16[%c0_113, %c0_114] : memref<16x128xf32, #tpu.memory_space<vmem>>, vector<16x128xf32>
    %c0_115 = arith.constant 0 : index
    %c0_116 = arith.constant 0 : index
    %286 = vector.load %arg17[%c0_115, %c0_116] : memref<16x128xf32, #tpu.memory_space<vmem>>, vector<16x128xf32>
    %287 = arith.select %10, %285, %286 : vector<16x128xi1>, vector<16x128xf32>
    %288 = arith.truncf %287 : vector<16x128xf32> to vector<16x128xbf16>
    %c0_117 = arith.constant 0 : index
    %c0_118 = arith.constant 0 : index
    %289 = vector.load %arg4[%c0_117, %c0_118] : memref<128x1024xbf16, #tpu.memory_space<vmem>>, vector<128x1024xbf16>
    %cst_119 = arith.constant dense<0.000000e+00> : vector<16x1024xf32>
    %290 = tpu.matmul %288, %289, %cst_119 {dimension_numbers = #tpu.dot_dimension_numbers<[1], [0], [0], [1], [0, 0, 1, 1], [], []>} : vector<16x128xbf16>, vector<128x1024xbf16>, vector<16x1024xf32> -> vector<16x1024xf32>
    %c0_120 = arith.constant 0 : index
    %c0_121 = arith.constant 0 : index
    %291 = vector.load %arg5[%c0_120, %c0_121] : memref<1x1024xf32, #tpu.memory_space<vmem>>, vector<1x1024xf32>
    %292 = vector.broadcast %291 : vector<1x1024xf32> to vector<16x1024xf32>
    %293 = arith.addf %290, %292 : vector<16x1024xf32>
    %c0_122 = arith.constant 0 : index
    %c0_123 = arith.constant 0 : index
    %294 = vector.load %arg15[%c0_122, %c0_123] : memref<16x1024xf32, #tpu.memory_space<vmem>>, vector<16x1024xf32>
    tpu.vector_store %arg15[%c0_122, %c0_123], %293 {strides = array<i32>} : memref<16x1024xf32, #tpu.memory_space<vmem>>, vector<16x1024xf32>,
    %cst_124 = arith.constant 0.000000e+00 : f32
    %295 = vector.broadcast %cst_124 : f32 to vector<2x128xf32>
    %cst_125 = arith.constant 0.000000e+00 : f32
    %296 = vector.broadcast %cst_125 : f32 to vector<2x128xf32>
    %c0_126 = arith.constant 0 : index
    %c0_127 = arith.constant 0 : index
    %297 = vector.load %arg15[%c0_126, %c0_127] : memref<16x1024xf32, #tpu.memory_space<vmem>>, vector<2x512xf32>
    %c14_128 = arith.constant 14 : index
    %c512_129 = arith.constant 512 : index
    %298 = vector.load %arg15[%c14_128, %c512_129] : memref<16x1024xf32, #tpu.memory_space<vmem>>, vector<2x512xf32>
    %299 = arith.addf %297, %298 : vector<2x512xf32>
    %300 = arith.truncf %295 : vector<2x128xf32> to vector<2x128xbf16>
    %c0_130 = arith.constant 0 : index
    %c0_131 = arith.constant 0 : index
    %301 = vector.load %arg6[%c0_130, %c0_131] : memref<128x512xbf16, #tpu.memory_space<vmem>>, vector<128x512xbf16>
    %cst_132 = arith.constant dense<0.000000e+00> : vector<2x512xf32>
    %302 = tpu.matmul %300, %301, %cst_132 {dimension_numbers = #tpu.dot_dimension_numbers<[1], [0], [0], [1], [0, 0, 1, 1], [], []>} : vector<2x128xbf16>, vector<128x512xbf16>, vector<2x512xf32> -> vector<2x512xf32>
    %303 = arith.addf %299, %302 : vector<2x512xf32>
    %304 = vector.extract_strided_slice %303 {offsets = [0, 0], sizes = [2, 128], strides = [1, 1]} : vector<2x512xf32> to vector<2x128xf32>
    %305 = arith.negf %304 : vector<2x128xf32>
    %306 = math.exp %305 : vector<2x128xf32>
    %cst_133 = arith.constant 1.000000e+00 : f32
    %307 = vector.broadcast %cst_133 : f32 to vector<2x128xf32>
    %308 = arith.addf %307, %306 : vector<2x128xf32>
    %309 = arith.divf %307, %308 : vector<2x128xf32>
    %310 = vector.extract_strided_slice %303 {offsets = [0, 128], sizes = [2, 128], strides = [1, 1]} : vector<2x512xf32> to vector<2x128xf32>
    %311 = arith.negf %310 : vector<2x128xf32>
    %312 = math.exp %311 : vector<2x128xf32>
    %cst_134 = arith.constant 1.000000e+00 : f32
    %313 = vector.broadcast %cst_134 : f32 to vector<2x128xf32>
    %314 = arith.addf %313, %312 : vector<2x128xf32>
    %315 = arith.divf %313, %314 : vector<2x128xf32>
    %316 = vector.extract_strided_slice %303 {offsets = [0, 256], sizes = [2, 128], strides = [1, 1]} : vector<2x512xf32> to vector<2x128xf32>
    %317 = math.tanh %316 : vector<2x128xf32>
    %318 = vector.extract_strided_slice %303 {offsets = [0, 384], sizes = [2, 128], strides = [1, 1]} : vector<2x512xf32> to vector<2x128xf32>
    %319 = arith.negf %318 : vector<2x128xf32>
    %320 = math.exp %319 : vector<2x128xf32>
    %cst_135 = arith.constant 1.000000e+00 : f32
    %321 = vector.broadcast %cst_135 : f32 to vector<2x128xf32>
    %322 = arith.addf %321, %320 : vector<2x128xf32>
    %323 = arith.divf %321, %322 : vector<2x128xf32>
    %324 = arith.mulf %315, %296 : vector<2x128xf32>
    %325 = arith.mulf %309, %317 : vector<2x128xf32>
    %326 = arith.addf %324, %325 : vector<2x128xf32>
    %327 = math.tanh %326 : vector<2x128xf32>
    %328 = arith.mulf %323, %327 : vector<2x128xf32>
    %c0_136 = arith.constant 0 : index
    %c0_137 = arith.constant 0 : index
    %329 = vector.load %arg18[%c0_136, %c0_137] : memref<16x128xf32, #tpu.memory_space<vmem>>, vector<2x128xf32>
    tpu.vector_store %arg18[%c0_136, %c0_137], %328 {strides = array<i32>} : memref<16x128xf32, #tpu.memory_space<vmem>>, vector<2x128xf32>,
    %c14_138 = arith.constant 14 : index
    %c0_139 = arith.constant 0 : index
    %330 = vector.load %arg19[%c14_138, %c0_139] : memref<16x128xf32, #tpu.memory_space<vmem>>, vector<2x128xf32>
    tpu.vector_store %arg19[%c14_138, %c0_139], %328 {strides = array<i32>} : memref<16x128xf32, #tpu.memory_space<vmem>>, vector<2x128xf32>,
    %c2_140 = arith.constant 2 : index
    %c0_141 = arith.constant 0 : index
    %331 = vector.load %arg15[%c2_140, %c0_141] : memref<16x1024xf32, #tpu.memory_space<vmem>>, vector<2x512xf32>
    %c12_142 = arith.constant 12 : index
    %c512_143 = arith.constant 512 : index
    %332 = vector.load %arg15[%c12_142, %c512_143] : memref<16x1024xf32, #tpu.memory_space<vmem>>, vector<2x512xf32>
    %333 = arith.addf %331, %332 : vector<2x512xf32>
    %334 = arith.truncf %328 : vector<2x128xf32> to vector<2x128xbf16>
    %c0_144 = arith.constant 0 : index
    %c0_145 = arith.constant 0 : index
    %335 = vector.load %arg6[%c0_144, %c0_145] : memref<128x512xbf16, #tpu.memory_space<vmem>>, vector<128x512xbf16>
    %cst_146 = arith.constant dense<0.000000e+00> : vector<2x512xf32>
    %336 = tpu.matmul %334, %335, %cst_146 {dimension_numbers = #tpu.dot_dimension_numbers<[1], [0], [0], [1], [0, 0, 1, 1], [], []>} : vector<2x128xbf16>, vector<128x512xbf16>, vector<2x512xf32> -> vector<2x512xf32>
    %337 = arith.addf %333, %336 : vector<2x512xf32>
    %338 = vector.extract_strided_slice %337 {offsets = [0, 0], sizes = [2, 128], strides = [1, 1]} : vector<2x512xf32> to vector<2x128xf32>
    %339 = arith.negf %338 : vector<2x128xf32>
    %340 = math.exp %339 : vector<2x128xf32>
    %cst_147 = arith.constant 1.000000e+00 : f32
    %341 = vector.broadcast %cst_147 : f32 to vector<2x128xf32>
    %342 = arith.addf %341, %340 : vector<2x128xf32>
    %343 = arith.divf %341, %342 : vector<2x128xf32>
    %344 = vector.extract_strided_slice %337 {offsets = [0, 128], sizes = [2, 128], strides = [1, 1]} : vector<2x512xf32> to vector<2x128xf32>
    %345 = arith.negf %344 : vector<2x128xf32>
    %346 = math.exp %345 : vector<2x128xf32>
    %cst_148 = arith.constant 1.000000e+00 : f32
    %347 = vector.broadcast %cst_148 : f32 to vector<2x128xf32>
    %348 = arith.addf %347, %346 : vector<2x128xf32>
    %349 = arith.divf %347, %348 : vector<2x128xf32>
    %350 = vector.extract_strided_slice %337 {offsets = [0, 256], sizes = [2, 128], strides = [1, 1]} : vector<2x512xf32> to vector<2x128xf32>
    %351 = math.tanh %350 : vector<2x128xf32>
    %352 = vector.extract_strided_slice %337 {offsets = [0, 384], sizes = [2, 128], strides = [1, 1]} : vector<2x512xf32> to vector<2x128xf32>
    %353 = arith.negf %352 : vector<2x128xf32>
    %354 = math.exp %353 : vector<2x128xf32>
    %cst_149 = arith.constant 1.000000e+00 : f32
    %355 = vector.broadcast %cst_149 : f32 to vector<2x128xf32>
    %356 = arith.addf %355, %354 : vector<2x128xf32>
    %357 = arith.divf %355, %356 : vector<2x128xf32>
    %358 = arith.mulf %349, %326 : vector<2x128xf32>
    %359 = arith.mulf %343, %351 : vector<2x128xf32>
    %360 = arith.addf %358, %359 : vector<2x128xf32>
    %361 = math.tanh %360 : vector<2x128xf32>
    %362 = arith.mulf %357, %361 : vector<2x128xf32>
    %c2_150 = arith.constant 2 : index
    %c0_151 = arith.constant 0 : index
    %363 = vector.load %arg18[%c2_150, %c0_151] : memref<16x128xf32, #tpu.memory_space<vmem>>, vector<2x128xf32>
    tpu.vector_store %arg18[%c2_150, %c0_151], %362 {strides = array<i32>} : memref<16x128xf32, #tpu.memory_space<vmem>>, vector<2x128xf32>,
    %c12_152 = arith.constant 12 : index
    %c0_153 = arith.constant 0 : index
    %364 = vector.load %arg19[%c12_152, %c0_153] : memref<16x128xf32, #tpu.memory_space<vmem>>, vector<2x128xf32>
    tpu.vector_store %arg19[%c12_152, %c0_153], %362 {strides = array<i32>} : memref<16x128xf32, #tpu.memory_space<vmem>>, vector<2x128xf32>,
    %c4_154 = arith.constant 4 : index
    %c0_155 = arith.constant 0 : index
    %365 = vector.load %arg15[%c4_154, %c0_155] : memref<16x1024xf32, #tpu.memory_space<vmem>>, vector<2x512xf32>
    %c10_156 = arith.constant 10 : index
    %c512_157 = arith.constant 512 : index
    %366 = vector.load %arg15[%c10_156, %c512_157] : memref<16x1024xf32, #tpu.memory_space<vmem>>, vector<2x512xf32>
    %367 = arith.addf %365, %366 : vector<2x512xf32>
    %368 = arith.truncf %362 : vector<2x128xf32> to vector<2x128xbf16>
    %c0_158 = arith.constant 0 : index
    %c0_159 = arith.constant 0 : index
    %369 = vector.load %arg6[%c0_158, %c0_159] : memref<128x512xbf16, #tpu.memory_space<vmem>>, vector<128x512xbf16>
    %cst_160 = arith.constant dense<0.000000e+00> : vector<2x512xf32>
    %370 = tpu.matmul %368, %369, %cst_160 {dimension_numbers = #tpu.dot_dimension_numbers<[1], [0], [0], [1], [0, 0, 1, 1], [], []>} : vector<2x128xbf16>, vector<128x512xbf16>, vector<2x512xf32> -> vector<2x512xf32>
    %371 = arith.addf %367, %370 : vector<2x512xf32>
    %372 = vector.extract_strided_slice %371 {offsets = [0, 0], sizes = [2, 128], strides = [1, 1]} : vector<2x512xf32> to vector<2x128xf32>
    %373 = arith.negf %372 : vector<2x128xf32>
    %374 = math.exp %373 : vector<2x128xf32>
    %cst_161 = arith.constant 1.000000e+00 : f32
    %375 = vector.broadcast %cst_161 : f32 to vector<2x128xf32>
    %376 = arith.addf %375, %374 : vector<2x128xf32>
    %377 = arith.divf %375, %376 : vector<2x128xf32>
    %378 = vector.extract_strided_slice %371 {offsets = [0, 128], sizes = [2, 128], strides = [1, 1]} : vector<2x512xf32> to vector<2x128xf32>
    %379 = arith.negf %378 : vector<2x128xf32>
    %380 = math.exp %379 : vector<2x128xf32>
    %cst_162 = arith.constant 1.000000e+00 : f32
    %381 = vector.broadcast %cst_162 : f32 to vector<2x128xf32>
    %382 = arith.addf %381, %380 : vector<2x128xf32>
    %383 = arith.divf %381, %382 : vector<2x128xf32>
    %384 = vector.extract_strided_slice %371 {offsets = [0, 256], sizes = [2, 128], strides = [1, 1]} : vector<2x512xf32> to vector<2x128xf32>
    %385 = math.tanh %384 : vector<2x128xf32>
    %386 = vector.extract_strided_slice %371 {offsets = [0, 384], sizes = [2, 128], strides = [1, 1]} : vector<2x512xf32> to vector<2x128xf32>
    %387 = arith.negf %386 : vector<2x128xf32>
    %388 = math.exp %387 : vector<2x128xf32>
    %cst_163 = arith.constant 1.000000e+00 : f32
    %389 = vector.broadcast %cst_163 : f32 to vector<2x128xf32>
    %390 = arith.addf %389, %388 : vector<2x128xf32>
    %391 = arith.divf %389, %390 : vector<2x128xf32>
    %392 = arith.mulf %383, %360 : vector<2x128xf32>
    %393 = arith.mulf %377, %385 : vector<2x128xf32>
    %394 = arith.addf %392, %393 : vector<2x128xf32>
    %395 = math.tanh %394 : vector<2x128xf32>
    %396 = arith.mulf %391, %395 : vector<2x128xf32>
    %c4_164 = arith.constant 4 : index
    %c0_165 = arith.constant 0 : index
    %397 = vector.load %arg18[%c4_164, %c0_165] : memref<16x128xf32, #tpu.memory_space<vmem>>, vector<2x128xf32>
    tpu.vector_store %arg18[%c4_164, %c0_165], %396 {strides = array<i32>} : memref<16x128xf32, #tpu.memory_space<vmem>>, vector<2x128xf32>,
    %c10_166 = arith.constant 10 : index
    %c0_167 = arith.constant 0 : index
    %398 = vector.load %arg19[%c10_166, %c0_167] : memref<16x128xf32, #tpu.memory_space<vmem>>, vector<2x128xf32>
    tpu.vector_store %arg19[%c10_166, %c0_167], %396 {strides = array<i32>} : memref<16x128xf32, #tpu.memory_space<vmem>>, vector<2x128xf32>,
    %c6_168 = arith.constant 6 : index
    %c0_169 = arith.constant 0 : index
    %399 = vector.load %arg15[%c6_168, %c0_169] : memref<16x1024xf32, #tpu.memory_space<vmem>>, vector<2x512xf32>
    %c8_170 = arith.constant 8 : index
    %c512_171 = arith.constant 512 : index
    %400 = vector.load %arg15[%c8_170, %c512_171] : memref<16x1024xf32, #tpu.memory_space<vmem>>, vector<2x512xf32>
    %401 = arith.addf %399, %400 : vector<2x512xf32>
    %402 = arith.truncf %396 : vector<2x128xf32> to vector<2x128xbf16>
    %c0_172 = arith.constant 0 : index
    %c0_173 = arith.constant 0 : index
    %403 = vector.load %arg6[%c0_172, %c0_173] : memref<128x512xbf16, #tpu.memory_space<vmem>>, vector<128x512xbf16>
    %cst_174 = arith.constant dense<0.000000e+00> : vector<2x512xf32>
    %404 = tpu.matmul %402, %403, %cst_174 {dimension_numbers = #tpu.dot_dimension_numbers<[1], [0], [0], [1], [0, 0, 1, 1], [], []>} : vector<2x128xbf16>, vector<128x512xbf16>, vector<2x512xf32> -> vector<2x512xf32>
    %405 = arith.addf %401, %404 : vector<2x512xf32>
    %406 = vector.extract_strided_slice %405 {offsets = [0, 0], sizes = [2, 128], strides = [1, 1]} : vector<2x512xf32> to vector<2x128xf32>
    %407 = arith.negf %406 : vector<2x128xf32>
    %408 = math.exp %407 : vector<2x128xf32>
    %cst_175 = arith.constant 1.000000e+00 : f32
    %409 = vector.broadcast %cst_175 : f32 to vector<2x128xf32>
    %410 = arith.addf %409, %408 : vector<2x128xf32>
    %411 = arith.divf %409, %410 : vector<2x128xf32>
    %412 = vector.extract_strided_slice %405 {offsets = [0, 128], sizes = [2, 128], strides = [1, 1]} : vector<2x512xf32> to vector<2x128xf32>
    %413 = arith.negf %412 : vector<2x128xf32>
    %414 = math.exp %413 : vector<2x128xf32>
    %cst_176 = arith.constant 1.000000e+00 : f32
    %415 = vector.broadcast %cst_176 : f32 to vector<2x128xf32>
    %416 = arith.addf %415, %414 : vector<2x128xf32>
    %417 = arith.divf %415, %416 : vector<2x128xf32>
    %418 = vector.extract_strided_slice %405 {offsets = [0, 256], sizes = [2, 128], strides = [1, 1]} : vector<2x512xf32> to vector<2x128xf32>
    %419 = math.tanh %418 : vector<2x128xf32>
    %420 = vector.extract_strided_slice %405 {offsets = [0, 384], sizes = [2, 128], strides = [1, 1]} : vector<2x512xf32> to vector<2x128xf32>
    %421 = arith.negf %420 : vector<2x128xf32>
    %422 = math.exp %421 : vector<2x128xf32>
    %cst_177 = arith.constant 1.000000e+00 : f32
    %423 = vector.broadcast %cst_177 : f32 to vector<2x128xf32>
    %424 = arith.addf %423, %422 : vector<2x128xf32>
    %425 = arith.divf %423, %424 : vector<2x128xf32>
    %426 = arith.mulf %417, %394 : vector<2x128xf32>
    %427 = arith.mulf %411, %419 : vector<2x128xf32>
    %428 = arith.addf %426, %427 : vector<2x128xf32>
    %429 = math.tanh %428 : vector<2x128xf32>
    %430 = arith.mulf %425, %429 : vector<2x128xf32>
    %c6_178 = arith.constant 6 : index
    %c0_179 = arith.constant 0 : index
    %431 = vector.load %arg18[%c6_178, %c0_179] : memref<16x128xf32, #tpu.memory_space<vmem>>, vector<2x128xf32>
    tpu.vector_store %arg18[%c6_178, %c0_179], %430 {strides = array<i32>} : memref<16x128xf32, #tpu.memory_space<vmem>>, vector<2x128xf32>,
    %c8_180 = arith.constant 8 : index
    %c0_181 = arith.constant 0 : index
    %432 = vector.load %arg19[%c8_180, %c0_181] : memref<16x128xf32, #tpu.memory_space<vmem>>, vector<2x128xf32>
    tpu.vector_store %arg19[%c8_180, %c0_181], %430 {strides = array<i32>} : memref<16x128xf32, #tpu.memory_space<vmem>>, vector<2x128xf32>,
    %c8_182 = arith.constant 8 : index
    %c0_183 = arith.constant 0 : index
    %433 = vector.load %arg15[%c8_182, %c0_183] : memref<16x1024xf32, #tpu.memory_space<vmem>>, vector<2x512xf32>
    %c6_184 = arith.constant 6 : index
    %c512_185 = arith.constant 512 : index
    %434 = vector.load %arg15[%c6_184, %c512_185] : memref<16x1024xf32, #tpu.memory_space<vmem>>, vector<2x512xf32>
    %435 = arith.addf %433, %434 : vector<2x512xf32>
    %436 = arith.truncf %430 : vector<2x128xf32> to vector<2x128xbf16>
    %c0_186 = arith.constant 0 : index
    %c0_187 = arith.constant 0 : index
    %437 = vector.load %arg6[%c0_186, %c0_187] : memref<128x512xbf16, #tpu.memory_space<vmem>>, vector<128x512xbf16>
    %cst_188 = arith.constant dense<0.000000e+00> : vector<2x512xf32>
    %438 = tpu.matmul %436, %437, %cst_188 {dimension_numbers = #tpu.dot_dimension_numbers<[1], [0], [0], [1], [0, 0, 1, 1], [], []>} : vector<2x128xbf16>, vector<128x512xbf16>, vector<2x512xf32> -> vector<2x512xf32>
    %439 = arith.addf %435, %438 : vector<2x512xf32>
    %440 = vector.extract_strided_slice %439 {offsets = [0, 0], sizes = [2, 128], strides = [1, 1]} : vector<2x512xf32> to vector<2x128xf32>
    %441 = arith.negf %440 : vector<2x128xf32>
    %442 = math.exp %441 : vector<2x128xf32>
    %cst_189 = arith.constant 1.000000e+00 : f32
    %443 = vector.broadcast %cst_189 : f32 to vector<2x128xf32>
    %444 = arith.addf %443, %442 : vector<2x128xf32>
    %445 = arith.divf %443, %444 : vector<2x128xf32>
    %446 = vector.extract_strided_slice %439 {offsets = [0, 128], sizes = [2, 128], strides = [1, 1]} : vector<2x512xf32> to vector<2x128xf32>
    %447 = arith.negf %446 : vector<2x128xf32>
    %448 = math.exp %447 : vector<2x128xf32>
    %cst_190 = arith.constant 1.000000e+00 : f32
    %449 = vector.broadcast %cst_190 : f32 to vector<2x128xf32>
    %450 = arith.addf %449, %448 : vector<2x128xf32>
    %451 = arith.divf %449, %450 : vector<2x128xf32>
    %452 = vector.extract_strided_slice %439 {offsets = [0, 256], sizes = [2, 128], strides = [1, 1]} : vector<2x512xf32> to vector<2x128xf32>
    %453 = math.tanh %452 : vector<2x128xf32>
    %454 = vector.extract_strided_slice %439 {offsets = [0, 384], sizes = [2, 128], strides = [1, 1]} : vector<2x512xf32> to vector<2x128xf32>
    %455 = arith.negf %454 : vector<2x128xf32>
    %456 = math.exp %455 : vector<2x128xf32>
    %cst_191 = arith.constant 1.000000e+00 : f32
    %457 = vector.broadcast %cst_191 : f32 to vector<2x128xf32>
    %458 = arith.addf %457, %456 : vector<2x128xf32>
    %459 = arith.divf %457, %458 : vector<2x128xf32>
    %460 = arith.mulf %451, %428 : vector<2x128xf32>
    %461 = arith.mulf %445, %453 : vector<2x128xf32>
    %462 = arith.addf %460, %461 : vector<2x128xf32>
    %463 = math.tanh %462 : vector<2x128xf32>
    %464 = arith.mulf %459, %463 : vector<2x128xf32>
    %c8_192 = arith.constant 8 : index
    %c0_193 = arith.constant 0 : index
    %465 = vector.load %arg18[%c8_192, %c0_193] : memref<16x128xf32, #tpu.memory_space<vmem>>, vector<2x128xf32>
    tpu.vector_store %arg18[%c8_192, %c0_193], %464 {strides = array<i32>} : memref<16x128xf32, #tpu.memory_space<vmem>>, vector<2x128xf32>,
    %c6_194 = arith.constant 6 : index
    %c0_195 = arith.constant 0 : index
    %466 = vector.load %arg19[%c6_194, %c0_195] : memref<16x128xf32, #tpu.memory_space<vmem>>, vector<2x128xf32>
    tpu.vector_store %arg19[%c6_194, %c0_195], %464 {strides = array<i32>} : memref<16x128xf32, #tpu.memory_space<vmem>>, vector<2x128xf32>,
    %c10_196 = arith.constant 10 : index
    %c0_197 = arith.constant 0 : index
    %467 = vector.load %arg15[%c10_196, %c0_197] : memref<16x1024xf32, #tpu.memory_space<vmem>>, vector<2x512xf32>
    %c4_198 = arith.constant 4 : index
    %c512_199 = arith.constant 512 : index
    %468 = vector.load %arg15[%c4_198, %c512_199] : memref<16x1024xf32, #tpu.memory_space<vmem>>, vector<2x512xf32>
    %469 = arith.addf %467, %468 : vector<2x512xf32>
    %470 = arith.truncf %464 : vector<2x128xf32> to vector<2x128xbf16>
    %c0_200 = arith.constant 0 : index
    %c0_201 = arith.constant 0 : index
    %471 = vector.load %arg6[%c0_200, %c0_201] : memref<128x512xbf16, #tpu.memory_space<vmem>>, vector<128x512xbf16>
    %cst_202 = arith.constant dense<0.000000e+00> : vector<2x512xf32>
    %472 = tpu.matmul %470, %471, %cst_202 {dimension_numbers = #tpu.dot_dimension_numbers<[1], [0], [0], [1], [0, 0, 1, 1], [], []>} : vector<2x128xbf16>, vector<128x512xbf16>, vector<2x512xf32> -> vector<2x512xf32>
    %473 = arith.addf %469, %472 : vector<2x512xf32>
    %474 = vector.extract_strided_slice %473 {offsets = [0, 0], sizes = [2, 128], strides = [1, 1]} : vector<2x512xf32> to vector<2x128xf32>
    %475 = arith.negf %474 : vector<2x128xf32>
    %476 = math.exp %475 : vector<2x128xf32>
    %cst_203 = arith.constant 1.000000e+00 : f32
    %477 = vector.broadcast %cst_203 : f32 to vector<2x128xf32>
    %478 = arith.addf %477, %476 : vector<2x128xf32>
    %479 = arith.divf %477, %478 : vector<2x128xf32>
    %480 = vector.extract_strided_slice %473 {offsets = [0, 128], sizes = [2, 128], strides = [1, 1]} : vector<2x512xf32> to vector<2x128xf32>
    %481 = arith.negf %480 : vector<2x128xf32>
    %482 = math.exp %481 : vector<2x128xf32>
    %cst_204 = arith.constant 1.000000e+00 : f32
    %483 = vector.broadcast %cst_204 : f32 to vector<2x128xf32>
    %484 = arith.addf %483, %482 : vector<2x128xf32>
    %485 = arith.divf %483, %484 : vector<2x128xf32>
    %486 = vector.extract_strided_slice %473 {offsets = [0, 256], sizes = [2, 128], strides = [1, 1]} : vector<2x512xf32> to vector<2x128xf32>
    %487 = math.tanh %486 : vector<2x128xf32>
    %488 = vector.extract_strided_slice %473 {offsets = [0, 384], sizes = [2, 128], strides = [1, 1]} : vector<2x512xf32> to vector<2x128xf32>
    %489 = arith.negf %488 : vector<2x128xf32>
    %490 = math.exp %489 : vector<2x128xf32>
    %cst_205 = arith.constant 1.000000e+00 : f32
    %491 = vector.broadcast %cst_205 : f32 to vector<2x128xf32>
    %492 = arith.addf %491, %490 : vector<2x128xf32>
    %493 = arith.divf %491, %492 : vector<2x128xf32>
    %494 = arith.mulf %485, %462 : vector<2x128xf32>
    %495 = arith.mulf %479, %487 : vector<2x128xf32>
    %496 = arith.addf %494, %495 : vector<2x128xf32>
    %497 = math.tanh %496 : vector<2x128xf32>
    %498 = arith.mulf %493, %497 : vector<2x128xf32>
    %c10_206 = arith.constant 10 : index
    %c0_207 = arith.constant 0 : index
    %499 = vector.load %arg18[%c10_206, %c0_207] : memref<16x128xf32, #tpu.memory_space<vmem>>, vector<2x128xf32>
    tpu.vector_store %arg18[%c10_206, %c0_207], %498 {strides = array<i32>} : memref<16x128xf32, #tpu.memory_space<vmem>>, vector<2x128xf32>,
    %c4_208 = arith.constant 4 : index
    %c0_209 = arith.constant 0 : index
    %500 = vector.load %arg19[%c4_208, %c0_209] : memref<16x128xf32, #tpu.memory_space<vmem>>, vector<2x128xf32>
    tpu.vector_store %arg19[%c4_208, %c0_209], %498 {strides = array<i32>} : memref<16x128xf32, #tpu.memory_space<vmem>>, vector<2x128xf32>,
    %c12_210 = arith.constant 12 : index
    %c0_211 = arith.constant 0 : index
    %501 = vector.load %arg15[%c12_210, %c0_211] : memref<16x1024xf32, #tpu.memory_space<vmem>>, vector<2x512xf32>
    %c2_212 = arith.constant 2 : index
    %c512_213 = arith.constant 512 : index
    %502 = vector.load %arg15[%c2_212, %c512_213] : memref<16x1024xf32, #tpu.memory_space<vmem>>, vector<2x512xf32>
    %503 = arith.addf %501, %502 : vector<2x512xf32>
    %504 = arith.truncf %498 : vector<2x128xf32> to vector<2x128xbf16>
    %c0_214 = arith.constant 0 : index
    %c0_215 = arith.constant 0 : index
    %505 = vector.load %arg6[%c0_214, %c0_215] : memref<128x512xbf16, #tpu.memory_space<vmem>>, vector<128x512xbf16>
    %cst_216 = arith.constant dense<0.000000e+00> : vector<2x512xf32>
    %506 = tpu.matmul %504, %505, %cst_216 {dimension_numbers = #tpu.dot_dimension_numbers<[1], [0], [0], [1], [0, 0, 1, 1], [], []>} : vector<2x128xbf16>, vector<128x512xbf16>, vector<2x512xf32> -> vector<2x512xf32>
    %507 = arith.addf %503, %506 : vector<2x512xf32>
    %508 = vector.extract_strided_slice %507 {offsets = [0, 0], sizes = [2, 128], strides = [1, 1]} : vector<2x512xf32> to vector<2x128xf32>
    %509 = arith.negf %508 : vector<2x128xf32>
    %510 = math.exp %509 : vector<2x128xf32>
    %cst_217 = arith.constant 1.000000e+00 : f32
    %511 = vector.broadcast %cst_217 : f32 to vector<2x128xf32>
    %512 = arith.addf %511, %510 : vector<2x128xf32>
    %513 = arith.divf %511, %512 : vector<2x128xf32>
    %514 = vector.extract_strided_slice %507 {offsets = [0, 128], sizes = [2, 128], strides = [1, 1]} : vector<2x512xf32> to vector<2x128xf32>
    %515 = arith.negf %514 : vector<2x128xf32>
    %516 = math.exp %515 : vector<2x128xf32>
    %cst_218 = arith.constant 1.000000e+00 : f32
    %517 = vector.broadcast %cst_218 : f32 to vector<2x128xf32>
    %518 = arith.addf %517, %516 : vector<2x128xf32>
    %519 = arith.divf %517, %518 : vector<2x128xf32>
    %520 = vector.extract_strided_slice %507 {offsets = [0, 256], sizes = [2, 128], strides = [1, 1]} : vector<2x512xf32> to vector<2x128xf32>
    %521 = math.tanh %520 : vector<2x128xf32>
    %522 = vector.extract_strided_slice %507 {offsets = [0, 384], sizes = [2, 128], strides = [1, 1]} : vector<2x512xf32> to vector<2x128xf32>
    %523 = arith.negf %522 : vector<2x128xf32>
    %524 = math.exp %523 : vector<2x128xf32>
    %cst_219 = arith.constant 1.000000e+00 : f32
    %525 = vector.broadcast %cst_219 : f32 to vector<2x128xf32>
    %526 = arith.addf %525, %524 : vector<2x128xf32>
    %527 = arith.divf %525, %526 : vector<2x128xf32>
    %528 = arith.mulf %519, %496 : vector<2x128xf32>
    %529 = arith.mulf %513, %521 : vector<2x128xf32>
    %530 = arith.addf %528, %529 : vector<2x128xf32>
    %531 = math.tanh %530 : vector<2x128xf32>
    %532 = arith.mulf %527, %531 : vector<2x128xf32>
    %c12_220 = arith.constant 12 : index
    %c0_221 = arith.constant 0 : index
    %533 = vector.load %arg18[%c12_220, %c0_221] : memref<16x128xf32, #tpu.memory_space<vmem>>, vector<2x128xf32>
    tpu.vector_store %arg18[%c12_220, %c0_221], %532 {strides = array<i32>} : memref<16x128xf32, #tpu.memory_space<vmem>>, vector<2x128xf32>,
    %c2_222 = arith.constant 2 : index
    %c0_223 = arith.constant 0 : index
    %534 = vector.load %arg19[%c2_222, %c0_223] : memref<16x128xf32, #tpu.memory_space<vmem>>, vector<2x128xf32>
    tpu.vector_store %arg19[%c2_222, %c0_223], %532 {strides = array<i32>} : memref<16x128xf32, #tpu.memory_space<vmem>>, vector<2x128xf32>,
    %c14_224 = arith.constant 14 : index
    %c0_225 = arith.constant 0 : index
    %535 = vector.load %arg15[%c14_224, %c0_225] : memref<16x1024xf32, #tpu.memory_space<vmem>>, vector<2x512xf32>
    %c0_226 = arith.constant 0 : index
    %c512_227 = arith.constant 512 : index
    %536 = vector.load %arg15[%c0_226, %c512_227] : memref<16x1024xf32, #tpu.memory_space<vmem>>, vector<2x512xf32>
    %537 = arith.addf %535, %536 : vector<2x512xf32>
    %538 = arith.truncf %532 : vector<2x128xf32> to vector<2x128xbf16>
    %c0_228 = arith.constant 0 : index
    %c0_229 = arith.constant 0 : index
    %539 = vector.load %arg6[%c0_228, %c0_229] : memref<128x512xbf16, #tpu.memory_space<vmem>>, vector<128x512xbf16>
    %cst_230 = arith.constant dense<0.000000e+00> : vector<2x512xf32>
    %540 = tpu.matmul %538, %539, %cst_230 {dimension_numbers = #tpu.dot_dimension_numbers<[1], [0], [0], [1], [0, 0, 1, 1], [], []>} : vector<2x128xbf16>, vector<128x512xbf16>, vector<2x512xf32> -> vector<2x512xf32>
    %541 = arith.addf %537, %540 : vector<2x512xf32>
    %542 = vector.extract_strided_slice %541 {offsets = [0, 0], sizes = [2, 128], strides = [1, 1]} : vector<2x512xf32> to vector<2x128xf32>
    %543 = arith.negf %542 : vector<2x128xf32>
    %544 = math.exp %543 : vector<2x128xf32>
    %cst_231 = arith.constant 1.000000e+00 : f32
    %545 = vector.broadcast %cst_231 : f32 to vector<2x128xf32>
    %546 = arith.addf %545, %544 : vector<2x128xf32>
    %547 = arith.divf %545, %546 : vector<2x128xf32>
    %548 = vector.extract_strided_slice %541 {offsets = [0, 128], sizes = [2, 128], strides = [1, 1]} : vector<2x512xf32> to vector<2x128xf32>
    %549 = arith.negf %548 : vector<2x128xf32>
    %550 = math.exp %549 : vector<2x128xf32>
    %cst_232 = arith.constant 1.000000e+00 : f32
    %551 = vector.broadcast %cst_232 : f32 to vector<2x128xf32>
    %552 = arith.addf %551, %550 : vector<2x128xf32>
    %553 = arith.divf %551, %552 : vector<2x128xf32>
    %554 = vector.extract_strided_slice %541 {offsets = [0, 256], sizes = [2, 128], strides = [1, 1]} : vector<2x512xf32> to vector<2x128xf32>
    %555 = math.tanh %554 : vector<2x128xf32>
    %556 = vector.extract_strided_slice %541 {offsets = [0, 384], sizes = [2, 128], strides = [1, 1]} : vector<2x512xf32> to vector<2x128xf32>
    %557 = arith.negf %556 : vector<2x128xf32>
    %558 = math.exp %557 : vector<2x128xf32>
    %cst_233 = arith.constant 1.000000e+00 : f32
    %559 = vector.broadcast %cst_233 : f32 to vector<2x128xf32>
    %560 = arith.addf %559, %558 : vector<2x128xf32>
    %561 = arith.divf %559, %560 : vector<2x128xf32>
    %562 = arith.mulf %553, %530 : vector<2x128xf32>
    %563 = arith.mulf %547, %555 : vector<2x128xf32>
    %564 = arith.addf %562, %563 : vector<2x128xf32>
    %565 = math.tanh %564 : vector<2x128xf32>
    %566 = arith.mulf %561, %565 : vector<2x128xf32>
    %c14_234 = arith.constant 14 : index
    %c0_235 = arith.constant 0 : index
    %567 = vector.load %arg18[%c14_234, %c0_235] : memref<16x128xf32, #tpu.memory_space<vmem>>, vector<2x128xf32>
    tpu.vector_store %arg18[%c14_234, %c0_235], %566 {strides = array<i32>} : memref<16x128xf32, #tpu.memory_space<vmem>>, vector<2x128xf32>,
    %c0_236 = arith.constant 0 : index
    %c0_237 = arith.constant 0 : index
    %568 = vector.load %arg19[%c0_236, %c0_237] : memref<16x128xf32, #tpu.memory_space<vmem>>, vector<2x128xf32>
    tpu.vector_store %arg19[%c0_236, %c0_237], %566 {strides = array<i32>} : memref<16x128xf32, #tpu.memory_space<vmem>>, vector<2x128xf32>,
    %c0_238 = arith.constant 0 : index
    %c0_239 = arith.constant 0 : index
    %569 = vector.load %arg18[%c0_238, %c0_239] : memref<16x128xf32, #tpu.memory_space<vmem>>, vector<16x128xf32>
    %c0_240 = arith.constant 0 : index
    %c0_241 = arith.constant 0 : index
    %570 = vector.load %arg19[%c0_240, %c0_241] : memref<16x128xf32, #tpu.memory_space<vmem>>, vector<16x128xf32>
    %571 = arith.select %10, %569, %570 : vector<16x128xi1>, vector<16x128xf32>
    %c0_242 = arith.constant 0 : index
    %c0_243 = arith.constant 0 : index
    %572 = vector.load %arg7[%c0_242, %c0_243] : memref<128x128xf32, #tpu.memory_space<vmem>>, vector<128x128xf32>
    %cst_244 = arith.constant dense<0.000000e+00> : vector<16x128xf32>
    %573 = tpu.matmul %287, %572, %cst_244 {dimension_numbers = #tpu.dot_dimension_numbers<[1], [0], [0], [1], [0, 0, 1, 1], [], []>} : vector<16x128xf32>, vector<128x128xf32>, vector<16x128xf32> -> vector<16x128xf32>
    %c0_245 = arith.constant 0 : index
    %c0_246 = arith.constant 0 : index
    %574 = vector.load %arg8[%c0_245, %c0_246] : memref<1x128xf32, #tpu.memory_space<vmem>>, vector<1x128xf32>
    %575 = vector.broadcast %574 : vector<1x128xf32> to vector<16x128xf32>
    %576 = arith.addf %573, %575 : vector<16x128xf32>
    %cst_247 = arith.constant 0.000000e+00 : f32
    %577 = vector.broadcast %cst_247 : f32 to vector<16x128xf32>
    %578 = arith.maximumf %576, %577 : vector<16x128xf32>
    %c0_248 = arith.constant 0 : index
    %c0_249 = arith.constant 0 : index
    %579 = vector.load %arg9[%c0_248, %c0_249] : memref<128x128xf32, #tpu.memory_space<vmem>>, vector<128x128xf32>
    %cst_250 = arith.constant dense<0.000000e+00> : vector<16x128xf32>
    %580 = tpu.matmul %571, %579, %cst_250 {dimension_numbers = #tpu.dot_dimension_numbers<[1], [0], [0], [1], [0, 0, 1, 1], [], []>} : vector<16x128xf32>, vector<128x128xf32>, vector<16x128xf32> -> vector<16x128xf32>
    %c0_251 = arith.constant 0 : index
    %c0_252 = arith.constant 0 : index
    %581 = vector.load %arg10[%c0_251, %c0_252] : memref<1x128xf32, #tpu.memory_space<vmem>>, vector<1x128xf32>
    %582 = vector.broadcast %581 : vector<1x128xf32> to vector<16x128xf32>
    %583 = arith.addf %580, %582 : vector<16x128xf32>
    %cst_253 = arith.constant 0.000000e+00 : f32
    %584 = vector.broadcast %cst_253 : f32 to vector<16x128xf32>
    %585 = arith.maximumf %583, %584 : vector<16x128xf32>
    %586 = arith.addf %287, %571 : vector<16x128xf32>
    %587 = arith.addf %586, %578 : vector<16x128xf32>
    %588 = arith.addf %587, %585 : vector<16x128xf32>
    %c0_254 = arith.constant 0 : index
    %c0_255 = arith.constant 0 : index
    %589 = vector.load %arg11[%c0_254, %c0_255] : memref<128x128xf32, #tpu.memory_space<vmem>>, vector<128x128xf32>
    %cst_256 = arith.constant dense<0.000000e+00> : vector<16x128xf32>
    %590 = tpu.matmul %588, %589, %cst_256 {dimension_numbers = #tpu.dot_dimension_numbers<[1], [0], [0], [1], [0, 0, 1, 1], [], []>} : vector<16x128xf32>, vector<128x128xf32>, vector<16x128xf32> -> vector<16x128xf32>
    %c0_257 = arith.constant 0 : index
    %c0_258 = arith.constant 0 : index
    %591 = vector.load %arg12[%c0_257, %c0_258] : memref<1x128xf32, #tpu.memory_space<vmem>>, vector<1x128xf32>
    %592 = vector.broadcast %591 : vector<1x128xf32> to vector<16x128xf32>
    %593 = arith.addf %590, %592 : vector<16x128xf32>
    %c0_259 = arith.constant 0 : index
    %c0_260 = arith.constant 0 : index
    %594 = vector.load %arg13[%c0_259, %c0_260] : memref<16x128xf32, #tpu.memory_space<vmem>>, vector<16x128xf32>
    tpu.vector_store %arg13[%c0_259, %c0_260], %593 {strides = array<i32>} : memref<16x128xf32, #tpu.memory_space<vmem>>, vector<16x128xf32>,
    return
  }
}

</mosaic_0001>

<llo_original>
// kernel: hemo_forward.1
$region0: #{hemo_forward.1}
  #allocation0 [shape = 'u32[]', space=smem, size = 0x4, offset = 0x4, fixed_abs, tag = 'smem constant byte address 0x4 - core index']
  #allocation1 [shape = 'u32[144,128]{1,0:T(1,128)}', space=vmem, size = 0x12000, scoped, tag = 'internal scratch']
  #allocation2 [shape = 'f32[16,1024]{1,0:T(8,128)}', space=vmem, size = 0x10000, scoped, tag = 'scratch operand']
  #allocation3 [shape = 'f32[16,1024]{1,0:T(8,128)}', space=vmem, size = 0x10000, scoped, tag = 'scratch operand']
  #allocation4 [shape = 'f32[16,128]{1,0:T(8,128)}', space=vmem, size = 0x2000, scoped, tag = 'scratch operand']
  #allocation5 [shape = 'f32[16,128]{1,0:T(8,128)}', space=vmem, size = 0x2000, scoped, tag = 'scratch operand']
  #allocation6 [shape = 'f32[16,128]{1,0:T(8,128)}', space=vmem, size = 0x2000, scoped, tag = 'scratch operand']
  #allocation7 [shape = 'f32[16,128]{1,0:T(8,128)}', space=vmem, size = 0x2000, scoped, tag = 'scratch operand']
  %s0 = inlined_call_operand.vmem [shape: f32[16,128], index: 0, kind: input, shape index: {}]
  %s1 = inlined_call_operand.hbm [shape: bf16[128,1024], index: 1, kind: input, shape index: {}]
  %s2 = inlined_call_operand.vmem [shape: f32[1,1024], index: 2, kind: input, shape index: {}]
  %s3 = inlined_call_operand.hbm [shape: bf16[128,512], index: 3, kind: input, shape index: {}]
  %s4 = inlined_call_operand.hbm [shape: bf16[128,1024], index: 4, kind: input, shape index: {}]
  %s5 = inlined_call_operand.vmem [shape: f32[1,1024], index: 5, kind: input, shape index: {}]
  %s6 = inlined_call_operand.hbm [shape: bf16[128,512], index: 6, kind: input, shape index: {}]
  %s7 = inlined_call_operand.hbm [shape: f32[128,128], index: 7, kind: input, shape index: {}]
  %s8 = inlined_call_operand.vmem [shape: f32[1,128], index: 8, kind: input, shape index: {}]
  %s9 = inlined_call_operand.hbm [shape: f32[128,128], index: 9, kind: input, shape index: {}]
  %s10 = inlined_call_operand.vmem [shape: f32[1,128], index: 10, kind: input, shape index: {}]
  %s11 = inlined_call_operand.hbm [shape: f32[128,128], index: 11, kind: input, shape index: {}]
  %s12 = inlined_call_operand.vmem [shape: f32[1,128], index: 12, kind: input, shape index: {}]
  %s13 = inlined_call_operand.vmem [shape: f32[16,128], index: 13, kind: output, shape index: {}]
  %s14 = sld [smem:[#allocation0]]
  $region90: #{hemo_forward.1} parent=0
    _
  %s16 = ssub.s32 1, %s14
  %s17 = scalar_select 0, %s16, %s14
  $region1: #{hemo_forward.1} parent=0
    #allocation8 [shape = 'u8[262144]{0}', space=vmem, size = 0x40000, scoped, tag = 'input window, operand 1, single buffered']
    #allocation9 [shape = 's32[1]{0}', space=sflag, size = 0x4, scoped, tag = 'scoped memory for hemo_forward.1']
    #allocation10 [shape = 'u8[131072]{0}', space=vmem, size = 0x20000, scoped, tag = 'input window, operand 3, single buffered']
    #allocation11 [shape = 's32[1]{0}', space=sflag, size = 0x4, scoped, tag = 'scoped memory for hemo_forward.1']
    #allocation12 [shape = 'u8[262144]{0}', space=vmem, size = 0x40000, scoped, tag = 'input window, operand 4, single buffered']
    #allocation13 [shape = 'u8[131072]{0}', space=vmem, size = 0x20000, scoped, tag = 'input window, operand 6, single buffered']
    #allocation14 [shape = 's32[1]{0}', space=sflag, size = 0x4, scoped, tag = 'scoped memory for hemo_forward.1']
    #allocation15 [shape = 'u8[65536]{0}', space=vmem, size = 0x10000, scoped, tag = 'input window, operand 7, single buffered']
    #allocation16 [shape = 'u8[65536]{0}', space=vmem, size = 0x10000, scoped, tag = 'input window, operand 9, single buffered']
    #allocation17 [shape = 's32[1]{0}', space=sflag, size = 0x4, scoped, tag = 'scoped memory for hemo_forward.1']
    #allocation18 [shape = 'u8[65536]{0}', space=vmem, size = 0x10000, scoped, tag = 'input window, operand 11, single buffered']
    %18 = vsyncpa [#allocation9], 0
    %19 = vsyncpa [#allocation11], 0
    %20 = vsyncpa [#allocation14], 0
    %21 = vsyncpa [#allocation17], 0
    // Predicated region
    $region2: #{hemo_forward.1} parent=1 // pred_check
      _
    $region3: #{hemo_forward.1} parent=1 // pred_check_branch
      %23 = sbr.rel (0) target = $region5
    $region4: #{hemo_forward.1} parent=1 // pred_region
      _
    $region5: #{hemo_forward.1} parent=1 // pred_fallthru
      _
    // Predicated region
    $region6: #{hemo_forward.1} parent=1 // pred_check
      _
    $region7: #{hemo_forward.1} parent=1 // pred_check_branch
      %25 = sbr.rel (0) target = $region9
    $region8: #{hemo_forward.1} parent=1 // pred_region
      %s27 = ssub.s32 8192, 8192
      %28 = vsyncadd [#allocation9], %s27
      %s29 = sshll.u32 [#allocation8], 4
      %s30 = int_to_ptr.vmem [resolvable:$true] %s29
      %35 = dma.hbm_to_vmem [thread:$0]  %s1, 8192, %s30, [#allocation9], 512, 512, 32
    $region9: #{hemo_forward.1} parent=1 // pred_fallthru
      _
    // Predicated region
    $region10: #{hemo_forward.1} parent=1 // pred_check
      _
    $region11: #{hemo_forward.1} parent=1 // pred_check_branch
      %37 = sbr.rel (0) target = $region13
    $region12: #{hemo_forward.1} parent=1 // pred_region
      _
    $region13: #{hemo_forward.1} parent=1 // pred_fallthru
      _
    // Predicated region
    $region14: #{hemo_forward.1} parent=1 // pred_check
      _
    $region15: #{hemo_forward.1} parent=1 // pred_check_branch
      %39 = sbr.rel (0) target = $region17
    $region16: #{hemo_forward.1} parent=1 // pred_region
      %s41 = ssub.s32 4096, 4096
      %42 = vsyncadd [#allocation11], %s41
      %s43 = sshll.u32 [#allocation10], 4
      %s44 = int_to_ptr.vmem [resolvable:$true] %s43
      %49 = dma.hbm_to_vmem [thread:$0]  %s3, 4096, %s44, [#allocation11], 256, 256, 16
    $region17: #{hemo_forward.1} parent=1 // pred_fallthru
      _
    // Predicated region
    $region18: #{hemo_forward.1} parent=1 // pred_check
      _
    $region19: #{hemo_forward.1} parent=1 // pred_check_branch
      %51 = sbr.rel (0) target = $region21
    $region20: #{hemo_forward.1} parent=1 // pred_region
      %s53 = ssub.s32 8192, 8192
      %54 = vsyncadd [#allocation11], %s53
      %s55 = sshll.u32 [#allocation12], 4
      %s56 = int_to_ptr.vmem [resolvable:$true] %s55
      %61 = dma.hbm_to_vmem [thread:$0]  %s4, 8192, %s56, [#allocation11], 512, 512, 32
    $region21: #{hemo_forward.1} parent=1 // pred_fallthru
      _
    // Predicated region
    $region22: #{hemo_forward.1} parent=1 // pred_check
      _
    $region23: #{hemo_forward.1} parent=1 // pred_check_branch
      %63 = sbr.rel (0) target = $region25
    $region24: #{hemo_forward.1} parent=1 // pred_region
      _
    $region25: #{hemo_forward.1} parent=1 // pred_fallthru
      _
    // Predicated region
    $region26: #{hemo_forward.1} parent=1 // pred_check
      _
    $region27: #{hemo_forward.1} parent=1 // pred_check_branch
      %65 = sbr.rel (0) target = $region29
    $region28: #{hemo_forward.1} parent=1 // pred_region
      %s67 = ssub.s32 4096, 4096
      %68 = vsyncadd [#allocation14], %s67
      %s69 = sshll.u32 [#allocation13], 4
      %s70 = int_to_ptr.vmem [resolvable:$true] %s69
      %75 = dma.hbm_to_vmem [thread:$0]  %s6, 4096, %s70, [#allocation14], 256, 256, 16
    $region29: #{hemo_forward.1} parent=1 // pred_fallthru
      _
    // Predicated region
    $region30: #{hemo_forward.1} parent=1 // pred_check
      _
    $region31: #{hemo_forward.1} parent=1 // pred_check_branch
      %77 = sbr.rel (0) target = $region33
    $region32: #{hemo_forward.1} parent=1 // pred_region
      %s79 = ssub.s32 2048, 2048
      %80 = vsyncadd [#allocation14], %s79
      %s81 = sshll.u32 [#allocation15], 4
      %s82 = int_to_ptr.vmem [resolvable:$true] %s81
      %87 = dma.hbm_to_vmem [thread:$0]  %s7, 2048, %s82, [#allocation14], 128, 128, 8
    $region33: #{hemo_forward.1} parent=1 // pred_fallthru
      _
    // Predicated region
    $region34: #{hemo_forward.1} parent=1 // pred_check
      _
    $region35: #{hemo_forward.1} parent=1 // pred_check_branch
      %89 = sbr.rel (0) target = $region37
    $region36: #{hemo_forward.1} parent=1 // pred_region
      _
    $region37: #{hemo_forward.1} parent=1 // pred_fallthru
      _
    // Predicated region
    $region38: #{hemo_forward.1} parent=1 // pred_check
      _
    $region39: #{hemo_forward.1} parent=1 // pred_check_branch
      %91 = sbr.rel (0) target = $region41
    $region40: #{hemo_forward.1} parent=1 // pred_region
      %s93 = ssub.s32 2048, 2048
      %94 = vsyncadd [#allocation17], %s93
      %s95 = sshll.u32 [#allocation16], 4
      %s96 = int_to_ptr.vmem [resolvable:$true] %s95
      %101 = dma.hbm_to_vmem [thread:$0]  %s9, 2048, %s96, [#allocation17], 128, 128, 8
    $region41: #{hemo_forward.1} parent=1 // pred_fallthru
      _
    // Predicated region
    $region42: #{hemo_forward.1} parent=1 // pred_check
      _
    $region43: #{hemo_forward.1} parent=1 // pred_check_branch
      %103 = sbr.rel (0) target = $region45
    $region44: #{hemo_forward.1} parent=1 // pred_region
      _
    $region45: #{hemo_forward.1} parent=1 // pred_fallthru
      _
    // Predicated region
    $region46: #{hemo_forward.1} parent=1 // pred_check
      _
    $region47: #{hemo_forward.1} parent=1 // pred_check_branch
      %105 = sbr.rel (0) target = $region49
    $region48: #{hemo_forward.1} parent=1 // pred_region
      %s107 = ssub.s32 2048, 2048
      %108 = vsyncadd [#allocation17], %s107
      %s109 = sshll.u32 [#allocation18], 4
      %s110 = int_to_ptr.vmem [resolvable:$true] %s109
      %115 = dma.hbm_to_vmem [thread:$0]  %s11, 2048, %s110, [#allocation17], 128, 128, 8
    $region49: #{hemo_forward.1} parent=1 // pred_fallthru
      _
    // Predicated region
    $region50: #{hemo_forward.1} parent=1 // pred_check
      _
    $region51: #{hemo_forward.1} parent=1 // pred_check_branch
      %117 = sbr.rel (0) target = $region53
    $region52: #{hemo_forward.1} parent=1 // pred_region
      _
    $region53: #{hemo_forward.1} parent=1 // pred_fallthru
      _
    // Predicated region
    $region54: #{hemo_forward.1} parent=1 // pred_check
      _
    $region55: #{hemo_forward.1} parent=1 // pred_check_branch
      %119 = sbr.rel (0) target = $region57
    $region56: #{hemo_forward.1} parent=1 // pred_region
      %120 = dma.done [#allocation9], 8192
    $region57: #{hemo_forward.1} parent=1 // pred_fallthru
      _
    // Predicated region
    $region58: #{hemo_forward.1} parent=1 // pred_check
      _
    $region59: #{hemo_forward.1} parent=1 // pred_check_branch
      %122 = sbr.rel (0) target = $region61
    $region60: #{hemo_forward.1} parent=1 // pred_region
      %123 = dma.done [#allocation11], 4096
    $region61: #{hemo_forward.1} parent=1 // pred_fallthru
      _
    // Predicated region
    $region62: #{hemo_forward.1} parent=1 // pred_check
      _
    $region63: #{hemo_forward.1} parent=1 // pred_check_branch
      %125 = sbr.rel (0) target = $region65
    $region64: #{hemo_forward.1} parent=1 // pred_region
      %126 = dma.done [#allocation11], 8192
    $region65: #{hemo_forward.1} parent=1 // pred_fallthru
      _
    // Predicated region
    $region66: #{hemo_forward.1} parent=1 // pred_check
      _
    $region67: #{hemo_forward.1} parent=1 // pred_check_branch
      %128 = sbr.rel (0) target = $region69
    $region68: #{hemo_forward.1} parent=1 // pred_region
      %129 = dma.done [#allocation14], 4096
    $region69: #{hemo_forward.1} parent=1 // pred_fallthru
      _
    // Predicated region
    $region70: #{hemo_forward.1} parent=1 // pred_check
      _
    $region71: #{hemo_forward.1} parent=1 // pred_check_branch
      %131 = sbr.rel (0) target = $region73
    $region72: #{hemo_forward.1} parent=1 // pred_region
      %132 = dma.done [#allocation14], 2048
    $region73: #{hemo_forward.1} parent=1 // pred_fallthru
      _
    // Predicated region
    $region74: #{hemo_forward.1} parent=1 // pred_check
      _
    $region75: #{hemo_forward.1} parent=1 // pred_check_branch
      %134 = sbr.rel (0) target = $region77
    $region76: #{hemo_forward.1} parent=1 // pred_region
      %135 = dma.done [#allocation17], 2048
    $region77: #{hemo_forward.1} parent=1 // pred_fallthru
      _
    // Predicated region
    $region78: #{hemo_forward.1} parent=1 // pred_check
      _
    $region79: #{hemo_forward.1} parent=1 // pred_check_branch
      %137 = sbr.rel (0) target = $region81
    $region80: #{hemo_forward.1} parent=1 // pred_region
      %138 = dma.done [#allocation17], 2048
    $region81: #{hemo_forward.1} parent=1 // pred_fallthru
      _
    %v140 = vld [vmem:[%s0] sm:$0xff]
    %v141 = vld [vmem:[%s0 + $0x8] sm:$0xff]
    %v142 = vpack.c.bf16 %v141, %v140
    %v143 = vld [vmem:[#allocation8] sm:$0xff]
    %v144 = vld [vmem:[#allocation8 + $0x8] sm:$0xff]
    %v145 = vld [vmem:[#allocation8 + $0x10] sm:$0xff]
    %v146 = vld [vmem:[#allocation8 + $0x18] sm:$0xff]
    %v147 = vld [vmem:[#allocation8 + $0x20] sm:$0xff]
    %v148 = vld [vmem:[#allocation8 + $0x28] sm:$0xff]
    %v149 = vld [vmem:[#allocation8 + $0x30] sm:$0xff]
    %v150 = vld [vmem:[#allocation8 + $0x38] sm:$0xff]
    %v151 = vld [vmem:[#allocation8 + $0x40] sm:$0xff]
    %v152 = vld [vmem:[#allocation8 + $0x48] sm:$0xff]
    %v153 = vld [vmem:[#allocation8 + $0x50] sm:$0xff]
    %v154 = vld [vmem:[#allocation8 + $0x58] sm:$0xff]
    %v155 = vld [vmem:[#allocation8 + $0x60] sm:$0xff]
    %v156 = vld [vmem:[#allocation8 + $0x68] sm:$0xff]
    %v157 = vld [vmem:[#allocation8 + $0x70] sm:$0xff]
    %v158 = vld [vmem:[#allocation8 + $0x78] sm:$0xff]
    %v159 = vld [vmem:[#allocation8 + $0x80] sm:$0xff]
    %v160 = vld [vmem:[#allocation8 + $0x88] sm:$0xff]
    %v161 = vld [vmem:[#allocation8 + $0x90] sm:$0xff]
    %v162 = vld [vmem:[#allocation8 + $0x98] sm:$0xff]
    %v163 = vld [vmem:[#allocation8 + $0xa0] sm:$0xff]
    %v164 = vld [vmem:[#allocation8 + $0xa8] sm:$0xff]
    %v165 = vld [vmem:[#allocation8 + $0xb0] sm:$0xff]
    %v166 = vld [vmem:[#allocation8 + $0xb8] sm:$0xff]
    %v167 = vld [vmem:[#allocation8 + $0xc0] sm:$0xff]
    %v168 = vld [vmem:[#allocation8 + $0xc8] sm:$0xff]
    %v169 = vld [vmem:[#allocation8 + $0xd0] sm:$0xff]
    %v170 = vld [vmem:[#allocation8 + $0xd8] sm:$0xff]
    %v171 = vld [vmem:[#allocation8 + $0xe0] sm:$0xff]
    %v172 = vld [vmem:[#allocation8 + $0xe8] sm:$0xff]
    %v173 = vld [vmem:[#allocation8 + $0xf0] sm:$0xff]
    %v174 = vld [vmem:[#allocation8 + $0xf8] sm:$0xff]
    %v175 = vld [vmem:[#allocation8 + $0x100] sm:$0xff]
    %v176 = vld [vmem:[#allocation8 + $0x108] sm:$0xff]
    %v177 = vld [vmem:[#allocation8 + $0x110] sm:$0xff]
    %v178 = vld [vmem:[#allocation8 + $0x118] sm:$0xff]
    %v179 = vld [vmem:[#allocation8 + $0x120] sm:$0xff]
    %v180 = vld [vmem:[#allocation8 + $0x128] sm:$0xff]
    %v181 = vld [vmem:[#allocation8 + $0x130] sm:$0xff]
    %v182 = vld [vmem:[#allocation8 + $0x138] sm:$0xff]
    %v183 = vld [vmem:[#allocation8 + $0x140] sm:$0xff]
    %v184 = vld [vmem:[#allocation8 + $0x148] sm:$0xff]
    %v185 = vld [vmem:[#allocation8 + $0x150] sm:$0xff]
    %v186 = vld [vmem:[#allocation8 + $0x158] sm:$0xff]
    %v187 = vld [vmem:[#allocation8 + $0x160] sm:$0xff]
    %v188 = vld [vmem:[#allocation8 + $0x168] sm:$0xff]
    %v189 = vld [vmem:[#allocation8 + $0x170] sm:$0xff]
    %v190 = vld [vmem:[#allocation8 + $0x178] sm:$0xff]
    %v191 = vld [vmem:[#allocation8 + $0x180] sm:$0xff]
    %v192 = vld [vmem:[#allocation8 + $0x188] sm:$0xff]
    %v193 = vld [vmem:[#allocation8 + $0x190] sm:$0xff]
    %v194 = vld [vmem:[#allocation8 + $0x198] sm:$0xff]
    %v195 = vld [vmem:[#allocation8 + $0x1a0] sm:$0xff]
    %v196 = vld [vmem:[#allocation8 + $0x1a8] sm:$0xff]
    %v197 = vld [vmem:[#allocation8 + $0x1b0] sm:$0xff]
    %v198 = vld [vmem:[#allocation8 + $0x1b8] sm:$0xff]
    %v199 = vld [vmem:[#allocation8 + $0x1c0] sm:$0xff]
    %v200 = vld [vmem:[#allocation8 + $0x1c8] sm:$0xff]
    %v201 = vld [vmem:[#allocation8 + $0x1d0] sm:$0xff]
    %v202 = vld [vmem:[#allocation8 + $0x1d8] sm:$0xff]
    %v203 = vld [vmem:[#allocation8 + $0x1e0] sm:$0xff]
    %v204 = vld [vmem:[#allocation8 + $0x1e8] sm:$0xff]
    %v205 = vld [vmem:[#allocation8 + $0x1f0] sm:$0xff]
    %v206 = vld [vmem:[#allocation8 + $0x1f8] sm:$0xff]
    %v207 = vld [vmem:[%s2] sm:$0xff]
    %v209 = vlaneseq
    %v210 = vshrl.u32 %v209, 7
    %v211 = vsub.s32 0, %v210
    %v212 = vrot.slane %v207, %v211
    %v213 = vlaneseq
    %v214 = vshrl.u32 %v213, 7
    %v215 = vsub.s32 1, %v214
    %v216 = vrot.slane %v207, %v215
    %v217 = vlaneseq
    %v218 = vshrl.u32 %v217, 7
    %v219 = vsub.s32 2, %v218
    %v220 = vrot.slane %v207, %v219
    %v221 = vlaneseq
    %v222 = vshrl.u32 %v221, 7
    %v223 = vsub.s32 3, %v222
    %v224 = vrot.slane %v207, %v223
    %v225 = vlaneseq
    %v226 = vshrl.u32 %v225, 7
    %v227 = vsub.s32 4, %v226
    %v228 = vrot.slane %v207, %v227
    %v229 = vlaneseq
    %v230 = vshrl.u32 %v229, 7
    %v231 = vsub.s32 5, %v230
    %v232 = vrot.slane %v207, %v231
    %v233 = vlaneseq
    %v234 = vshrl.u32 %v233, 7
    %v235 = vsub.s32 6, %v234
    %v236 = vrot.slane %v207, %v235
    %v237 = vlaneseq
    %v238 = vshrl.u32 %v237, 7
    %v239 = vsub.s32 7, %v238
    %v240 = vrot.slane %v207, %v239
    %v313 = vunpack.c.l.b16 %v143
    %v314 = vunpack.c.h.b16 %v143
    %v315 = vunpack.c.l.b16 %v144
    %v316 = vunpack.c.h.b16 %v144
    %v317 = vunpack.c.l.b16 %v145
    %v318 = vunpack.c.h.b16 %v145
    %v319 = vunpack.c.l.b16 %v146
    %v320 = vunpack.c.h.b16 %v146
    %v321 = vunpack.c.l.b16 %v147
    %v322 = vunpack.c.h.b16 %v147
    %v323 = vunpack.c.l.b16 %v148
    %v324 = vunpack.c.h.b16 %v148
    %v325 = vunpack.c.l.b16 %v149
    %v326 = vunpack.c.h.b16 %v149
    %v327 = vunpack.c.l.b16 %v150
    %v328 = vunpack.c.h.b16 %v150
    %v329 = vunpack.c.l.b16 %v151
    %v330 = vunpack.c.h.b16 %v151
    %v331 = vunpack.c.l.b16 %v152
    %v332 = vunpack.c.h.b16 %v152
    %v333 = vunpack.c.l.b16 %v153
    %v334 = vunpack.c.h.b16 %v153
    %v335 = vunpack.c.l.b16 %v154
    %v336 = vunpack.c.h.b16 %v154
    %v337 = vunpack.c.l.b16 %v155
    %v338 = vunpack.c.h.b16 %v155
    %v339 = vunpack.c.l.b16 %v156
    %v340 = vunpack.c.h.b16 %v156
    %v341 = vunpack.c.l.b16 %v157
    %v342 = vunpack.c.h.b16 %v157
    %v343 = vunpack.c.l.b16 %v158
    %v344 = vunpack.c.h.b16 %v158
    %v345 = vunpack.c.l.b16 %v159
    %v346 = vunpack.c.h.b16 %v159
    %v347 = vunpack.c.l.b16 %v160
    %v348 = vunpack.c.h.b16 %v160
    %v349 = vunpack.c.l.b16 %v161
    %v350 = vunpack.c.h.b16 %v161
    %v351 = vunpack.c.l.b16 %v162
    %v352 = vunpack.c.h.b16 %v162
    %v353 = vunpack.c.l.b16 %v163
    %v354 = vunpack.c.h.b16 %v163
    %v355 = vunpack.c.l.b16 %v164
    %v356 = vunpack.c.h.b16 %v164
    %v357 = vunpack.c.l.b16 %v165
    %v358 = vunpack.c.h.b16 %v165
    %v359 = vunpack.c.l.b16 %v166
    %v360 = vunpack.c.h.b16 %v166
    %v361 = vunpack.c.l.b16 %v167
    %v362 = vunpack.c.h.b16 %v167
    %v363 = vunpack.c.l.b16 %v168
    %v364 = vunpack.c.h.b16 %v168
    %v365 = vunpack.c.l.b16 %v169
    %v366 = vunpack.c.h.b16 %v169
    %v367 = vunpack.c.l.b16 %v170
    %v368 = vunpack.c.h.b16 %v170
    %v369 = vunpack.c.l.b16 %v171
    %v370 = vunpack.c.h.b16 %v171
    %v371 = vunpack.c.l.b16 %v172
    %v372 = vunpack.c.h.b16 %v172
    %v373 = vunpack.c.l.b16 %v173
    %v374 = vunpack.c.h.b16 %v173
    %v375 = vunpack.c.l.b16 %v174
    %v376 = vunpack.c.h.b16 %v174
    %v377 = vunpack.c.l.b16 %v175
    %v378 = vunpack.c.h.b16 %v175
    %v379 = vunpack.c.l.b16 %v176
    %v380 = vunpack.c.h.b16 %v176
    %v381 = vunpack.c.l.b16 %v177
    %v382 = vunpack.c.h.b16 %v177
    %v383 = vunpack.c.l.b16 %v178
    %v384 = vunpack.c.h.b16 %v178
    %v385 = vunpack.c.l.b16 %v179
    %v386 = vunpack.c.h.b16 %v179
    %v387 = vunpack.c.l.b16 %v180
    %v388 = vunpack.c.h.b16 %v180
    %v389 = vunpack.c.l.b16 %v181
    %v390 = vunpack.c.h.b16 %v181
    %v391 = vunpack.c.l.b16 %v182
    %v392 = vunpack.c.h.b16 %v182
    %v393 = vunpack.c.l.b16 %v183
    %v394 = vunpack.c.h.b16 %v183
    %v395 = vunpack.c.l.b16 %v184
    %v396 = vunpack.c.h.b16 %v184
    %v397 = vunpack.c.l.b16 %v185
    %v398 = vunpack.c.h.b16 %v185
    %v399 = vunpack.c.l.b16 %v186
    %v400 = vunpack.c.h.b16 %v186
    %v401 = vunpack.c.l.b16 %v187
    %v402 = vunpack.c.h.b16 %v187
    %v403 = vunpack.c.l.b16 %v188
    %v404 = vunpack.c.h.b16 %v188
    %v405 = vunpack.c.l.b16 %v189
    %v406 = vunpack.c.h.b16 %v189
    %v407 = vunpack.c.l.b16 %v190
    %v408 = vunpack.c.h.b16 %v190
    %v409 = vunpack.c.l.b16 %v191
    %v410 = vunpack.c.h.b16 %v191
    %v411 = vunpack.c.l.b16 %v192
    %v412 = vunpack.c.h.b16 %v192
    %v413 = vunpack.c.l.b16 %v193
    %v414 = vunpack.c.h.b16 %v193
    %v415 = vunpack.c.l.b16 %v194
    %v416 = vunpack.c.h.b16 %v194
    %v417 = vunpack.c.l.b16 %v195
    %v418 = vunpack.c.h.b16 %v195
    %v419 = vunpack.c.l.b16 %v196
    %v420 = vunpack.c.h.b16 %v196
    %v421 = vunpack.c.l.b16 %v197
    %v422 = vunpack.c.h.b16 %v197
    %v423 = vunpack.c.l.b16 %v198
    %v424 = vunpack.c.h.b16 %v198
    %v425 = vunpack.c.l.b16 %v199
    %v426 = vunpack.c.h.b16 %v199
    %v427 = vunpack.c.l.b16 %v200
    %v428 = vunpack.c.h.b16 %v200
    %v429 = vunpack.c.l.b16 %v201
    %v430 = vunpack.c.h.b16 %v201
    %v431 = vunpack.c.l.b16 %v202
    %v432 = vunpack.c.h.b16 %v202
    %v433 = vunpack.c.l.b16 %v203
    %v434 = vunpack.c.h.b16 %v203
    %v435 = vunpack.c.l.b16 %v204
    %v436 = vunpack.c.h.b16 %v204
    %v437 = vunpack.c.l.b16 %v205
    %v438 = vunpack.c.h.b16 %v205
    %v439 = vunpack.c.l.b16 %v206
    %v440 = vunpack.c.h.b16 %v206
    %v441 = vpack.c.b16 %v321, %v313
    %v442 = vpack.c.b16 %v322, %v314
    %v443 = vpack.c.b16 %v323, %v315
    %v444 = vpack.c.b16 %v324, %v316
    %v445 = vpack.c.b16 %v325, %v317
    %v446 = vpack.c.b16 %v326, %v318
    %v447 = vpack.c.b16 %v327, %v319
    %v448 = vpack.c.b16 %v328, %v320
    %v449 = vpack.c.b16 %v337, %v329
    %v450 = vpack.c.b16 %v338, %v330
    %v451 = vpack.c.b16 %v339, %v331
    %v452 = vpack.c.b16 %v340, %v332
    %v453 = vpack.c.b16 %v341, %v333
    %v454 = vpack.c.b16 %v342, %v334
    %v455 = vpack.c.b16 %v343, %v335
    %v456 = vpack.c.b16 %v344, %v336
    %v457 = vpack.c.b16 %v353, %v345
    %v458 = vpack.c.b16 %v354, %v346
    %v459 = vpack.c.b16 %v355, %v347
    %v460 = vpack.c.b16 %v356, %v348
    %v461 = vpack.c.b16 %v357, %v349
    %v462 = vpack.c.b16 %v358, %v350
    %v463 = vpack.c.b16 %v359, %v351
    %v464 = vpack.c.b16 %v360, %v352
    %v465 = vpack.c.b16 %v369, %v361
    %v466 = vpack.c.b16 %v370, %v362
    %v467 = vpack.c.b16 %v371, %v363
    %v468 = vpack.c.b16 %v372, %v364
    %v469 = vpack.c.b16 %v373, %v365
    %v470 = vpack.c.b16 %v374, %v366
    %v471 = vpack.c.b16 %v375, %v367
    %v472 = vpack.c.b16 %v376, %v368
    %v473 = vpack.c.b16 %v385, %v377
    %v474 = vpack.c.b16 %v386, %v378
    %v475 = vpack.c.b16 %v387, %v379
    %v476 = vpack.c.b16 %v388, %v380
    %v477 = vpack.c.b16 %v389, %v381
    %v478 = vpack.c.b16 %v390, %v382
    %v479 = vpack.c.b16 %v391, %v383
    %v480 = vpack.c.b16 %v392, %v384
    %v481 = vpack.c.b16 %v401, %v393
    %v482 = vpack.c.b16 %v402, %v394
    %v483 = vpack.c.b16 %v403, %v395
    %v484 = vpack.c.b16 %v404, %v396
    %v485 = vpack.c.b16 %v405, %v397
    %v486 = vpack.c.b16 %v406, %v398
    %v487 = vpack.c.b16 %v407, %v399
    %v488 = vpack.c.b16 %v408, %v400
    %v489 = vpack.c.b16 %v417, %v409
    %v490 = vpack.c.b16 %v418, %v410
    %v491 = vpack.c.b16 %v419, %v411
    %v492 = vpack.c.b16 %v420, %v412
    %v493 = vpack.c.b16 %v421, %v413
    %v494 = vpack.c.b16 %v422, %v414
    %v495 = vpack.c.b16 %v423, %v415
    %v496 = vpack.c.b16 %v424, %v416
    %v497 = vpack.c.b16 %v433, %v425
    %v498 = vpack.c.b16 %v434, %v426
    %v499 = vpack.c.b16 %v435, %v427
    %v500 = vpack.c.b16 %v436, %v428
    %v501 = vpack.c.b16 %v437, %v429
    %v502 = vpack.c.b16 %v438, %v430
    %v503 = vpack.c.b16 %v439, %v431
    %v504 = vpack.c.b16 %v440, %v432
    %569 = vmatprep.subr.bf16.mxu0 %v442
    %570 = vmatpush1.bf16.msra.mxu0 %v441
    %571 = vmatprep.subr.bf16.mxu0 %v450
    %572 = vmatpush1.bf16.msra.mxu0 %v449
    %573 = vmatprep.subr.bf16.mxu0 %v458
    %574 = vmatpush1.bf16.msra.mxu0 %v457
    %575 = vmatprep.subr.bf16.mxu0 %v466
    %576 = vmatpush1.bf16.msra.mxu0 %v465
    %577 = vmatprep.subr.bf16.mxu0 %v474
    %578 = vmatpush1.bf16.msra.mxu0 %v473
    %579 = vmatprep.subr.bf16.mxu0 %v482
    %580 = vmatpush1.bf16.msra.mxu0 %v481
    %581 = vmatprep.subr.bf16.mxu0 %v490
    %582 = vmatpush1.bf16.msra.mxu0 %v489
    %583 = vmatprep.subr.bf16.mxu0 %v498
    %584 = vmatpush1.bf16.msra.mxu0 %v497
    %585 = vmatprep.subr.bf16.mxu0 0
    %586 = vmatpush1.bf16.msra.mxu0 0
    %587 = vmatprep.subr.bf16.mxu0 0
    %588 = vmatpush1.bf16.msra.mxu0 0
    %589 = vmatprep.subr.bf16.mxu0 0
    %590 = vmatpush1.bf16.msra.mxu0 0
    %591 = vmatprep.subr.bf16.mxu0 0
    %592 = vmatpush1.bf16.msra.mxu0 0
    %593 = vmatprep.subr.bf16.mxu0 0
    %594 = vmatpush1.bf16.msra.mxu0 0
    %595 = vmatprep.subr.bf16.mxu0 0
    %596 = vmatpush1.bf16.msra.mxu0 0
    %597 = vmatprep.subr.bf16.mxu0 0
    %598 = vmatpush1.bf16.msra.mxu0 0
    %599 = vmatprep.subr.bf16.mxu0 0
    %600 = vmatpush1.bf16.msra.mxu0 0
    %601 = vmatprep.mubr.bf16.mxu0 0
    %602 = vmatmul.mubr.bf16.gmra.mrb[0].mxu0 %v142
    %v603 = vpop.f32.mrb[0].mxu0
    %v604 = vadd.f32 %v212, %v603
    %v605 = vpop.f32.mrb[0].mxu0
    %v606 = vadd.f32 %v216, %v605
    %v607 = vpop.f32.mrb[0].mxu0
    %v608 = vadd.f32 %v212, %v607
    %v609 = vpop.f32.mrb[0].mxu0
    %v610 = vadd.f32 %v216, %v609
    %611 = vdwg.mxu0
    %612 = vmatprep.subr.bf16.mxu0 %v444
    %613 = vmatpush1.bf16.msra.mxu0 %v443
    %614 = vmatprep.subr.bf16.mxu0 %v452
    %615 = vmatpush1.bf16.msra.mxu0 %v451
    %616 = vmatprep.subr.bf16.mxu0 %v460
    %617 = vmatpush1.bf16.msra.mxu0 %v459
    %618 = vmatprep.subr.bf16.mxu0 %v468
    %619 = vmatpush1.bf16.msra.mxu0 %v467
    %620 = vmatprep.subr.bf16.mxu0 %v476
    %621 = vmatpush1.bf16.msra.mxu0 %v475
    %622 = vmatprep.subr.bf16.mxu0 %v484
    %623 = vmatpush1.bf16.msra.mxu0 %v483
    %624 = vmatprep.subr.bf16.mxu0 %v492
    %625 = vmatpush1.bf16.msra.mxu0 %v491
    %626 = vmatprep.subr.bf16.mxu0 %v500
    %627 = vmatpush1.bf16.msra.mxu0 %v499
    %628 = vmatprep.subr.bf16.mxu0 0
    %629 = vmatpush1.bf16.msra.mxu0 0
    %630 = vmatprep.subr.bf16.mxu0 0
    %631 = vmatpush1.bf16.msra.mxu0 0
    %632 = vmatprep.subr.bf16.mxu0 0
    %633 = vmatpush1.bf16.msra.mxu0 0
    %634 = vmatprep.subr.bf16.mxu0 0
    %635 = vmatpush1.bf16.msra.mxu0 0
    %636 = vmatprep.subr.bf16.mxu0 0
    %637 = vmatpush1.bf16.msra.mxu0 0
    %638 = vmatprep.subr.bf16.mxu0 0
    %639 = vmatpush1.bf16.msra.mxu0 0
    %640 = vmatprep.subr.bf16.mxu0 0
    %641 = vmatpush1.bf16.msra.mxu0 0
    %642 = vmatprep.subr.bf16.mxu0 0
    %643 = vmatpush1.bf16.msra.mxu0 0
    %644 = vmatprep.mubr.bf16.mxu0 0
    %645 = vmatmul.mubr.bf16.gmra.mrb[0].mxu0 %v142
    %v646 = vpop.f32.mrb[0].mxu0
    %v647 = vadd.f32 %v220, %v646
    %v648 = vpop.f32.mrb[0].mxu0
    %v649 = vadd.f32 %v224, %v648
    %v650 = vpop.f32.mrb[0].mxu0
    %v651 = vadd.f32 %v220, %v650
    %v652 = vpop.f32.mrb[0].mxu0
    %v653 = vadd.f32 %v224, %v652
    %654 = vdwg.mxu0
    %655 = vmatprep.subr.bf16.mxu0 %v446
    %656 = vmatpush1.bf16.msra.mxu0 %v445
    %657 = vmatprep.subr.bf16.mxu0 %v454
    %658 = vmatpush1.bf16.msra.mxu0 %v453
    %659 = vmatprep.subr.bf16.mxu0 %v462
    %660 = vmatpush1.bf16.msra.mxu0 %v461
    %661 = vmatprep.subr.bf16.mxu0 %v470
    %662 = vmatpush1.bf16.msra.mxu0 %v469
    %663 = vmatprep.subr.bf16.mxu0 %v478
    %664 = vmatpush1.bf16.msra.mxu0 %v477
    %665 = vmatprep.subr.bf16.mxu0 %v486
    %666 = vmatpush1.bf16.msra.mxu0 %v485
    %667 = vmatprep.subr.bf16.mxu0 %v494
    %668 = vmatpush1.bf16.msra.mxu0 %v493
    %669 = vmatprep.subr.bf16.mxu0 %v502
    %670 = vmatpush1.bf16.msra.mxu0 %v501
    %671 = vmatprep.subr.bf16.mxu0 0
    %672 = vmatpush1.bf16.msra.mxu0 0
    %673 = vmatprep.subr.bf16.mxu0 0
    %674 = vmatpush1.bf16.msra.mxu0 0
    %675 = vmatprep.subr.bf16.mxu0 0
    %676 = vmatpush1.bf16.msra.mxu0 0
    %677 = vmatprep.subr.bf16.mxu0 0
    %678 = vmatpush1.bf16.msra.mxu0 0
    %679 = vmatprep.subr.bf16.mxu0 0
    %680 = vmatpush1.bf16.msra.mxu0 0
    %681 = vmatprep.subr.bf16.mxu0 0
    %682 = vmatpush1.bf16.msra.mxu0 0
    %683 = vmatprep.subr.bf16.mxu0 0
    %684 = vmatpush1.bf16.msra.mxu0 0
    %685 = vmatprep.subr.bf16.mxu0 0
    %686 = vmatpush1.bf16.msra.mxu0 0
    %687 = vmatprep.mubr.bf16.mxu0 0
    %688 = vmatmul.mubr.bf16.gmra.mrb[0].mxu0 %v142
    %v689 = vpop.f32.mrb[0].mxu0
    %v690 = vadd.f32 %v228, %v689
    %v691 = vpop.f32.mrb[0].mxu0
    %v692 = vadd.f32 %v232, %v691
    %v693 = vpop.f32.mrb[0].mxu0
    %v694 = vadd.f32 %v228, %v693
    %v695 = vpop.f32.mrb[0].mxu0
    %v696 = vadd.f32 %v232, %v695
    %697 = vdwg.mxu0
    %698 = vmatprep.subr.bf16.mxu0 %v448
    %699 = vmatpush1.bf16.msra.mxu0 %v447
    %700 = vmatprep.subr.bf16.mxu0 %v456
    %701 = vmatpush1.bf16.msra.mxu0 %v455
    %702 = vmatprep.subr.bf16.mxu0 %v464
    %703 = vmatpush1.bf16.msra.mxu0 %v463
    %704 = vmatprep.subr.bf16.mxu0 %v472
    %705 = vmatpush1.bf16.msra.mxu0 %v471
    %706 = vmatprep.subr.bf16.mxu0 %v480
    %707 = vmatpush1.bf16.msra.mxu0 %v479
    %708 = vmatprep.subr.bf16.mxu0 %v488
    %709 = vmatpush1.bf16.msra.mxu0 %v487
    %710 = vmatprep.subr.bf16.mxu0 %v496
    %711 = vmatpush1.bf16.msra.mxu0 %v495
    %712 = vmatprep.subr.bf16.mxu0 %v504
    %713 = vmatpush1.bf16.msra.mxu0 %v503
    %714 = vmatprep.subr.bf16.mxu0 0
    %715 = vmatpush1.bf16.msra.mxu0 0
    %716 = vmatprep.subr.bf16.mxu0 0
    %717 = vmatpush1.bf16.msra.mxu0 0
    %718 = vmatprep.subr.bf16.mxu0 0
    %719 = vmatpush1.bf16.msra.mxu0 0
    %720 = vmatprep.subr.bf16.mxu0 0
    %721 = vmatpush1.bf16.msra.mxu0 0
    %722 = vmatprep.subr.bf16.mxu0 0
    %723 = vmatpush1.bf16.msra.mxu0 0
    %724 = vmatprep.subr.bf16.mxu0 0
    %725 = vmatpush1.bf16.msra.mxu0 0
    %726 = vmatprep.subr.bf16.mxu0 0
    %727 = vmatpush1.bf16.msra.mxu0 0
    %728 = vmatprep.subr.bf16.mxu0 0
    %729 = vmatpush1.bf16.msra.mxu0 0
    %730 = vmatprep.mubr.bf16.mxu0 0
    %731 = vmatmul.mubr.bf16.gmra.mrb[0].mxu0 %v142
    %v732 = vpop.f32.mrb[0].mxu0
    %v733 = vadd.f32 %v236, %v732
    %v734 = vpop.f32.mrb[0].mxu0
    %v735 = vadd.f32 %v240, %v734
    %v736 = vpop.f32.mrb[0].mxu0
    %v737 = vadd.f32 %v236, %v736
    %v738 = vpop.f32.mrb[0].mxu0
    %v739 = vadd.f32 %v240, %v738
    %740 = vdwg.mxu0
    %741 = vst [vmem:[#allocation2] sm:$0xff] %v604
    %742 = vst [vmem:[#allocation2 + $0x8] sm:$0xff] %v606
    %743 = vst [vmem:[#allocation2 + $0x10] sm:$0xff] %v647
    %744 = vst [vmem:[#allocation2 + $0x18] sm:$0xff] %v649
    %745 = vst [vmem:[#allocation2 + $0x20] sm:$0xff] %v690
    %746 = vst [vmem:[#allocation2 + $0x28] sm:$0xff] %v692
    %747 = vst [vmem:[#allocation2 + $0x30] sm:$0xff] %v733
    %748 = vst [vmem:[#allocation2 + $0x38] sm:$0xff] %v735
    %749 = vst [vmem:[#allocation2 + $0x40] sm:$0xff] %v608
    %750 = vst [vmem:[#allocation2 + $0x48] sm:$0xff] %v610
    %751 = vst [vmem:[#allocation2 + $0x50] sm:$0xff] %v651
    %752 = vst [vmem:[#allocation2 + $0x58] sm:$0xff] %v653
    %753 = vst [vmem:[#allocation2 + $0x60] sm:$0xff] %v694
    %754 = vst [vmem:[#allocation2 + $0x68] sm:$0xff] %v696
    %755 = vst [vmem:[#allocation2 + $0x70] sm:$0xff] %v737
    %756 = vst [vmem:[#allocation2 + $0x78] sm:$0xff] %v739
    %v757 = vlaneseq
    %v758 = vand.u32 %v757, 127
    %vm759 = vcmp.lt.s32.totalorder %v758, 64
    %v760 = vld [vmem:[#allocation2] sm:$0x3]
    %v761 = vld [vmem:[#allocation2 + $0x8] sm:$0x3]
    %v762 = vld [vmem:[#allocation2 + $0x10] sm:$0x3]
    %v763 = vld [vmem:[#allocation2 + $0x18] sm:$0x3]
    %v764 = vld [vmem:[#allocation2 + $0x60] sm:$0xc0]
    %v765 = vld [vmem:[#allocation2 + $0x68] sm:$0xc0]
    %v766 = vld [vmem:[#allocation2 + $0x70] sm:$0xc0]
    %v767 = vld [vmem:[#allocation2 + $0x78] sm:$0xc0]
    %v772 = vrot.slane %v764, 6
    %v773 = vrot.slane %v765, 6
    %v774 = vrot.slane %v766, 6
    %v775 = vrot.slane %v767, 6
    %v780 = vadd.f32 %v760, %v772
    %v781 = vadd.f32 %v761, %v773
    %v782 = vadd.f32 %v762, %v774
    %v783 = vadd.f32 %v763, %v775
    %v784 = vld [vmem:[#allocation10] sm:$0xff]
    %v785 = vld [vmem:[#allocation10 + $0x8] sm:$0xff]
    %v786 = vld [vmem:[#allocation10 + $0x10] sm:$0xff]
    %v787 = vld [vmem:[#allocation10 + $0x18] sm:$0xff]
    %v788 = vld [vmem:[#allocation10 + $0x20] sm:$0xff]
    %v789 = vld [vmem:[#allocation10 + $0x28] sm:$0xff]
    %v790 = vld [vmem:[#allocation10 + $0x30] sm:$0xff]
    %v791 = vld [vmem:[#allocation10 + $0x38] sm:$0xff]
    %v792 = vld [vmem:[#allocation10 + $0x40] sm:$0xff]
    %v793 = vld [vmem:[#allocation10 + $0x48] sm:$0xff]
    %v794 = vld [vmem:[#allocation10 + $0x50] sm:$0xff]
    %v795 = vld [vmem:[#allocation10 + $0x58] sm:$0xff]
    %v796 = vld [vmem:[#allocation10 + $0x60] sm:$0xff]
    %v797 = vld [vmem:[#allocation10 + $0x68] sm:$0xff]
    %v798 = vld [vmem:[#allocation10 + $0x70] sm:$0xff]
    %v799 = vld [vmem:[#allocation10 + $0x78] sm:$0xff]
    %v800 = vld [vmem:[#allocation10 + $0x80] sm:$0xff]
    %v801 = vld [vmem:[#allocation10 + $0x88] sm:$0xff]
    %v802 = vld [vmem:[#allocation10 + $0x90] sm:$0xff]
    %v803 = vld [vmem:[#allocation10 + $0x98] sm:$0xff]
    %v804 = vld [vmem:[#allocation10 + $0xa0] sm:$0xff]
    %v805 = vld [vmem:[#allocation10 + $0xa8] sm:$0xff]
    %v806 = vld [vmem:[#allocation10 + $0xb0] sm:$0xff]
    %v807 = vld [vmem:[#allocation10 + $0xb8] sm:$0xff]
    %v808 = vld [vmem:[#allocation10 + $0xc0] sm:$0xff]
    %v809 = vld [vmem:[#allocation10 + $0xc8] sm:$0xff]
    %v810 = vld [vmem:[#allocation10 + $0xd0] sm:$0xff]
    %v811 = vld [vmem:[#allocation10 + $0xd8] sm:$0xff]
    %v812 = vld [vmem:[#allocation10 + $0xe0] sm:$0xff]
    %v813 = vld [vmem:[#allocation10 + $0xe8] sm:$0xff]
    %v814 = vld [vmem:[#allocation10 + $0xf0] sm:$0xff]
    %v815 = vld [vmem:[#allocation10 + $0xf8] sm:$0xff]
    %v848 = vunpack.c.l.b16 %v784
    %v849 = vunpack.c.h.b16 %v784
    %v850 = vunpack.c.l.b16 %v785
    %v851 = vunpack.c.h.b16 %v785
    %v852 = vunpack.c.l.b16 %v786
    %v853 = vunpack.c.h.b16 %v786
    %v854 = vunpack.c.l.b16 %v787
    %v855 = vunpack.c.h.b16 %v787
    %v856 = vunpack.c.l.b16 %v788
    %v857 = vunpack.c.h.b16 %v788
    %v858 = vunpack.c.l.b16 %v789
    %v859 = vunpack.c.h.b16 %v789
    %v860 = vunpack.c.l.b16 %v790
    %v861 = vunpack.c.h.b16 %v790
    %v862 = vunpack.c.l.b16 %v791
    %v863 = vunpack.c.h.b16 %v791
    %v864 = vunpack.c.l.b16 %v792
    %v865 = vunpack.c.h.b16 %v792
    %v866 = vunpack.c.l.b16 %v793
    %v867 = vunpack.c.h.b16 %v793
    %v868 = vunpack.c.l.b16 %v794
    %v869 = vunpack.c.h.b16 %v794
    %v870 = vunpack.c.l.b16 %v795
    %v871 = vunpack.c.h.b16 %v795
    %v872 = vunpack.c.l.b16 %v796
    %v873 = vunpack.c.h.b16 %v796
    %v874 = vunpack.c.l.b16 %v797
    %v875 = vunpack.c.h.b16 %v797
    %v876 = vunpack.c.l.b16 %v798
    %v877 = vunpack.c.h.b16 %v798
    %v878 = vunpack.c.l.b16 %v799
    %v879 = vunpack.c.h.b16 %v799
    %v880 = vunpack.c.l.b16 %v800
    %v881 = vunpack.c.h.b16 %v800
    %v882 = vunpack.c.l.b16 %v801
    %v883 = vunpack.c.h.b16 %v801
    %v884 = vunpack.c.l.b16 %v802
    %v885 = vunpack.c.h.b16 %v802
    %v886 = vunpack.c.l.b16 %v803
    %v887 = vunpack.c.h.b16 %v803
    %v888 = vunpack.c.l.b16 %v804
    %v889 = vunpack.c.h.b16 %v804
    %v890 = vunpack.c.l.b16 %v805
    %v891 = vunpack.c.h.b16 %v805
    %v892 = vunpack.c.l.b16 %v806
    %v893 = vunpack.c.h.b16 %v806
    %v894 = vunpack.c.l.b16 %v807
    %v895 = vunpack.c.h.b16 %v807
    %v896 = vunpack.c.l.b16 %v808
    %v897 = vunpack.c.h.b16 %v808
    %v898 = vunpack.c.l.b16 %v809
    %v899 = vunpack.c.h.b16 %v809
    %v900 = vunpack.c.l.b16 %v810
    %v901 = vunpack.c.h.b16 %v810
    %v902 = vunpack.c.l.b16 %v811
    %v903 = vunpack.c.h.b16 %v811
    %v904 = vunpack.c.l.b16 %v812
    %v905 = vunpack.c.h.b16 %v812
    %v906 = vunpack.c.l.b16 %v813
    %v907 = vunpack.c.h.b16 %v813
    %v908 = vunpack.c.l.b16 %v814
    %v909 = vunpack.c.h.b16 %v814
    %v910 = vunpack.c.l.b16 %v815
    %v911 = vunpack.c.h.b16 %v815
    %v912 = vpack.c.b16 %v852, %v848
    %v913 = vpack.c.b16 %v853, %v849
    %v914 = vpack.c.b16 %v854, %v850
    %v915 = vpack.c.b16 %v855, %v851
    %v916 = vpack.c.b16 %v860, %v856
    %v917 = vpack.c.b16 %v861, %v857
    %v918 = vpack.c.b16 %v862, %v858
    %v919 = vpack.c.b16 %v863, %v859
    %v920 = vpack.c.b16 %v868, %v864
    %v921 = vpack.c.b16 %v869, %v865
    %v922 = vpack.c.b16 %v870, %v866
    %v923 = vpack.c.b16 %v871, %v867
    %v924 = vpack.c.b16 %v876, %v872
    %v925 = vpack.c.b16 %v877, %v873
    %v926 = vpack.c.b16 %v878, %v874
    %v927 = vpack.c.b16 %v879, %v875
    %v928 = vpack.c.b16 %v884, %v880
    %v929 = vpack.c.b16 %v885, %v881
    %v930 = vpack.c.b16 %v886, %v882
    %v931 = vpack.c.b16 %v887, %v883
    %v932 = vpack.c.b16 %v892, %v888
    %v933 = vpack.c.b16 %v893, %v889
    %v934 = vpack.c.b16 %v894, %v890
    %v935 = vpack.c.b16 %v895, %v891
    %v936 = vpack.c.b16 %v900, %v896
    %v937 = vpack.c.b16 %v901, %v897
    %v938 = vpack.c.b16 %v902, %v898
    %v939 = vpack.c.b16 %v903, %v899
    %v940 = vpack.c.b16 %v908, %v904
    %v941 = vpack.c.b16 %v909, %v905
    %v942 = vpack.c.b16 %v910, %v906
    %v943 = vpack.c.b16 %v911, %v907
    %976 = vmatprep.subr.bf16.mxu0 %v913
    %977 = vmatpush1.bf16.msra.mxu0 %v912
    %978 = vmatprep.subr.bf16.mxu0 %v917
    %979 = vmatpush1.bf16.msra.mxu0 %v916
    %980 = vmatprep.subr.bf16.mxu0 %v921
    %981 = vmatpush1.bf16.msra.mxu0 %v920
    %982 = vmatprep.subr.bf16.mxu0 %v925
    %983 = vmatpush1.bf16.msra.mxu0 %v924
    %984 = vmatprep.subr.bf16.mxu0 %v929
    %985 = vmatpush1.bf16.msra.mxu0 %v928
    %986 = vmatprep.subr.bf16.mxu0 %v933
    %987 = vmatpush1.bf16.msra.mxu0 %v932
    %988 = vmatprep.subr.bf16.mxu0 %v937
    %989 = vmatpush1.bf16.msra.mxu0 %v936
    %990 = vmatprep.subr.bf16.mxu0 %v941
    %991 = vmatpush1.bf16.msra.mxu0 %v940
    %992 = vmatprep.subr.bf16.mxu0 0
    %993 = vmatpush1.bf16.msra.mxu0 0
    %994 = vmatprep.subr.bf16.mxu0 0
    %995 = vmatpush1.bf16.msra.mxu0 0
    %996 = vmatprep.subr.bf16.mxu0 0
    %997 = vmatpush1.bf16.msra.mxu0 0
    %998 = vmatprep.subr.bf16.mxu0 0
    %999 = vmatpush1.bf16.msra.mxu0 0
    %1000 = vmatprep.subr.bf16.mxu0 0
    %1001 = vmatpush1.bf16.msra.mxu0 0
    %1002 = vmatprep.subr.bf16.mxu0 0
    %1003 = vmatpush1.bf16.msra.mxu0 0
    %1004 = vmatprep.subr.bf16.mxu0 0
    %1005 = vmatpush1.bf16.msra.mxu0 0
    %1006 = vmatprep.subr.bf16.mxu0 0
    %1007 = vmatpush1.bf16.msra.mxu0 0
    %1008 = vmatprep.mubr.bf16.mxu0 0
    %1009 = vmatmul.mubr.bf16.gmra.mrb[0].mxu0 0
    %v1010 = vpop.f32.mrb[0].mxu0
    %v1011 = vadd.f32 0.0, %v1010
    %v1012 = vpop.f32.mrb[0].mxu0
    %v1013 = vadd.f32 0.0, %v1012
    %v1014 = vpop.f32.mrb[0].mxu0
    %v1015 = vpop.f32.mrb[0].mxu0
    %1016 = vdwg.mxu0
    %1017 = vmatprep.subr.bf16.mxu0 %v915
    %1018 = vmatpush1.bf16.msra.mxu0 %v914
    %1019 = vmatprep.subr.bf16.mxu0 %v919
    %1020 = vmatpush1.bf16.msra.mxu0 %v918
    %1021 = vmatprep.subr.bf16.mxu0 %v923
    %1022 = vmatpush1.bf16.msra.mxu0 %v922
    %1023 = vmatprep.subr.bf16.mxu0 %v927
    %1024 = vmatpush1.bf16.msra.mxu0 %v926
    %1025 = vmatprep.subr.bf16.mxu0 %v931
    %1026 = vmatpush1.bf16.msra.mxu0 %v930
    %1027 = vmatprep.subr.bf16.mxu0 %v935
    %1028 = vmatpush1.bf16.msra.mxu0 %v934
    %1029 = vmatprep.subr.bf16.mxu0 %v939
    %1030 = vmatpush1.bf16.msra.mxu0 %v938
    %1031 = vmatprep.subr.bf16.mxu0 %v943
    %1032 = vmatpush1.bf16.msra.mxu0 %v942
    %1033 = vmatprep.subr.bf16.mxu0 0
    %1034 = vmatpush1.bf16.msra.mxu0 0
    %1035 = vmatprep.subr.bf16.mxu0 0
    %1036 = vmatpush1.bf16.msra.mxu0 0
    %1037 = vmatprep.subr.bf16.mxu0 0
    %1038 = vmatpush1.bf16.msra.mxu0 0
    %1039 = vmatprep.subr.bf16.mxu0 0
    %1040 = vmatpush1.bf16.msra.mxu0 0
    %1041 = vmatprep.subr.bf16.mxu0 0
    %1042 = vmatpush1.bf16.msra.mxu0 0
    %1043 = vmatprep.subr.bf16.mxu0 0
    %1044 = vmatpush1.bf16.msra.mxu0 0
    %1045 = vmatprep.subr.bf16.mxu0 0
    %1046 = vmatpush1.bf16.msra.mxu0 0
    %1047 = vmatprep.subr.bf16.mxu0 0
    %1048 = vmatpush1.bf16.msra.mxu0 0
    %1049 = vmatprep.mubr.bf16.mxu0 0
    %1050 = vmatmul.mubr.bf16.gmra.mrb[0].mxu0 0
    %v1051 = vpop.f32.mrb[0].mxu0
    %v1052 = vadd.f32 0.0, %v1051
    %v1053 = vpop.f32.mrb[0].mxu0
    %v1054 = vadd.f32 0.0, %v1053
    %v1055 = vpop.f32.mrb[0].mxu0
    %v1056 = vpop.f32.mrb[0].mxu0
    %1057 = vdwg.mxu0
    %v1058 = vadd.f32 %v780, %v1011
    %v1059 = vadd.f32 %v781, %v1013
    %v1060 = vadd.f32 %v782, %v1052
    %v1061 = vadd.f32 %v783, %v1054
    %v1062 = vxor.u32 %v1058, 2147483648
    %v1063 = vmul.f32 %v1062, 1.442695
    %v1064 = vpow.pop %v1063
    %v1065 = vadd.f32 %v1064, 1.0
    %v1066 = vrcp.pop %v1065
    %v1067 = vmul.f32 1.0, %v1066
    %v1068 = vxor.u32 %v1059, 2147483648
    %v1069 = vmul.f32 %v1068, 1.442695
    %v1070 = vpow.pop %v1069
    %v1071 = vadd.f32 %v1070, 1.0
    %v1072 = vrcp.pop %v1071
    %v1073 = vmul.f32 1.0, %v1072
    %v1074 = vtanh.pop %v1060
    %v1075 = vxor.u32 %v1061, 2147483648
    %v1076 = vmul.f32 %v1075, 1.442695
    %v1077 = vpow.pop %v1076
    %v1078 = vadd.f32 %v1077, 1.0
    %v1079 = vrcp.pop %v1078
    %v1080 = vmul.f32 1.0, %v1079
    %v1081 = vmul.f32 %v1073, 0.0
    %v1082 = vmul.f32 %v1067, %v1074
    %v1083 = vadd.f32 %v1081, %v1082
    %v1084 = vtanh.pop %v1083
    %v1085 = vmul.f32 %v1080, %v1084
    %1086 = vst [vmem:[#allocation4] sm:$0x3] %v1085
    %1087 = vst [vmem:[#allocation5 + $0xe] sm:$0x3] %v1085
    %v1088 = vld [vmem:[#allocation2] sm:$0xc]
    %v1089 = vld [vmem:[#allocation2 + $0x8] sm:$0xc]
    %v1090 = vld [vmem:[#allocation2 + $0x10] sm:$0xc]
    %v1091 = vld [vmem:[#allocation2 + $0x18] sm:$0xc]
    %v1092 = vld [vmem:[#allocation2 + $0x60] sm:$0x30]
    %v1093 = vld [vmem:[#allocation2 + $0x68] sm:$0x30]
    %v1094 = vld [vmem:[#allocation2 + $0x70] sm:$0x30]
    %v1095 = vld [vmem:[#allocation2 + $0x78] sm:$0x30]
    %v1100 = vrot.slane %v1092, 2
    %v1101 = vrot.slane %v1093, 2
    %v1102 = vrot.slane %v1094, 2
    %v1103 = vrot.slane %v1095, 2
    %v1108 = vadd.f32 %v1088, %v1100
    %v1109 = vadd.f32 %v1089, %v1101
    %v1110 = vadd.f32 %v1090, %v1102
    %v1111 = vadd.f32 %v1091, %v1103
    %v1112 = vpack.c.bf16 %v1085, %v1085
    %v1113 = vld [vmem:[#allocation10] sm:$0xff]
    %v1114 = vld [vmem:[#allocation10 + $0x8] sm:$0xff]
    %v1115 = vld [vmem:[#allocation10 + $0x10] sm:$0xff]
    %v1116 = vld [vmem:[#allocation10 + $0x18] sm:$0xff]
    %v1117 = vld [vmem:[#allocation10 + $0x20] sm:$0xff]
    %v1118 = vld [vmem:[#allocation10 + $0x28] sm:$0xff]
    %v1119 = vld [vmem:[#allocation10 + $0x30] sm:$0xff]
    %v1120 = vld [vmem:[#allocation10 + $0x38] sm:$0xff]
    %v1121 = vld [vmem:[#allocation10 + $0x40] sm:$0xff]
    %v1122 = vld [vmem:[#allocation10 + $0x48] sm:$0xff]
    %v1123 = vld [vmem:[#allocation10 + $0x50] sm:$0xff]
    %v1124 = vld [vmem:[#allocation10 + $0x58] sm:$0xff]
    %v1125 = vld [vmem:[#allocation10 + $0x60] sm:$0xff]
    %v1126 = vld [vmem:[#allocation10 + $0x68] sm:$0xff]
    %v1127 = vld [vmem:[#allocation10 + $0x70] sm:$0xff]
    %v1128 = vld [vmem:[#allocation10 + $0x78] sm:$0xff]
    %v1129 = vld [vmem:[#allocation10 + $0x80] sm:$0xff]
    %v1130 = vld [vmem:[#allocation10 + $0x88] sm:$0xff]
    %v1131 = vld [vmem:[#allocation10 + $0x90] sm:$0xff]
    %v1132 = vld [vmem:[#allocation10 + $0x98] sm:$0xff]
    %v1133 = vld [vmem:[#allocation10 + $0xa0] sm:$0xff]
    %v1134 = vld [vmem:[#allocation10 + $0xa8] sm:$0xff]
    %v1135 = vld [vmem:[#allocation10 + $0xb0] sm:$0xff]
    %v1136 = vld [vmem:[#allocation10 + $0xb8] sm:$0xff]
    %v1137 = vld [vmem:[#allocation10 + $0xc0] sm:$0xff]
    %v1138 = vld [vmem:[#allocation10 + $0xc8] sm:$0xff]
    %v1139 = vld [vmem:[#allocation10 + $0xd0] sm:$0xff]
    %v1140 = vld [vmem:[#allocation10 + $0xd8] sm:$0xff]
    %v1141 = vld [vmem:[#allocation10 + $0xe0] sm:$0xff]
    %v1142 = vld [vmem:[#allocation10 + $0xe8] sm:$0xff]
    %v1143 = vld [vmem:[#allocation10 + $0xf0] sm:$0xff]
    %v1144 = vld [vmem:[#allocation10 + $0xf8] sm:$0xff]
    %v1177 = vunpack.c.l.b16 %v1113
    %v1178 = vunpack.c.h.b16 %v1113
    %v1179 = vunpack.c.l.b16 %v1114
    %v1180 = vunpack.c.h.b16 %v1114
    %v1181 = vunpack.c.l.b16 %v1115
    %v1182 = vunpack.c.h.b16 %v1115
    %v1183 = vunpack.c.l.b16 %v1116
    %v1184 = vunpack.c.h.b16 %v1116
    %v1185 = vunpack.c.l.b16 %v1117
    %v1186 = vunpack.c.h.b16 %v1117
    %v1187 = vunpack.c.l.b16 %v1118
    %v1188 = vunpack.c.h.b16 %v1118
    %v1189 = vunpack.c.l.b16 %v1119
    %v1190 = vunpack.c.h.b16 %v1119
    %v1191 = vunpack.c.l.b16 %v1120
    %v1192 = vunpack.c.h.b16 %v1120
    %v1193 = vunpack.c.l.b16 %v1121
    %v1194 = vunpack.c.h.b16 %v1121
    %v1195 = vunpack.c.l.b16 %v1122
    %v1196 = vunpack.c.h.b16 %v1122
    %v1197 = vunpack.c.l.b16 %v1123
    %v1198 = vunpack.c.h.b16 %v1123
    %v1199 = vunpack.c.l.b16 %v1124
    %v1200 = vunpack.c.h.b16 %v1124
    %v1201 = vunpack.c.l.b16 %v1125
    %v1202 = vunpack.c.h.b16 %v1125
    %v1203 = vunpack.c.l.b16 %v1126
    %v1204 = vunpack.c.h.b16 %v1126
    %v1205 = vunpack.c.l.b16 %v1127
    %v1206 = vunpack.c.h.b16 %v1127
    %v1207 = vunpack.c.l.b16 %v1128
    %v1208 = vunpack.c.h.b16 %v1128
    %v1209 = vunpack.c.l.b16 %v1129
    %v1210 = vunpack.c.h.b16 %v1129
    %v1211 = vunpack.c.l.b16 %v1130
    %v1212 = vunpack.c.h.b16 %v1130
    %v1213 = vunpack.c.l.b16 %v1131
    %v1214 = vunpack.c.h.b16 %v1131
    %v1215 = vunpack.c.l.b16 %v1132
    %v1216 = vunpack.c.h.b16 %v1132
    %v1217 = vunpack.c.l.b16 %v1133
    %v1218 = vunpack.c.h.b16 %v1133
    %v1219 = vunpack.c.l.b16 %v1134
    %v1220 = vunpack.c.h.b16 %v1134
    %v1221 = vunpack.c.l.b16 %v1135
    %v1222 = vunpack.c.h.b16 %v1135
    %v1223 = vunpack.c.l.b16 %v1136
    %v1224 = vunpack.c.h.b16 %v1136
    %v1225 = vunpack.c.l.b16 %v1137
    %v1226 = vunpack.c.h.b16 %v1137
    %v1227 = vunpack.c.l.b16 %v1138
    %v1228 = vunpack.c.h.b16 %v1138
    %v1229 = vunpack.c.l.b16 %v1139
    %v1230 = vunpack.c.h.b16 %v1139
    %v1231 = vunpack.c.l.b16 %v1140
    %v1232 = vunpack.c.h.b16 %v1140
    %v1233 = vunpack.c.l.b16 %v1141
    %v1234 = vunpack.c.h.b16 %v1141
    %v1235 = vunpack.c.l.b16 %v1142
    %v1236 = vunpack.c.h.b16 %v1142
    %v1237 = vunpack.c.l.b16 %v1143
    %v1238 = vunpack.c.h.b16 %v1143
    %v1239 = vunpack.c.l.b16 %v1144
    %v1240 = vunpack.c.h.b16 %v1144
    %v1241 = vpack.c.b16 %v1181, %v1177
    %v1242 = vpack.c.b16 %v1182, %v1178
    %v1243 = vpack.c.b16 %v1183, %v1179
    %v1244 = vpack.c.b16 %v1184, %v1180
    %v1245 = vpack.c.b16 %v1189, %v1185
    %v1246 = vpack.c.b16 %v1190, %v1186
    %v1247 = vpack.c.b16 %v1191, %v1187
    %v1248 = vpack.c.b16 %v1192, %v1188
    %v1249 = vpack.c.b16 %v1197, %v1193
    %v1250 = vpack.c.b16 %v1198, %v1194
    %v1251 = vpack.c.b16 %v1199, %v1195
    %v1252 = vpack.c.b16 %v1200, %v1196
    %v1253 = vpack.c.b16 %v1205, %v1201
    %v1254 = vpack.c.b16 %v1206, %v1202
    %v1255 = vpack.c.b16 %v1207, %v1203
    %v1256 = vpack.c.b16 %v1208, %v1204
    %v1257 = vpack.c.b16 %v1213, %v1209
    %v1258 = vpack.c.b16 %v1214, %v1210
    %v1259 = vpack.c.b16 %v1215, %v1211
    %v1260 = vpack.c.b16 %v1216, %v1212
    %v1261 = vpack.c.b16 %v1221, %v1217
    %v1262 = vpack.c.b16 %v1222, %v1218
    %v1263 = vpack.c.b16 %v1223, %v1219
    %v1264 = vpack.c.b16 %v1224, %v1220
    %v1265 = vpack.c.b16 %v1229, %v1225
    %v1266 = vpack.c.b16 %v1230, %v1226
    %v1267 = vpack.c.b16 %v1231, %v1227
    %v1268 = vpack.c.b16 %v1232, %v1228
    %v1269 = vpack.c.b16 %v1237, %v1233
    %v1270 = vpack.c.b16 %v1238, %v1234
    %v1271 = vpack.c.b16 %v1239, %v1235
    %v1272 = vpack.c.b16 %v1240, %v1236
    %1305 = vmatprep.subr.bf16.mxu0 %v1242
    %1306 = vmatpush1.bf16.msra.mxu0 %v1241
    %1307 = vmatprep.subr.bf16.mxu0 %v1246
    %1308 = vmatpush1.bf16.msra.mxu0 %v1245
    %1309 = vmatprep.subr.bf16.mxu0 %v1250
    %1310 = vmatpush1.bf16.msra.mxu0 %v1249
    %1311 = vmatprep.subr.bf16.mxu0 %v1254
    %1312 = vmatpush1.bf16.msra.mxu0 %v1253
    %1313 = vmatprep.subr.bf16.mxu0 %v1258
    %1314 = vmatpush1.bf16.msra.mxu0 %v1257
    %1315 = vmatprep.subr.bf16.mxu0 %v1262
    %1316 = vmatpush1.bf16.msra.mxu0 %v1261
    %1317 = vmatprep.subr.bf16.mxu0 %v1266
    %1318 = vmatpush1.bf16.msra.mxu0 %v1265
    %1319 = vmatprep.subr.bf16.mxu0 %v1270
    %1320 = vmatpush1.bf16.msra.mxu0 %v1269
    %1321 = vmatprep.subr.bf16.mxu0 0
    %1322 = vmatpush1.bf16.msra.mxu0 0
    %1323 = vmatprep.subr.bf16.mxu0 0
    %1324 = vmatpush1.bf16.msra.mxu0 0
    %1325 = vmatprep.subr.bf16.mxu0 0
    %1326 = vmatpush1.bf16.msra.mxu0 0
    %1327 = vmatprep.subr.bf16.mxu0 0
    %1328 = vmatpush1.bf16.msra.mxu0 0
    %1329 = vmatprep.subr.bf16.mxu0 0
    %1330 = vmatpush1.bf16.msra.mxu0 0
    %1331 = vmatprep.subr.bf16.mxu0 0
    %1332 = vmatpush1.bf16.msra.mxu0 0
    %1333 = vmatprep.subr.bf16.mxu0 0
    %1334 = vmatpush1.bf16.msra.mxu0 0
    %1335 = vmatprep.subr.bf16.mxu0 0
    %1336 = vmatpush1.bf16.msra.mxu0 0
    %1337 = vmatprep.mubr.bf16.mxu0 0
    %1338 = vmatmul.mubr.bf16.gmra.mrb[0].mxu0 %v1112
    %v1339 = vpop.f32.mrb[0].mxu0
    %v1340 = vadd.f32 0.0, %v1339
    %v1341 = vpop.f32.mrb[0].mxu0
    %v1342 = vadd.f32 0.0, %v1341
    %v1343 = vpop.f32.mrb[0].mxu0
    %v1344 = vpop.f32.mrb[0].mxu0
    %1345 = vdwg.mxu0
    %1346 = vmatprep.subr.bf16.mxu0 %v1244
    %1347 = vmatpush1.bf16.msra.mxu0 %v1243
    %1348 = vmatprep.subr.bf16.mxu0 %v1248
    %1349 = vmatpush1.bf16.msra.mxu0 %v1247
    %1350 = vmatprep.subr.bf16.mxu0 %v1252
    %1351 = vmatpush1.bf16.msra.mxu0 %v1251
    %1352 = vmatprep.subr.bf16.mxu0 %v1256
    %1353 = vmatpush1.bf16.msra.mxu0 %v1255
    %1354 = vmatprep.subr.bf16.mxu0 %v1260
    %1355 = vmatpush1.bf16.msra.mxu0 %v1259
    %1356 = vmatprep.subr.bf16.mxu0 %v1264
    %1357 = vmatpush1.bf16.msra.mxu0 %v1263
    %1358 = vmatprep.subr.bf16.mxu0 %v1268
    %1359 = vmatpush1.bf16.msra.mxu0 %v1267
    %1360 = vmatprep.subr.bf16.mxu0 %v1272
    %1361 = vmatpush1.bf16.msra.mxu0 %v1271
    %1362 = vmatprep.subr.bf16.mxu0 0
    %1363 = vmatpush1.bf16.msra.mxu0 0
    %1364 = vmatprep.subr.bf16.mxu0 0
    %1365 = vmatpush1.bf16.msra.mxu0 0
    %1366 = vmatprep.subr.bf16.mxu0 0
    %1367 = vmatpush1.bf16.msra.mxu0 0
    %1368 = vmatprep.subr.bf16.mxu0 0
    %1369 = vmatpush1.bf16.msra.mxu0 0
    %1370 = vmatprep.subr.bf16.mxu0 0
    %1371 = vmatpush1.bf16.msra.mxu0 0
    %1372 = vmatprep.subr.bf16.mxu0 0
    %1373 = vmatpush1.bf16.msra.mxu0 0
    %1374 = vmatprep.subr.bf16.mxu0 0
    %1375 = vmatpush1.bf16.msra.mxu0 0
    %1376 = vmatprep.subr.bf16.mxu0 0
    %1377 = vmatpush1.bf16.msra.mxu0 0
    %1378 = vmatprep.mubr.bf16.mxu0 0
    %1379 = vmatmul.mubr.bf16.gmra.mrb[0].mxu0 %v1112
    %v1380 = vpop.f32.mrb[0].mxu0
    %v1381 = vadd.f32 0.0, %v1380
    %v1382 = vpop.f32.mrb[0].mxu0
    %v1383 = vadd.f32 0.0, %v1382
    %v1384 = vpop.f32.mrb[0].mxu0
    %v1385 = vpop.f32.mrb[0].mxu0
    %1386 = vdwg.mxu0
    %v1391 = vrot.slane %v1340, 6
    %v1392 = vrot.slane %v1342, 6
    %v1393 = vrot.slane %v1381, 6
    %v1394 = vrot.slane %v1383, 6
    %v1399 = vadd.f32 %v1108, %v1391
    %v1400 = vadd.f32 %v1109, %v1392
    %v1401 = vadd.f32 %v1110, %v1393
    %v1402 = vadd.f32 %v1111, %v1394
    %v1403 = vxor.u32 %v1399, 2147483648
    %v1404 = vmul.f32 %v1403, 1.442695
    %v1405 = vpow.pop %v1404
    %v1406 = vadd.f32 %v1405, 1.0
    %v1407 = vrcp.pop %v1406
    %v1408 = vmul.f32 1.0, %v1407
    %v1409 = vxor.u32 %v1400, 2147483648
    %v1410 = vmul.f32 %v1409, 1.442695
    %v1411 = vpow.pop %v1410
    %v1412 = vadd.f32 %v1411, 1.0
    %v1413 = vrcp.pop %v1412
    %v1414 = vmul.f32 1.0, %v1413
    %v1415 = vtanh.pop %v1401
    %v1416 = vxor.u32 %v1402, 2147483648
    %v1417 = vmul.f32 %v1416, 1.442695
    %v1418 = vpow.pop %v1417
    %v1419 = vadd.f32 %v1418, 1.0
    %v1420 = vrcp.pop %v1419
    %v1421 = vmul.f32 1.0, %v1420
    %v1423 = vrot.slane %v1083, 6
    %v1425 = vmul.f32 %v1414, %v1423
    %v1426 = vmul.f32 %v1408, %v1415
    %v1427 = vadd.f32 %v1425, %v1426
    %v1428 = vtanh.pop %v1427
    %v1429 = vmul.f32 %v1421, %v1428
    %1430 = vst [vmem:[#allocation4] sm:$0xc] %v1429
    %1431 = vst [vmem:[#allocation5 + $0xa] sm:$0xc] %v1429
    %v1432 = vld [vmem:[#allocation2] sm:$0x30]
    %v1433 = vld [vmem:[#allocation2 + $0x8] sm:$0x30]
    %v1434 = vld [vmem:[#allocation2 + $0x10] sm:$0x30]
    %v1435 = vld [vmem:[#allocation2 + $0x18] sm:$0x30]
    %v1436 = vld [vmem:[#allocation2 + $0x60] sm:$0xc]
    %v1437 = vld [vmem:[#allocation2 + $0x68] sm:$0xc]
    %v1438 = vld [vmem:[#allocation2 + $0x70] sm:$0xc]
    %v1439 = vld [vmem:[#allocation2 + $0x78] sm:$0xc]
    %v1444 = vrot.slane %v1436, 6
    %v1445 = vrot.slane %v1437, 6
    %v1446 = vrot.slane %v1438, 6
    %v1447 = vrot.slane %v1439, 6
    %v1452 = vadd.f32 %v1432, %v1444
    %v1453 = vadd.f32 %v1433, %v1445
    %v1454 = vadd.f32 %v1434, %v1446
    %v1455 = vadd.f32 %v1435, %v1447
    %v1456 = vpack.c.bf16 %v1429, %v1429
    %v1457 = vld [vmem:[#allocation10] sm:$0xff]
    %v1458 = vld [vmem:[#allocation10 + $0x8] sm:$0xff]
    %v1459 = vld [vmem:[#allocation10 + $0x10] sm:$0xff]
    %v1460 = vld [vmem:[#allocation10 + $0x18] sm:$0xff]
    %v1461 = vld [vmem:[#allocation10 + $0x20] sm:$0xff]
    %v1462 = vld [vmem:[#allocation10 + $0x28] sm:$0xff]
    %v1463 = vld [vmem:[#allocation10 + $0x30] sm:$0xff]
    %v1464 = vld [vmem:[#allocation10 + $0x38] sm:$0xff]
    %v1465 = vld [vmem:[#allocation10 + $0x40] sm:$0xff]
    %v1466 = vld [vmem:[#allocation10 + $0x48] sm:$0xff]
    %v1467 = vld [vmem:[#allocation10 + $0x50] sm:$0xff]
    %v1468 = vld [vmem:[#allocation10 + $0x58] sm:$0xff]
    %v1469 = vld [vmem:[#allocation10 + $0x60] sm:$0xff]
    %v1470 = vld [vmem:[#allocation10 + $0x68] sm:$0xff]
    %v1471 = vld [vmem:[#allocation10 + $0x70] sm:$0xff]
    %v1472 = vld [vmem:[#allocation10 + $0x78] sm:$0xff]
    %v1473 = vld [vmem:[#allocation10 + $0x80] sm:$0xff]
    %v1474 = vld [vmem:[#allocation10 + $0x88] sm:$0xff]
    %v1475 = vld [vmem:[#allocation10 + $0x90] sm:$0xff]
    %v1476 = vld [vmem:[#allocation10 + $0x98] sm:$0xff]
    %v1477 = vld [vmem:[#allocation10 + $0xa0] sm:$0xff]
    %v1478 = vld [vmem:[#allocation10 + $0xa8] sm:$0xff]
    %v1479 = vld [vmem:[#allocation10 + $0xb0] sm:$0xff]
    %v1480 = vld [vmem:[#allocation10 + $0xb8] sm:$0xff]
    %v1481 = vld [vmem:[#allocation10 + $0xc0] sm:$0xff]
    %v1482 = vld [vmem:[#allocation10 + $0xc8] sm:$0xff]
    %v1483 = vld [vmem:[#allocation10 + $0xd0] sm:$0xff]
    %v1484 = vld [vmem:[#allocation10 + $0xd8] sm:$0xff]
    %v1485 = vld [vmem:[#allocation10 + $0xe0] sm:$0xff]
    %v1486 = vld [vmem:[#allocation10 + $0xe8] sm:$0xff]
    %v1487 = vld [vmem:[#allocation10 + $0xf0] sm:$0xff]
    %v1488 = vld [vmem:[#allocation10 + $0xf8] sm:$0xff]
    %v1490 = vrot.slane %v1456, 1
    %v1524 = vunpack.c.l.b16 %v1457
    %v1525 = vunpack.c.h.b16 %v1457
    %v1526 = vunpack.c.l.b16 %v1458
    %v1527 = vunpack.c.h.b16 %v1458
    %v1528 = vunpack.c.l.b16 %v1459
    %v1529 = vunpack.c.h.b16 %v1459
    %v1530 = vunpack.c.l.b16 %v1460
    %v1531 = vunpack.c.h.b16 %v1460
    %v1532 = vunpack.c.l.b16 %v1461
    %v1533 = vunpack.c.h.b16 %v1461
    %v1534 = vunpack.c.l.b16 %v1462
    %v1535 = vunpack.c.h.b16 %v1462
    %v1536 = vunpack.c.l.b16 %v1463
    %v1537 = vunpack.c.h.b16 %v1463
    %v1538 = vunpack.c.l.b16 %v1464
    %v1539 = vunpack.c.h.b16 %v1464
    %v1540 = vunpack.c.l.b16 %v1465
    %v1541 = vunpack.c.h.b16 %v1465
    %v1542 = vunpack.c.l.b16 %v1466
    %v1543 = vunpack.c.h.b16 %v1466
    %v1544 = vunpack.c.l.b16 %v1467
    %v1545 = vunpack.c.h.b16 %v1467
    %v1546 = vunpack.c.l.b16 %v1468
    %v1547 = vunpack.c.h.b16 %v1468
    %v1548 = vunpack.c.l.b16 %v1469
    %v1549 = vunpack.c.h.b16 %v1469
    %v1550 = vunpack.c.l.b16 %v1470
    %v1551 = vunpack.c.h.b16 %v1470
    %v1552 = vunpack.c.l.b16 %v1471
    %v1553 = vunpack.c.h.b16 %v1471
    %v1554 = vunpack.c.l.b16 %v1472
    %v1555 = vunpack.c.h.b16 %v1472
    %v1556 = vunpack.c.l.b16 %v1473
    %v1557 = vunpack.c.h.b16 %v1473
    %v1558 = vunpack.c.l.b16 %v1474
    %v1559 = vunpack.c.h.b16 %v1474
    %v1560 = vunpack.c.l.b16 %v1475
    %v1561 = vunpack.c.h.b16 %v1475
    %v1562 = vunpack.c.l.b16 %v1476
    %v1563 = vunpack.c.h.b16 %v1476
    %v1564 = vunpack.c.l.b16 %v1477
    %v1565 = vunpack.c.h.b16 %v1477
    %v1566 = vunpack.c.l.b16 %v1478
    %v1567 = vunpack.c.h.b16 %v1478
    %v1568 = vunpack.c.l.b16 %v1479
    %v1569 = vunpack.c.h.b16 %v1479
    %v1570 = vunpack.c.l.b16 %v1480
    %v1571 = vunpack.c.h.b16 %v1480
    %v1572 = vunpack.c.l.b16 %v1481
    %v1573 = vunpack.c.h.b16 %v1481
    %v1574 = vunpack.c.l.b16 %v1482
    %v1575 = vunpack.c.h.b16 %v1482
    %v1576 = vunpack.c.l.b16 %v1483
    %v1577 = vunpack.c.h.b16 %v1483
    %v1578 = vunpack.c.l.b16 %v1484
    %v1579 = vunpack.c.h.b16 %v1484
    %v1580 = vunpack.c.l.b16 %v1485
    %v1581 = vunpack.c.h.b16 %v1485
    %v1582 = vunpack.c.l.b16 %v1486
    %v1583 = vunpack.c.h.b16 %v1486
    %v1584 = vunpack.c.l.b16 %v1487
    %v1585 = vunpack.c.h.b16 %v1487
    %v1586 = vunpack.c.l.b16 %v1488
    %v1587 = vunpack.c.h.b16 %v1488
    %v1588 = vpack.c.b16 %v1528, %v1524
    %v1589 = vpack.c.b16 %v1529, %v1525
    %v1590 = vpack.c.b16 %v1530, %v1526
    %v1591 = vpack.c.b16 %v1531, %v1527
    %v1592 = vpack.c.b16 %v1536, %v1532
    %v1593 = vpack.c.b16 %v1537, %v1533
    %v1594 = vpack.c.b16 %v1538, %v1534
    %v1595 = vpack.c.b16 %v1539, %v1535
    %v1596 = vpack.c.b16 %v1544, %v1540
    %v1597 = vpack.c.b16 %v1545, %v1541
    %v1598 = vpack.c.b16 %v1546, %v1542
    %v1599 = vpack.c.b16 %v1547, %v1543
    %v1600 = vpack.c.b16 %v1552, %v1548
    %v1601 = vpack.c.b16 %v1553, %v1549
    %v1602 = vpack.c.b16 %v1554, %v1550
    %v1603 = vpack.c.b16 %v1555, %v1551
    %v1604 = vpack.c.b16 %v1560, %v1556
    %v1605 = vpack.c.b16 %v1561, %v1557
    %v1606 = vpack.c.b16 %v1562, %v1558
    %v1607 = vpack.c.b16 %v1563, %v1559
    %v1608 = vpack.c.b16 %v1568, %v1564
    %v1609 = vpack.c.b16 %v1569, %v1565
    %v1610 = vpack.c.b16 %v1570, %v1566
    %v1611 = vpack.c.b16 %v1571, %v1567
    %v1612 = vpack.c.b16 %v1576, %v1572
    %v1613 = vpack.c.b16 %v1577, %v1573
    %v1614 = vpack.c.b16 %v1578, %v1574
    %v1615 = vpack.c.b16 %v1579, %v1575
    %v1616 = vpack.c.b16 %v1584, %v1580
    %v1617 = vpack.c.b16 %v1585, %v1581
    %v1618 = vpack.c.b16 %v1586, %v1582
    %v1619 = vpack.c.b16 %v1587, %v1583
    %1652 = vmatprep.subr.bf16.mxu0 %v1589
    %1653 = vmatpush1.bf16.msra.mxu0 %v1588
    %1654 = vmatprep.subr.bf16.mxu0 %v1593
    %1655 = vmatpush1.bf16.msra.mxu0 %v1592
    %1656 = vmatprep.subr.bf16.mxu0 %v1597
    %1657 = vmatpush1.bf16.msra.mxu0 %v1596
    %1658 = vmatprep.subr.bf16.mxu0 %v1601
    %1659 = vmatpush1.bf16.msra.mxu0 %v1600
    %1660 = vmatprep.subr.bf16.mxu0 %v1605
    %1661 = vmatpush1.bf16.msra.mxu0 %v1604
    %1662 = vmatprep.subr.bf16.mxu0 %v1609
    %1663 = vmatpush1.bf16.msra.mxu0 %v1608
    %1664 = vmatprep.subr.bf16.mxu0 %v1613
    %1665 = vmatpush1.bf16.msra.mxu0 %v1612
    %1666 = vmatprep.subr.bf16.mxu0 %v1617
    %1667 = vmatpush1.bf16.msra.mxu0 %v1616
    %1668 = vmatprep.subr.bf16.mxu0 0
    %1669 = vmatpush1.bf16.msra.mxu0 0
    %1670 = vmatprep.subr.bf16.mxu0 0
    %1671 = vmatpush1.bf16.msra.mxu0 0
    %1672 = vmatprep.subr.bf16.mxu0 0
    %1673 = vmatpush1.bf16.msra.mxu0 0
    %1674 = vmatprep.subr.bf16.mxu0 0
    %1675 = vmatpush1.bf16.msra.mxu0 0
    %1676 = vmatprep.subr.bf16.mxu0 0
    %1677 = vmatpush1.bf16.msra.mxu0 0
    %1678 = vmatprep.subr.bf16.mxu0 0
    %1679 = vmatpush1.bf16.msra.mxu0 0
    %1680 = vmatprep.subr.bf16.mxu0 0
    %1681 = vmatpush1.bf16.msra.mxu0 0
    %1682 = vmatprep.subr.bf16.mxu0 0
    %1683 = vmatpush1.bf16.msra.mxu0 0
    %1684 = vmatprep.mubr.bf16.mxu0 0
    %1685 = vmatmul.mubr.bf16.gmra.mrb[0].mxu0 %v1490
    %v1686 = vpop.f32.mrb[0].mxu0
    %v1687 = vadd.f32 0.0, %v1686
    %v1688 = vpop.f32.mrb[0].mxu0
    %v1689 = vadd.f32 0.0, %v1688
    %v1690 = vpop.f32.mrb[0].mxu0
    %v1691 = vpop.f32.mrb[0].mxu0
    %1692 = vdwg.mxu0
    %1693 = vmatprep.subr.bf16.mxu0 %v1591
    %1694 = vmatpush1.bf16.msra.mxu0 %v1590
    %1695 = vmatprep.subr.bf16.mxu0 %v1595
    %1696 = vmatpush1.bf16.msra.mxu0 %v1594
    %1697 = vmatprep.subr.bf16.mxu0 %v1599
    %1698 = vmatpush1.bf16.msra.mxu0 %v1598
    %1699 = vmatprep.subr.bf16.mxu0 %v1603
    %1700 = vmatpush1.bf16.msra.mxu0 %v1602
    %1701 = vmatprep.subr.bf16.mxu0 %v1607
    %1702 = vmatpush1.bf16.msra.mxu0 %v1606
    %1703 = vmatprep.subr.bf16.mxu0 %v1611
    %1704 = vmatpush1.bf16.msra.mxu0 %v1610
    %1705 = vmatprep.subr.bf16.mxu0 %v1615
    %1706 = vmatpush1.bf16.msra.mxu0 %v1614
    %1707 = vmatprep.subr.bf16.mxu0 %v1619
    %1708 = vmatpush1.bf16.msra.mxu0 %v1618
    %1709 = vmatprep.subr.bf16.mxu0 0
    %1710 = vmatpush1.bf16.msra.mxu0 0
    %1711 = vmatprep.subr.bf16.mxu0 0
    %1712 = vmatpush1.bf16.msra.mxu0 0
    %1713 = vmatprep.subr.bf16.mxu0 0
    %1714 = vmatpush1.bf16.msra.mxu0 0
    %1715 = vmatprep.subr.bf16.mxu0 0
    %1716 = vmatpush1.bf16.msra.mxu0 0
    %1717 = vmatprep.subr.bf16.mxu0 0
    %1718 = vmatpush1.bf16.msra.mxu0 0
    %1719 = vmatprep.subr.bf16.mxu0 0
    %1720 = vmatpush1.bf16.msra.mxu0 0
    %1721 = vmatprep.subr.bf16.mxu0 0
    %1722 = vmatpush1.bf16.msra.mxu0 0
    %1723 = vmatprep.subr.bf16.mxu0 0
    %1724 = vmatpush1.bf16.msra.mxu0 0
    %1725 = vmatprep.mubr.bf16.mxu0 0
    %1726 = vmatmul.mubr.bf16.gmra.mrb[0].mxu0 %v1490
    %v1727 = vpop.f32.mrb[0].mxu0
    %v1728 = vadd.f32 0.0, %v1727
    %v1729 = vpop.f32.mrb[0].mxu0
    %v1730 = vadd.f32 0.0, %v1729
    %v1731 = vpop.f32.mrb[0].mxu0
    %v1732 = vpop.f32.mrb[0].mxu0
    %1733 = vdwg.mxu0
    %v1738 = vrot.slane %v1687, 4
    %v1739 = vrot.slane %v1689, 4
    %v1740 = vrot.slane %v1728, 4
    %v1741 = vrot.slane %v1730, 4
    %v1746 = vadd.f32 %v1452, %v1738
    %v1747 = vadd.f32 %v1453, %v1739
    %v1748 = vadd.f32 %v1454, %v1740
    %v1749 = vadd.f32 %v1455, %v1741
    %v1750 = vxor.u32 %v1746, 2147483648
    %v1751 = vmul.f32 %v1750, 1.442695
    %v1752 = vpow.pop %v1751
    %v1753 = vadd.f32 %v1752, 1.0
    %v1754 = vrcp.pop %v1753
    %v1755 = vmul.f32 1.0, %v1754
    %v1756 = vxor.u32 %v1747, 2147483648
    %v1757 = vmul.f32 %v1756, 1.442695
    %v1758 = vpow.pop %v1757
    %v1759 = vadd.f32 %v1758, 1.0
    %v1760 = vrcp.pop %v1759
    %v1761 = vmul.f32 1.0, %v1760
    %v1762 = vtanh.pop %v1748
    %v1763 = vxor.u32 %v1749, 2147483648
    %v1764 = vmul.f32 %v1763, 1.442695
    %v1765 = vpow.pop %v1764
    %v1766 = vadd.f32 %v1765, 1.0
    %v1767 = vrcp.pop %v1766
    %v1768 = vmul.f32 1.0, %v1767
    %v1770 = vrot.slane %v1427, 6
    %v1772 = vmul.f32 %v1761, %v1770
    %v1773 = vmul.f32 %v1755, %v1762
    %v1774 = vadd.f32 %v1772, %v1773
    %v1775 = vtanh.pop %v1774
    %v1776 = vmul.f32 %v1768, %v1775
    %1777 = vst [vmem:[#allocation4] sm:$0x30] %v1776
    %1778 = vst [vmem:[#allocation5 + $0x6] sm:$0x30] %v1776
    %v1779 = vld [vmem:[#allocation2] sm:$0xc0]
    %v1780 = vld [vmem:[#allocation2 + $0x8] sm:$0xc0]
    %v1781 = vld [vmem:[#allocation2 + $0x10] sm:$0xc0]
    %v1782 = vld [vmem:[#allocation2 + $0x18] sm:$0xc0]
    %v1783 = vld [vmem:[#allocation2 + $0x60] sm:$0x3]
    %v1784 = vld [vmem:[#allocation2 + $0x68] sm:$0x3]
    %v1785 = vld [vmem:[#allocation2 + $0x70] sm:$0x3]
    %v1786 = vld [vmem:[#allocation2 + $0x78] sm:$0x3]
    %v1791 = vrot.slane %v1783, 2
    %v1792 = vrot.slane %v1784, 2
    %v1793 = vrot.slane %v1785, 2
    %v1794 = vrot.slane %v1786, 2
    %v1799 = vadd.f32 %v1779, %v1791
    %v1800 = vadd.f32 %v1780, %v1792
    %v1801 = vadd.f32 %v1781, %v1793
    %v1802 = vadd.f32 %v1782, %v1794
    %v1803 = vpack.c.bf16 %v1776, %v1776
    %v1804 = vld [vmem:[#allocation10] sm:$0xff]
    %v1805 = vld [vmem:[#allocation10 + $0x8] sm:$0xff]
    %v1806 = vld [vmem:[#allocation10 + $0x10] sm:$0xff]
    %v1807 = vld [vmem:[#allocation10 + $0x18] sm:$0xff]
    %v1808 = vld [vmem:[#allocation10 + $0x20] sm:$0xff]
    %v1809 = vld [vmem:[#allocation10 + $0x28] sm:$0xff]
    %v1810 = vld [vmem:[#allocation10 + $0x30] sm:$0xff]
    %v1811 = vld [vmem:[#allocation10 + $0x38] sm:$0xff]
    %v1812 = vld [vmem:[#allocation10 + $0x40] sm:$0xff]
    %v1813 = vld [vmem:[#allocation10 + $0x48] sm:$0xff]
    %v1814 = vld [vmem:[#allocation10 + $0x50] sm:$0xff]
    %v1815 = vld [vmem:[#allocation10 + $0x58] sm:$0xff]
    %v1816 = vld [vmem:[#allocation10 + $0x60] sm:$0xff]
    %v1817 = vld [vmem:[#allocation10 + $0x68] sm:$0xff]
    %v1818 = vld [vmem:[#allocation10 + $0x70] sm:$0xff]
    %v1819 = vld [vmem:[#allocation10 + $0x78] sm:$0xff]
    %v1820 = vld [vmem:[#allocation10 + $0x80] sm:$0xff]
    %v1821 = vld [vmem:[#allocation10 + $0x88] sm:$0xff]
    %v1822 = vld [vmem:[#allocation10 + $0x90] sm:$0xff]
    %v1823 = vld [vmem:[#allocation10 + $0x98] sm:$0xff]
    %v1824 = vld [vmem:[#allocation10 + $0xa0] sm:$0xff]
    %v1825 = vld [vmem:[#allocation10 + $0xa8] sm:$0xff]
    %v1826 = vld [vmem:[#allocation10 + $0xb0] sm:$0xff]
    %v1827 = vld [vmem:[#allocation10 + $0xb8] sm:$0xff]
    %v1828 = vld [vmem:[#allocation10 + $0xc0] sm:$0xff]
    %v1829 = vld [vmem:[#allocation10 + $0xc8] sm:$0xff]
    %v1830 = vld [vmem:[#allocation10 + $0xd0] sm:$0xff]
    %v1831 = vld [vmem:[#allocation10 + $0xd8] sm:$0xff]
    %v1832 = vld [vmem:[#allocation10 + $0xe0] sm:$0xff]
    %v1833 = vld [vmem:[#allocation10 + $0xe8] sm:$0xff]
    %v1834 = vld [vmem:[#allocation10 + $0xf0] sm:$0xff]
    %v1835 = vld [vmem:[#allocation10 + $0xf8] sm:$0xff]
    %v1837 = vrot.slane %v1803, 2
    %v1871 = vunpack.c.l.b16 %v1804
    %v1872 = vunpack.c.h.b16 %v1804
    %v1873 = vunpack.c.l.b16 %v1805
    %v1874 = vunpack.c.h.b16 %v1805
    %v1875 = vunpack.c.l.b16 %v1806
    %v1876 = vunpack.c.h.b16 %v1806
    %v1877 = vunpack.c.l.b16 %v1807
    %v1878 = vunpack.c.h.b16 %v1807
    %v1879 = vunpack.c.l.b16 %v1808
    %v1880 = vunpack.c.h.b16 %v1808
    %v1881 = vunpack.c.l.b16 %v1809
    %v1882 = vunpack.c.h.b16 %v1809
    %v1883 = vunpack.c.l.b16 %v1810
    %v1884 = vunpack.c.h.b16 %v1810
    %v1885 = vunpack.c.l.b16 %v1811
    %v1886 = vunpack.c.h.b16 %v1811
    %v1887 = vunpack.c.l.b16 %v1812
    %v1888 = vunpack.c.h.b16 %v1812
    %v1889 = vunpack.c.l.b16 %v1813
    %v1890 = vunpack.c.h.b16 %v1813
    %v1891 = vunpack.c.l.b16 %v1814
    %v1892 = vunpack.c.h.b16 %v1814
    %v1893 = vunpack.c.l.b16 %v1815
    %v1894 = vunpack.c.h.b16 %v1815
    %v1895 = vunpack.c.l.b16 %v1816
    %v1896 = vunpack.c.h.b16 %v1816
    %v1897 = vunpack.c.l.b16 %v1817
    %v1898 = vunpack.c.h.b16 %v1817
    %v1899 = vunpack.c.l.b16 %v1818
    %v1900 = vunpack.c.h.b16 %v1818
    %v1901 = vunpack.c.l.b16 %v1819
    %v1902 = vunpack.c.h.b16 %v1819
    %v1903 = vunpack.c.l.b16 %v1820
    %v1904 = vunpack.c.h.b16 %v1820
    %v1905 = vunpack.c.l.b16 %v1821
    %v1906 = vunpack.c.h.b16 %v1821
    %v1907 = vunpack.c.l.b16 %v1822
    %v1908 = vunpack.c.h.b16 %v1822
    %v1909 = vunpack.c.l.b16 %v1823
    %v1910 = vunpack.c.h.b16 %v1823
    %v1911 = vunpack.c.l.b16 %v1824
    %v1912 = vunpack.c.h.b16 %v1824
    %v1913 = vunpack.c.l.b16 %v1825
    %v1914 = vunpack.c.h.b16 %v1825
    %v1915 = vunpack.c.l.b16 %v1826
    %v1916 = vunpack.c.h.b16 %v1826
    %v1917 = vunpack.c.l.b16 %v1827
    %v1918 = vunpack.c.h.b16 %v1827
    %v1919 = vunpack.c.l.b16 %v1828
    %v1920 = vunpack.c.h.b16 %v1828
    %v1921 = vunpack.c.l.b16 %v1829
    %v1922 = vunpack.c.h.b16 %v1829
    %v1923 = vunpack.c.l.b16 %v1830
    %v1924 = vunpack.c.h.b16 %v1830
    %v1925 = vunpack.c.l.b16 %v1831
    %v1926 = vunpack.c.h.b16 %v1831
    %v1927 = vunpack.c.l.b16 %v1832
    %v1928 = vunpack.c.h.b16 %v1832
    %v1929 = vunpack.c.l.b16 %v1833
    %v1930 = vunpack.c.h.b16 %v1833
    %v1931 = vunpack.c.l.b16 %v1834
    %v1932 = vunpack.c.h.b16 %v1834
    %v1933 = vunpack.c.l.b16 %v1835
    %v1934 = vunpack.c.h.b16 %v1835
    %v1935 = vpack.c.b16 %v1875, %v1871
    %v1936 = vpack.c.b16 %v1876, %v1872
    %v1937 = vpack.c.b16 %v1877, %v1873
    %v1938 = vpack.c.b16 %v1878, %v1874
    %v1939 = vpack.c.b16 %v1883, %v1879
    %v1940 = vpack.c.b16 %v1884, %v1880
    %v1941 = vpack.c.b16 %v1885, %v1881
    %v1942 = vpack.c.b16 %v1886, %v1882
    %v1943 = vpack.c.b16 %v1891, %v1887
    %v1944 = vpack.c.b16 %v1892, %v1888
    %v1945 = vpack.c.b16 %v1893, %v1889
    %v1946 = vpack.c.b16 %v1894, %v1890
    %v1947 = vpack.c.b16 %v1899, %v1895
    %v1948 = vpack.c.b16 %v1900, %v1896
    %v1949 = vpack.c.b16 %v1901, %v1897
    %v1950 = vpack.c.b16 %v1902, %v1898
    %v1951 = vpack.c.b16 %v1907, %v1903
    %v1952 = vpack.c.b16 %v1908, %v1904
    %v1953 = vpack.c.b16 %v1909, %v1905
    %v1954 = vpack.c.b16 %v1910, %v1906
    %v1955 = vpack.c.b16 %v1915, %v1911
    %v1956 = vpack.c.b16 %v1916, %v1912
    %v1957 = vpack.c.b16 %v1917, %v1913
    %v1958 = vpack.c.b16 %v1918, %v1914
    %v1959 = vpack.c.b16 %v1923, %v1919
    %v1960 = vpack.c.b16 %v1924, %v1920
    %v1961 = vpack.c.b16 %v1925, %v1921
    %v1962 = vpack.c.b16 %v1926, %v1922
    %v1963 = vpack.c.b16 %v1931, %v1927
    %v1964 = vpack.c.b16 %v1932, %v1928
    %v1965 = vpack.c.b16 %v1933, %v1929
    %v1966 = vpack.c.b16 %v1934, %v1930
    %1999 = vmatprep.subr.bf16.mxu0 %v1936
    %2000 = vmatpush1.bf16.msra.mxu0 %v1935
    %2001 = vmatprep.subr.bf16.mxu0 %v1940
    %2002 = vmatpush1.bf16.msra.mxu0 %v1939
    %2003 = vmatprep.subr.bf16.mxu0 %v1944
    %2004 = vmatpush1.bf16.msra.mxu0 %v1943
    %2005 = vmatprep.subr.bf16.mxu0 %v1948
    %2006 = vmatpush1.bf16.msra.mxu0 %v1947
    %2007 = vmatprep.subr.bf16.mxu0 %v1952
    %2008 = vmatpush1.bf16.msra.mxu0 %v1951
    %2009 = vmatprep.subr.bf16.mxu0 %v1956
    %2010 = vmatpush1.bf16.msra.mxu0 %v1955
    %2011 = vmatprep.subr.bf16.mxu0 %v1960
    %2012 = vmatpush1.bf16.msra.mxu0 %v1959
    %2013 = vmatprep.subr.bf16.mxu0 %v1964
    %2014 = vmatpush1.bf16.msra.mxu0 %v1963
    %2015 = vmatprep.subr.bf16.mxu0 0
    %2016 = vmatpush1.bf16.msra.mxu0 0
    %2017 = vmatprep.subr.bf16.mxu0 0
    %2018 = vmatpush1.bf16.msra.mxu0 0
    %2019 = vmatprep.subr.bf16.mxu0 0
    %2020 = vmatpush1.bf16.msra.mxu0 0
    %2021 = vmatprep.subr.bf16.mxu0 0
    %2022 = vmatpush1.bf16.msra.mxu0 0
    %2023 = vmatprep.subr.bf16.mxu0 0
    %2024 = vmatpush1.bf16.msra.mxu0 0
    %2025 = vmatprep.subr.bf16.mxu0 0
    %2026 = vmatpush1.bf16.msra.mxu0 0
    %2027 = vmatprep.subr.bf16.mxu0 0
    %2028 = vmatpush1.bf16.msra.mxu0 0
    %2029 = vmatprep.subr.bf16.mxu0 0
    %2030 = vmatpush1.bf16.msra.mxu0 0
    %2031 = vmatprep.mubr.bf16.mxu0 0
    %2032 = vmatmul.mubr.bf16.gmra.mrb[0].mxu0 %v1837
    %v2033 = vpop.f32.mrb[0].mxu0
    %v2034 = vadd.f32 0.0, %v2033
    %v2035 = vpop.f32.mrb[0].mxu0
    %v2036 = vadd.f32 0.0, %v2035
    %v2037 = vpop.f32.mrb[0].mxu0
    %v2038 = vpop.f32.mrb[0].mxu0
    %2039 = vdwg.mxu0
    %2040 = vmatprep.subr.bf16.mxu0 %v1938
    %2041 = vmatpush1.bf16.msra.mxu0 %v1937
    %2042 = vmatprep.subr.bf16.mxu0 %v1942
    %2043 = vmatpush1.bf16.msra.mxu0 %v1941
    %2044 = vmatprep.subr.bf16.mxu0 %v1946
    %2045 = vmatpush1.bf16.msra.mxu0 %v1945
    %2046 = vmatprep.subr.bf16.mxu0 %v1950
    %2047 = vmatpush1.bf16.msra.mxu0 %v1949
    %2048 = vmatprep.subr.bf16.mxu0 %v1954
    %2049 = vmatpush1.bf16.msra.mxu0 %v1953
    %2050 = vmatprep.subr.bf16.mxu0 %v1958
    %2051 = vmatpush1.bf16.msra.mxu0 %v1957
    %2052 = vmatprep.subr.bf16.mxu0 %v1962
    %2053 = vmatpush1.bf16.msra.mxu0 %v1961
    %2054 = vmatprep.subr.bf16.mxu0 %v1966
    %2055 = vmatpush1.bf16.msra.mxu0 %v1965
    %2056 = vmatprep.subr.bf16.mxu0 0
    %2057 = vmatpush1.bf16.msra.mxu0 0
    %2058 = vmatprep.subr.bf16.mxu0 0
    %2059 = vmatpush1.bf16.msra.mxu0 0
    %2060 = vmatprep.subr.bf16.mxu0 0
    %2061 = vmatpush1.bf16.msra.mxu0 0
    %2062 = vmatprep.subr.bf16.mxu0 0
    %2063 = vmatpush1.bf16.msra.mxu0 0
    %2064 = vmatprep.subr.bf16.mxu0 0
    %2065 = vmatpush1.bf16.msra.mxu0 0
    %2066 = vmatprep.subr.bf16.mxu0 0
    %2067 = vmatpush1.bf16.msra.mxu0 0
    %2068 = vmatprep.subr.bf16.mxu0 0
    %2069 = vmatpush1.bf16.msra.mxu0 0
    %2070 = vmatprep.subr.bf16.mxu0 0
    %2071 = vmatpush1.bf16.msra.mxu0 0
    %2072 = vmatprep.mubr.bf16.mxu0 0
    %2073 = vmatmul.mubr.bf16.gmra.mrb[0].mxu0 %v1837
    %v2074 = vpop.f32.mrb[0].mxu0
    %v2075 = vadd.f32 0.0, %v2074
    %v2076 = vpop.f32.mrb[0].mxu0
    %v2077 = vadd.f32 0.0, %v2076
    %v2078 = vpop.f32.mrb[0].mxu0
    %v2079 = vpop.f32.mrb[0].mxu0
    %2080 = vdwg.mxu0
    %v2085 = vrot.slane %v2034, 2
    %v2086 = vrot.slane %v2036, 2
    %v2087 = vrot.slane %v2075, 2
    %v2088 = vrot.slane %v2077, 2
    %v2093 = vadd.f32 %v1799, %v2085
    %v2094 = vadd.f32 %v1800, %v2086
    %v2095 = vadd.f32 %v1801, %v2087
    %v2096 = vadd.f32 %v1802, %v2088
    %v2097 = vxor.u32 %v2093, 2147483648
    %v2098 = vmul.f32 %v2097, 1.442695
    %v2099 = vpow.pop %v2098
    %v2100 = vadd.f32 %v2099, 1.0
    %v2101 = vrcp.pop %v2100
    %v2102 = vmul.f32 1.0, %v2101
    %v2103 = vxor.u32 %v2094, 2147483648
    %v2104 = vmul.f32 %v2103, 1.442695
    %v2105 = vpow.pop %v2104
    %v2106 = vadd.f32 %v2105, 1.0
    %v2107 = vrcp.pop %v2106
    %v2108 = vmul.f32 1.0, %v2107
    %v2109 = vtanh.pop %v2095
    %v2110 = vxor.u32 %v2096, 2147483648
    %v2111 = vmul.f32 %v2110, 1.442695
    %v2112 = vpow.pop %v2111
    %v2113 = vadd.f32 %v2112, 1.0
    %v2114 = vrcp.pop %v2113
    %v2115 = vmul.f32 1.0, %v2114
    %v2117 = vrot.slane %v1774, 6
    %v2119 = vmul.f32 %v2108, %v2117
    %v2120 = vmul.f32 %v2102, %v2109
    %v2121 = vadd.f32 %v2119, %v2120
    %v2122 = vtanh.pop %v2121
    %v2123 = vmul.f32 %v2115, %v2122
    %2124 = vst [vmem:[#allocation4] sm:$0xc0] %v2123
    %2125 = vst [vmem:[#allocation5 + $0x2] sm:$0xc0] %v2123
    %v2126 = vld [vmem:[#allocation2 + $0x40] sm:$0x3]
    %v2127 = vld [vmem:[#allocation2 + $0x48] sm:$0x3]
    %v2128 = vld [vmem:[#allocation2 + $0x50] sm:$0x3]
    %v2129 = vld [vmem:[#allocation2 + $0x58] sm:$0x3]
    %v2130 = vld [vmem:[#allocation2 + $0x20] sm:$0xc0]
    %v2131 = vld [vmem:[#allocation2 + $0x28] sm:$0xc0]
    %v2132 = vld [vmem:[#allocation2 + $0x30] sm:$0xc0]
    %v2133 = vld [vmem:[#allocation2 + $0x38] sm:$0xc0]
    %v2138 = vrot.slane %v2130, 6
    %v2139 = vrot.slane %v2131, 6
    %v2140 = vrot.slane %v2132, 6
    %v2141 = vrot.slane %v2133, 6
    %v2146 = vadd.f32 %v2126, %v2138
    %v2147 = vadd.f32 %v2127, %v2139
    %v2148 = vadd.f32 %v2128, %v2140
    %v2149 = vadd.f32 %v2129, %v2141
    %v2150 = vpack.c.bf16 %v2123, %v2123
    %v2151 = vld [vmem:[#allocation10] sm:$0xff]
    %v2152 = vld [vmem:[#allocation10 + $0x8] sm:$0xff]
    %v2153 = vld [vmem:[#allocation10 + $0x10] sm:$0xff]
    %v2154 = vld [vmem:[#allocation10 + $0x18] sm:$0xff]
    %v2155 = vld [vmem:[#allocation10 + $0x20] sm:$0xff]
    %v2156 = vld [vmem:[#allocation10 + $0x28] sm:$0xff]
    %v2157 = vld [vmem:[#allocation10 + $0x30] sm:$0xff]
    %v2158 = vld [vmem:[#allocation10 + $0x38] sm:$0xff]
    %v2159 = vld [vmem:[#allocation10 + $0x40] sm:$0xff]
    %v2160 = vld [vmem:[#allocation10 + $0x48] sm:$0xff]
    %v2161 = vld [vmem:[#allocation10 + $0x50] sm:$0xff]
    %v2162 = vld [vmem:[#allocation10 + $0x58] sm:$0xff]
    %v2163 = vld [vmem:[#allocation10 + $0x60] sm:$0xff]
    %v2164 = vld [vmem:[#allocation10 + $0x68] sm:$0xff]
    %v2165 = vld [vmem:[#allocation10 + $0x70] sm:$0xff]
    %v2166 = vld [vmem:[#allocation10 + $0x78] sm:$0xff]
    %v2167 = vld [vmem:[#allocation10 + $0x80] sm:$0xff]
    %v2168 = vld [vmem:[#allocation10 + $0x88] sm:$0xff]
    %v2169 = vld [vmem:[#allocation10 + $0x90] sm:$0xff]
    %v2170 = vld [vmem:[#allocation10 + $0x98] sm:$0xff]
    %v2171 = vld [vmem:[#allocation10 + $0xa0] sm:$0xff]
    %v2172 = vld [vmem:[#allocation10 + $0xa8] sm:$0xff]
    %v2173 = vld [vmem:[#allocation10 + $0xb0] sm:$0xff]
    %v2174 = vld [vmem:[#allocation10 + $0xb8] sm:$0xff]
    %v2175 = vld [vmem:[#allocation10 + $0xc0] sm:$0xff]
    %v2176 = vld [vmem:[#allocation10 + $0xc8] sm:$0xff]
    %v2177 = vld [vmem:[#allocation10 + $0xd0] sm:$0xff]
    %v2178 = vld [vmem:[#allocation10 + $0xd8] sm:$0xff]
    %v2179 = vld [vmem:[#allocation10 + $0xe0] sm:$0xff]
    %v2180 = vld [vmem:[#allocation10 + $0xe8] sm:$0xff]
    %v2181 = vld [vmem:[#allocation10 + $0xf0] sm:$0xff]
    %v2182 = vld [vmem:[#allocation10 + $0xf8] sm:$0xff]
    %v2184 = vrot.slane %v2150, 3
    %v2218 = vunpack.c.l.b16 %v2151
    %v2219 = vunpack.c.h.b16 %v2151
    %v2220 = vunpack.c.l.b16 %v2152
    %v2221 = vunpack.c.h.b16 %v2152
    %v2222 = vunpack.c.l.b16 %v2153
    %v2223 = vunpack.c.h.b16 %v2153
    %v2224 = vunpack.c.l.b16 %v2154
    %v2225 = vunpack.c.h.b16 %v2154
    %v2226 = vunpack.c.l.b16 %v2155
    %v2227 = vunpack.c.h.b16 %v2155
    %v2228 = vunpack.c.l.b16 %v2156
    %v2229 = vunpack.c.h.b16 %v2156
    %v2230 = vunpack.c.l.b16 %v2157
    %v2231 = vunpack.c.h.b16 %v2157
    %v2232 = vunpack.c.l.b16 %v2158
    %v2233 = vunpack.c.h.b16 %v2158
    %v2234 = vunpack.c.l.b16 %v2159
    %v2235 = vunpack.c.h.b16 %v2159
    %v2236 = vunpack.c.l.b16 %v2160
    %v2237 = vunpack.c.h.b16 %v2160
    %v2238 = vunpack.c.l.b16 %v2161
    %v2239 = vunpack.c.h.b16 %v2161
    %v2240 = vunpack.c.l.b16 %v2162
    %v2241 = vunpack.c.h.b16 %v2162
    %v2242 = vunpack.c.l.b16 %v2163
    %v2243 = vunpack.c.h.b16 %v2163
    %v2244 = vunpack.c.l.b16 %v2164
    %v2245 = vunpack.c.h.b16 %v2164
    %v2246 = vunpack.c.l.b16 %v2165
    %v2247 = vunpack.c.h.b16 %v2165
    %v2248 = vunpack.c.l.b16 %v2166
    %v2249 = vunpack.c.h.b16 %v2166
    %v2250 = vunpack.c.l.b16 %v2167
    %v2251 = vunpack.c.h.b16 %v2167
    %v2252 = vunpack.c.l.b16 %v2168
    %v2253 = vunpack.c.h.b16 %v2168
    %v2254 = vunpack.c.l.b16 %v2169
    %v2255 = vunpack.c.h.b16 %v2169
    %v2256 = vunpack.c.l.b16 %v2170
    %v2257 = vunpack.c.h.b16 %v2170
    %v2258 = vunpack.c.l.b16 %v2171
    %v2259 = vunpack.c.h.b16 %v2171
    %v2260 = vunpack.c.l.b16 %v2172
    %v2261 = vunpack.c.h.b16 %v2172
    %v2262 = vunpack.c.l.b16 %v2173
    %v2263 = vunpack.c.h.b16 %v2173
    %v2264 = vunpack.c.l.b16 %v2174
    %v2265 = vunpack.c.h.b16 %v2174
    %v2266 = vunpack.c.l.b16 %v2175
    %v2267 = vunpack.c.h.b16 %v2175
    %v2268 = vunpack.c.l.b16 %v2176
    %v2269 = vunpack.c.h.b16 %v2176
    %v2270 = vunpack.c.l.b16 %v2177
    %v2271 = vunpack.c.h.b16 %v2177
    %v2272 = vunpack.c.l.b16 %v2178
    %v2273 = vunpack.c.h.b16 %v2178
    %v2274 = vunpack.c.l.b16 %v2179
    %v2275 = vunpack.c.h.b16 %v2179
    %v2276 = vunpack.c.l.b16 %v2180
    %v2277 = vunpack.c.h.b16 %v2180
    %v2278 = vunpack.c.l.b16 %v2181
    %v2279 = vunpack.c.h.b16 %v2181
    %v2280 = vunpack.c.l.b16 %v2182
    %v2281 = vunpack.c.h.b16 %v2182
    %v2282 = vpack.c.b16 %v2222, %v2218
    %v2283 = vpack.c.b16 %v2223, %v2219
    %v2284 = vpack.c.b16 %v2224, %v2220
    %v2285 = vpack.c.b16 %v2225, %v2221
    %v2286 = vpack.c.b16 %v2230, %v2226
    %v2287 = vpack.c.b16 %v2231, %v2227
    %v2288 = vpack.c.b16 %v2232, %v2228
    %v2289 = vpack.c.b16 %v2233, %v2229
    %v2290 = vpack.c.b16 %v2238, %v2234
    %v2291 = vpack.c.b16 %v2239, %v2235
    %v2292 = vpack.c.b16 %v2240, %v2236
    %v2293 = vpack.c.b16 %v2241, %v2237
    %v2294 = vpack.c.b16 %v2246, %v2242
    %v2295 = vpack.c.b16 %v2247, %v2243
    %v2296 = vpack.c.b16 %v2248, %v2244
    %v2297 = vpack.c.b16 %v2249, %v2245
    %v2298 = vpack.c.b16 %v2254, %v2250
    %v2299 = vpack.c.b16 %v2255, %v2251
    %v2300 = vpack.c.b16 %v2256, %v2252
    %v2301 = vpack.c.b16 %v2257, %v2253
    %v2302 = vpack.c.b16 %v2262, %v2258
    %v2303 = vpack.c.b16 %v2263, %v2259
    %v2304 = vpack.c.b16 %v2264, %v2260
    %v2305 = vpack.c.b16 %v2265, %v2261
    %v2306 = vpack.c.b16 %v2270, %v2266
    %v2307 = vpack.c.b16 %v2271, %v2267
    %v2308 = vpack.c.b16 %v2272, %v2268
    %v2309 = vpack.c.b16 %v2273, %v2269
    %v2310 = vpack.c.b16 %v2278, %v2274
    %v2311 = vpack.c.b16 %v2279, %v2275
    %v2312 = vpack.c.b16 %v2280, %v2276
    %v2313 = vpack.c.b16 %v2281, %v2277
    %2346 = vmatprep.subr.bf16.mxu0 %v2283
    %2347 = vmatpush1.bf16.msra.mxu0 %v2282
    %2348 = vmatprep.subr.bf16.mxu0 %v2287
    %2349 = vmatpush1.bf16.msra.mxu0 %v2286
    %2350 = vmatprep.subr.bf16.mxu0 %v2291
    %2351 = vmatpush1.bf16.msra.mxu0 %v2290
    %2352 = vmatprep.subr.bf16.mxu0 %v2295
    %2353 = vmatpush1.bf16.msra.mxu0 %v2294
    %2354 = vmatprep.subr.bf16.mxu0 %v2299
    %2355 = vmatpush1.bf16.msra.mxu0 %v2298
    %2356 = vmatprep.subr.bf16.mxu0 %v2303
    %2357 = vmatpush1.bf16.msra.mxu0 %v2302
    %2358 = vmatprep.subr.bf16.mxu0 %v2307
    %2359 = vmatpush1.bf16.msra.mxu0 %v2306
    %2360 = vmatprep.subr.bf16.mxu0 %v2311
    %2361 = vmatpush1.bf16.msra.mxu0 %v2310
    %2362 = vmatprep.subr.bf16.mxu0 0
    %2363 = vmatpush1.bf16.msra.mxu0 0
    %2364 = vmatprep.subr.bf16.mxu0 0
    %2365 = vmatpush1.bf16.msra.mxu0 0
    %2366 = vmatprep.subr.bf16.mxu0 0
    %2367 = vmatpush1.bf16.msra.mxu0 0
    %2368 = vmatprep.subr.bf16.mxu0 0
    %2369 = vmatpush1.bf16.msra.mxu0 0
    %2370 = vmatprep.subr.bf16.mxu0 0
    %2371 = vmatpush1.bf16.msra.mxu0 0
    %2372 = vmatprep.subr.bf16.mxu0 0
    %2373 = vmatpush1.bf16.msra.mxu0 0
    %2374 = vmatprep.subr.bf16.mxu0 0
    %2375 = vmatpush1.bf16.msra.mxu0 0
    %2376 = vmatprep.subr.bf16.mxu0 0
    %2377 = vmatpush1.bf16.msra.mxu0 0
    %2378 = vmatprep.mubr.bf16.mxu0 0
    %2379 = vmatmul.mubr.bf16.gmra.mrb[0].mxu0 %v2184
    %v2380 = vpop.f32.mrb[0].mxu0
    %v2381 = vadd.f32 0.0, %v2380
    %v2382 = vpop.f32.mrb[0].mxu0
    %v2383 = vadd.f32 0.0, %v2382
    %v2384 = vpop.f32.mrb[0].mxu0
    %v2385 = vpop.f32.mrb[0].mxu0
    %2386 = vdwg.mxu0
    %2387 = vmatprep.subr.bf16.mxu0 %v2285
    %2388 = vmatpush1.bf16.msra.mxu0 %v2284
    %2389 = vmatprep.subr.bf16.mxu0 %v2289
    %2390 = vmatpush1.bf16.msra.mxu0 %v2288
    %2391 = vmatprep.subr.bf16.mxu0 %v2293
    %2392 = vmatpush1.bf16.msra.mxu0 %v2292
    %2393 = vmatprep.subr.bf16.mxu0 %v2297
    %2394 = vmatpush1.bf16.msra.mxu0 %v2296
    %2395 = vmatprep.subr.bf16.mxu0 %v2301
    %2396 = vmatpush1.bf16.msra.mxu0 %v2300
    %2397 = vmatprep.subr.bf16.mxu0 %v2305
    %2398 = vmatpush1.bf16.msra.mxu0 %v2304
    %2399 = vmatprep.subr.bf16.mxu0 %v2309
    %2400 = vmatpush1.bf16.msra.mxu0 %v2308
    %2401 = vmatprep.subr.bf16.mxu0 %v2313
    %2402 = vmatpush1.bf16.msra.mxu0 %v2312
    %2403 = vmatprep.subr.bf16.mxu0 0
    %2404 = vmatpush1.bf16.msra.mxu0 0
    %2405 = vmatprep.subr.bf16.mxu0 0
    %2406 = vmatpush1.bf16.msra.mxu0 0
    %2407 = vmatprep.subr.bf16.mxu0 0
    %2408 = vmatpush1.bf16.msra.mxu0 0
    %2409 = vmatprep.subr.bf16.mxu0 0
    %2410 = vmatpush1.bf16.msra.mxu0 0
    %2411 = vmatprep.subr.bf16.mxu0 0
    %2412 = vmatpush1.bf16.msra.mxu0 0
    %2413 = vmatprep.subr.bf16.mxu0 0
    %2414 = vmatpush1.bf16.msra.mxu0 0
    %2415 = vmatprep.subr.bf16.mxu0 0
    %2416 = vmatpush1.bf16.msra.mxu0 0
    %2417 = vmatprep.subr.bf16.mxu0 0
    %2418 = vmatpush1.bf16.msra.mxu0 0
    %2419 = vmatprep.mubr.bf16.mxu0 0
    %2420 = vmatmul.mubr.bf16.gmra.mrb[0].mxu0 %v2184
    %v2421 = vpop.f32.mrb[0].mxu0
    %v2422 = vadd.f32 0.0, %v2421
    %v2423 = vpop.f32.mrb[0].mxu0
    %v2424 = vadd.f32 0.0, %v2423
    %v2425 = vpop.f32.mrb[0].mxu0
    %v2426 = vpop.f32.mrb[0].mxu0
    %2427 = vdwg.mxu0
    %v2428 = vadd.f32 %v2146, %v2381
    %v2429 = vadd.f32 %v2147, %v2383
    %v2430 = vadd.f32 %v2148, %v2422
    %v2431 = vadd.f32 %v2149, %v2424
    %v2432 = vxor.u32 %v2428, 2147483648
    %v2433 = vmul.f32 %v2432, 1.442695
    %v2434 = vpow.pop %v2433
    %v2435 = vadd.f32 %v2434, 1.0
    %v2436 = vrcp.pop %v2435
    %v2437 = vmul.f32 1.0, %v2436
    %v2438 = vxor.u32 %v2429, 2147483648
    %v2439 = vmul.f32 %v2438, 1.442695
    %v2440 = vpow.pop %v2439
    %v2441 = vadd.f32 %v2440, 1.0
    %v2442 = vrcp.pop %v2441
    %v2443 = vmul.f32 1.0, %v2442
    %v2444 = vtanh.pop %v2430
    %v2445 = vxor.u32 %v2431, 2147483648
    %v2446 = vmul.f32 %v2445, 1.442695
    %v2447 = vpow.pop %v2446
    %v2448 = vadd.f32 %v2447, 1.0
    %v2449 = vrcp.pop %v2448
    %v2450 = vmul.f32 1.0, %v2449
    %v2452 = vrot.slane %v2121, 6
    %v2454 = vmul.f32 %v2443, %v2452
    %v2455 = vmul.f32 %v2437, %v2444
    %v2456 = vadd.f32 %v2454, %v2455
    %v2457 = vtanh.pop %v2456
    %v2458 = vmul.f32 %v2450, %v2457
    %2459 = vst [vmem:[#allocation4 + $0x8] sm:$0x3] %v2458
    %2460 = vst [vmem:[#allocation5 + $0x6] sm:$0x3] %v2458
    %v2461 = vld [vmem:[#allocation2 + $0x40] sm:$0xc]
    %v2462 = vld [vmem:[#allocation2 + $0x48] sm:$0xc]
    %v2463 = vld [vmem:[#allocation2 + $0x50] sm:$0xc]
    %v2464 = vld [vmem:[#allocation2 + $0x58] sm:$0xc]
    %v2465 = vld [vmem:[#allocation2 + $0x20] sm:$0x30]
    %v2466 = vld [vmem:[#allocation2 + $0x28] sm:$0x30]
    %v2467 = vld [vmem:[#allocation2 + $0x30] sm:$0x30]
    %v2468 = vld [vmem:[#allocation2 + $0x38] sm:$0x30]
    %v2473 = vrot.slane %v2465, 2
    %v2474 = vrot.slane %v2466, 2
    %v2475 = vrot.slane %v2467, 2
    %v2476 = vrot.slane %v2468, 2
    %v2481 = vadd.f32 %v2461, %v2473
    %v2482 = vadd.f32 %v2462, %v2474
    %v2483 = vadd.f32 %v2463, %v2475
    %v2484 = vadd.f32 %v2464, %v2476
    %v2485 = vpack.c.bf16 %v2458, %v2458
    %v2486 = vld [vmem:[#allocation10] sm:$0xff]
    %v2487 = vld [vmem:[#allocation10 + $0x8] sm:$0xff]
    %v2488 = vld [vmem:[#allocation10 + $0x10] sm:$0xff]
    %v2489 = vld [vmem:[#allocation10 + $0x18] sm:$0xff]
    %v2490 = vld [vmem:[#allocation10 + $0x20] sm:$0xff]
    %v2491 = vld [vmem:[#allocation10 + $0x28] sm:$0xff]
    %v2492 = vld [vmem:[#allocation10 + $0x30] sm:$0xff]
    %v2493 = vld [vmem:[#allocation10 + $0x38] sm:$0xff]
    %v2494 = vld [vmem:[#allocation10 + $0x40] sm:$0xff]
    %v2495 = vld [vmem:[#allocation10 + $0x48] sm:$0xff]
    %v2496 = vld [vmem:[#allocation10 + $0x50] sm:$0xff]
    %v2497 = vld [vmem:[#allocation10 + $0x58] sm:$0xff]
    %v2498 = vld [vmem:[#allocation10 + $0x60] sm:$0xff]
    %v2499 = vld [vmem:[#allocation10 + $0x68] sm:$0xff]
    %v2500 = vld [vmem:[#allocation10 + $0x70] sm:$0xff]
    %v2501 = vld [vmem:[#allocation10 + $0x78] sm:$0xff]
    %v2502 = vld [vmem:[#allocation10 + $0x80] sm:$0xff]
    %v2503 = vld [vmem:[#allocation10 + $0x88] sm:$0xff]
    %v2504 = vld [vmem:[#allocation10 + $0x90] sm:$0xff]
    %v2505 = vld [vmem:[#allocation10 + $0x98] sm:$0xff]
    %v2506 = vld [vmem:[#allocation10 + $0xa0] sm:$0xff]
    %v2507 = vld [vmem:[#allocation10 + $0xa8] sm:$0xff]
    %v2508 = vld [vmem:[#allocation10 + $0xb0] sm:$0xff]
    %v2509 = vld [vmem:[#allocation10 + $0xb8] sm:$0xff]
    %v2510 = vld [vmem:[#allocation10 + $0xc0] sm:$0xff]
    %v2511 = vld [vmem:[#allocation10 + $0xc8] sm:$0xff]
    %v2512 = vld [vmem:[#allocation10 + $0xd0] sm:$0xff]
    %v2513 = vld [vmem:[#allocation10 + $0xd8] sm:$0xff]
    %v2514 = vld [vmem:[#allocation10 + $0xe0] sm:$0xff]
    %v2515 = vld [vmem:[#allocation10 + $0xe8] sm:$0xff]
    %v2516 = vld [vmem:[#allocation10 + $0xf0] sm:$0xff]
    %v2517 = vld [vmem:[#allocation10 + $0xf8] sm:$0xff]
    %v2550 = vunpack.c.l.b16 %v2486
    %v2551 = vunpack.c.h.b16 %v2486
    %v2552 = vunpack.c.l.b16 %v2487
    %v2553 = vunpack.c.h.b16 %v2487
    %v2554 = vunpack.c.l.b16 %v2488
    %v2555 = vunpack.c.h.b16 %v2488
    %v2556 = vunpack.c.l.b16 %v2489
    %v2557 = vunpack.c.h.b16 %v2489
    %v2558 = vunpack.c.l.b16 %v2490
    %v2559 = vunpack.c.h.b16 %v2490
    %v2560 = vunpack.c.l.b16 %v2491
    %v2561 = vunpack.c.h.b16 %v2491
    %v2562 = vunpack.c.l.b16 %v2492
    %v2563 = vunpack.c.h.b16 %v2492
    %v2564 = vunpack.c.l.b16 %v2493
    %v2565 = vunpack.c.h.b16 %v2493
    %v2566 = vunpack.c.l.b16 %v2494
    %v2567 = vunpack.c.h.b16 %v2494
    %v2568 = vunpack.c.l.b16 %v2495
    %v2569 = vunpack.c.h.b16 %v2495
    %v2570 = vunpack.c.l.b16 %v2496
    %v2571 = vunpack.c.h.b16 %v2496
    %v2572 = vunpack.c.l.b16 %v2497
    %v2573 = vunpack.c.h.b16 %v2497
    %v2574 = vunpack.c.l.b16 %v2498
    %v2575 = vunpack.c.h.b16 %v2498
    %v2576 = vunpack.c.l.b16 %v2499
    %v2577 = vunpack.c.h.b16 %v2499
    %v2578 = vunpack.c.l.b16 %v2500
    %v2579 = vunpack.c.h.b16 %v2500
    %v2580 = vunpack.c.l.b16 %v2501
    %v2581 = vunpack.c.h.b16 %v2501
    %v2582 = vunpack.c.l.b16 %v2502
    %v2583 = vunpack.c.h.b16 %v2502
    %v2584 = vunpack.c.l.b16 %v2503
    %v2585 = vunpack.c.h.b16 %v2503
    %v2586 = vunpack.c.l.b16 %v2504
    %v2587 = vunpack.c.h.b16 %v2504
    %v2588 = vunpack.c.l.b16 %v2505
    %v2589 = vunpack.c.h.b16 %v2505
    %v2590 = vunpack.c.l.b16 %v2506
    %v2591 = vunpack.c.h.b16 %v2506
    %v2592 = vunpack.c.l.b16 %v2507
    %v2593 = vunpack.c.h.b16 %v2507
    %v2594 = vunpack.c.l.b16 %v2508
    %v2595 = vunpack.c.h.b16 %v2508
    %v2596 = vunpack.c.l.b16 %v2509
    %v2597 = vunpack.c.h.b16 %v2509
    %v2598 = vunpack.c.l.b16 %v2510
    %v2599 = vunpack.c.h.b16 %v2510
    %v2600 = vunpack.c.l.b16 %v2511
    %v2601 = vunpack.c.h.b16 %v2511
    %v2602 = vunpack.c.l.b16 %v2512
    %v2603 = vunpack.c.h.b16 %v2512
    %v2604 = vunpack.c.l.b16 %v2513
    %v2605 = vunpack.c.h.b16 %v2513
    %v2606 = vunpack.c.l.b16 %v2514
    %v2607 = vunpack.c.h.b16 %v2514
    %v2608 = vunpack.c.l.b16 %v2515
    %v2609 = vunpack.c.h.b16 %v2515
    %v2610 = vunpack.c.l.b16 %v2516
    %v2611 = vunpack.c.h.b16 %v2516
    %v2612 = vunpack.c.l.b16 %v2517
    %v2613 = vunpack.c.h.b16 %v2517
    %v2614 = vpack.c.b16 %v2554, %v2550
    %v2615 = vpack.c.b16 %v2555, %v2551
    %v2616 = vpack.c.b16 %v2556, %v2552
    %v2617 = vpack.c.b16 %v2557, %v2553
    %v2618 = vpack.c.b16 %v2562, %v2558
    %v2619 = vpack.c.b16 %v2563, %v2559
    %v2620 = vpack.c.b16 %v2564, %v2560
    %v2621 = vpack.c.b16 %v2565, %v2561
    %v2622 = vpack.c.b16 %v2570, %v2566
    %v2623 = vpack.c.b16 %v2571, %v2567
    %v2624 = vpack.c.b16 %v2572, %v2568
    %v2625 = vpack.c.b16 %v2573, %v2569
    %v2626 = vpack.c.b16 %v2578, %v2574
    %v2627 = vpack.c.b16 %v2579, %v2575
    %v2628 = vpack.c.b16 %v2580, %v2576
    %v2629 = vpack.c.b16 %v2581, %v2577
    %v2630 = vpack.c.b16 %v2586, %v2582
    %v2631 = vpack.c.b16 %v2587, %v2583
    %v2632 = vpack.c.b16 %v2588, %v2584
    %v2633 = vpack.c.b16 %v2589, %v2585
    %v2634 = vpack.c.b16 %v2594, %v2590
    %v2635 = vpack.c.b16 %v2595, %v2591
    %v2636 = vpack.c.b16 %v2596, %v2592
    %v2637 = vpack.c.b16 %v2597, %v2593
    %v2638 = vpack.c.b16 %v2602, %v2598
    %v2639 = vpack.c.b16 %v2603, %v2599
    %v2640 = vpack.c.b16 %v2604, %v2600
    %v2641 = vpack.c.b16 %v2605, %v2601
    %v2642 = vpack.c.b16 %v2610, %v2606
    %v2643 = vpack.c.b16 %v2611, %v2607
    %v2644 = vpack.c.b16 %v2612, %v2608
    %v2645 = vpack.c.b16 %v2613, %v2609
    %2678 = vmatprep.subr.bf16.mxu0 %v2615
    %2679 = vmatpush1.bf16.msra.mxu0 %v2614
    %2680 = vmatprep.subr.bf16.mxu0 %v2619
    %2681 = vmatpush1.bf16.msra.mxu0 %v2618
    %2682 = vmatprep.subr.bf16.mxu0 %v2623
    %2683 = vmatpush1.bf16.msra.mxu0 %v2622
    %2684 = vmatprep.subr.bf16.mxu0 %v2627
    %2685 = vmatpush1.bf16.msra.mxu0 %v2626
    %2686 = vmatprep.subr.bf16.mxu0 %v2631
    %2687 = vmatpush1.bf16.msra.mxu0 %v2630
    %2688 = vmatprep.subr.bf16.mxu0 %v2635
    %2689 = vmatpush1.bf16.msra.mxu0 %v2634
    %2690 = vmatprep.subr.bf16.mxu0 %v2639
    %2691 = vmatpush1.bf16.msra.mxu0 %v2638
    %2692 = vmatprep.subr.bf16.mxu0 %v2643
    %2693 = vmatpush1.bf16.msra.mxu0 %v2642
    %2694 = vmatprep.subr.bf16.mxu0 0
    %2695 = vmatpush1.bf16.msra.mxu0 0
    %2696 = vmatprep.subr.bf16.mxu0 0
    %2697 = vmatpush1.bf16.msra.mxu0 0
    %2698 = vmatprep.subr.bf16.mxu0 0
    %2699 = vmatpush1.bf16.msra.mxu0 0
    %2700 = vmatprep.subr.bf16.mxu0 0
    %2701 = vmatpush1.bf16.msra.mxu0 0
    %2702 = vmatprep.subr.bf16.mxu0 0
    %2703 = vmatpush1.bf16.msra.mxu0 0
    %2704 = vmatprep.subr.bf16.mxu0 0
    %2705 = vmatpush1.bf16.msra.mxu0 0
    %2706 = vmatprep.subr.bf16.mxu0 0
    %2707 = vmatpush1.bf16.msra.mxu0 0
    %2708 = vmatprep.subr.bf16.mxu0 0
    %2709 = vmatpush1.bf16.msra.mxu0 0
    %2710 = vmatprep.mubr.bf16.mxu0 0
    %2711 = vmatmul.mubr.bf16.gmra.mrb[0].mxu0 %v2485
    %v2712 = vpop.f32.mrb[0].mxu0
    %v2713 = vadd.f32 0.0, %v2712
    %v2714 = vpop.f32.mrb[0].mxu0
    %v2715 = vadd.f32 0.0, %v2714
    %v2716 = vpop.f32.mrb[0].mxu0
    %v2717 = vpop.f32.mrb[0].mxu0
    %2718 = vdwg.mxu0
    %2719 = vmatprep.subr.bf16.mxu0 %v2617
    %2720 = vmatpush1.bf16.msra.mxu0 %v2616
    %2721 = vmatprep.subr.bf16.mxu0 %v2621
    %2722 = vmatpush1.bf16.msra.mxu0 %v2620
    %2723 = vmatprep.subr.bf16.mxu0 %v2625
    %2724 = vmatpush1.bf16.msra.mxu0 %v2624
    %2725 = vmatprep.subr.bf16.mxu0 %v2629
    %2726 = vmatpush1.bf16.msra.mxu0 %v2628
    %2727 = vmatprep.subr.bf16.mxu0 %v2633
    %2728 = vmatpush1.bf16.msra.mxu0 %v2632
    %2729 = vmatprep.subr.bf16.mxu0 %v2637
    %2730 = vmatpush1.bf16.msra.mxu0 %v2636
    %2731 = vmatprep.subr.bf16.mxu0 %v2641
    %2732 = vmatpush1.bf16.msra.mxu0 %v2640
    %2733 = vmatprep.subr.bf16.mxu0 %v2645
    %2734 = vmatpush1.bf16.msra.mxu0 %v2644
    %2735 = vmatprep.subr.bf16.mxu0 0
    %2736 = vmatpush1.bf16.msra.mxu0 0
    %2737 = vmatprep.subr.bf16.mxu0 0
    %2738 = vmatpush1.bf16.msra.mxu0 0
    %2739 = vmatprep.subr.bf16.mxu0 0
    %2740 = vmatpush1.bf16.msra.mxu0 0
    %2741 = vmatprep.subr.bf16.mxu0 0
    %2742 = vmatpush1.bf16.msra.mxu0 0
    %2743 = vmatprep.subr.bf16.mxu0 0
    %2744 = vmatpush1.bf16.msra.mxu0 0
    %2745 = vmatprep.subr.bf16.mxu0 0
    %2746 = vmatpush1.bf16.msra.mxu0 0
    %2747 = vmatprep.subr.bf16.mxu0 0
    %2748 = vmatpush1.bf16.msra.mxu0 0
    %2749 = vmatprep.subr.bf16.mxu0 0
    %2750 = vmatpush1.bf16.msra.mxu0 0
    %2751 = vmatprep.mubr.bf16.mxu0 0
    %2752 = vmatmul.mubr.bf16.gmra.mrb[0].mxu0 %v2485
    %v2753 = vpop.f32.mrb[0].mxu0
    %v2754 = vadd.f32 0.0, %v2753
    %v2755 = vpop.f32.mrb[0].mxu0
    %v2756 = vadd.f32 0.0, %v2755
    %v2757 = vpop.f32.mrb[0].mxu0
    %v2758 = vpop.f32.mrb[0].mxu0
    %2759 = vdwg.mxu0
    %v2764 = vrot.slane %v2713, 6
    %v2765 = vrot.slane %v2715, 6
    %v2766 = vrot.slane %v2754, 6
    %v2767 = vrot.slane %v2756, 6
    %v2772 = vadd.f32 %v2481, %v2764
    %v2773 = vadd.f32 %v2482, %v2765
    %v2774 = vadd.f32 %v2483, %v2766
    %v2775 = vadd.f32 %v2484, %v2767
    %v2776 = vxor.u32 %v2772, 2147483648
    %v2777 = vmul.f32 %v2776, 1.442695
    %v2778 = vpow.pop %v2777
    %v2779 = vadd.f32 %v2778, 1.0
    %v2780 = vrcp.pop %v2779
    %v2781 = vmul.f32 1.0, %v2780
    %v2782 = vxor.u32 %v2773, 2147483648
    %v2783 = vmul.f32 %v2782, 1.442695
    %v2784 = vpow.pop %v2783
    %v2785 = vadd.f32 %v2784, 1.0
    %v2786 = vrcp.pop %v2785
    %v2787 = vmul.f32 1.0, %v2786
    %v2788 = vtanh.pop %v2774
    %v2789 = vxor.u32 %v2775, 2147483648
    %v2790 = vmul.f32 %v2789, 1.442695
    %v2791 = vpow.pop %v2790
    %v2792 = vadd.f32 %v2791, 1.0
    %v2793 = vrcp.pop %v2792
    %v2794 = vmul.f32 1.0, %v2793
    %v2796 = vrot.slane %v2456, 6
    %v2798 = vmul.f32 %v2787, %v2796
    %v2799 = vmul.f32 %v2781, %v2788
    %v2800 = vadd.f32 %v2798, %v2799
    %v2801 = vtanh.pop %v2800
    %v2802 = vmul.f32 %v2794, %v2801
    %2803 = vst [vmem:[#allocation4 + $0x8] sm:$0xc] %v2802
    %2804 = vst [vmem:[#allocation5 + $0x2] sm:$0xc] %v2802
    %v2805 = vld [vmem:[#allocation2 + $0x40] sm:$0x30]
    %v2806 = vld [vmem:[#allocation2 + $0x48] sm:$0x30]
    %v2807 = vld [vmem:[#allocation2 + $0x50] sm:$0x30]
    %v2808 = vld [vmem:[#allocation2 + $0x58] sm:$0x30]
    %v2809 = vld [vmem:[#allocation2 + $0x20] sm:$0xc]
    %v2810 = vld [vmem:[#allocation2 + $0x28] sm:$0xc]
    %v2811 = vld [vmem:[#allocation2 + $0x30] sm:$0xc]
    %v2812 = vld [vmem:[#allocation2 + $0x38] sm:$0xc]
    %v2817 = vrot.slane %v2809, 6
    %v2818 = vrot.slane %v2810, 6
    %v2819 = vrot.slane %v2811, 6
    %v2820 = vrot.slane %v2812, 6
    %v2825 = vadd.f32 %v2805, %v2817
    %v2826 = vadd.f32 %v2806, %v2818
    %v2827 = vadd.f32 %v2807, %v2819
    %v2828 = vadd.f32 %v2808, %v2820
    %v2829 = vpack.c.bf16 %v2802, %v2802
    %v2830 = vld [vmem:[#allocation10] sm:$0xff]
    %v2831 = vld [vmem:[#allocation10 + $0x8] sm:$0xff]
    %v2832 = vld [vmem:[#allocation10 + $0x10] sm:$0xff]
    %v2833 = vld [vmem:[#allocation10 + $0x18] sm:$0xff]
    %v2834 = vld [vmem:[#allocation10 + $0x20] sm:$0xff]
    %v2835 = vld [vmem:[#allocation10 + $0x28] sm:$0xff]
    %v2836 = vld [vmem:[#allocation10 + $0x30] sm:$0xff]
    %v2837 = vld [vmem:[#allocation10 + $0x38] sm:$0xff]
    %v2838 = vld [vmem:[#allocation10 + $0x40] sm:$0xff]
    %v2839 = vld [vmem:[#allocation10 + $0x48] sm:$0xff]
    %v2840 = vld [vmem:[#allocation10 + $0x50] sm:$0xff]
    %v2841 = vld [vmem:[#allocation10 + $0x58] sm:$0xff]
    %v2842 = vld [vmem:[#allocation10 + $0x60] sm:$0xff]
    %v2843 = vld [vmem:[#allocation10 + $0x68] sm:$0xff]
    %v2844 = vld [vmem:[#allocation10 + $0x70] sm:$0xff]
    %v2845 = vld [vmem:[#allocation10 + $0x78] sm:$0xff]
    %v2846 = vld [vmem:[#allocation10 + $0x80] sm:$0xff]
    %v2847 = vld [vmem:[#allocation10 + $0x88] sm:$0xff]
    %v2848 = vld [vmem:[#allocation10 + $0x90] sm:$0xff]
    %v2849 = vld [vmem:[#allocation10 + $0x98] sm:$0xff]
    %v2850 = vld [vmem:[#allocation10 + $0xa0] sm:$0xff]
    %v2851 = vld [vmem:[#allocation10 + $0xa8] sm:$0xff]
    %v2852 = vld [vmem:[#allocation10 + $0xb0] sm:$0xff]
    %v2853 = vld [vmem:[#allocation10 + $0xb8] sm:$0xff]
    %v2854 = vld [vmem:[#allocation10 + $0xc0] sm:$0xff]
    %v2855 = vld [vmem:[#allocation10 + $0xc8] sm:$0xff]
    %v2856 = vld [vmem:[#allocation10 + $0xd0] sm:$0xff]
    %v2857 = vld [vmem:[#allocation10 + $0xd8] sm:$0xff]
    %v2858 = vld [vmem:[#allocation10 + $0xe0] sm:$0xff]
    %v2859 = vld [vmem:[#allocation10 + $0xe8] sm:$0xff]
    %v2860 = vld [vmem:[#allocation10 + $0xf0] sm:$0xff]
    %v2861 = vld [vmem:[#allocation10 + $0xf8] sm:$0xff]
    %v2863 = vrot.slane %v2829, 1
    %v2897 = vunpack.c.l.b16 %v2830
    %v2898 = vunpack.c.h.b16 %v2830
    %v2899 = vunpack.c.l.b16 %v2831
    %v2900 = vunpack.c.h.b16 %v2831
    %v2901 = vunpack.c.l.b16 %v2832
    %v2902 = vunpack.c.h.b16 %v2832
    %v2903 = vunpack.c.l.b16 %v2833
    %v2904 = vunpack.c.h.b16 %v2833
    %v2905 = vunpack.c.l.b16 %v2834
    %v2906 = vunpack.c.h.b16 %v2834
    %v2907 = vunpack.c.l.b16 %v2835
    %v2908 = vunpack.c.h.b16 %v2835
    %v2909 = vunpack.c.l.b16 %v2836
    %v2910 = vunpack.c.h.b16 %v2836
    %v2911 = vunpack.c.l.b16 %v2837
    %v2912 = vunpack.c.h.b16 %v2837
    %v2913 = vunpack.c.l.b16 %v2838
    %v2914 = vunpack.c.h.b16 %v2838
    %v2915 = vunpack.c.l.b16 %v2839
    %v2916 = vunpack.c.h.b16 %v2839
    %v2917 = vunpack.c.l.b16 %v2840
    %v2918 = vunpack.c.h.b16 %v2840
    %v2919 = vunpack.c.l.b16 %v2841
    %v2920 = vunpack.c.h.b16 %v2841
    %v2921 = vunpack.c.l.b16 %v2842
    %v2922 = vunpack.c.h.b16 %v2842
    %v2923 = vunpack.c.l.b16 %v2843
    %v2924 = vunpack.c.h.b16 %v2843
    %v2925 = vunpack.c.l.b16 %v2844
    %v2926 = vunpack.c.h.b16 %v2844
    %v2927 = vunpack.c.l.b16 %v2845
    %v2928 = vunpack.c.h.b16 %v2845
    %v2929 = vunpack.c.l.b16 %v2846
    %v2930 = vunpack.c.h.b16 %v2846
    %v2931 = vunpack.c.l.b16 %v2847
    %v2932 = vunpack.c.h.b16 %v2847
    %v2933 = vunpack.c.l.b16 %v2848
    %v2934 = vunpack.c.h.b16 %v2848
    %v2935 = vunpack.c.l.b16 %v2849
    %v2936 = vunpack.c.h.b16 %v2849
    %v2937 = vunpack.c.l.b16 %v2850
    %v2938 = vunpack.c.h.b16 %v2850
    %v2939 = vunpack.c.l.b16 %v2851
    %v2940 = vunpack.c.h.b16 %v2851
    %v2941 = vunpack.c.l.b16 %v2852
    %v2942 = vunpack.c.h.b16 %v2852
    %v2943 = vunpack.c.l.b16 %v2853
    %v2944 = vunpack.c.h.b16 %v2853
    %v2945 = vunpack.c.l.b16 %v2854
    %v2946 = vunpack.c.h.b16 %v2854
    %v2947 = vunpack.c.l.b16 %v2855
    %v2948 = vunpack.c.h.b16 %v2855
    %v2949 = vunpack.c.l.b16 %v2856
    %v2950 = vunpack.c.h.b16 %v2856
    %v2951 = vunpack.c.l.b16 %v2857
    %v2952 = vunpack.c.h.b16 %v2857
    %v2953 = vunpack.c.l.b16 %v2858
    %v2954 = vunpack.c.h.b16 %v2858
    %v2955 = vunpack.c.l.b16 %v2859
    %v2956 = vunpack.c.h.b16 %v2859
    %v2957 = vunpack.c.l.b16 %v2860
    %v2958 = vunpack.c.h.b16 %v2860
    %v2959 = vunpack.c.l.b16 %v2861
    %v2960 = vunpack.c.h.b16 %v2861
    %v2961 = vpack.c.b16 %v2901, %v2897
    %v2962 = vpack.c.b16 %v2902, %v2898
    %v2963 = vpack.c.b16 %v2903, %v2899
    %v2964 = vpack.c.b16 %v2904, %v2900
    %v2965 = vpack.c.b16 %v2909, %v2905
    %v2966 = vpack.c.b16 %v2910, %v2906
    %v2967 = vpack.c.b16 %v2911, %v2907
    %v2968 = vpack.c.b16 %v2912, %v2908
    %v2969 = vpack.c.b16 %v2917, %v2913
    %v2970 = vpack.c.b16 %v2918, %v2914
    %v2971 = vpack.c.b16 %v2919, %v2915
    %v2972 = vpack.c.b16 %v2920, %v2916
    %v2973 = vpack.c.b16 %v2925, %v2921
    %v2974 = vpack.c.b16 %v2926, %v2922
    %v2975 = vpack.c.b16 %v2927, %v2923
    %v2976 = vpack.c.b16 %v2928, %v2924
    %v2977 = vpack.c.b16 %v2933, %v2929
    %v2978 = vpack.c.b16 %v2934, %v2930
    %v2979 = vpack.c.b16 %v2935, %v2931
    %v2980 = vpack.c.b16 %v2936, %v2932
    %v2981 = vpack.c.b16 %v2941, %v2937
    %v2982 = vpack.c.b16 %v2942, %v2938
    %v2983 = vpack.c.b16 %v2943, %v2939
    %v2984 = vpack.c.b16 %v2944, %v2940
    %v2985 = vpack.c.b16 %v2949, %v2945
    %v2986 = vpack.c.b16 %v2950, %v2946
    %v2987 = vpack.c.b16 %v2951, %v2947
    %v2988 = vpack.c.b16 %v2952, %v2948
    %v2989 = vpack.c.b16 %v2957, %v2953
    %v2990 = vpack.c.b16 %v2958, %v2954
    %v2991 = vpack.c.b16 %v2959, %v2955
    %v2992 = vpack.c.b16 %v2960, %v2956
    %3025 = vmatprep.subr.bf16.mxu0 %v2962
    %3026 = vmatpush1.bf16.msra.mxu0 %v2961
    %3027 = vmatprep.subr.bf16.mxu0 %v2966
    %3028 = vmatpush1.bf16.msra.mxu0 %v2965
    %3029 = vmatprep.subr.bf16.mxu0 %v2970
    %3030 = vmatpush1.bf16.msra.mxu0 %v2969
    %3031 = vmatprep.subr.bf16.mxu0 %v2974
    %3032 = vmatpush1.bf16.msra.mxu0 %v2973
    %3033 = vmatprep.subr.bf16.mxu0 %v2978
    %3034 = vmatpush1.bf16.msra.mxu0 %v2977
    %3035 = vmatprep.subr.bf16.mxu0 %v2982
    %3036 = vmatpush1.bf16.msra.mxu0 %v2981
    %3037 = vmatprep.subr.bf16.mxu0 %v2986
    %3038 = vmatpush1.bf16.msra.mxu0 %v2985
    %3039 = vmatprep.subr.bf16.mxu0 %v2990
    %3040 = vmatpush1.bf16.msra.mxu0 %v2989
    %3041 = vmatprep.subr.bf16.mxu0 0
    %3042 = vmatpush1.bf16.msra.mxu0 0
    %3043 = vmatprep.subr.bf16.mxu0 0
    %3044 = vmatpush1.bf16.msra.mxu0 0
    %3045 = vmatprep.subr.bf16.mxu0 0
    %3046 = vmatpush1.bf16.msra.mxu0 0
    %3047 = vmatprep.subr.bf16.mxu0 0
    %3048 = vmatpush1.bf16.msra.mxu0 0
    %3049 = vmatprep.subr.bf16.mxu0 0
    %3050 = vmatpush1.bf16.msra.mxu0 0
    %3051 = vmatprep.subr.bf16.mxu0 0
    %3052 = vmatpush1.bf16.msra.mxu0 0
    %3053 = vmatprep.subr.bf16.mxu0 0
    %3054 = vmatpush1.bf16.msra.mxu0 0
    %3055 = vmatprep.subr.bf16.mxu0 0
    %3056 = vmatpush1.bf16.msra.mxu0 0
    %3057 = vmatprep.mubr.bf16.mxu0 0
    %3058 = vmatmul.mubr.bf16.gmra.mrb[0].mxu0 %v2863
    %v3059 = vpop.f32.mrb[0].mxu0
    %v3060 = vadd.f32 0.0, %v3059
    %v3061 = vpop.f32.mrb[0].mxu0
    %v3062 = vadd.f32 0.0, %v3061
    %v3063 = vpop.f32.mrb[0].mxu0
    %v3064 = vpop.f32.mrb[0].mxu0
    %3065 = vdwg.mxu0
    %3066 = vmatprep.subr.bf16.mxu0 %v2964
    %3067 = vmatpush1.bf16.msra.mxu0 %v2963
    %3068 = vmatprep.subr.bf16.mxu0 %v2968
    %3069 = vmatpush1.bf16.msra.mxu0 %v2967
    %3070 = vmatprep.subr.bf16.mxu0 %v2972
    %3071 = vmatpush1.bf16.msra.mxu0 %v2971
    %3072 = vmatprep.subr.bf16.mxu0 %v2976
    %3073 = vmatpush1.bf16.msra.mxu0 %v2975
    %3074 = vmatprep.subr.bf16.mxu0 %v2980
    %3075 = vmatpush1.bf16.msra.mxu0 %v2979
    %3076 = vmatprep.subr.bf16.mxu0 %v2984
    %3077 = vmatpush1.bf16.msra.mxu0 %v2983
    %3078 = vmatprep.subr.bf16.mxu0 %v2988
    %3079 = vmatpush1.bf16.msra.mxu0 %v2987
    %3080 = vmatprep.subr.bf16.mxu0 %v2992
    %3081 = vmatpush1.bf16.msra.mxu0 %v2991
    %3082 = vmatprep.subr.bf16.mxu0 0
    %3083 = vmatpush1.bf16.msra.mxu0 0
    %3084 = vmatprep.subr.bf16.mxu0 0
    %3085 = vmatpush1.bf16.msra.mxu0 0
    %3086 = vmatprep.subr.bf16.mxu0 0
    %3087 = vmatpush1.bf16.msra.mxu0 0
    %3088 = vmatprep.subr.bf16.mxu0 0
    %3089 = vmatpush1.bf16.msra.mxu0 0
    %3090 = vmatprep.subr.bf16.mxu0 0
    %3091 = vmatpush1.bf16.msra.mxu0 0
    %3092 = vmatprep.subr.bf16.mxu0 0
    %3093 = vmatpush1.bf16.msra.mxu0 0
    %3094 = vmatprep.subr.bf16.mxu0 0
    %3095 = vmatpush1.bf16.msra.mxu0 0
    %3096 = vmatprep.subr.bf16.mxu0 0
    %3097 = vmatpush1.bf16.msra.mxu0 0
    %3098 = vmatprep.mubr.bf16.mxu0 0
    %3099 = vmatmul.mubr.bf16.gmra.mrb[0].mxu0 %v2863
    %v3100 = vpop.f32.mrb[0].mxu0
    %v3101 = vadd.f32 0.0, %v3100
    %v3102 = vpop.f32.mrb[0].mxu0
    %v3103 = vadd.f32 0.0, %v3102
    %v3104 = vpop.f32.mrb[0].mxu0
    %v3105 = vpop.f32.mrb[0].mxu0
    %3106 = vdwg.mxu0
    %v3111 = vrot.slane %v3060, 4
    %v3112 = vrot.slane %v3062, 4
    %v3113 = vrot.slane %v3101, 4
    %v3114 = vrot.slane %v3103, 4
    %v3119 = vadd.f32 %v2825, %v3111
    %v3120 = vadd.f32 %v2826, %v3112
    %v3121 = vadd.f32 %v2827, %v3113
    %v3122 = vadd.f32 %v2828, %v3114
    %v3123 = vxor.u32 %v3119, 2147483648
    %v3124 = vmul.f32 %v3123, 1.442695
    %v3125 = vpow.pop %v3124
    %v3126 = vadd.f32 %v3125, 1.0
    %v3127 = vrcp.pop %v3126
    %v3128 = vmul.f32 1.0, %v3127
    %v3129 = vxor.u32 %v3120, 2147483648
    %v3130 = vmul.f32 %v3129, 1.442695
    %v3131 = vpow.pop %v3130
    %v3132 = vadd.f32 %v3131, 1.0
    %v3133 = vrcp.pop %v3132
    %v3134 = vmul.f32 1.0, %v3133
    %v3135 = vtanh.pop %v3121
    %v3136 = vxor.u32 %v3122, 2147483648
    %v3137 = vmul.f32 %v3136, 1.442695
    %v3138 = vpow.pop %v3137
    %v3139 = vadd.f32 %v3138, 1.0
    %v3140 = vrcp.pop %v3139
    %v3141 = vmul.f32 1.0, %v3140
    %v3143 = vrot.slane %v2800, 6
    %v3145 = vmul.f32 %v3134, %v3143
    %v3146 = vmul.f32 %v3128, %v3135
    %v3147 = vadd.f32 %v3145, %v3146
    %v3148 = vtanh.pop %v3147
    %v3149 = vmul.f32 %v3141, %v3148
    %3150 = vst [vmem:[#allocation4 + $0x8] sm:$0x30] %v3149
    %3151 = vst [vmem:[#allocation5 - $0x2] sm:$0x30] %v3149
    %v3152 = vld [vmem:[#allocation2 + $0x40] sm:$0xc0]
    %v3153 = vld [vmem:[#allocation2 + $0x48] sm:$0xc0]
    %v3154 = vld [vmem:[#allocation2 + $0x50] sm:$0xc0]
    %v3155 = vld [vmem:[#allocation2 + $0x58] sm:$0xc0]
    %v3156 = vld [vmem:[#allocation2 + $0x20] sm:$0x3]
    %v3157 = vld [vmem:[#allocation2 + $0x28] sm:$0x3]
    %v3158 = vld [vmem:[#allocation2 + $0x30] sm:$0x3]
    %v3159 = vld [vmem:[#allocation2 + $0x38] sm:$0x3]
    %v3164 = vrot.slane %v3156, 2
    %v3165 = vrot.slane %v3157, 2
    %v3166 = vrot.slane %v3158, 2
    %v3167 = vrot.slane %v3159, 2
    %v3172 = vadd.f32 %v3152, %v3164
    %v3173 = vadd.f32 %v3153, %v3165
    %v3174 = vadd.f32 %v3154, %v3166
    %v3175 = vadd.f32 %v3155, %v3167
    %v3176 = vpack.c.bf16 %v3149, %v3149
    %v3177 = vld [vmem:[#allocation10] sm:$0xff]
    %v3178 = vld [vmem:[#allocation10 + $0x8] sm:$0xff]
    %v3179 = vld [vmem:[#allocation10 + $0x10] sm:$0xff]
    %v3180 = vld [vmem:[#allocation10 + $0x18] sm:$0xff]
    %v3181 = vld [vmem:[#allocation10 + $0x20] sm:$0xff]
    %v3182 = vld [vmem:[#allocation10 + $0x28] sm:$0xff]
    %v3183 = vld [vmem:[#allocation10 + $0x30] sm:$0xff]
    %v3184 = vld [vmem:[#allocation10 + $0x38] sm:$0xff]
    %v3185 = vld [vmem:[#allocation10 + $0x40] sm:$0xff]
    %v3186 = vld [vmem:[#allocation10 + $0x48] sm:$0xff]
    %v3187 = vld [vmem:[#allocation10 + $0x50] sm:$0xff]
    %v3188 = vld [vmem:[#allocation10 + $0x58] sm:$0xff]
    %v3189 = vld [vmem:[#allocation10 + $0x60] sm:$0xff]
    %v3190 = vld [vmem:[#allocation10 + $0x68] sm:$0xff]
    %v3191 = vld [vmem:[#allocation10 + $0x70] sm:$0xff]
    %v3192 = vld [vmem:[#allocation10 + $0x78] sm:$0xff]
    %v3193 = vld [vmem:[#allocation10 + $0x80] sm:$0xff]
    %v3194 = vld [vmem:[#allocation10 + $0x88] sm:$0xff]
    %v3195 = vld [vmem:[#allocation10 + $0x90] sm:$0xff]
    %v3196 = vld [vmem:[#allocation10 + $0x98] sm:$0xff]
    %v3197 = vld [vmem:[#allocation10 + $0xa0] sm:$0xff]
    %v3198 = vld [vmem:[#allocation10 + $0xa8] sm:$0xff]
    %v3199 = vld [vmem:[#allocation10 + $0xb0] sm:$0xff]
    %v3200 = vld [vmem:[#allocation10 + $0xb8] sm:$0xff]
    %v3201 = vld [vmem:[#allocation10 + $0xc0] sm:$0xff]
    %v3202 = vld [vmem:[#allocation10 + $0xc8] sm:$0xff]
    %v3203 = vld [vmem:[#allocation10 + $0xd0] sm:$0xff]
    %v3204 = vld [vmem:[#allocation10 + $0xd8] sm:$0xff]
    %v3205 = vld [vmem:[#allocation10 + $0xe0] sm:$0xff]
    %v3206 = vld [vmem:[#allocation10 + $0xe8] sm:$0xff]
    %v3207 = vld [vmem:[#allocation10 + $0xf0] sm:$0xff]
    %v3208 = vld [vmem:[#allocation10 + $0xf8] sm:$0xff]
    %v3210 = vrot.slane %v3176, 2
    %v3244 = vunpack.c.l.b16 %v3177
    %v3245 = vunpack.c.h.b16 %v3177
    %v3246 = vunpack.c.l.b16 %v3178
    %v3247 = vunpack.c.h.b16 %v3178
    %v3248 = vunpack.c.l.b16 %v3179
    %v3249 = vunpack.c.h.b16 %v3179
    %v3250 = vunpack.c.l.b16 %v3180
    %v3251 = vunpack.c.h.b16 %v3180
    %v3252 = vunpack.c.l.b16 %v3181
    %v3253 = vunpack.c.h.b16 %v3181
    %v3254 = vunpack.c.l.b16 %v3182
    %v3255 = vunpack.c.h.b16 %v3182
    %v3256 = vunpack.c.l.b16 %v3183
    %v3257 = vunpack.c.h.b16 %v3183
    %v3258 = vunpack.c.l.b16 %v3184
    %v3259 = vunpack.c.h.b16 %v3184
    %v3260 = vunpack.c.l.b16 %v3185
    %v3261 = vunpack.c.h.b16 %v3185
    %v3262 = vunpack.c.l.b16 %v3186
    %v3263 = vunpack.c.h.b16 %v3186
    %v3264 = vunpack.c.l.b16 %v3187
    %v3265 = vunpack.c.h.b16 %v3187
    %v3266 = vunpack.c.l.b16 %v3188
    %v3267 = vunpack.c.h.b16 %v3188
    %v3268 = vunpack.c.l.b16 %v3189
    %v3269 = vunpack.c.h.b16 %v3189
    %v3270 = vunpack.c.l.b16 %v3190
    %v3271 = vunpack.c.h.b16 %v3190
    %v3272 = vunpack.c.l.b16 %v3191
    %v3273 = vunpack.c.h.b16 %v3191
    %v3274 = vunpack.c.l.b16 %v3192
    %v3275 = vunpack.c.h.b16 %v3192
    %v3276 = vunpack.c.l.b16 %v3193
    %v3277 = vunpack.c.h.b16 %v3193
    %v3278 = vunpack.c.l.b16 %v3194
    %v3279 = vunpack.c.h.b16 %v3194
    %v3280 = vunpack.c.l.b16 %v3195
    %v3281 = vunpack.c.h.b16 %v3195
    %v3282 = vunpack.c.l.b16 %v3196
    %v3283 = vunpack.c.h.b16 %v3196
    %v3284 = vunpack.c.l.b16 %v3197
    %v3285 = vunpack.c.h.b16 %v3197
    %v3286 = vunpack.c.l.b16 %v3198
    %v3287 = vunpack.c.h.b16 %v3198
    %v3288 = vunpack.c.l.b16 %v3199
    %v3289 = vunpack.c.h.b16 %v3199
    %v3290 = vunpack.c.l.b16 %v3200
    %v3291 = vunpack.c.h.b16 %v3200
    %v3292 = vunpack.c.l.b16 %v3201
    %v3293 = vunpack.c.h.b16 %v3201
    %v3294 = vunpack.c.l.b16 %v3202
    %v3295 = vunpack.c.h.b16 %v3202
    %v3296 = vunpack.c.l.b16 %v3203
    %v3297 = vunpack.c.h.b16 %v3203
    %v3298 = vunpack.c.l.b16 %v3204
    %v3299 = vunpack.c.h.b16 %v3204
    %v3300 = vunpack.c.l.b16 %v3205
    %v3301 = vunpack.c.h.b16 %v3205
    %v3302 = vunpack.c.l.b16 %v3206
    %v3303 = vunpack.c.h.b16 %v3206
    %v3304 = vunpack.c.l.b16 %v3207
    %v3305 = vunpack.c.h.b16 %v3207
    %v3306 = vunpack.c.l.b16 %v3208
    %v3307 = vunpack.c.h.b16 %v3208
    %v3308 = vpack.c.b16 %v3248, %v3244
    %v3309 = vpack.c.b16 %v3249, %v3245
    %v3310 = vpack.c.b16 %v3250, %v3246
    %v3311 = vpack.c.b16 %v3251, %v3247
    %v3312 = vpack.c.b16 %v3256, %v3252
    %v3313 = vpack.c.b16 %v3257, %v3253
    %v3314 = vpack.c.b16 %v3258, %v3254
    %v3315 = vpack.c.b16 %v3259, %v3255
    %v3316 = vpack.c.b16 %v3264, %v3260
    %v3317 = vpack.c.b16 %v3265, %v3261
    %v3318 = vpack.c.b16 %v3266, %v3262
    %v3319 = vpack.c.b16 %v3267, %v3263
    %v3320 = vpack.c.b16 %v3272, %v3268
    %v3321 = vpack.c.b16 %v3273, %v3269
    %v3322 = vpack.c.b16 %v3274, %v3270
    %v3323 = vpack.c.b16 %v3275, %v3271
    %v3324 = vpack.c.b16 %v3280, %v3276
    %v3325 = vpack.c.b16 %v3281, %v3277
    %v3326 = vpack.c.b16 %v3282, %v3278
    %v3327 = vpack.c.b16 %v3283, %v3279
    %v3328 = vpack.c.b16 %v3288, %v3284
    %v3329 = vpack.c.b16 %v3289, %v3285
    %v3330 = vpack.c.b16 %v3290, %v3286
    %v3331 = vpack.c.b16 %v3291, %v3287
    %v3332 = vpack.c.b16 %v3296, %v3292
    %v3333 = vpack.c.b16 %v3297, %v3293
    %v3334 = vpack.c.b16 %v3298, %v3294
    %v3335 = vpack.c.b16 %v3299, %v3295
    %v3336 = vpack.c.b16 %v3304, %v3300
    %v3337 = vpack.c.b16 %v3305, %v3301
    %v3338 = vpack.c.b16 %v3306, %v3302
    %v3339 = vpack.c.b16 %v3307, %v3303
    %3372 = vmatprep.subr.bf16.mxu0 %v3309
    %3373 = vmatpush1.bf16.msra.mxu0 %v3308
    %3374 = vmatprep.subr.bf16.mxu0 %v3313
    %3375 = vmatpush1.bf16.msra.mxu0 %v3312
    %3376 = vmatprep.subr.bf16.mxu0 %v3317
    %3377 = vmatpush1.bf16.msra.mxu0 %v3316
    %3378 = vmatprep.subr.bf16.mxu0 %v3321
    %3379 = vmatpush1.bf16.msra.mxu0 %v3320
    %3380 = vmatprep.subr.bf16.mxu0 %v3325
    %3381 = vmatpush1.bf16.msra.mxu0 %v3324
    %3382 = vmatprep.subr.bf16.mxu0 %v3329
    %3383 = vmatpush1.bf16.msra.mxu0 %v3328
    %3384 = vmatprep.subr.bf16.mxu0 %v3333
    %3385 = vmatpush1.bf16.msra.mxu0 %v3332
    %3386 = vmatprep.subr.bf16.mxu0 %v3337
    %3387 = vmatpush1.bf16.msra.mxu0 %v3336
    %3388 = vmatprep.subr.bf16.mxu0 0
    %3389 = vmatpush1.bf16.msra.mxu0 0
    %3390 = vmatprep.subr.bf16.mxu0 0
    %3391 = vmatpush1.bf16.msra.mxu0 0
    %3392 = vmatprep.subr.bf16.mxu0 0
    %3393 = vmatpush1.bf16.msra.mxu0 0
    %3394 = vmatprep.subr.bf16.mxu0 0
    %3395 = vmatpush1.bf16.msra.mxu0 0
    %3396 = vmatprep.subr.bf16.mxu0 0
    %3397 = vmatpush1.bf16.msra.mxu0 0
    %3398 = vmatprep.subr.bf16.mxu0 0
    %3399 = vmatpush1.bf16.msra.mxu0 0
    %3400 = vmatprep.subr.bf16.mxu0 0
    %3401 = vmatpush1.bf16.msra.mxu0 0
    %3402 = vmatprep.subr.bf16.mxu0 0
    %3403 = vmatpush1.bf16.msra.mxu0 0
    %3404 = vmatprep.mubr.bf16.mxu0 0
    %3405 = vmatmul.mubr.bf16.gmra.mrb[0].mxu0 %v3210
    %v3406 = vpop.f32.mrb[0].mxu0
    %v3407 = vadd.f32 0.0, %v3406
    %v3408 = vpop.f32.mrb[0].mxu0
    %v3409 = vadd.f32 0.0, %v3408
    %v3410 = vpop.f32.mrb[0].mxu0
    %v3411 = vpop.f32.mrb[0].mxu0
    %3412 = vdwg.mxu0
    %3413 = vmatprep.subr.bf16.mxu0 %v3311
    %3414 = vmatpush1.bf16.msra.mxu0 %v3310
    %3415 = vmatprep.subr.bf16.mxu0 %v3315
    %3416 = vmatpush1.bf16.msra.mxu0 %v3314
    %3417 = vmatprep.subr.bf16.mxu0 %v3319
    %3418 = vmatpush1.bf16.msra.mxu0 %v3318
    %3419 = vmatprep.subr.bf16.mxu0 %v3323
    %3420 = vmatpush1.bf16.msra.mxu0 %v3322
    %3421 = vmatprep.subr.bf16.mxu0 %v3327
    %3422 = vmatpush1.bf16.msra.mxu0 %v3326
    %3423 = vmatprep.subr.bf16.mxu0 %v3331
    %3424 = vmatpush1.bf16.msra.mxu0 %v3330
    %3425 = vmatprep.subr.bf16.mxu0 %v3335
    %3426 = vmatpush1.bf16.msra.mxu0 %v3334
    %3427 = vmatprep.subr.bf16.mxu0 %v3339
    %3428 = vmatpush1.bf16.msra.mxu0 %v3338
    %3429 = vmatprep.subr.bf16.mxu0 0
    %3430 = vmatpush1.bf16.msra.mxu0 0
    %3431 = vmatprep.subr.bf16.mxu0 0
    %3432 = vmatpush1.bf16.msra.mxu0 0
    %3433 = vmatprep.subr.bf16.mxu0 0
    %3434 = vmatpush1.bf16.msra.mxu0 0
    %3435 = vmatprep.subr.bf16.mxu0 0
    %3436 = vmatpush1.bf16.msra.mxu0 0
    %3437 = vmatprep.subr.bf16.mxu0 0
    %3438 = vmatpush1.bf16.msra.mxu0 0
    %3439 = vmatprep.subr.bf16.mxu0 0
    %3440 = vmatpush1.bf16.msra.mxu0 0
    %3441 = vmatprep.subr.bf16.mxu0 0
    %3442 = vmatpush1.bf16.msra.mxu0 0
    %3443 = vmatprep.subr.bf16.mxu0 0
    %3444 = vmatpush1.bf16.msra.mxu0 0
    %3445 = vmatprep.mubr.bf16.mxu0 0
    %3446 = vmatmul.mubr.bf16.gmra.mrb[0].mxu0 %v3210
    %v3447 = vpop.f32.mrb[0].mxu0
    %v3448 = vadd.f32 0.0, %v3447
    %v3449 = vpop.f32.mrb[0].mxu0
    %v3450 = vadd.f32 0.0, %v3449
    %v3451 = vpop.f32.mrb[0].mxu0
    %v3452 = vpop.f32.mrb[0].mxu0
    %3453 = vdwg.mxu0
    %v3458 = vrot.slane %v3407, 2
    %v3459 = vrot.slane %v3409, 2
    %v3460 = vrot.slane %v3448, 2
    %v3461 = vrot.slane %v3450, 2
    %v3466 = vadd.f32 %v3172, %v3458
    %v3467 = vadd.f32 %v3173, %v3459
    %v3468 = vadd.f32 %v3174, %v3460
    %v3469 = vadd.f32 %v3175, %v3461
    %v3470 = vxor.u32 %v3466, 2147483648
    %v3471 = vmul.f32 %v3470, 1.442695
    %v3472 = vpow.pop %v3471
    %v3473 = vadd.f32 %v3472, 1.0
    %v3474 = vrcp.pop %v3473
    %v3475 = vmul.f32 1.0, %v3474
    %v3476 = vxor.u32 %v3467, 2147483648
    %v3477 = vmul.f32 %v3476, 1.442695
    %v3478 = vpow.pop %v3477
    %v3479 = vadd.f32 %v3478, 1.0
    %v3480 = vrcp.pop %v3479
    %v3481 = vmul.f32 1.0, %v3480
    %v3482 = vtanh.pop %v3468
    %v3483 = vxor.u32 %v3469, 2147483648
    %v3484 = vmul.f32 %v3483, 1.442695
    %v3485 = vpow.pop %v3484
    %v3486 = vadd.f32 %v3485, 1.0
    %v3487 = vrcp.pop %v3486
    %v3488 = vmul.f32 1.0, %v3487
    %v3490 = vrot.slane %v3147, 6
    %v3492 = vmul.f32 %v3481, %v3490
    %v3493 = vmul.f32 %v3475, %v3482
    %v3494 = vadd.f32 %v3492, %v3493
    %v3495 = vtanh.pop %v3494
    %v3496 = vmul.f32 %v3488, %v3495
    %3497 = vst [vmem:[#allocation4 + $0x8] sm:$0xc0] %v3496
    %3498 = vst [vmem:[#allocation5 - $0x6] sm:$0xc0] %v3496
    %v3499 = vld [vmem:[#allocation4] sm:$0xff]
    %v3500 = vld [vmem:[#allocation4 + $0x8] sm:$0xff]
    %v3501 = vld [vmem:[#allocation5] sm:$0xff]
    %v3502 = vld [vmem:[#allocation5 + $0x8] sm:$0xff]
    %v3503 = vsel %vm759, %v3499, %v3501
    %v3504 = vsel %vm759, %v3500, %v3502
    %v3505 = vpack.c.bf16 %v3504, %v3503
    %v3506 = vld [vmem:[#allocation12] sm:$0xff]
    %v3507 = vld [vmem:[#allocation12 + $0x8] sm:$0xff]
    %v3508 = vld [vmem:[#allocation12 + $0x10] sm:$0xff]
    %v3509 = vld [vmem:[#allocation12 + $0x18] sm:$0xff]
    %v3510 = vld [vmem:[#allocation12 + $0x20] sm:$0xff]
    %v3511 = vld [vmem:[#allocation12 + $0x28] sm:$0xff]
    %v3512 = vld [vmem:[#allocation12 + $0x30] sm:$0xff]
    %v3513 = vld [vmem:[#allocation12 + $0x38] sm:$0xff]
    %v3514 = vld [vmem:[#allocation12 + $0x40] sm:$0xff]
    %v3515 = vld [vmem:[#allocation12 + $0x48] sm:$0xff]
    %v3516 = vld [vmem:[#allocation12 + $0x50] sm:$0xff]
    %v3517 = vld [vmem:[#allocation12 + $0x58] sm:$0xff]
    %v3518 = vld [vmem:[#allocation12 + $0x60] sm:$0xff]
    %v3519 = vld [vmem:[#allocation12 + $0x68] sm:$0xff]
    %v3520 = vld [vmem:[#allocation12 + $0x70] sm:$0xff]
    %v3521 = vld [vmem:[#allocation12 + $0x78] sm:$0xff]
    %v3522 = vld [vmem:[#allocation12 + $0x80] sm:$0xff]
    %v3523 = vld [vmem:[#allocation12 + $0x88] sm:$0xff]
    %v3524 = vld [vmem:[#allocation12 + $0x90] sm:$0xff]
    %v3525 = vld [vmem:[#allocation12 + $0x98] sm:$0xff]
    %v3526 = vld [vmem:[#allocation12 + $0xa0] sm:$0xff]
    %v3527 = vld [vmem:[#allocation12 + $0xa8] sm:$0xff]
    %v3528 = vld [vmem:[#allocation12 + $0xb0] sm:$0xff]
    %v3529 = vld [vmem:[#allocation12 + $0xb8] sm:$0xff]
    %v3530 = vld [vmem:[#allocation12 + $0xc0] sm:$0xff]
    %v3531 = vld [vmem:[#allocation12 + $0xc8] sm:$0xff]
    %v3532 = vld [vmem:[#allocation12 + $0xd0] sm:$0xff]
    %v3533 = vld [vmem:[#allocation12 + $0xd8] sm:$0xff]
    %v3534 = vld [vmem:[#allocation12 + $0xe0] sm:$0xff]
    %v3535 = vld [vmem:[#allocation12 + $0xe8] sm:$0xff]
    %v3536 = vld [vmem:[#allocation12 + $0xf0] sm:$0xff]
    %v3537 = vld [vmem:[#allocation12 + $0xf8] sm:$0xff]
    %v3538 = vld [vmem:[#allocation12 + $0x100] sm:$0xff]
    %v3539 = vld [vmem:[#allocation12 + $0x108] sm:$0xff]
    %v3540 = vld [vmem:[#allocation12 + $0x110] sm:$0xff]
    %v3541 = vld [vmem:[#allocation12 + $0x118] sm:$0xff]
    %v3542 = vld [vmem:[#allocation12 + $0x120] sm:$0xff]
    %v3543 = vld [vmem:[#allocation12 + $0x128] sm:$0xff]
    %v3544 = vld [vmem:[#allocation12 + $0x130] sm:$0xff]
    %v3545 = vld [vmem:[#allocation12 + $0x138] sm:$0xff]
    %v3546 = vld [vmem:[#allocation12 + $0x140] sm:$0xff]
    %v3547 = vld [vmem:[#allocation12 + $0x148] sm:$0xff]
    %v3548 = vld [vmem:[#allocation12 + $0x150] sm:$0xff]
    %v3549 = vld [vmem:[#allocation12 + $0x158] sm:$0xff]
    %v3550 = vld [vmem:[#allocation12 + $0x160] sm:$0xff]
    %v3551 = vld [vmem:[#allocation12 + $0x168] sm:$0xff]
    %v3552 = vld [vmem:[#allocation12 + $0x170] sm:$0xff]
    %v3553 = vld [vmem:[#allocation12 + $0x178] sm:$0xff]
    %v3554 = vld [vmem:[#allocation12 + $0x180] sm:$0xff]
    %v3555 = vld [vmem:[#allocation12 + $0x188] sm:$0xff]
    %v3556 = vld [vmem:[#allocation12 + $0x190] sm:$0xff]
    %v3557 = vld [vmem:[#allocation12 + $0x198] sm:$0xff]
    %v3558 = vld [vmem:[#allocation12 + $0x1a0] sm:$0xff]
    %v3559 = vld [vmem:[#allocation12 + $0x1a8] sm:$0xff]
    %v3560 = vld [vmem:[#allocation12 + $0x1b0] sm:$0xff]
    %v3561 = vld [vmem:[#allocation12 + $0x1b8] sm:$0xff]
    %v3562 = vld [vmem:[#allocation12 + $0x1c0] sm:$0xff]
    %v3563 = vld [vmem:[#allocation12 + $0x1c8] sm:$0xff]
    %v3564 = vld [vmem:[#allocation12 + $0x1d0] sm:$0xff]
    %v3565 = vld [vmem:[#allocation12 + $0x1d8] sm:$0xff]
    %v3566 = vld [vmem:[#allocation12 + $0x1e0] sm:$0xff]
    %v3567 = vld [vmem:[#allocation12 + $0x1e8] sm:$0xff]
    %v3568 = vld [vmem:[#allocation12 + $0x1f0] sm:$0xff]
    %v3569 = vld [vmem:[#allocation12 + $0x1f8] sm:$0xff]
    %v3570 = vld [vmem:[%s5] sm:$0xff]
    %v3572 = vlaneseq
    %v3573 = vshrl.u32 %v3572, 7
    %v3574 = vsub.s32 0, %v3573
    %v3575 = vrot.slane %v3570, %v3574
    %v3576 = vlaneseq
    %v3577 = vshrl.u32 %v3576, 7
    %v3578 = vsub.s32 1, %v3577
    %v3579 = vrot.slane %v3570, %v3578
    %v3580 = vlaneseq
    %v3581 = vshrl.u32 %v3580, 7
    %v3582 = vsub.s32 2, %v3581
    %v3583 = vrot.slane %v3570, %v3582
    %v3584 = vlaneseq
    %v3585 = vshrl.u32 %v3584, 7
    %v3586 = vsub.s32 3, %v3585
    %v3587 = vrot.slane %v3570, %v3586
    %v3588 = vlaneseq
    %v3589 = vshrl.u32 %v3588, 7
    %v3590 = vsub.s32 4, %v3589
    %v3591 = vrot.slane %v3570, %v3590
    %v3592 = vlaneseq
    %v3593 = vshrl.u32 %v3592, 7
    %v3594 = vsub.s32 5, %v3593
    %v3595 = vrot.slane %v3570, %v3594
    %v3596 = vlaneseq
    %v3597 = vshrl.u32 %v3596, 7
    %v3598 = vsub.s32 6, %v3597
    %v3599 = vrot.slane %v3570, %v3598
    %v3600 = vlaneseq
    %v3601 = vshrl.u32 %v3600, 7
    %v3602 = vsub.s32 7, %v3601
    %v3603 = vrot.slane %v3570, %v3602
    %v3676 = vunpack.c.l.b16 %v3506
    %v3677 = vunpack.c.h.b16 %v3506
    %v3678 = vunpack.c.l.b16 %v3507
    %v3679 = vunpack.c.h.b16 %v3507
    %v3680 = vunpack.c.l.b16 %v3508
    %v3681 = vunpack.c.h.b16 %v3508
    %v3682 = vunpack.c.l.b16 %v3509
    %v3683 = vunpack.c.h.b16 %v3509
    %v3684 = vunpack.c.l.b16 %v3510
    %v3685 = vunpack.c.h.b16 %v3510
    %v3686 = vunpack.c.l.b16 %v3511
    %v3687 = vunpack.c.h.b16 %v3511
    %v3688 = vunpack.c.l.b16 %v3512
    %v3689 = vunpack.c.h.b16 %v3512
    %v3690 = vunpack.c.l.b16 %v3513
    %v3691 = vunpack.c.h.b16 %v3513
    %v3692 = vunpack.c.l.b16 %v3514
    %v3693 = vunpack.c.h.b16 %v3514
    %v3694 = vunpack.c.l.b16 %v3515
    %v3695 = vunpack.c.h.b16 %v3515
    %v3696 = vunpack.c.l.b16 %v3516
    %v3697 = vunpack.c.h.b16 %v3516
    %v3698 = vunpack.c.l.b16 %v3517
    %v3699 = vunpack.c.h.b16 %v3517
    %v3700 = vunpack.c.l.b16 %v3518
    %v3701 = vunpack.c.h.b16 %v3518
    %v3702 = vunpack.c.l.b16 %v3519
    %v3703 = vunpack.c.h.b16 %v3519
    %v3704 = vunpack.c.l.b16 %v3520
    %v3705 = vunpack.c.h.b16 %v3520
    %v3706 = vunpack.c.l.b16 %v3521
    %v3707 = vunpack.c.h.b16 %v3521
    %v3708 = vunpack.c.l.b16 %v3522
    %v3709 = vunpack.c.h.b16 %v3522
    %v3710 = vunpack.c.l.b16 %v3523
    %v3711 = vunpack.c.h.b16 %v3523
    %v3712 = vunpack.c.l.b16 %v3524
    %v3713 = vunpack.c.h.b16 %v3524
    %v3714 = vunpack.c.l.b16 %v3525
    %v3715 = vunpack.c.h.b16 %v3525
    %v3716 = vunpack.c.l.b16 %v3526
    %v3717 = vunpack.c.h.b16 %v3526
    %v3718 = vunpack.c.l.b16 %v3527
    %v3719 = vunpack.c.h.b16 %v3527
    %v3720 = vunpack.c.l.b16 %v3528
    %v3721 = vunpack.c.h.b16 %v3528
    %v3722 = vunpack.c.l.b16 %v3529
    %v3723 = vunpack.c.h.b16 %v3529
    %v3724 = vunpack.c.l.b16 %v3530
    %v3725 = vunpack.c.h.b16 %v3530
    %v3726 = vunpack.c.l.b16 %v3531
    %v3727 = vunpack.c.h.b16 %v3531
    %v3728 = vunpack.c.l.b16 %v3532
    %v3729 = vunpack.c.h.b16 %v3532
    %v3730 = vunpack.c.l.b16 %v3533
    %v3731 = vunpack.c.h.b16 %v3533
    %v3732 = vunpack.c.l.b16 %v3534
    %v3733 = vunpack.c.h.b16 %v3534
    %v3734 = vunpack.c.l.b16 %v3535
    %v3735 = vunpack.c.h.b16 %v3535
    %v3736 = vunpack.c.l.b16 %v3536
    %v3737 = vunpack.c.h.b16 %v3536
    %v3738 = vunpack.c.l.b16 %v3537
    %v3739 = vunpack.c.h.b16 %v3537
    %v3740 = vunpack.c.l.b16 %v3538
    %v3741 = vunpack.c.h.b16 %v3538
    %v3742 = vunpack.c.l.b16 %v3539
    %v3743 = vunpack.c.h.b16 %v3539
    %v3744 = vunpack.c.l.b16 %v3540
    %v3745 = vunpack.c.h.b16 %v3540
    %v3746 = vunpack.c.l.b16 %v3541
    %v3747 = vunpack.c.h.b16 %v3541
    %v3748 = vunpack.c.l.b16 %v3542
    %v3749 = vunpack.c.h.b16 %v3542
    %v3750 = vunpack.c.l.b16 %v3543
    %v3751 = vunpack.c.h.b16 %v3543
    %v3752 = vunpack.c.l.b16 %v3544
    %v3753 = vunpack.c.h.b16 %v3544
    %v3754 = vunpack.c.l.b16 %v3545
    %v3755 = vunpack.c.h.b16 %v3545
    %v3756 = vunpack.c.l.b16 %v3546
    %v3757 = vunpack.c.h.b16 %v3546
    %v3758 = vunpack.c.l.b16 %v3547
    %v3759 = vunpack.c.h.b16 %v3547
    %v3760 = vunpack.c.l.b16 %v3548
    %v3761 = vunpack.c.h.b16 %v3548
    %v3762 = vunpack.c.l.b16 %v3549
    %v3763 = vunpack.c.h.b16 %v3549
    %v3764 = vunpack.c.l.b16 %v3550
    %v3765 = vunpack.c.h.b16 %v3550
    %v3766 = vunpack.c.l.b16 %v3551
    %v3767 = vunpack.c.h.b16 %v3551
    %v3768 = vunpack.c.l.b16 %v3552
    %v3769 = vunpack.c.h.b16 %v3552
    %v3770 = vunpack.c.l.b16 %v3553
    %v3771 = vunpack.c.h.b16 %v3553
    %v3772 = vunpack.c.l.b16 %v3554
    %v3773 = vunpack.c.h.b16 %v3554
    %v3774 = vunpack.c.l.b16 %v3555
    %v3775 = vunpack.c.h.b16 %v3555
    %v3776 = vunpack.c.l.b16 %v3556
    %v3777 = vunpack.c.h.b16 %v3556
    %v3778 = vunpack.c.l.b16 %v3557
    %v3779 = vunpack.c.h.b16 %v3557
    %v3780 = vunpack.c.l.b16 %v3558
    %v3781 = vunpack.c.h.b16 %v3558
    %v3782 = vunpack.c.l.b16 %v3559
    %v3783 = vunpack.c.h.b16 %v3559
    %v3784 = vunpack.c.l.b16 %v3560
    %v3785 = vunpack.c.h.b16 %v3560
    %v3786 = vunpack.c.l.b16 %v3561
    %v3787 = vunpack.c.h.b16 %v3561
    %v3788 = vunpack.c.l.b16 %v3562
    %v3789 = vunpack.c.h.b16 %v3562
    %v3790 = vunpack.c.l.b16 %v3563
    %v3791 = vunpack.c.h.b16 %v3563
    %v3792 = vunpack.c.l.b16 %v3564
    %v3793 = vunpack.c.h.b16 %v3564
    %v3794 = vunpack.c.l.b16 %v3565
    %v3795 = vunpack.c.h.b16 %v3565
    %v3796 = vunpack.c.l.b16 %v3566
    %v3797 = vunpack.c.h.b16 %v3566
    %v3798 = vunpack.c.l.b16 %v3567
    %v3799 = vunpack.c.h.b16 %v3567
    %v3800 = vunpack.c.l.b16 %v3568
    %v3801 = vunpack.c.h.b16 %v3568
    %v3802 = vunpack.c.l.b16 %v3569
    %v3803 = vunpack.c.h.b16 %v3569
    %v3804 = vpack.c.b16 %v3684, %v3676
    %v3805 = vpack.c.b16 %v3685, %v3677
    %v3806 = vpack.c.b16 %v3686, %v3678
    %v3807 = vpack.c.b16 %v3687, %v3679
    %v3808 = vpack.c.b16 %v3688, %v3680
    %v3809 = vpack.c.b16 %v3689, %v3681
    %v3810 = vpack.c.b16 %v3690, %v3682
    %v3811 = vpack.c.b16 %v3691, %v3683
    %v3812 = vpack.c.b16 %v3700, %v3692
    %v3813 = vpack.c.b16 %v3701, %v3693
    %v3814 = vpack.c.b16 %v3702, %v3694
    %v3815 = vpack.c.b16 %v3703, %v3695
    %v3816 = vpack.c.b16 %v3704, %v3696
    %v3817 = vpack.c.b16 %v3705, %v3697
    %v3818 = vpack.c.b16 %v3706, %v3698
    %v3819 = vpack.c.b16 %v3707, %v3699
    %v3820 = vpack.c.b16 %v3716, %v3708
    %v3821 = vpack.c.b16 %v3717, %v3709
    %v3822 = vpack.c.b16 %v3718, %v3710
    %v3823 = vpack.c.b16 %v3719, %v3711
    %v3824 = vpack.c.b16 %v3720, %v3712
    %v3825 = vpack.c.b16 %v3721, %v3713
    %v3826 = vpack.c.b16 %v3722, %v3714
    %v3827 = vpack.c.b16 %v3723, %v3715
    %v3828 = vpack.c.b16 %v3732, %v3724
    %v3829 = vpack.c.b16 %v3733, %v3725
    %v3830 = vpack.c.b16 %v3734, %v3726
    %v3831 = vpack.c.b16 %v3735, %v3727
    %v3832 = vpack.c.b16 %v3736, %v3728
    %v3833 = vpack.c.b16 %v3737, %v3729
    %v3834 = vpack.c.b16 %v3738, %v3730
    %v3835 = vpack.c.b16 %v3739, %v3731
    %v3836 = vpack.c.b16 %v3748, %v3740
    %v3837 = vpack.c.b16 %v3749, %v3741
    %v3838 = vpack.c.b16 %v3750, %v3742
    %v3839 = vpack.c.b16 %v3751, %v3743
    %v3840 = vpack.c.b16 %v3752, %v3744
    %v3841 = vpack.c.b16 %v3753, %v3745
    %v3842 = vpack.c.b16 %v3754, %v3746
    %v3843 = vpack.c.b16 %v3755, %v3747
    %v3844 = vpack.c.b16 %v3764, %v3756
    %v3845 = vpack.c.b16 %v3765, %v3757
    %v3846 = vpack.c.b16 %v3766, %v3758
    %v3847 = vpack.c.b16 %v3767, %v3759
    %v3848 = vpack.c.b16 %v3768, %v3760
    %v3849 = vpack.c.b16 %v3769, %v3761
    %v3850 = vpack.c.b16 %v3770, %v3762
    %v3851 = vpack.c.b16 %v3771, %v3763
    %v3852 = vpack.c.b16 %v3780, %v3772
    %v3853 = vpack.c.b16 %v3781, %v3773
    %v3854 = vpack.c.b16 %v3782, %v3774
    %v3855 = vpack.c.b16 %v3783, %v3775
    %v3856 = vpack.c.b16 %v3784, %v3776
    %v3857 = vpack.c.b16 %v3785, %v3777
    %v3858 = vpack.c.b16 %v3786, %v3778
    %v3859 = vpack.c.b16 %v3787, %v3779
    %v3860 = vpack.c.b16 %v3796, %v3788
    %v3861 = vpack.c.b16 %v3797, %v3789
    %v3862 = vpack.c.b16 %v3798, %v3790
    %v3863 = vpack.c.b16 %v3799, %v3791
    %v3864 = vpack.c.b16 %v3800, %v3792
    %v3865 = vpack.c.b16 %v3801, %v3793
    %v3866 = vpack.c.b16 %v3802, %v3794
    %v3867 = vpack.c.b16 %v3803, %v3795
    %3932 = vmatprep.subr.bf16.mxu0 %v3805
    %3933 = vmatpush1.bf16.msra.mxu0 %v3804
    %3934 = vmatprep.subr.bf16.mxu0 %v3813
    %3935 = vmatpush1.bf16.msra.mxu0 %v3812
    %3936 = vmatprep.subr.bf16.mxu0 %v3821
    %3937 = vmatpush1.bf16.msra.mxu0 %v3820
    %3938 = vmatprep.subr.bf16.mxu0 %v3829
    %3939 = vmatpush1.bf16.msra.mxu0 %v3828
    %3940 = vmatprep.subr.bf16.mxu0 %v3837
    %3941 = vmatpush1.bf16.msra.mxu0 %v3836
    %3942 = vmatprep.subr.bf16.mxu0 %v3845
    %3943 = vmatpush1.bf16.msra.mxu0 %v3844
    %3944 = vmatprep.subr.bf16.mxu0 %v3853
    %3945 = vmatpush1.bf16.msra.mxu0 %v3852
    %3946 = vmatprep.subr.bf16.mxu0 %v3861
    %3947 = vmatpush1.bf16.msra.mxu0 %v3860
    %3948 = vmatprep.subr.bf16.mxu0 0
    %3949 = vmatpush1.bf16.msra.mxu0 0
    %3950 = vmatprep.subr.bf16.mxu0 0
    %3951 = vmatpush1.bf16.msra.mxu0 0
    %3952 = vmatprep.subr.bf16.mxu0 0
    %3953 = vmatpush1.bf16.msra.mxu0 0
    %3954 = vmatprep.subr.bf16.mxu0 0
    %3955 = vmatpush1.bf16.msra.mxu0 0
    %3956 = vmatprep.subr.bf16.mxu0 0
    %3957 = vmatpush1.bf16.msra.mxu0 0
    %3958 = vmatprep.subr.bf16.mxu0 0
    %3959 = vmatpush1.bf16.msra.mxu0 0
    %3960 = vmatprep.subr.bf16.mxu0 0
    %3961 = vmatpush1.bf16.msra.mxu0 0
    %3962 = vmatprep.subr.bf16.mxu0 0
    %3963 = vmatpush1.bf16.msra.mxu0 0
    %3964 = vmatprep.mubr.bf16.mxu0 0
    %3965 = vmatmul.mubr.bf16.gmra.mrb[0].mxu0 %v3505
    %v3966 = vpop.f32.mrb[0].mxu0
    %v3967 = vadd.f32 %v3575, %v3966
    %v3968 = vpop.f32.mrb[0].mxu0
    %v3969 = vadd.f32 %v3579, %v3968
    %v3970 = vpop.f32.mrb[0].mxu0
    %v3971 = vadd.f32 %v3575, %v3970
    %v3972 = vpop.f32.mrb[0].mxu0
    %v3973 = vadd.f32 %v3579, %v3972
    %3974 = vdwg.mxu0
    %3975 = vmatprep.subr.bf16.mxu0 %v3807
    %3976 = vmatpush1.bf16.msra.mxu0 %v3806
    %3977 = vmatprep.subr.bf16.mxu0 %v3815
    %3978 = vmatpush1.bf16.msra.mxu0 %v3814
    %3979 = vmatprep.subr.bf16.mxu0 %v3823
    %3980 = vmatpush1.bf16.msra.mxu0 %v3822
    %3981 = vmatprep.subr.bf16.mxu0 %v3831
    %3982 = vmatpush1.bf16.msra.mxu0 %v3830
    %3983 = vmatprep.subr.bf16.mxu0 %v3839
    %3984 = vmatpush1.bf16.msra.mxu0 %v3838
    %3985 = vmatprep.subr.bf16.mxu0 %v3847
    %3986 = vmatpush1.bf16.msra.mxu0 %v3846
    %3987 = vmatprep.subr.bf16.mxu0 %v3855
    %3988 = vmatpush1.bf16.msra.mxu0 %v3854
    %3989 = vmatprep.subr.bf16.mxu0 %v3863
    %3990 = vmatpush1.bf16.msra.mxu0 %v3862
    %3991 = vmatprep.subr.bf16.mxu0 0
    %3992 = vmatpush1.bf16.msra.mxu0 0
    %3993 = vmatprep.subr.bf16.mxu0 0
    %3994 = vmatpush1.bf16.msra.mxu0 0
    %3995 = vmatprep.subr.bf16.mxu0 0
    %3996 = vmatpush1.bf16.msra.mxu0 0
    %3997 = vmatprep.subr.bf16.mxu0 0
    %3998 = vmatpush1.bf16.msra.mxu0 0
    %3999 = vmatprep.subr.bf16.mxu0 0
    %4000 = vmatpush1.bf16.msra.mxu0 0
    %4001 = vmatprep.subr.bf16.mxu0 0
    %4002 = vmatpush1.bf16.msra.mxu0 0
    %4003 = vmatprep.subr.bf16.mxu0 0
    %4004 = vmatpush1.bf16.msra.mxu0 0
    %4005 = vmatprep.subr.bf16.mxu0 0
    %4006 = vmatpush1.bf16.msra.mxu0 0
    %4007 = vmatprep.mubr.bf16.mxu0 0
    %4008 = vmatmul.mubr.bf16.gmra.mrb[0].mxu0 %v3505
    %v4009 = vpop.f32.mrb[0].mxu0
    %v4010 = vadd.f32 %v3583, %v4009
    %v4011 = vpop.f32.mrb[0].mxu0
    %v4012 = vadd.f32 %v3587, %v4011
    %v4013 = vpop.f32.mrb[0].mxu0
    %v4014 = vadd.f32 %v3583, %v4013
    %v4015 = vpop.f32.mrb[0].mxu0
    %v4016 = vadd.f32 %v3587, %v4015
    %4017 = vdwg.mxu0
    %4018 = vmatprep.subr.bf16.mxu0 %v3809
    %4019 = vmatpush1.bf16.msra.mxu0 %v3808
    %4020 = vmatprep.subr.bf16.mxu0 %v3817
    %4021 = vmatpush1.bf16.msra.mxu0 %v3816
    %4022 = vmatprep.subr.bf16.mxu0 %v3825
    %4023 = vmatpush1.bf16.msra.mxu0 %v3824
    %4024 = vmatprep.subr.bf16.mxu0 %v3833
    %4025 = vmatpush1.bf16.msra.mxu0 %v3832
    %4026 = vmatprep.subr.bf16.mxu0 %v3841
    %4027 = vmatpush1.bf16.msra.mxu0 %v3840
    %4028 = vmatprep.subr.bf16.mxu0 %v3849
    %4029 = vmatpush1.bf16.msra.mxu0 %v3848
    %4030 = vmatprep.subr.bf16.mxu0 %v3857
    %4031 = vmatpush1.bf16.msra.mxu0 %v3856
    %4032 = vmatprep.subr.bf16.mxu0 %v3865
    %4033 = vmatpush1.bf16.msra.mxu0 %v3864
    %4034 = vmatprep.subr.bf16.mxu0 0
    %4035 = vmatpush1.bf16.msra.mxu0 0
    %4036 = vmatprep.subr.bf16.mxu0 0
    %4037 = vmatpush1.bf16.msra.mxu0 0
    %4038 = vmatprep.subr.bf16.mxu0 0
    %4039 = vmatpush1.bf16.msra.mxu0 0
    %4040 = vmatprep.subr.bf16.mxu0 0
    %4041 = vmatpush1.bf16.msra.mxu0 0
    %4042 = vmatprep.subr.bf16.mxu0 0
    %4043 = vmatpush1.bf16.msra.mxu0 0
    %4044 = vmatprep.subr.bf16.mxu0 0
    %4045 = vmatpush1.bf16.msra.mxu0 0
    %4046 = vmatprep.subr.bf16.mxu0 0
    %4047 = vmatpush1.bf16.msra.mxu0 0
    %4048 = vmatprep.subr.bf16.mxu0 0
    %4049 = vmatpush1.bf16.msra.mxu0 0
    %4050 = vmatprep.mubr.bf16.mxu0 0
    %4051 = vmatmul.mubr.bf16.gmra.mrb[0].mxu0 %v3505
    %v4052 = vpop.f32.mrb[0].mxu0
    %v4053 = vadd.f32 %v3591, %v4052
    %v4054 = vpop.f32.mrb[0].mxu0
    %v4055 = vadd.f32 %v3595, %v4054
    %v4056 = vpop.f32.mrb[0].mxu0
    %v4057 = vadd.f32 %v3591, %v4056
    %v4058 = vpop.f32.mrb[0].mxu0
    %v4059 = vadd.f32 %v3595, %v4058
    %4060 = vdwg.mxu0
    %4061 = vmatprep.subr.bf16.mxu0 %v3811
    %4062 = vmatpush1.bf16.msra.mxu0 %v3810
    %4063 = vmatprep.subr.bf16.mxu0 %v3819
    %4064 = vmatpush1.bf16.msra.mxu0 %v3818
    %4065 = vmatprep.subr.bf16.mxu0 %v3827
    %4066 = vmatpush1.bf16.msra.mxu0 %v3826
    %4067 = vmatprep.subr.bf16.mxu0 %v3835
    %4068 = vmatpush1.bf16.msra.mxu0 %v3834
    %4069 = vmatprep.subr.bf16.mxu0 %v3843
    %4070 = vmatpush1.bf16.msra.mxu0 %v3842
    %4071 = vmatprep.subr.bf16.mxu0 %v3851
    %4072 = vmatpush1.bf16.msra.mxu0 %v3850
    %4073 = vmatprep.subr.bf16.mxu0 %v3859
    %4074 = vmatpush1.bf16.msra.mxu0 %v3858
    %4075 = vmatprep.subr.bf16.mxu0 %v3867
    %4076 = vmatpush1.bf16.msra.mxu0 %v3866
    %4077 = vmatprep.subr.bf16.mxu0 0
    %4078 = vmatpush1.bf16.msra.mxu0 0
    %4079 = vmatprep.subr.bf16.mxu0 0
    %4080 = vmatpush1.bf16.msra.mxu0 0
    %4081 = vmatprep.subr.bf16.mxu0 0
    %4082 = vmatpush1.bf16.msra.mxu0 0
    %4083 = vmatprep.subr.bf16.mxu0 0
    %4084 = vmatpush1.bf16.msra.mxu0 0
    %4085 = vmatprep.subr.bf16.mxu0 0
    %4086 = vmatpush1.bf16.msra.mxu0 0
    %4087 = vmatprep.subr.bf16.mxu0 0
    %4088 = vmatpush1.bf16.msra.mxu0 0
    %4089 = vmatprep.subr.bf16.mxu0 0
    %4090 = vmatpush1.bf16.msra.mxu0 0
    %4091 = vmatprep.subr.bf16.mxu0 0
    %4092 = vmatpush1.bf16.msra.mxu0 0
    %4093 = vmatprep.mubr.bf16.mxu0 0
    %4094 = vmatmul.mubr.bf16.gmra.mrb[0].mxu0 %v3505
    %v4095 = vpop.f32.mrb[0].mxu0
    %v4096 = vadd.f32 %v3599, %v4095
    %v4097 = vpop.f32.mrb[0].mxu0
    %v4098 = vadd.f32 %v3603, %v4097
    %v4099 = vpop.f32.mrb[0].mxu0
    %v4100 = vadd.f32 %v3599, %v4099
    %v4101 = vpop.f32.mrb[0].mxu0
    %v4102 = vadd.f32 %v3603, %v4101
    %4103 = vdwg.mxu0
    %4104 = vst [vmem:[#allocation3] sm:$0xff] %v3967
    %4105 = vst [vmem:[#allocation3 + $0x8] sm:$0xff] %v3969
    %4106 = vst [vmem:[#allocation3 + $0x10] sm:$0xff] %v4010
    %4107 = vst [vmem:[#allocation3 + $0x18] sm:$0xff] %v4012
    %4108 = vst [vmem:[#allocation3 + $0x20] sm:$0xff] %v4053
    %4109 = vst [vmem:[#allocation3 + $0x28] sm:$0xff] %v4055
    %4110 = vst [vmem:[#allocation3 + $0x30] sm:$0xff] %v4096
    %4111 = vst [vmem:[#allocation3 + $0x38] sm:$0xff] %v4098
    %4112 = vst [vmem:[#allocation3 + $0x40] sm:$0xff] %v3971
    %4113 = vst [vmem:[#allocation3 + $0x48] sm:$0xff] %v3973
    %4114 = vst [vmem:[#allocation3 + $0x50] sm:$0xff] %v4014
    %4115 = vst [vmem:[#allocation3 + $0x58] sm:$0xff] %v4016
    %4116 = vst [vmem:[#allocation3 + $0x60] sm:$0xff] %v4057
    %4117 = vst [vmem:[#allocation3 + $0x68] sm:$0xff] %v4059
    %4118 = vst [vmem:[#allocation3 + $0x70] sm:$0xff] %v4100
    %4119 = vst [vmem:[#allocation3 + $0x78] sm:$0xff] %v4102
    %v4120 = vld [vmem:[#allocation3] sm:$0x3]
    %v4121 = vld [vmem:[#allocation3 + $0x8] sm:$0x3]
    %v4122 = vld [vmem:[#allocation3 + $0x10] sm:$0x3]
    %v4123 = vld [vmem:[#allocation3 + $0x18] sm:$0x3]
    %v4124 = vld [vmem:[#allocation3 + $0x60] sm:$0xc0]
    %v4125 = vld [vmem:[#allocation3 + $0x68] sm:$0xc0]
    %v4126 = vld [vmem:[#allocation3 + $0x70] sm:$0xc0]
    %v4127 = vld [vmem:[#allocation3 + $0x78] sm:$0xc0]
    %v4132 = vrot.slane %v4124, 6
    %v4133 = vrot.slane %v4125, 6
    %v4134 = vrot.slane %v4126, 6
    %v4135 = vrot.slane %v4127, 6
    %v4140 = vadd.f32 %v4120, %v4132
    %v4141 = vadd.f32 %v4121, %v4133
    %v4142 = vadd.f32 %v4122, %v4134
    %v4143 = vadd.f32 %v4123, %v4135
    %v4144 = vld [vmem:[#allocation13] sm:$0xff]
    %v4145 = vld [vmem:[#allocation13 + $0x8] sm:$0xff]
    %v4146 = vld [vmem:[#allocation13 + $0x10] sm:$0xff]
    %v4147 = vld [vmem:[#allocation13 + $0x18] sm:$0xff]
    %v4148 = vld [vmem:[#allocation13 + $0x20] sm:$0xff]
    %v4149 = vld [vmem:[#allocation13 + $0x28] sm:$0xff]
    %v4150 = vld [vmem:[#allocation13 + $0x30] sm:$0xff]
    %v4151 = vld [vmem:[#allocation13 + $0x38] sm:$0xff]
    %v4152 = vld [vmem:[#allocation13 + $0x40] sm:$0xff]
    %v4153 = vld [vmem:[#allocation13 + $0x48] sm:$0xff]
    %v4154 = vld [vmem:[#allocation13 + $0x50] sm:$0xff]
    %v4155 = vld [vmem:[#allocation13 + $0x58] sm:$0xff]
    %v4156 = vld [vmem:[#allocation13 + $0x60] sm:$0xff]
    %v4157 = vld [vmem:[#allocation13 + $0x68] sm:$0xff]
    %v4158 = vld [vmem:[#allocation13 + $0x70] sm:$0xff]
    %v4159 = vld [vmem:[#allocation13 + $0x78] sm:$0xff]
    %v4160 = vld [vmem:[#allocation13 + $0x80] sm:$0xff]
    %v4161 = vld [vmem:[#allocation13 + $0x88] sm:$0xff]
    %v4162 = vld [vmem:[#allocation13 + $0x90] sm:$0xff]
    %v4163 = vld [vmem:[#allocation13 + $0x98] sm:$0xff]
    %v4164 = vld [vmem:[#allocation13 + $0xa0] sm:$0xff]
    %v4165 = vld [vmem:[#allocation13 + $0xa8] sm:$0xff]
    %v4166 = vld [vmem:[#allocation13 + $0xb0] sm:$0xff]
    %v4167 = vld [vmem:[#allocation13 + $0xb8] sm:$0xff]
    %v4168 = vld [vmem:[#allocation13 + $0xc0] sm:$0xff]
    %v4169 = vld [vmem:[#allocation13 + $0xc8] sm:$0xff]
    %v4170 = vld [vmem:[#allocation13 + $0xd0] sm:$0xff]
    %v4171 = vld [vmem:[#allocation13 + $0xd8] sm:$0xff]
    %v4172 = vld [vmem:[#allocation13 + $0xe0] sm:$0xff]
    %v4173 = vld [vmem:[#allocation13 + $0xe8] sm:$0xff]
    %v4174 = vld [vmem:[#allocation13 + $0xf0] sm:$0xff]
    %v4175 = vld [vmem:[#allocation13 + $0xf8] sm:$0xff]
    %v4208 = vunpack.c.l.b16 %v4144
    %v4209 = vunpack.c.h.b16 %v4144
    %v4210 = vunpack.c.l.b16 %v4145
    %v4211 = vunpack.c.h.b16 %v4145
    %v4212 = vunpack.c.l.b16 %v4146
    %v4213 = vunpack.c.h.b16 %v4146
    %v4214 = vunpack.c.l.b16 %v4147
    %v4215 = vunpack.c.h.b16 %v4147
    %v4216 = vunpack.c.l.b16 %v4148
    %v4217 = vunpack.c.h.b16 %v4148
    %v4218 = vunpack.c.l.b16 %v4149
    %v4219 = vunpack.c.h.b16 %v4149
    %v4220 = vunpack.c.l.b16 %v4150
    %v4221 = vunpack.c.h.b16 %v4150
    %v4222 = vunpack.c.l.b16 %v4151
    %v4223 = vunpack.c.h.b16 %v4151
    %v4224 = vunpack.c.l.b16 %v4152
    %v4225 = vunpack.c.h.b16 %v4152
    %v4226 = vunpack.c.l.b16 %v4153
    %v4227 = vunpack.c.h.b16 %v4153
    %v4228 = vunpack.c.l.b16 %v4154
    %v4229 = vunpack.c.h.b16 %v4154
    %v4230 = vunpack.c.l.b16 %v4155
    %v4231 = vunpack.c.h.b16 %v4155
    %v4232 = vunpack.c.l.b16 %v4156
    %v4233 = vunpack.c.h.b16 %v4156
    %v4234 = vunpack.c.l.b16 %v4157
    %v4235 = vunpack.c.h.b16 %v4157
    %v4236 = vunpack.c.l.b16 %v4158
    %v4237 = vunpack.c.h.b16 %v4158
    %v4238 = vunpack.c.l.b16 %v4159
    %v4239 = vunpack.c.h.b16 %v4159
    %v4240 = vunpack.c.l.b16 %v4160
    %v4241 = vunpack.c.h.b16 %v4160
    %v4242 = vunpack.c.l.b16 %v4161
    %v4243 = vunpack.c.h.b16 %v4161
    %v4244 = vunpack.c.l.b16 %v4162
    %v4245 = vunpack.c.h.b16 %v4162
    %v4246 = vunpack.c.l.b16 %v4163
    %v4247 = vunpack.c.h.b16 %v4163
    %v4248 = vunpack.c.l.b16 %v4164
    %v4249 = vunpack.c.h.b16 %v4164
    %v4250 = vunpack.c.l.b16 %v4165
    %v4251 = vunpack.c.h.b16 %v4165
    %v4252 = vunpack.c.l.b16 %v4166
    %v4253 = vunpack.c.h.b16 %v4166
    %v4254 = vunpack.c.l.b16 %v4167
    %v4255 = vunpack.c.h.b16 %v4167
    %v4256 = vunpack.c.l.b16 %v4168
    %v4257 = vunpack.c.h.b16 %v4168
    %v4258 = vunpack.c.l.b16 %v4169
    %v4259 = vunpack.c.h.b16 %v4169
    %v4260 = vunpack.c.l.b16 %v4170
    %v4261 = vunpack.c.h.b16 %v4170
    %v4262 = vunpack.c.l.b16 %v4171
    %v4263 = vunpack.c.h.b16 %v4171
    %v4264 = vunpack.c.l.b16 %v4172
    %v4265 = vunpack.c.h.b16 %v4172
    %v4266 = vunpack.c.l.b16 %v4173
    %v4267 = vunpack.c.h.b16 %v4173
    %v4268 = vunpack.c.l.b16 %v4174
    %v4269 = vunpack.c.h.b16 %v4174
    %v4270 = vunpack.c.l.b16 %v4175
    %v4271 = vunpack.c.h.b16 %v4175
    %v4272 = vpack.c.b16 %v4212, %v4208
    %v4273 = vpack.c.b16 %v4213, %v4209
    %v4274 = vpack.c.b16 %v4214, %v4210
    %v4275 = vpack.c.b16 %v4215, %v4211
    %v4276 = vpack.c.b16 %v4220, %v4216
    %v4277 = vpack.c.b16 %v4221, %v4217
    %v4278 = vpack.c.b16 %v4222, %v4218
    %v4279 = vpack.c.b16 %v4223, %v4219
    %v4280 = vpack.c.b16 %v4228, %v4224
    %v4281 = vpack.c.b16 %v4229, %v4225
    %v4282 = vpack.c.b16 %v4230, %v4226
    %v4283 = vpack.c.b16 %v4231, %v4227
    %v4284 = vpack.c.b16 %v4236, %v4232
    %v4285 = vpack.c.b16 %v4237, %v4233
    %v4286 = vpack.c.b16 %v4238, %v4234
    %v4287 = vpack.c.b16 %v4239, %v4235
    %v4288 = vpack.c.b16 %v4244, %v4240
    %v4289 = vpack.c.b16 %v4245, %v4241
    %v4290 = vpack.c.b16 %v4246, %v4242
    %v4291 = vpack.c.b16 %v4247, %v4243
    %v4292 = vpack.c.b16 %v4252, %v4248
    %v4293 = vpack.c.b16 %v4253, %v4249
    %v4294 = vpack.c.b16 %v4254, %v4250
    %v4295 = vpack.c.b16 %v4255, %v4251
    %v4296 = vpack.c.b16 %v4260, %v4256
    %v4297 = vpack.c.b16 %v4261, %v4257
    %v4298 = vpack.c.b16 %v4262, %v4258
    %v4299 = vpack.c.b16 %v4263, %v4259
    %v4300 = vpack.c.b16 %v4268, %v4264
    %v4301 = vpack.c.b16 %v4269, %v4265
    %v4302 = vpack.c.b16 %v4270, %v4266
    %v4303 = vpack.c.b16 %v4271, %v4267
    %4336 = vmatprep.subr.bf16.mxu0 %v4273
    %4337 = vmatpush1.bf16.msra.mxu0 %v4272
    %4338 = vmatprep.subr.bf16.mxu0 %v4277
    %4339 = vmatpush1.bf16.msra.mxu0 %v4276
    %4340 = vmatprep.subr.bf16.mxu0 %v4281
    %4341 = vmatpush1.bf16.msra.mxu0 %v4280
    %4342 = vmatprep.subr.bf16.mxu0 %v4285
    %4343 = vmatpush1.bf16.msra.mxu0 %v4284
    %4344 = vmatprep.subr.bf16.mxu0 %v4289
    %4345 = vmatpush1.bf16.msra.mxu0 %v4288
    %4346 = vmatprep.subr.bf16.mxu0 %v4293
    %4347 = vmatpush1.bf16.msra.mxu0 %v4292
    %4348 = vmatprep.subr.bf16.mxu0 %v4297
    %4349 = vmatpush1.bf16.msra.mxu0 %v4296
    %4350 = vmatprep.subr.bf16.mxu0 %v4301
    %4351 = vmatpush1.bf16.msra.mxu0 %v4300
    %4352 = vmatprep.subr.bf16.mxu0 0
    %4353 = vmatpush1.bf16.msra.mxu0 0
    %4354 = vmatprep.subr.bf16.mxu0 0
    %4355 = vmatpush1.bf16.msra.mxu0 0
    %4356 = vmatprep.subr.bf16.mxu0 0
    %4357 = vmatpush1.bf16.msra.mxu0 0
    %4358 = vmatprep.subr.bf16.mxu0 0
    %4359 = vmatpush1.bf16.msra.mxu0 0
    %4360 = vmatprep.subr.bf16.mxu0 0
    %4361 = vmatpush1.bf16.msra.mxu0 0
    %4362 = vmatprep.subr.bf16.mxu0 0
    %4363 = vmatpush1.bf16.msra.mxu0 0
    %4364 = vmatprep.subr.bf16.mxu0 0
    %4365 = vmatpush1.bf16.msra.mxu0 0
    %4366 = vmatprep.subr.bf16.mxu0 0
    %4367 = vmatpush1.bf16.msra.mxu0 0
    %4368 = vmatprep.mubr.bf16.mxu0 0
    %4369 = vmatmul.mubr.bf16.gmra.mrb[0].mxu0 0
    %v4370 = vpop.f32.mrb[0].mxu0
    %v4371 = vadd.f32 0.0, %v4370
    %v4372 = vpop.f32.mrb[0].mxu0
    %v4373 = vadd.f32 0.0, %v4372
    %v4374 = vpop.f32.mrb[0].mxu0
    %v4375 = vpop.f32.mrb[0].mxu0
    %4376 = vdwg.mxu0
    %4377 = vmatprep.subr.bf16.mxu0 %v4275
    %4378 = vmatpush1.bf16.msra.mxu0 %v4274
    %4379 = vmatprep.subr.bf16.mxu0 %v4279
    %4380 = vmatpush1.bf16.msra.mxu0 %v4278
    %4381 = vmatprep.subr.bf16.mxu0 %v4283
    %4382 = vmatpush1.bf16.msra.mxu0 %v4282
    %4383 = vmatprep.subr.bf16.mxu0 %v4287
    %4384 = vmatpush1.bf16.msra.mxu0 %v4286
    %4385 = vmatprep.subr.bf16.mxu0 %v4291
    %4386 = vmatpush1.bf16.msra.mxu0 %v4290
    %4387 = vmatprep.subr.bf16.mxu0 %v4295
    %4388 = vmatpush1.bf16.msra.mxu0 %v4294
    %4389 = vmatprep.subr.bf16.mxu0 %v4299
    %4390 = vmatpush1.bf16.msra.mxu0 %v4298
    %4391 = vmatprep.subr.bf16.mxu0 %v4303
    %4392 = vmatpush1.bf16.msra.mxu0 %v4302
    %4393 = vmatprep.subr.bf16.mxu0 0
    %4394 = vmatpush1.bf16.msra.mxu0 0
    %4395 = vmatprep.subr.bf16.mxu0 0
    %4396 = vmatpush1.bf16.msra.mxu0 0
    %4397 = vmatprep.subr.bf16.mxu0 0
    %4398 = vmatpush1.bf16.msra.mxu0 0
    %4399 = vmatprep.subr.bf16.mxu0 0
    %4400 = vmatpush1.bf16.msra.mxu0 0
    %4401 = vmatprep.subr.bf16.mxu0 0
    %4402 = vmatpush1.bf16.msra.mxu0 0
    %4403 = vmatprep.subr.bf16.mxu0 0
    %4404 = vmatpush1.bf16.msra.mxu0 0
    %4405 = vmatprep.subr.bf16.mxu0 0
    %4406 = vmatpush1.bf16.msra.mxu0 0
    %4407 = vmatprep.subr.bf16.mxu0 0
    %4408 = vmatpush1.bf16.msra.mxu0 0
    %4409 = vmatprep.mubr.bf16.mxu0 0
    %4410 = vmatmul.mubr.bf16.gmra.mrb[0].mxu0 0
    %v4411 = vpop.f32.mrb[0].mxu0
    %v4412 = vadd.f32 0.0, %v4411
    %v4413 = vpop.f32.mrb[0].mxu0
    %v4414 = vadd.f32 0.0, %v4413
    %v4415 = vpop.f32.mrb[0].mxu0
    %v4416 = vpop.f32.mrb[0].mxu0
    %4417 = vdwg.mxu0
    %v4418 = vadd.f32 %v4140, %v4371
    %v4419 = vadd.f32 %v4141, %v4373
    %v4420 = vadd.f32 %v4142, %v4412
    %v4421 = vadd.f32 %v4143, %v4414
    %v4422 = vxor.u32 %v4418, 2147483648
    %v4423 = vmul.f32 %v4422, 1.442695
    %v4424 = vpow.pop %v4423
    %v4425 = vadd.f32 %v4424, 1.0
    %v4426 = vrcp.pop %v4425
    %v4427 = vmul.f32 1.0, %v4426
    %v4428 = vxor.u32 %v4419, 2147483648
    %v4429 = vmul.f32 %v4428, 1.442695
    %v4430 = vpow.pop %v4429
    %v4431 = vadd.f32 %v4430, 1.0
    %v4432 = vrcp.pop %v4431
    %v4433 = vmul.f32 1.0, %v4432
    %v4434 = vtanh.pop %v4420
    %v4435 = vxor.u32 %v4421, 2147483648
    %v4436 = vmul.f32 %v4435, 1.442695
    %v4437 = vpow.pop %v4436
    %v4438 = vadd.f32 %v4437, 1.0
    %v4439 = vrcp.pop %v4438
    %v4440 = vmul.f32 1.0, %v4439
    %v4441 = vmul.f32 %v4433, 0.0
    %v4442 = vmul.f32 %v4427, %v4434
    %v4443 = vadd.f32 %v4441, %v4442
    %v4444 = vtanh.pop %v4443
    %v4445 = vmul.f32 %v4440, %v4444
    %4446 = vst [vmem:[#allocation6] sm:$0x3] %v4445
    %4447 = vst [vmem:[#allocation7 + $0xe] sm:$0x3] %v4445
    %v4448 = vld [vmem:[#allocation3] sm:$0xc]
    %v4449 = vld [vmem:[#allocation3 + $0x8] sm:$0xc]
    %v4450 = vld [vmem:[#allocation3 + $0x10] sm:$0xc]
    %v4451 = vld [vmem:[#allocation3 + $0x18] sm:$0xc]
    %v4452 = vld [vmem:[#allocation3 + $0x60] sm:$0x30]
    %v4453 = vld [vmem:[#allocation3 + $0x68] sm:$0x30]
    %v4454 = vld [vmem:[#allocation3 + $0x70] sm:$0x30]
    %v4455 = vld [vmem:[#allocation3 + $0x78] sm:$0x30]
    %v4460 = vrot.slane %v4452, 2
    %v4461 = vrot.slane %v4453, 2
    %v4462 = vrot.slane %v4454, 2
    %v4463 = vrot.slane %v4455, 2
    %v4468 = vadd.f32 %v4448, %v4460
    %v4469 = vadd.f32 %v4449, %v4461
    %v4470 = vadd.f32 %v4450, %v4462
    %v4471 = vadd.f32 %v4451, %v4463
    %v4472 = vpack.c.bf16 %v4445, %v4445
    %v4473 = vld [vmem:[#allocation13] sm:$0xff]
    %v4474 = vld [vmem:[#allocation13 + $0x8] sm:$0xff]
    %v4475 = vld [vmem:[#allocation13 + $0x10] sm:$0xff]
    %v4476 = vld [vmem:[#allocation13 + $0x18] sm:$0xff]
    %v4477 = vld [vmem:[#allocation13 + $0x20] sm:$0xff]
    %v4478 = vld [vmem:[#allocation13 + $0x28] sm:$0xff]
    %v4479 = vld [vmem:[#allocation13 + $0x30] sm:$0xff]
    %v4480 = vld [vmem:[#allocation13 + $0x38] sm:$0xff]
    %v4481 = vld [vmem:[#allocation13 + $0x40] sm:$0xff]
    %v4482 = vld [vmem:[#allocation13 + $0x48] sm:$0xff]
    %v4483 = vld [vmem:[#allocation13 + $0x50] sm:$0xff]
    %v4484 = vld [vmem:[#allocation13 + $0x58] sm:$0xff]
    %v4485 = vld [vmem:[#allocation13 + $0x60] sm:$0xff]
    %v4486 = vld [vmem:[#allocation13 + $0x68] sm:$0xff]
    %v4487 = vld [vmem:[#allocation13 + $0x70] sm:$0xff]
    %v4488 = vld [vmem:[#allocation13 + $0x78] sm:$0xff]
    %v4489 = vld [vmem:[#allocation13 + $0x80] sm:$0xff]
    %v4490 = vld [vmem:[#allocation13 + $0x88] sm:$0xff]
    %v4491 = vld [vmem:[#allocation13 + $0x90] sm:$0xff]
    %v4492 = vld [vmem:[#allocation13 + $0x98] sm:$0xff]
    %v4493 = vld [vmem:[#allocation13 + $0xa0] sm:$0xff]
    %v4494 = vld [vmem:[#allocation13 + $0xa8] sm:$0xff]
    %v4495 = vld [vmem:[#allocation13 + $0xb0] sm:$0xff]
    %v4496 = vld [vmem:[#allocation13 + $0xb8] sm:$0xff]
    %v4497 = vld [vmem:[#allocation13 + $0xc0] sm:$0xff]
    %v4498 = vld [vmem:[#allocation13 + $0xc8] sm:$0xff]
    %v4499 = vld [vmem:[#allocation13 + $0xd0] sm:$0xff]
    %v4500 = vld [vmem:[#allocation13 + $0xd8] sm:$0xff]
    %v4501 = vld [vmem:[#allocation13 + $0xe0] sm:$0xff]
    %v4502 = vld [vmem:[#allocation13 + $0xe8] sm:$0xff]
    %v4503 = vld [vmem:[#allocation13 + $0xf0] sm:$0xff]
    %v4504 = vld [vmem:[#allocation13 + $0xf8] sm:$0xff]
    %v4537 = vunpack.c.l.b16 %v4473
    %v4538 = vunpack.c.h.b16 %v4473
    %v4539 = vunpack.c.l.b16 %v4474
    %v4540 = vunpack.c.h.b16 %v4474
    %v4541 = vunpack.c.l.b16 %v4475
    %v4542 = vunpack.c.h.b16 %v4475
    %v4543 = vunpack.c.l.b16 %v4476
    %v4544 = vunpack.c.h.b16 %v4476
    %v4545 = vunpack.c.l.b16 %v4477
    %v4546 = vunpack.c.h.b16 %v4477
    %v4547 = vunpack.c.l.b16 %v4478
    %v4548 = vunpack.c.h.b16 %v4478
    %v4549 = vunpack.c.l.b16 %v4479
    %v4550 = vunpack.c.h.b16 %v4479
    %v4551 = vunpack.c.l.b16 %v4480
    %v4552 = vunpack.c.h.b16 %v4480
    %v4553 = vunpack.c.l.b16 %v4481
    %v4554 = vunpack.c.h.b16 %v4481
    %v4555 = vunpack.c.l.b16 %v4482
    %v4556 = vunpack.c.h.b16 %v4482
    %v4557 = vunpack.c.l.b16 %v4483
    %v4558 = vunpack.c.h.b16 %v4483
    %v4559 = vunpack.c.l.b16 %v4484
    %v4560 = vunpack.c.h.b16 %v4484
    %v4561 = vunpack.c.l.b16 %v4485
    %v4562 = vunpack.c.h.b16 %v4485
    %v4563 = vunpack.c.l.b16 %v4486
    %v4564 = vunpack.c.h.b16 %v4486
    %v4565 = vunpack.c.l.b16 %v4487
    %v4566 = vunpack.c.h.b16 %v4487
    %v4567 = vunpack.c.l.b16 %v4488
    %v4568 = vunpack.c.h.b16 %v4488
    %v4569 = vunpack.c.l.b16 %v4489
    %v4570 = vunpack.c.h.b16 %v4489
    %v4571 = vunpack.c.l.b16 %v4490
    %v4572 = vunpack.c.h.b16 %v4490
    %v4573 = vunpack.c.l.b16 %v4491
    %v4574 = vunpack.c.h.b16 %v4491
    %v4575 = vunpack.c.l.b16 %v4492
    %v4576 = vunpack.c.h.b16 %v4492
    %v4577 = vunpack.c.l.b16 %v4493
    %v4578 = vunpack.c.h.b16 %v4493
    %v4579 = vunpack.c.l.b16 %v4494
    %v4580 = vunpack.c.h.b16 %v4494
    %v4581 = vunpack.c.l.b16 %v4495
    %v4582 = vunpack.c.h.b16 %v4495
    %v4583 = vunpack.c.l.b16 %v4496
    %v4584 = vunpack.c.h.b16 %v4496
    %v4585 = vunpack.c.l.b16 %v4497
    %v4586 = vunpack.c.h.b16 %v4497
    %v4587 = vunpack.c.l.b16 %v4498
    %v4588 = vunpack.c.h.b16 %v4498
    %v4589 = vunpack.c.l.b16 %v4499
    %v4590 = vunpack.c.h.b16 %v4499
    %v4591 = vunpack.c.l.b16 %v4500
    %v4592 = vunpack.c.h.b16 %v4500
    %v4593 = vunpack.c.l.b16 %v4501
    %v4594 = vunpack.c.h.b16 %v4501
    %v4595 = vunpack.c.l.b16 %v4502
    %v4596 = vunpack.c.h.b16 %v4502
    %v4597 = vunpack.c.l.b16 %v4503
    %v4598 = vunpack.c.h.b16 %v4503
    %v4599 = vunpack.c.l.b16 %v4504
    %v4600 = vunpack.c.h.b16 %v4504
    %v4601 = vpack.c.b16 %v4541, %v4537
    %v4602 = vpack.c.b16 %v4542, %v4538
    %v4603 = vpack.c.b16 %v4543, %v4539
    %v4604 = vpack.c.b16 %v4544, %v4540
    %v4605 = vpack.c.b16 %v4549, %v4545
    %v4606 = vpack.c.b16 %v4550, %v4546
    %v4607 = vpack.c.b16 %v4551, %v4547
    %v4608 = vpack.c.b16 %v4552, %v4548
    %v4609 = vpack.c.b16 %v4557, %v4553
    %v4610 = vpack.c.b16 %v4558, %v4554
    %v4611 = vpack.c.b16 %v4559, %v4555
    %v4612 = vpack.c.b16 %v4560, %v4556
    %v4613 = vpack.c.b16 %v4565, %v4561
    %v4614 = vpack.c.b16 %v4566, %v4562
    %v4615 = vpack.c.b16 %v4567, %v4563
    %v4616 = vpack.c.b16 %v4568, %v4564
    %v4617 = vpack.c.b16 %v4573, %v4569
    %v4618 = vpack.c.b16 %v4574, %v4570
    %v4619 = vpack.c.b16 %v4575, %v4571
    %v4620 = vpack.c.b16 %v4576, %v4572
    %v4621 = vpack.c.b16 %v4581, %v4577
    %v4622 = vpack.c.b16 %v4582, %v4578
    %v4623 = vpack.c.b16 %v4583, %v4579
    %v4624 = vpack.c.b16 %v4584, %v4580
    %v4625 = vpack.c.b16 %v4589, %v4585
    %v4626 = vpack.c.b16 %v4590, %v4586
    %v4627 = vpack.c.b16 %v4591, %v4587
    %v4628 = vpack.c.b16 %v4592, %v4588
    %v4629 = vpack.c.b16 %v4597, %v4593
    %v4630 = vpack.c.b16 %v4598, %v4594
    %v4631 = vpack.c.b16 %v4599, %v4595
    %v4632 = vpack.c.b16 %v4600, %v4596
    %4665 = vmatprep.subr.bf16.mxu0 %v4602
    %4666 = vmatpush1.bf16.msra.mxu0 %v4601
    %4667 = vmatprep.subr.bf16.mxu0 %v4606
    %4668 = vmatpush1.bf16.msra.mxu0 %v4605
    %4669 = vmatprep.subr.bf16.mxu0 %v4610
    %4670 = vmatpush1.bf16.msra.mxu0 %v4609
    %4671 = vmatprep.subr.bf16.mxu0 %v4614
    %4672 = vmatpush1.bf16.msra.mxu0 %v4613
    %4673 = vmatprep.subr.bf16.mxu0 %v4618
    %4674 = vmatpush1.bf16.msra.mxu0 %v4617
    %4675 = vmatprep.subr.bf16.mxu0 %v4622
    %4676 = vmatpush1.bf16.msra.mxu0 %v4621
    %4677 = vmatprep.subr.bf16.mxu0 %v4626
    %4678 = vmatpush1.bf16.msra.mxu0 %v4625
    %4679 = vmatprep.subr.bf16.mxu0 %v4630
    %4680 = vmatpush1.bf16.msra.mxu0 %v4629
    %4681 = vmatprep.subr.bf16.mxu0 0
    %4682 = vmatpush1.bf16.msra.mxu0 0
    %4683 = vmatprep.subr.bf16.mxu0 0
    %4684 = vmatpush1.bf16.msra.mxu0 0
    %4685 = vmatprep.subr.bf16.mxu0 0
    %4686 = vmatpush1.bf16.msra.mxu0 0
    %4687 = vmatprep.subr.bf16.mxu0 0
    %4688 = vmatpush1.bf16.msra.mxu0 0
    %4689 = vmatprep.subr.bf16.mxu0 0
    %4690 = vmatpush1.bf16.msra.mxu0 0
    %4691 = vmatprep.subr.bf16.mxu0 0
    %4692 = vmatpush1.bf16.msra.mxu0 0
    %4693 = vmatprep.subr.bf16.mxu0 0
    %4694 = vmatpush1.bf16.msra.mxu0 0
    %4695 = vmatprep.subr.bf16.mxu0 0
    %4696 = vmatpush1.bf16.msra.mxu0 0
    %4697 = vmatprep.mubr.bf16.mxu0 0
    %4698 = vmatmul.mubr.bf16.gmra.mrb[0].mxu0 %v4472
    %v4699 = vpop.f32.mrb[0].mxu0
    %v4700 = vadd.f32 0.0, %v4699
    %v4701 = vpop.f32.mrb[0].mxu0
    %v4702 = vadd.f32 0.0, %v4701
    %v4703 = vpop.f32.mrb[0].mxu0
    %v4704 = vpop.f32.mrb[0].mxu0
    %4705 = vdwg.mxu0
    %4706 = vmatprep.subr.bf16.mxu0 %v4604
    %4707 = vmatpush1.bf16.msra.mxu0 %v4603
    %4708 = vmatprep.subr.bf16.mxu0 %v4608
    %4709 = vmatpush1.bf16.msra.mxu0 %v4607
    %4710 = vmatprep.subr.bf16.mxu0 %v4612
    %4711 = vmatpush1.bf16.msra.mxu0 %v4611
    %4712 = vmatprep.subr.bf16.mxu0 %v4616
    %4713 = vmatpush1.bf16.msra.mxu0 %v4615
    %4714 = vmatprep.subr.bf16.mxu0 %v4620
    %4715 = vmatpush1.bf16.msra.mxu0 %v4619
    %4716 = vmatprep.subr.bf16.mxu0 %v4624
    %4717 = vmatpush1.bf16.msra.mxu0 %v4623
    %4718 = vmatprep.subr.bf16.mxu0 %v4628
    %4719 = vmatpush1.bf16.msra.mxu0 %v4627
    %4720 = vmatprep.subr.bf16.mxu0 %v4632
    %4721 = vmatpush1.bf16.msra.mxu0 %v4631
    %4722 = vmatprep.subr.bf16.mxu0 0
    %4723 = vmatpush1.bf16.msra.mxu0 0
    %4724 = vmatprep.subr.bf16.mxu0 0
    %4725 = vmatpush1.bf16.msra.mxu0 0
    %4726 = vmatprep.subr.bf16.mxu0 0
    %4727 = vmatpush1.bf16.msra.mxu0 0
    %4728 = vmatprep.subr.bf16.mxu0 0
    %4729 = vmatpush1.bf16.msra.mxu0 0
    %4730 = vmatprep.subr.bf16.mxu0 0
    %4731 = vmatpush1.bf16.msra.mxu0 0
    %4732 = vmatprep.subr.bf16.mxu0 0
    %4733 = vmatpush1.bf16.msra.mxu0 0
    %4734 = vmatprep.subr.bf16.mxu0 0
    %4735 = vmatpush1.bf16.msra.mxu0 0
    %4736 = vmatprep.subr.bf16.mxu0 0
    %4737 = vmatpush1.bf16.msra.mxu0 0
    %4738 = vmatprep.mubr.bf16.mxu0 0
    %4739 = vmatmul.mubr.bf16.gmra.mrb[0].mxu0 %v4472
    %v4740 = vpop.f32.mrb[0].mxu0
    %v4741 = vadd.f32 0.0, %v4740
    %v4742 = vpop.f32.mrb[0].mxu0
    %v4743 = vadd.f32 0.0, %v4742
    %v4744 = vpop.f32.mrb[0].mxu0
    %v4745 = vpop.f32.mrb[0].mxu0
    %4746 = vdwg.mxu0
    %v4751 = vrot.slane %v4700, 6
    %v4752 = vrot.slane %v4702, 6
    %v4753 = vrot.slane %v4741, 6
    %v4754 = vrot.slane %v4743, 6
    %v4759 = vadd.f32 %v4468, %v4751
    %v4760 = vadd.f32 %v4469, %v4752
    %v4761 = vadd.f32 %v4470, %v4753
    %v4762 = vadd.f32 %v4471, %v4754
    %v4763 = vxor.u32 %v4759, 2147483648
    %v4764 = vmul.f32 %v4763, 1.442695
    %v4765 = vpow.pop %v4764
    %v4766 = vadd.f32 %v4765, 1.0
    %v4767 = vrcp.pop %v4766
    %v4768 = vmul.f32 1.0, %v4767
    %v4769 = vxor.u32 %v4760, 2147483648
    %v4770 = vmul.f32 %v4769, 1.442695
    %v4771 = vpow.pop %v4770
    %v4772 = vadd.f32 %v4771, 1.0
    %v4773 = vrcp.pop %v4772
    %v4774 = vmul.f32 1.0, %v4773
    %v4775 = vtanh.pop %v4761
    %v4776 = vxor.u32 %v4762, 2147483648
    %v4777 = vmul.f32 %v4776, 1.442695
    %v4778 = vpow.pop %v4777
    %v4779 = vadd.f32 %v4778, 1.0
    %v4780 = vrcp.pop %v4779
    %v4781 = vmul.f32 1.0, %v4780
    %v4783 = vrot.slane %v4443, 6
    %v4785 = vmul.f32 %v4774, %v4783
    %v4786 = vmul.f32 %v4768, %v4775
    %v4787 = vadd.f32 %v4785, %v4786
    %v4788 = vtanh.pop %v4787
    %v4789 = vmul.f32 %v4781, %v4788
    %4790 = vst [vmem:[#allocation6] sm:$0xc] %v4789
    %4791 = vst [vmem:[#allocation7 + $0xa] sm:$0xc] %v4789
    %v4792 = vld [vmem:[#allocation3] sm:$0x30]
    %v4793 = vld [vmem:[#allocation3 + $0x8] sm:$0x30]
    %v4794 = vld [vmem:[#allocation3 + $0x10] sm:$0x30]
    %v4795 = vld [vmem:[#allocation3 + $0x18] sm:$0x30]
    %v4796 = vld [vmem:[#allocation3 + $0x60] sm:$0xc]
    %v4797 = vld [vmem:[#allocation3 + $0x68] sm:$0xc]
    %v4798 = vld [vmem:[#allocation3 + $0x70] sm:$0xc]
    %v4799 = vld [vmem:[#allocation3 + $0x78] sm:$0xc]
    %v4804 = vrot.slane %v4796, 6
    %v4805 = vrot.slane %v4797, 6
    %v4806 = vrot.slane %v4798, 6
    %v4807 = vrot.slane %v4799, 6
    %v4812 = vadd.f32 %v4792, %v4804
    %v4813 = vadd.f32 %v4793, %v4805
    %v4814 = vadd.f32 %v4794, %v4806
    %v4815 = vadd.f32 %v4795, %v4807
    %v4816 = vpack.c.bf16 %v4789, %v4789
    %v4817 = vld [vmem:[#allocation13] sm:$0xff]
    %v4818 = vld [vmem:[#allocation13 + $0x8] sm:$0xff]
    %v4819 = vld [vmem:[#allocation13 + $0x10] sm:$0xff]
    %v4820 = vld [vmem:[#allocation13 + $0x18] sm:$0xff]
    %v4821 = vld [vmem:[#allocation13 + $0x20] sm:$0xff]
    %v4822 = vld [vmem:[#allocation13 + $0x28] sm:$0xff]
    %v4823 = vld [vmem:[#allocation13 + $0x30] sm:$0xff]
    %v4824 = vld [vmem:[#allocation13 + $0x38] sm:$0xff]
    %v4825 = vld [vmem:[#allocation13 + $0x40] sm:$0xff]
    %v4826 = vld [vmem:[#allocation13 + $0x48] sm:$0xff]
    %v4827 = vld [vmem:[#allocation13 + $0x50] sm:$0xff]
    %v4828 = vld [vmem:[#allocation13 + $0x58] sm:$0xff]
    %v4829 = vld [vmem:[#allocation13 + $0x60] sm:$0xff]
    %v4830 = vld [vmem:[#allocation13 + $0x68] sm:$0xff]
    %v4831 = vld [vmem:[#allocation13 + $0x70] sm:$0xff]
    %v4832 = vld [vmem:[#allocation13 + $0x78] sm:$0xff]
    %v4833 = vld [vmem:[#allocation13 + $0x80] sm:$0xff]
    %v4834 = vld [vmem:[#allocation13 + $0x88] sm:$0xff]
    %v4835 = vld [vmem:[#allocation13 + $0x90] sm:$0xff]
    %v4836 = vld [vmem:[#allocation13 + $0x98] sm:$0xff]
    %v4837 = vld [vmem:[#allocation13 + $0xa0] sm:$0xff]
    %v4838 = vld [vmem:[#allocation13 + $0xa8] sm:$0xff]
    %v4839 = vld [vmem:[#allocation13 + $0xb0] sm:$0xff]
    %v4840 = vld [vmem:[#allocation13 + $0xb8] sm:$0xff]
    %v4841 = vld [vmem:[#allocation13 + $0xc0] sm:$0xff]
    %v4842 = vld [vmem:[#allocation13 + $0xc8] sm:$0xff]
    %v4843 = vld [vmem:[#allocation13 + $0xd0] sm:$0xff]
    %v4844 = vld [vmem:[#allocation13 + $0xd8] sm:$0xff]
    %v4845 = vld [vmem:[#allocation13 + $0xe0] sm:$0xff]
    %v4846 = vld [vmem:[#allocation13 + $0xe8] sm:$0xff]
    %v4847 = vld [vmem:[#allocation13 + $0xf0] sm:$0xff]
    %v4848 = vld [vmem:[#allocation13 + $0xf8] sm:$0xff]
    %v4850 = vrot.slane %v4816, 1
    %v4884 = vunpack.c.l.b16 %v4817
    %v4885 = vunpack.c.h.b16 %v4817
    %v4886 = vunpack.c.l.b16 %v4818
    %v4887 = vunpack.c.h.b16 %v4818
    %v4888 = vunpack.c.l.b16 %v4819
    %v4889 = vunpack.c.h.b16 %v4819
    %v4890 = vunpack.c.l.b16 %v4820
    %v4891 = vunpack.c.h.b16 %v4820
    %v4892 = vunpack.c.l.b16 %v4821
    %v4893 = vunpack.c.h.b16 %v4821
    %v4894 = vunpack.c.l.b16 %v4822
    %v4895 = vunpack.c.h.b16 %v4822
    %v4896 = vunpack.c.l.b16 %v4823
    %v4897 = vunpack.c.h.b16 %v4823
    %v4898 = vunpack.c.l.b16 %v4824
    %v4899 = vunpack.c.h.b16 %v4824
    %v4900 = vunpack.c.l.b16 %v4825
    %v4901 = vunpack.c.h.b16 %v4825
    %v4902 = vunpack.c.l.b16 %v4826
    %v4903 = vunpack.c.h.b16 %v4826
    %v4904 = vunpack.c.l.b16 %v4827
    %v4905 = vunpack.c.h.b16 %v4827
    %v4906 = vunpack.c.l.b16 %v4828
    %v4907 = vunpack.c.h.b16 %v4828
    %v4908 = vunpack.c.l.b16 %v4829
    %v4909 = vunpack.c.h.b16 %v4829
    %v4910 = vunpack.c.l.b16 %v4830
    %v4911 = vunpack.c.h.b16 %v4830
    %v4912 = vunpack.c.l.b16 %v4831
    %v4913 = vunpack.c.h.b16 %v4831
    %v4914 = vunpack.c.l.b16 %v4832
    %v4915 = vunpack.c.h.b16 %v4832
    %v4916 = vunpack.c.l.b16 %v4833
    %v4917 = vunpack.c.h.b16 %v4833
    %v4918 = vunpack.c.l.b16 %v4834
    %v4919 = vunpack.c.h.b16 %v4834
    %v4920 = vunpack.c.l.b16 %v4835
    %v4921 = vunpack.c.h.b16 %v4835
    %v4922 = vunpack.c.l.b16 %v4836
    %v4923 = vunpack.c.h.b16 %v4836
    %v4924 = vunpack.c.l.b16 %v4837
    %v4925 = vunpack.c.h.b16 %v4837
    %v4926 = vunpack.c.l.b16 %v4838
    %v4927 = vunpack.c.h.b16 %v4838
    %v4928 = vunpack.c.l.b16 %v4839
    %v4929 = vunpack.c.h.b16 %v4839
    %v4930 = vunpack.c.l.b16 %v4840
    %v4931 = vunpack.c.h.b16 %v4840
    %v4932 = vunpack.c.l.b16 %v4841
    %v4933 = vunpack.c.h.b16 %v4841
    %v4934 = vunpack.c.l.b16 %v4842
    %v4935 = vunpack.c.h.b16 %v4842
    %v4936 = vunpack.c.l.b16 %v4843
    %v4937 = vunpack.c.h.b16 %v4843
    %v4938 = vunpack.c.l.b16 %v4844
    %v4939 = vunpack.c.h.b16 %v4844
    %v4940 = vunpack.c.l.b16 %v4845
    %v4941 = vunpack.c.h.b16 %v4845
    %v4942 = vunpack.c.l.b16 %v4846
    %v4943 = vunpack.c.h.b16 %v4846
    %v4944 = vunpack.c.l.b16 %v4847
    %v4945 = vunpack.c.h.b16 %v4847
    %v4946 = vunpack.c.l.b16 %v4848
    %v4947 = vunpack.c.h.b16 %v4848
    %v4948 = vpack.c.b16 %v4888, %v4884
    %v4949 = vpack.c.b16 %v4889, %v4885
    %v4950 = vpack.c.b16 %v4890, %v4886
    %v4951 = vpack.c.b16 %v4891, %v4887
    %v4952 = vpack.c.b16 %v4896, %v4892
    %v4953 = vpack.c.b16 %v4897, %v4893
    %v4954 = vpack.c.b16 %v4898, %v4894
    %v4955 = vpack.c.b16 %v4899, %v4895
    %v4956 = vpack.c.b16 %v4904, %v4900
    %v4957 = vpack.c.b16 %v4905, %v4901
    %v4958 = vpack.c.b16 %v4906, %v4902
    %v4959 = vpack.c.b16 %v4907, %v4903
    %v4960 = vpack.c.b16 %v4912, %v4908
    %v4961 = vpack.c.b16 %v4913, %v4909
    %v4962 = vpack.c.b16 %v4914, %v4910
    %v4963 = vpack.c.b16 %v4915, %v4911
    %v4964 = vpack.c.b16 %v4920, %v4916
    %v4965 = vpack.c.b16 %v4921, %v4917
    %v4966 = vpack.c.b16 %v4922, %v4918
    %v4967 = vpack.c.b16 %v4923, %v4919
    %v4968 = vpack.c.b16 %v4928, %v4924
    %v4969 = vpack.c.b16 %v4929, %v4925
    %v4970 = vpack.c.b16 %v4930, %v4926
    %v4971 = vpack.c.b16 %v4931, %v4927
    %v4972 = vpack.c.b16 %v4936, %v4932
    %v4973 = vpack.c.b16 %v4937, %v4933
    %v4974 = vpack.c.b16 %v4938, %v4934
    %v4975 = vpack.c.b16 %v4939, %v4935
    %v4976 = vpack.c.b16 %v4944, %v4940
    %v4977 = vpack.c.b16 %v4945, %v4941
    %v4978 = vpack.c.b16 %v4946, %v4942
    %v4979 = vpack.c.b16 %v4947, %v4943
    %5012 = vmatprep.subr.bf16.mxu0 %v4949
    %5013 = vmatpush1.bf16.msra.mxu0 %v4948
    %5014 = vmatprep.subr.bf16.mxu0 %v4953
    %5015 = vmatpush1.bf16.msra.mxu0 %v4952
    %5016 = vmatprep.subr.bf16.mxu0 %v4957
    %5017 = vmatpush1.bf16.msra.mxu0 %v4956
    %5018 = vmatprep.subr.bf16.mxu0 %v4961
    %5019 = vmatpush1.bf16.msra.mxu0 %v4960
    %5020 = vmatprep.subr.bf16.mxu0 %v4965
    %5021 = vmatpush1.bf16.msra.mxu0 %v4964
    %5022 = vmatprep.subr.bf16.mxu0 %v4969
    %5023 = vmatpush1.bf16.msra.mxu0 %v4968
    %5024 = vmatprep.subr.bf16.mxu0 %v4973
    %5025 = vmatpush1.bf16.msra.mxu0 %v4972
    %5026 = vmatprep.subr.bf16.mxu0 %v4977
    %5027 = vmatpush1.bf16.msra.mxu0 %v4976
    %5028 = vmatprep.subr.bf16.mxu0 0
    %5029 = vmatpush1.bf16.msra.mxu0 0
    %5030 = vmatprep.subr.bf16.mxu0 0
    %5031 = vmatpush1.bf16.msra.mxu0 0
    %5032 = vmatprep.subr.bf16.mxu0 0
    %5033 = vmatpush1.bf16.msra.mxu0 0
    %5034 = vmatprep.subr.bf16.mxu0 0
    %5035 = vmatpush1.bf16.msra.mxu0 0
    %5036 = vmatprep.subr.bf16.mxu0 0
    %5037 = vmatpush1.bf16.msra.mxu0 0
    %5038 = vmatprep.subr.bf16.mxu0 0
    %5039 = vmatpush1.bf16.msra.mxu0 0
    %5040 = vmatprep.subr.bf16.mxu0 0
    %5041 = vmatpush1.bf16.msra.mxu0 0
    %5042 = vmatprep.subr.bf16.mxu0 0
    %5043 = vmatpush1.bf16.msra.mxu0 0
    %5044 = vmatprep.mubr.bf16.mxu0 0
    %5045 = vmatmul.mubr.bf16.gmra.mrb[0].mxu0 %v4850
    %v5046 = vpop.f32.mrb[0].mxu0
    %v5047 = vadd.f32 0.0, %v5046
    %v5048 = vpop.f32.mrb[0].mxu0
    %v5049 = vadd.f32 0.0, %v5048
    %v5050 = vpop.f32.mrb[0].mxu0
    %v5051 = vpop.f32.mrb[0].mxu0
    %5052 = vdwg.mxu0
    %5053 = vmatprep.subr.bf16.mxu0 %v4951
    %5054 = vmatpush1.bf16.msra.mxu0 %v4950
    %5055 = vmatprep.subr.bf16.mxu0 %v4955
    %5056 = vmatpush1.bf16.msra.mxu0 %v4954
    %5057 = vmatprep.subr.bf16.mxu0 %v4959
    %5058 = vmatpush1.bf16.msra.mxu0 %v4958
    %5059 = vmatprep.subr.bf16.mxu0 %v4963
    %5060 = vmatpush1.bf16.msra.mxu0 %v4962
    %5061 = vmatprep.subr.bf16.mxu0 %v4967
    %5062 = vmatpush1.bf16.msra.mxu0 %v4966
    %5063 = vmatprep.subr.bf16.mxu0 %v4971
    %5064 = vmatpush1.bf16.msra.mxu0 %v4970
    %5065 = vmatprep.subr.bf16.mxu0 %v4975
    %5066 = vmatpush1.bf16.msra.mxu0 %v4974
    %5067 = vmatprep.subr.bf16.mxu0 %v4979
    %5068 = vmatpush1.bf16.msra.mxu0 %v4978
    %5069 = vmatprep.subr.bf16.mxu0 0
    %5070 = vmatpush1.bf16.msra.mxu0 0
    %5071 = vmatprep.subr.bf16.mxu0 0
    %5072 = vmatpush1.bf16.msra.mxu0 0
    %5073 = vmatprep.subr.bf16.mxu0 0
    %5074 = vmatpush1.bf16.msra.mxu0 0
    %5075 = vmatprep.subr.bf16.mxu0 0
    %5076 = vmatpush1.bf16.msra.mxu0 0
    %5077 = vmatprep.subr.bf16.mxu0 0
    %5078 = vmatpush1.bf16.msra.mxu0 0
    %5079 = vmatprep.subr.bf16.mxu0 0
    %5080 = vmatpush1.bf16.msra.mxu0 0
    %5081 = vmatprep.subr.bf16.mxu0 0
    %5082 = vmatpush1.bf16.msra.mxu0 0
    %5083 = vmatprep.subr.bf16.mxu0 0
    %5084 = vmatpush1.bf16.msra.mxu0 0
    %5085 = vmatprep.mubr.bf16.mxu0 0
    %5086 = vmatmul.mubr.bf16.gmra.mrb[0].mxu0 %v4850
    %v5087 = vpop.f32.mrb[0].mxu0
    %v5088 = vadd.f32 0.0, %v5087
    %v5089 = vpop.f32.mrb[0].mxu0
    %v5090 = vadd.f32 0.0, %v5089
    %v5091 = vpop.f32.mrb[0].mxu0
    %v5092 = vpop.f32.mrb[0].mxu0
    %5093 = vdwg.mxu0
    %v5098 = vrot.slane %v5047, 4
    %v5099 = vrot.slane %v5049, 4
    %v5100 = vrot.slane %v5088, 4
    %v5101 = vrot.slane %v5090, 4
    %v5106 = vadd.f32 %v4812, %v5098
    %v5107 = vadd.f32 %v4813, %v5099
    %v5108 = vadd.f32 %v4814, %v5100
    %v5109 = vadd.f32 %v4815, %v5101
    %v5110 = vxor.u32 %v5106, 2147483648
    %v5111 = vmul.f32 %v5110, 1.442695
    %v5112 = vpow.pop %v5111
    %v5113 = vadd.f32 %v5112, 1.0
    %v5114 = vrcp.pop %v5113
    %v5115 = vmul.f32 1.0, %v5114
    %v5116 = vxor.u32 %v5107, 2147483648
    %v5117 = vmul.f32 %v5116, 1.442695
    %v5118 = vpow.pop %v5117
    %v5119 = vadd.f32 %v5118, 1.0
    %v5120 = vrcp.pop %v5119
    %v5121 = vmul.f32 1.0, %v5120
    %v5122 = vtanh.pop %v5108
    %v5123 = vxor.u32 %v5109, 2147483648
    %v5124 = vmul.f32 %v5123, 1.442695
    %v5125 = vpow.pop %v5124
    %v5126 = vadd.f32 %v5125, 1.0
    %v5127 = vrcp.pop %v5126
    %v5128 = vmul.f32 1.0, %v5127
    %v5130 = vrot.slane %v4787, 6
    %v5132 = vmul.f32 %v5121, %v5130
    %v5133 = vmul.f32 %v5115, %v5122
    %v5134 = vadd.f32 %v5132, %v5133
    %v5135 = vtanh.pop %v5134
    %v5136 = vmul.f32 %v5128, %v5135
    %5137 = vst [vmem:[#allocation6] sm:$0x30] %v5136
    %5138 = vst [vmem:[#allocation7 + $0x6] sm:$0x30] %v5136
    %v5139 = vld [vmem:[#allocation3] sm:$0xc0]
    %v5140 = vld [vmem:[#allocation3 + $0x8] sm:$0xc0]
    %v5141 = vld [vmem:[#allocation3 + $0x10] sm:$0xc0]
    %v5142 = vld [vmem:[#allocation3 + $0x18] sm:$0xc0]
    %v5143 = vld [vmem:[#allocation3 + $0x60] sm:$0x3]
    %v5144 = vld [vmem:[#allocation3 + $0x68] sm:$0x3]
    %v5145 = vld [vmem:[#allocation3 + $0x70] sm:$0x3]
    %v5146 = vld [vmem:[#allocation3 + $0x78] sm:$0x3]
    %v5151 = vrot.slane %v5143, 2
    %v5152 = vrot.slane %v5144, 2
    %v5153 = vrot.slane %v5145, 2
    %v5154 = vrot.slane %v5146, 2
    %v5159 = vadd.f32 %v5139, %v5151
    %v5160 = vadd.f32 %v5140, %v5152
    %v5161 = vadd.f32 %v5141, %v5153
    %v5162 = vadd.f32 %v5142, %v5154
    %v5163 = vpack.c.bf16 %v5136, %v5136
    %v5164 = vld [vmem:[#allocation13] sm:$0xff]
    %v5165 = vld [vmem:[#allocation13 + $0x8] sm:$0xff]
    %v5166 = vld [vmem:[#allocation13 + $0x10] sm:$0xff]
    %v5167 = vld [vmem:[#allocation13 + $0x18] sm:$0xff]
    %v5168 = vld [vmem:[#allocation13 + $0x20] sm:$0xff]
    %v5169 = vld [vmem:[#allocation13 + $0x28] sm:$0xff]
    %v5170 = vld [vmem:[#allocation13 + $0x30] sm:$0xff]
    %v5171 = vld [vmem:[#allocation13 + $0x38] sm:$0xff]
    %v5172 = vld [vmem:[#allocation13 + $0x40] sm:$0xff]
    %v5173 = vld [vmem:[#allocation13 + $0x48] sm:$0xff]
    %v5174 = vld [vmem:[#allocation13 + $0x50] sm:$0xff]
    %v5175 = vld [vmem:[#allocation13 + $0x58] sm:$0xff]
    %v5176 = vld [vmem:[#allocation13 + $0x60] sm:$0xff]
    %v5177 = vld [vmem:[#allocation13 + $0x68] sm:$0xff]
    %v5178 = vld [vmem:[#allocation13 + $0x70] sm:$0xff]
    %v5179 = vld [vmem:[#allocation13 + $0x78] sm:$0xff]
    %v5180 = vld [vmem:[#allocation13 + $0x80] sm:$0xff]
    %v5181 = vld [vmem:[#allocation13 + $0x88] sm:$0xff]
    %v5182 = vld [vmem:[#allocation13 + $0x90] sm:$0xff]
    %v5183 = vld [vmem:[#allocation13 + $0x98] sm:$0xff]
    %v5184 = vld [vmem:[#allocation13 + $0xa0] sm:$0xff]
    %v5185 = vld [vmem:[#allocation13 + $0xa8] sm:$0xff]
    %v5186 = vld [vmem:[#allocation13 + $0xb0] sm:$0xff]
    %v5187 = vld [vmem:[#allocation13 + $0xb8] sm:$0xff]
    %v5188 = vld [vmem:[#allocation13 + $0xc0] sm:$0xff]
    %v5189 = vld [vmem:[#allocation13 + $0xc8] sm:$0xff]
    %v5190 = vld [vmem:[#allocation13 + $0xd0] sm:$0xff]
    %v5191 = vld [vmem:[#allocation13 + $0xd8] sm:$0xff]
    %v5192 = vld [vmem:[#allocation13 + $0xe0] sm:$0xff]
    %v5193 = vld [vmem:[#allocation13 + $0xe8] sm:$0xff]
    %v5194 = vld [vmem:[#allocation13 + $0xf0] sm:$0xff]
    %v5195 = vld [vmem:[#allocation13 + $0xf8] sm:$0xff]
    %v5197 = vrot.slane %v5163, 2
    %v5231 = vunpack.c.l.b16 %v5164
    %v5232 = vunpack.c.h.b16 %v5164
    %v5233 = vunpack.c.l.b16 %v5165
    %v5234 = vunpack.c.h.b16 %v5165
    %v5235 = vunpack.c.l.b16 %v5166
    %v5236 = vunpack.c.h.b16 %v5166
    %v5237 = vunpack.c.l.b16 %v5167
    %v5238 = vunpack.c.h.b16 %v5167
    %v5239 = vunpack.c.l.b16 %v5168
    %v5240 = vunpack.c.h.b16 %v5168
    %v5241 = vunpack.c.l.b16 %v5169
    %v5242 = vunpack.c.h.b16 %v5169
    %v5243 = vunpack.c.l.b16 %v5170
    %v5244 = vunpack.c.h.b16 %v5170
    %v5245 = vunpack.c.l.b16 %v5171
    %v5246 = vunpack.c.h.b16 %v5171
    %v5247 = vunpack.c.l.b16 %v5172
    %v5248 = vunpack.c.h.b16 %v5172
    %v5249 = vunpack.c.l.b16 %v5173
    %v5250 = vunpack.c.h.b16 %v5173
    %v5251 = vunpack.c.l.b16 %v5174
    %v5252 = vunpack.c.h.b16 %v5174
    %v5253 = vunpack.c.l.b16 %v5175
    %v5254 = vunpack.c.h.b16 %v5175
    %v5255 = vunpack.c.l.b16 %v5176
    %v5256 = vunpack.c.h.b16 %v5176
    %v5257 = vunpack.c.l.b16 %v5177
    %v5258 = vunpack.c.h.b16 %v5177
    %v5259 = vunpack.c.l.b16 %v5178
    %v5260 = vunpack.c.h.b16 %v5178
    %v5261 = vunpack.c.l.b16 %v5179
    %v5262 = vunpack.c.h.b16 %v5179
    %v5263 = vunpack.c.l.b16 %v5180
    %v5264 = vunpack.c.h.b16 %v5180
    %v5265 = vunpack.c.l.b16 %v5181
    %v5266 = vunpack.c.h.b16 %v5181
    %v5267 = vunpack.c.l.b16 %v5182
    %v5268 = vunpack.c.h.b16 %v5182
    %v5269 = vunpack.c.l.b16 %v5183
    %v5270 = vunpack.c.h.b16 %v5183
    %v5271 = vunpack.c.l.b16 %v5184
    %v5272 = vunpack.c.h.b16 %v5184
    %v5273 = vunpack.c.l.b16 %v5185
    %v5274 = vunpack.c.h.b16 %v5185
    %v5275 = vunpack.c.l.b16 %v5186
    %v5276 = vunpack.c.h.b16 %v5186
    %v5277 = vunpack.c.l.b16 %v5187
    %v5278 = vunpack.c.h.b16 %v5187
    %v5279 = vunpack.c.l.b16 %v5188
    %v5280 = vunpack.c.h.b16 %v5188
    %v5281 = vunpack.c.l.b16 %v5189
    %v5282 = vunpack.c.h.b16 %v5189
    %v5283 = vunpack.c.l.b16 %v5190
    %v5284 = vunpack.c.h.b16 %v5190
    %v5285 = vunpack.c.l.b16 %v5191
    %v5286 = vunpack.c.h.b16 %v5191
    %v5287 = vunpack.c.l.b16 %v5192
    %v5288 = vunpack.c.h.b16 %v5192
    %v5289 = vunpack.c.l.b16 %v5193
    %v5290 = vunpack.c.h.b16 %v5193
    %v5291 = vunpack.c.l.b16 %v5194
    %v5292 = vunpack.c.h.b16 %v5194
    %v5293 = vunpack.c.l.b16 %v5195
    %v5294 = vunpack.c.h.b16 %v5195
    %v5295 = vpack.c.b16 %v5235, %v5231
    %v5296 = vpack.c.b16 %v5236, %v5232
    %v5297 = vpack.c.b16 %v5237, %v5233
    %v5298 = vpack.c.b16 %v5238, %v5234
    %v5299 = vpack.c.b16 %v5243, %v5239
    %v5300 = vpack.c.b16 %v5244, %v5240
    %v5301 = vpack.c.b16 %v5245, %v5241
    %v5302 = vpack.c.b16 %v5246, %v5242
    %v5303 = vpack.c.b16 %v5251, %v5247
    %v5304 = vpack.c.b16 %v5252, %v5248
    %v5305 = vpack.c.b16 %v5253, %v5249
    %v5306 = vpack.c.b16 %v5254, %v5250
    %v5307 = vpack.c.b16 %v5259, %v5255
    %v5308 = vpack.c.b16 %v5260, %v5256
    %v5309 = vpack.c.b16 %v5261, %v5257
    %v5310 = vpack.c.b16 %v5262, %v5258
    %v5311 = vpack.c.b16 %v5267, %v5263
    %v5312 = vpack.c.b16 %v5268, %v5264
    %v5313 = vpack.c.b16 %v5269, %v5265
    %v5314 = vpack.c.b16 %v5270, %v5266
    %v5315 = vpack.c.b16 %v5275, %v5271
    %v5316 = vpack.c.b16 %v5276, %v5272
    %v5317 = vpack.c.b16 %v5277, %v5273
    %v5318 = vpack.c.b16 %v5278, %v5274
    %v5319 = vpack.c.b16 %v5283, %v5279
    %v5320 = vpack.c.b16 %v5284, %v5280
    %v5321 = vpack.c.b16 %v5285, %v5281
    %v5322 = vpack.c.b16 %v5286, %v5282
    %v5323 = vpack.c.b16 %v5291, %v5287
    %v5324 = vpack.c.b16 %v5292, %v5288
    %v5325 = vpack.c.b16 %v5293, %v5289
    %v5326 = vpack.c.b16 %v5294, %v5290
    %5359 = vmatprep.subr.bf16.mxu0 %v5296
    %5360 = vmatpush1.bf16.msra.mxu0 %v5295
    %5361 = vmatprep.subr.bf16.mxu0 %v5300
    %5362 = vmatpush1.bf16.msra.mxu0 %v5299
    %5363 = vmatprep.subr.bf16.mxu0 %v5304
    %5364 = vmatpush1.bf16.msra.mxu0 %v5303
    %5365 = vmatprep.subr.bf16.mxu0 %v5308
    %5366 = vmatpush1.bf16.msra.mxu0 %v5307
    %5367 = vmatprep.subr.bf16.mxu0 %v5312
    %5368 = vmatpush1.bf16.msra.mxu0 %v5311
    %5369 = vmatprep.subr.bf16.mxu0 %v5316
    %5370 = vmatpush1.bf16.msra.mxu0 %v5315
    %5371 = vmatprep.subr.bf16.mxu0 %v5320
    %5372 = vmatpush1.bf16.msra.mxu0 %v5319
    %5373 = vmatprep.subr.bf16.mxu0 %v5324
    %5374 = vmatpush1.bf16.msra.mxu0 %v5323
    %5375 = vmatprep.subr.bf16.mxu0 0
    %5376 = vmatpush1.bf16.msra.mxu0 0
    %5377 = vmatprep.subr.bf16.mxu0 0
    %5378 = vmatpush1.bf16.msra.mxu0 0
    %5379 = vmatprep.subr.bf16.mxu0 0
    %5380 = vmatpush1.bf16.msra.mxu0 0
    %5381 = vmatprep.subr.bf16.mxu0 0
    %5382 = vmatpush1.bf16.msra.mxu0 0
    %5383 = vmatprep.subr.bf16.mxu0 0
    %5384 = vmatpush1.bf16.msra.mxu0 0
    %5385 = vmatprep.subr.bf16.mxu0 0
    %5386 = vmatpush1.bf16.msra.mxu0 0
    %5387 = vmatprep.subr.bf16.mxu0 0
    %5388 = vmatpush1.bf16.msra.mxu0 0
    %5389 = vmatprep.subr.bf16.mxu0 0
    %5390 = vmatpush1.bf16.msra.mxu0 0
    %5391 = vmatprep.mubr.bf16.mxu0 0
    %5392 = vmatmul.mubr.bf16.gmra.mrb[0].mxu0 %v5197
    %v5393 = vpop.f32.mrb[0].mxu0
    %v5394 = vadd.f32 0.0, %v5393
    %v5395 = vpop.f32.mrb[0].mxu0
    %v5396 = vadd.f32 0.0, %v5395
    %v5397 = vpop.f32.mrb[0].mxu0
    %v5398 = vpop.f32.mrb[0].mxu0
    %5399 = vdwg.mxu0
    %5400 = vmatprep.subr.bf16.mxu0 %v5298
    %5401 = vmatpush1.bf16.msra.mxu0 %v5297
    %5402 = vmatprep.subr.bf16.mxu0 %v5302
    %5403 = vmatpush1.bf16.msra.mxu0 %v5301
    %5404 = vmatprep.subr.bf16.mxu0 %v5306
    %5405 = vmatpush1.bf16.msra.mxu0 %v5305
    %5406 = vmatprep.subr.bf16.mxu0 %v5310
    %5407 = vmatpush1.bf16.msra.mxu0 %v5309
    %5408 = vmatprep.subr.bf16.mxu0 %v5314
    %5409 = vmatpush1.bf16.msra.mxu0 %v5313
    %5410 = vmatprep.subr.bf16.mxu0 %v5318
    %5411 = vmatpush1.bf16.msra.mxu0 %v5317
    %5412 = vmatprep.subr.bf16.mxu0 %v5322
    %5413 = vmatpush1.bf16.msra.mxu0 %v5321
    %5414 = vmatprep.subr.bf16.mxu0 %v5326
    %5415 = vmatpush1.bf16.msra.mxu0 %v5325
    %5416 = vmatprep.subr.bf16.mxu0 0
    %5417 = vmatpush1.bf16.msra.mxu0 0
    %5418 = vmatprep.subr.bf16.mxu0 0
    %5419 = vmatpush1.bf16.msra.mxu0 0
    %5420 = vmatprep.subr.bf16.mxu0 0
    %5421 = vmatpush1.bf16.msra.mxu0 0
    %5422 = vmatprep.subr.bf16.mxu0 0
    %5423 = vmatpush1.bf16.msra.mxu0 0
    %5424 = vmatprep.subr.bf16.mxu0 0
    %5425 = vmatpush1.bf16.msra.mxu0 0
    %5426 = vmatprep.subr.bf16.mxu0 0
    %5427 = vmatpush1.bf16.msra.mxu0 0
    %5428 = vmatprep.subr.bf16.mxu0 0
    %5429 = vmatpush1.bf16.msra.mxu0 0
    %5430 = vmatprep.subr.bf16.mxu0 0
    %5431 = vmatpush1.bf16.msra.mxu0 0
    %5432 = vmatprep.mubr.bf16.mxu0 0
    %5433 = vmatmul.mubr.bf16.gmra.mrb[0].mxu0 %v5197
    %v5434 = vpop.f32.mrb[0].mxu0
    %v5435 = vadd.f32 0.0, %v5434
    %v5436 = vpop.f32.mrb[0].mxu0
    %v5437 = vadd.f32 0.0, %v5436
    %v5438 = vpop.f32.mrb[0].mxu0
    %v5439 = vpop.f32.mrb[0].mxu0
    %5440 = vdwg.mxu0
    %v5445 = vrot.slane %v5394, 2
    %v5446 = vrot.slane %v5396, 2
    %v5447 = vrot.slane %v5435, 2
    %v5448 = vrot.slane %v5437, 2
    %v5453 = vadd.f32 %v5159, %v5445
    %v5454 = vadd.f32 %v5160, %v5446
    %v5455 = vadd.f32 %v5161, %v5447
    %v5456 = vadd.f32 %v5162, %v5448
    %v5457 = vxor.u32 %v5453, 2147483648
    %v5458 = vmul.f32 %v5457, 1.442695
    %v5459 = vpow.pop %v5458
    %v5460 = vadd.f32 %v5459, 1.0
    %v5461 = vrcp.pop %v5460
    %v5462 = vmul.f32 1.0, %v5461
    %v5463 = vxor.u32 %v5454, 2147483648
    %v5464 = vmul.f32 %v5463, 1.442695
    %v5465 = vpow.pop %v5464
    %v5466 = vadd.f32 %v5465, 1.0
    %v5467 = vrcp.pop %v5466
    %v5468 = vmul.f32 1.0, %v5467
    %v5469 = vtanh.pop %v5455
    %v5470 = vxor.u32 %v5456, 2147483648
    %v5471 = vmul.f32 %v5470, 1.442695
    %v5472 = vpow.pop %v5471
    %v5473 = vadd.f32 %v5472, 1.0
    %v5474 = vrcp.pop %v5473
    %v5475 = vmul.f32 1.0, %v5474
    %v5477 = vrot.slane %v5134, 6
    %v5479 = vmul.f32 %v5468, %v5477
    %v5480 = vmul.f32 %v5462, %v5469
    %v5481 = vadd.f32 %v5479, %v5480
    %v5482 = vtanh.pop %v5481
    %v5483 = vmul.f32 %v5475, %v5482
    %5484 = vst [vmem:[#allocation6] sm:$0xc0] %v5483
    %5485 = vst [vmem:[#allocation7 + $0x2] sm:$0xc0] %v5483
    %v5486 = vld [vmem:[#allocation3 + $0x40] sm:$0x3]
    %v5487 = vld [vmem:[#allocation3 + $0x48] sm:$0x3]
    %v5488 = vld [vmem:[#allocation3 + $0x50] sm:$0x3]
    %v5489 = vld [vmem:[#allocation3 + $0x58] sm:$0x3]
    %v5490 = vld [vmem:[#allocation3 + $0x20] sm:$0xc0]
    %v5491 = vld [vmem:[#allocation3 + $0x28] sm:$0xc0]
    %v5492 = vld [vmem:[#allocation3 + $0x30] sm:$0xc0]
    %v5493 = vld [vmem:[#allocation3 + $0x38] sm:$0xc0]
    %v5498 = vrot.slane %v5490, 6
    %v5499 = vrot.slane %v5491, 6
    %v5500 = vrot.slane %v5492, 6
    %v5501 = vrot.slane %v5493, 6
    %v5506 = vadd.f32 %v5486, %v5498
    %v5507 = vadd.f32 %v5487, %v5499
    %v5508 = vadd.f32 %v5488, %v5500
    %v5509 = vadd.f32 %v5489, %v5501
    %v5510 = vpack.c.bf16 %v5483, %v5483
    %v5511 = vld [vmem:[#allocation13] sm:$0xff]
    %v5512 = vld [vmem:[#allocation13 + $0x8] sm:$0xff]
    %v5513 = vld [vmem:[#allocation13 + $0x10] sm:$0xff]
    %v5514 = vld [vmem:[#allocation13 + $0x18] sm:$0xff]
    %v5515 = vld [vmem:[#allocation13 + $0x20] sm:$0xff]
    %v5516 = vld [vmem:[#allocation13 + $0x28] sm:$0xff]
    %v5517 = vld [vmem:[#allocation13 + $0x30] sm:$0xff]
    %v5518 = vld [vmem:[#allocation13 + $0x38] sm:$0xff]
    %v5519 = vld [vmem:[#allocation13 + $0x40] sm:$0xff]
    %v5520 = vld [vmem:[#allocation13 + $0x48] sm:$0xff]
    %v5521 = vld [vmem:[#allocation13 + $0x50] sm:$0xff]
    %v5522 = vld [vmem:[#allocation13 + $0x58] sm:$0xff]
    %v5523 = vld [vmem:[#allocation13 + $0x60] sm:$0xff]
    %v5524 = vld [vmem:[#allocation13 + $0x68] sm:$0xff]
    %v5525 = vld [vmem:[#allocation13 + $0x70] sm:$0xff]
    %v5526 = vld [vmem:[#allocation13 + $0x78] sm:$0xff]
    %v5527 = vld [vmem:[#allocation13 + $0x80] sm:$0xff]
    %v5528 = vld [vmem:[#allocation13 + $0x88] sm:$0xff]
    %v5529 = vld [vmem:[#allocation13 + $0x90] sm:$0xff]
    %v5530 = vld [vmem:[#allocation13 + $0x98] sm:$0xff]
    %v5531 = vld [vmem:[#allocation13 + $0xa0] sm:$0xff]
    %v5532 = vld [vmem:[#allocation13 + $0xa8] sm:$0xff]
    %v5533 = vld [vmem:[#allocation13 + $0xb0] sm:$0xff]
    %v5534 = vld [vmem:[#allocation13 + $0xb8] sm:$0xff]
    %v5535 = vld [vmem:[#allocation13 + $0xc0] sm:$0xff]
    %v5536 = vld [vmem:[#allocation13 + $0xc8] sm:$0xff]
    %v5537 = vld [vmem:[#allocation13 + $0xd0] sm:$0xff]
    %v5538 = vld [vmem:[#allocation13 + $0xd8] sm:$0xff]
    %v5539 = vld [vmem:[#allocation13 + $0xe0] sm:$0xff]
    %v5540 = vld [vmem:[#allocation13 + $0xe8] sm:$0xff]
    %v5541 = vld [vmem:[#allocation13 + $0xf0] sm:$0xff]
    %v5542 = vld [vmem:[#allocation13 + $0xf8] sm:$0xff]
    %v5544 = vrot.slane %v5510, 3
    %v5578 = vunpack.c.l.b16 %v5511
    %v5579 = vunpack.c.h.b16 %v5511
    %v5580 = vunpack.c.l.b16 %v5512
    %v5581 = vunpack.c.h.b16 %v5512
    %v5582 = vunpack.c.l.b16 %v5513
    %v5583 = vunpack.c.h.b16 %v5513
    %v5584 = vunpack.c.l.b16 %v5514
    %v5585 = vunpack.c.h.b16 %v5514
    %v5586 = vunpack.c.l.b16 %v5515
    %v5587 = vunpack.c.h.b16 %v5515
    %v5588 = vunpack.c.l.b16 %v5516
    %v5589 = vunpack.c.h.b16 %v5516
    %v5590 = vunpack.c.l.b16 %v5517
    %v5591 = vunpack.c.h.b16 %v5517
    %v5592 = vunpack.c.l.b16 %v5518
    %v5593 = vunpack.c.h.b16 %v5518
    %v5594 = vunpack.c.l.b16 %v5519
    %v5595 = vunpack.c.h.b16 %v5519
    %v5596 = vunpack.c.l.b16 %v5520
    %v5597 = vunpack.c.h.b16 %v5520
    %v5598 = vunpack.c.l.b16 %v5521
    %v5599 = vunpack.c.h.b16 %v5521
    %v5600 = vunpack.c.l.b16 %v5522
    %v5601 = vunpack.c.h.b16 %v5522
    %v5602 = vunpack.c.l.b16 %v5523
    %v5603 = vunpack.c.h.b16 %v5523
    %v5604 = vunpack.c.l.b16 %v5524
    %v5605 = vunpack.c.h.b16 %v5524
    %v5606 = vunpack.c.l.b16 %v5525
    %v5607 = vunpack.c.h.b16 %v5525
    %v5608 = vunpack.c.l.b16 %v5526
    %v5609 = vunpack.c.h.b16 %v5526
    %v5610 = vunpack.c.l.b16 %v5527
    %v5611 = vunpack.c.h.b16 %v5527
    %v5612 = vunpack.c.l.b16 %v5528
    %v5613 = vunpack.c.h.b16 %v5528
    %v5614 = vunpack.c.l.b16 %v5529
    %v5615 = vunpack.c.h.b16 %v5529
    %v5616 = vunpack.c.l.b16 %v5530
    %v5617 = vunpack.c.h.b16 %v5530
    %v5618 = vunpack.c.l.b16 %v5531
    %v5619 = vunpack.c.h.b16 %v5531
    %v5620 = vunpack.c.l.b16 %v5532
    %v5621 = vunpack.c.h.b16 %v5532
    %v5622 = vunpack.c.l.b16 %v5533
    %v5623 = vunpack.c.h.b16 %v5533
    %v5624 = vunpack.c.l.b16 %v5534
    %v5625 = vunpack.c.h.b16 %v5534
    %v5626 = vunpack.c.l.b16 %v5535
    %v5627 = vunpack.c.h.b16 %v5535
    %v5628 = vunpack.c.l.b16 %v5536
    %v5629 = vunpack.c.h.b16 %v5536
    %v5630 = vunpack.c.l.b16 %v5537
    %v5631 = vunpack.c.h.b16 %v5537
    %v5632 = vunpack.c.l.b16 %v5538
    %v5633 = vunpack.c.h.b16 %v5538
    %v5634 = vunpack.c.l.b16 %v5539
    %v5635 = vunpack.c.h.b16 %v5539
    %v5636 = vunpack.c.l.b16 %v5540
    %v5637 = vunpack.c.h.b16 %v5540
    %v5638 = vunpack.c.l.b16 %v5541
    %v5639 = vunpack.c.h.b16 %v5541
    %v5640 = vunpack.c.l.b16 %v5542
    %v5641 = vunpack.c.h.b16 %v5542
    %v5642 = vpack.c.b16 %v5582, %v5578
    %v5643 = vpack.c.b16 %v5583, %v5579
    %v5644 = vpack.c.b16 %v5584, %v5580
    %v5645 = vpack.c.b16 %v5585, %v5581
    %v5646 = vpack.c.b16 %v5590, %v5586
    %v5647 = vpack.c.b16 %v5591, %v5587
    %v5648 = vpack.c.b16 %v5592, %v5588
    %v5649 = vpack.c.b16 %v5593, %v5589
    %v5650 = vpack.c.b16 %v5598, %v5594
    %v5651 = vpack.c.b16 %v5599, %v5595
    %v5652 = vpack.c.b16 %v5600, %v5596
    %v5653 = vpack.c.b16 %v5601, %v5597
    %v5654 = vpack.c.b16 %v5606, %v5602
    %v5655 = vpack.c.b16 %v5607, %v5603
    %v5656 = vpack.c.b16 %v5608, %v5604
    %v5657 = vpack.c.b16 %v5609, %v5605
    %v5658 = vpack.c.b16 %v5614, %v5610
    %v5659 = vpack.c.b16 %v5615, %v5611
    %v5660 = vpack.c.b16 %v5616, %v5612
    %v5661 = vpack.c.b16 %v5617, %v5613
    %v5662 = vpack.c.b16 %v5622, %v5618
    %v5663 = vpack.c.b16 %v5623, %v5619
    %v5664 = vpack.c.b16 %v5624, %v5620
    %v5665 = vpack.c.b16 %v5625, %v5621
    %v5666 = vpack.c.b16 %v5630, %v5626
    %v5667 = vpack.c.b16 %v5631, %v5627
    %v5668 = vpack.c.b16 %v5632, %v5628
    %v5669 = vpack.c.b16 %v5633, %v5629
    %v5670 = vpack.c.b16 %v5638, %v5634
    %v5671 = vpack.c.b16 %v5639, %v5635
    %v5672 = vpack.c.b16 %v5640, %v5636
    %v5673 = vpack.c.b16 %v5641, %v5637
    %5706 = vmatprep.subr.bf16.mxu0 %v5643
    %5707 = vmatpush1.bf16.msra.mxu0 %v5642
    %5708 = vmatprep.subr.bf16.mxu0 %v5647
    %5709 = vmatpush1.bf16.msra.mxu0 %v5646
    %5710 = vmatprep.subr.bf16.mxu0 %v5651
    %5711 = vmatpush1.bf16.msra.mxu0 %v5650
    %5712 = vmatprep.subr.bf16.mxu0 %v5655
    %5713 = vmatpush1.bf16.msra.mxu0 %v5654
    %5714 = vmatprep.subr.bf16.mxu0 %v5659
    %5715 = vmatpush1.bf16.msra.mxu0 %v5658
    %5716 = vmatprep.subr.bf16.mxu0 %v5663
    %5717 = vmatpush1.bf16.msra.mxu0 %v5662
    %5718 = vmatprep.subr.bf16.mxu0 %v5667
    %5719 = vmatpush1.bf16.msra.mxu0 %v5666
    %5720 = vmatprep.subr.bf16.mxu0 %v5671
    %5721 = vmatpush1.bf16.msra.mxu0 %v5670
    %5722 = vmatprep.subr.bf16.mxu0 0
    %5723 = vmatpush1.bf16.msra.mxu0 0
    %5724 = vmatprep.subr.bf16.mxu0 0
    %5725 = vmatpush1.bf16.msra.mxu0 0
    %5726 = vmatprep.subr.bf16.mxu0 0
    %5727 = vmatpush1.bf16.msra.mxu0 0
    %5728 = vmatprep.subr.bf16.mxu0 0
    %5729 = vmatpush1.bf16.msra.mxu0 0
    %5730 = vmatprep.subr.bf16.mxu0 0
    %5731 = vmatpush1.bf16.msra.mxu0 0
    %5732 = vmatprep.subr.bf16.mxu0 0
    %5733 = vmatpush1.bf16.msra.mxu0 0
    %5734 = vmatprep.subr.bf16.mxu0 0
    %5735 = vmatpush1.bf16.msra.mxu0 0
    %5736 = vmatprep.subr.bf16.mxu0 0
    %5737 = vmatpush1.bf16.msra.mxu0 0
    %5738 = vmatprep.mubr.bf16.mxu0 0
    %5739 = vmatmul.mubr.bf16.gmra.mrb[0].mxu0 %v5544
    %v5740 = vpop.f32.mrb[0].mxu0
    %v5741 = vadd.f32 0.0, %v5740
    %v5742 = vpop.f32.mrb[0].mxu0
    %v5743 = vadd.f32 0.0, %v5742
    %v5744 = vpop.f32.mrb[0].mxu0
    %v5745 = vpop.f32.mrb[0].mxu0
    %5746 = vdwg.mxu0
    %5747 = vmatprep.subr.bf16.mxu0 %v5645
    %5748 = vmatpush1.bf16.msra.mxu0 %v5644
    %5749 = vmatprep.subr.bf16.mxu0 %v5649
    %5750 = vmatpush1.bf16.msra.mxu0 %v5648
    %5751 = vmatprep.subr.bf16.mxu0 %v5653
    %5752 = vmatpush1.bf16.msra.mxu0 %v5652
    %5753 = vmatprep.subr.bf16.mxu0 %v5657
    %5754 = vmatpush1.bf16.msra.mxu0 %v5656
    %5755 = vmatprep.subr.bf16.mxu0 %v5661
    %5756 = vmatpush1.bf16.msra.mxu0 %v5660
    %5757 = vmatprep.subr.bf16.mxu0 %v5665
    %5758 = vmatpush1.bf16.msra.mxu0 %v5664
    %5759 = vmatprep.subr.bf16.mxu0 %v5669
    %5760 = vmatpush1.bf16.msra.mxu0 %v5668
    %5761 = vmatprep.subr.bf16.mxu0 %v5673
    %5762 = vmatpush1.bf16.msra.mxu0 %v5672
    %5763 = vmatprep.subr.bf16.mxu0 0
    %5764 = vmatpush1.bf16.msra.mxu0 0
    %5765 = vmatprep.subr.bf16.mxu0 0
    %5766 = vmatpush1.bf16.msra.mxu0 0
    %5767 = vmatprep.subr.bf16.mxu0 0
    %5768 = vmatpush1.bf16.msra.mxu0 0
    %5769 = vmatprep.subr.bf16.mxu0 0
    %5770 = vmatpush1.bf16.msra.mxu0 0
    %5771 = vmatprep.subr.bf16.mxu0 0
    %5772 = vmatpush1.bf16.msra.mxu0 0
    %5773 = vmatprep.subr.bf16.mxu0 0
    %5774 = vmatpush1.bf16.msra.mxu0 0
    %5775 = vmatprep.subr.bf16.mxu0 0
    %5776 = vmatpush1.bf16.msra.mxu0 0
    %5777 = vmatprep.subr.bf16.mxu0 0
    %5778 = vmatpush1.bf16.msra.mxu0 0
    %5779 = vmatprep.mubr.bf16.mxu0 0
    %5780 = vmatmul.mubr.bf16.gmra.mrb[0].mxu0 %v5544
    %v5781 = vpop.f32.mrb[0].mxu0
    %v5782 = vadd.f32 0.0, %v5781
    %v5783 = vpop.f32.mrb[0].mxu0
    %v5784 = vadd.f32 0.0, %v5783
    %v5785 = vpop.f32.mrb[0].mxu0
    %v5786 = vpop.f32.mrb[0].mxu0
    %5787 = vdwg.mxu0
    %v5788 = vadd.f32 %v5506, %v5741
    %v5789 = vadd.f32 %v5507, %v5743
    %v5790 = vadd.f32 %v5508, %v5782
    %v5791 = vadd.f32 %v5509, %v5784
    %v5792 = vxor.u32 %v5788, 2147483648
    %v5793 = vmul.f32 %v5792, 1.442695
    %v5794 = vpow.pop %v5793
    %v5795 = vadd.f32 %v5794, 1.0
    %v5796 = vrcp.pop %v5795
    %v5797 = vmul.f32 1.0, %v5796
    %v5798 = vxor.u32 %v5789, 2147483648
    %v5799 = vmul.f32 %v5798, 1.442695
    %v5800 = vpow.pop %v5799
    %v5801 = vadd.f32 %v5800, 1.0
    %v5802 = vrcp.pop %v5801
    %v5803 = vmul.f32 1.0, %v5802
    %v5804 = vtanh.pop %v5790
    %v5805 = vxor.u32 %v5791, 2147483648
    %v5806 = vmul.f32 %v5805, 1.442695
    %v5807 = vpow.pop %v5806
    %v5808 = vadd.f32 %v5807, 1.0
    %v5809 = vrcp.pop %v5808
    %v5810 = vmul.f32 1.0, %v5809
    %v5812 = vrot.slane %v5481, 6
    %v5814 = vmul.f32 %v5803, %v5812
    %v5815 = vmul.f32 %v5797, %v5804
    %v5816 = vadd.f32 %v5814, %v5815
    %v5817 = vtanh.pop %v5816
    %v5818 = vmul.f32 %v5810, %v5817
    %5819 = vst [vmem:[#allocation6 + $0x8] sm:$0x3] %v5818
    %5820 = vst [vmem:[#allocation7 + $0x6] sm:$0x3] %v5818
    %v5821 = vld [vmem:[#allocation3 + $0x40] sm:$0xc]
    %v5822 = vld [vmem:[#allocation3 + $0x48] sm:$0xc]
    %v5823 = vld [vmem:[#allocation3 + $0x50] sm:$0xc]
    %v5824 = vld [vmem:[#allocation3 + $0x58] sm:$0xc]
    %v5825 = vld [vmem:[#allocation3 + $0x20] sm:$0x30]
    %v5826 = vld [vmem:[#allocation3 + $0x28] sm:$0x30]
    %v5827 = vld [vmem:[#allocation3 + $0x30] sm:$0x30]
    %v5828 = vld [vmem:[#allocation3 + $0x38] sm:$0x30]
    %v5833 = vrot.slane %v5825, 2
    %v5834 = vrot.slane %v5826, 2
    %v5835 = vrot.slane %v5827, 2
    %v5836 = vrot.slane %v5828, 2
    %v5841 = vadd.f32 %v5821, %v5833
    %v5842 = vadd.f32 %v5822, %v5834
    %v5843 = vadd.f32 %v5823, %v5835
    %v5844 = vadd.f32 %v5824, %v5836
    %v5845 = vpack.c.bf16 %v5818, %v5818
    %v5846 = vld [vmem:[#allocation13] sm:$0xff]
    %v5847 = vld [vmem:[#allocation13 + $0x8] sm:$0xff]
    %v5848 = vld [vmem:[#allocation13 + $0x10] sm:$0xff]
    %v5849 = vld [vmem:[#allocation13 + $0x18] sm:$0xff]
    %v5850 = vld [vmem:[#allocation13 + $0x20] sm:$0xff]
    %v5851 = vld [vmem:[#allocation13 + $0x28] sm:$0xff]
    %v5852 = vld [vmem:[#allocation13 + $0x30] sm:$0xff]
    %v5853 = vld [vmem:[#allocation13 + $0x38] sm:$0xff]
    %v5854 = vld [vmem:[#allocation13 + $0x40] sm:$0xff]
    %v5855 = vld [vmem:[#allocation13 + $0x48] sm:$0xff]
    %v5856 = vld [vmem:[#allocation13 + $0x50] sm:$0xff]
    %v5857 = vld [vmem:[#allocation13 + $0x58] sm:$0xff]
    %v5858 = vld [vmem:[#allocation13 + $0x60] sm:$0xff]
    %v5859 = vld [vmem:[#allocation13 + $0x68] sm:$0xff]
    %v5860 = vld [vmem:[#allocation13 + $0x70] sm:$0xff]
    %v5861 = vld [vmem:[#allocation13 + $0x78] sm:$0xff]
    %v5862 = vld [vmem:[#allocation13 + $0x80] sm:$0xff]
    %v5863 = vld [vmem:[#allocation13 + $0x88] sm:$0xff]
    %v5864 = vld [vmem:[#allocation13 + $0x90] sm:$0xff]
    %v5865 = vld [vmem:[#allocation13 + $0x98] sm:$0xff]
    %v5866 = vld [vmem:[#allocation13 + $0xa0] sm:$0xff]
    %v5867 = vld [vmem:[#allocation13 + $0xa8] sm:$0xff]
    %v5868 = vld [vmem:[#allocation13 + $0xb0] sm:$0xff]
    %v5869 = vld [vmem:[#allocation13 + $0xb8] sm:$0xff]
    %v5870 = vld [vmem:[#allocation13 + $0xc0] sm:$0xff]
    %v5871 = vld [vmem:[#allocation13 + $0xc8] sm:$0xff]
    %v5872 = vld [vmem:[#allocation13 + $0xd0] sm:$0xff]
    %v5873 = vld [vmem:[#allocation13 + $0xd8] sm:$0xff]
    %v5874 = vld [vmem:[#allocation13 + $0xe0] sm:$0xff]
    %v5875 = vld [vmem:[#allocation13 + $0xe8] sm:$0xff]
    %v5876 = vld [vmem:[#allocation13 + $0xf0] sm:$0xff]
    %v5877 = vld [vmem:[#allocation13 + $0xf8] sm:$0xff]
    %v5910 = vunpack.c.l.b16 %v5846
    %v5911 = vunpack.c.h.b16 %v5846
    %v5912 = vunpack.c.l.b16 %v5847
    %v5913 = vunpack.c.h.b16 %v5847
    %v5914 = vunpack.c.l.b16 %v5848
    %v5915 = vunpack.c.h.b16 %v5848
    %v5916 = vunpack.c.l.b16 %v5849
    %v5917 = vunpack.c.h.b16 %v5849
    %v5918 = vunpack.c.l.b16 %v5850
    %v5919 = vunpack.c.h.b16 %v5850
    %v5920 = vunpack.c.l.b16 %v5851
    %v5921 = vunpack.c.h.b16 %v5851
    %v5922 = vunpack.c.l.b16 %v5852
    %v5923 = vunpack.c.h.b16 %v5852
    %v5924 = vunpack.c.l.b16 %v5853
    %v5925 = vunpack.c.h.b16 %v5853
    %v5926 = vunpack.c.l.b16 %v5854
    %v5927 = vunpack.c.h.b16 %v5854
    %v5928 = vunpack.c.l.b16 %v5855
    %v5929 = vunpack.c.h.b16 %v5855
    %v5930 = vunpack.c.l.b16 %v5856
    %v5931 = vunpack.c.h.b16 %v5856
    %v5932 = vunpack.c.l.b16 %v5857
    %v5933 = vunpack.c.h.b16 %v5857
    %v5934 = vunpack.c.l.b16 %v5858
    %v5935 = vunpack.c.h.b16 %v5858
    %v5936 = vunpack.c.l.b16 %v5859
    %v5937 = vunpack.c.h.b16 %v5859
    %v5938 = vunpack.c.l.b16 %v5860
    %v5939 = vunpack.c.h.b16 %v5860
    %v5940 = vunpack.c.l.b16 %v5861
    %v5941 = vunpack.c.h.b16 %v5861
    %v5942 = vunpack.c.l.b16 %v5862
    %v5943 = vunpack.c.h.b16 %v5862
    %v5944 = vunpack.c.l.b16 %v5863
    %v5945 = vunpack.c.h.b16 %v5863
    %v5946 = vunpack.c.l.b16 %v5864
    %v5947 = vunpack.c.h.b16 %v5864
    %v5948 = vunpack.c.l.b16 %v5865
    %v5949 = vunpack.c.h.b16 %v5865
    %v5950 = vunpack.c.l.b16 %v5866
    %v5951 = vunpack.c.h.b16 %v5866
    %v5952 = vunpack.c.l.b16 %v5867
    %v5953 = vunpack.c.h.b16 %v5867
    %v5954 = vunpack.c.l.b16 %v5868
    %v5955 = vunpack.c.h.b16 %v5868
    %v5956 = vunpack.c.l.b16 %v5869
    %v5957 = vunpack.c.h.b16 %v5869
    %v5958 = vunpack.c.l.b16 %v5870
    %v5959 = vunpack.c.h.b16 %v5870
    %v5960 = vunpack.c.l.b16 %v5871
    %v5961 = vunpack.c.h.b16 %v5871
    %v5962 = vunpack.c.l.b16 %v5872
    %v5963 = vunpack.c.h.b16 %v5872
    %v5964 = vunpack.c.l.b16 %v5873
    %v5965 = vunpack.c.h.b16 %v5873
    %v5966 = vunpack.c.l.b16 %v5874
    %v5967 = vunpack.c.h.b16 %v5874
    %v5968 = vunpack.c.l.b16 %v5875
    %v5969 = vunpack.c.h.b16 %v5875
    %v5970 = vunpack.c.l.b16 %v5876
    %v5971 = vunpack.c.h.b16 %v5876
    %v5972 = vunpack.c.l.b16 %v5877
    %v5973 = vunpack.c.h.b16 %v5877
    %v5974 = vpack.c.b16 %v5914, %v5910
    %v5975 = vpack.c.b16 %v5915, %v5911
    %v5976 = vpack.c.b16 %v5916, %v5912
    %v5977 = vpack.c.b16 %v5917, %v5913
    %v5978 = vpack.c.b16 %v5922, %v5918
    %v5979 = vpack.c.b16 %v5923, %v5919
    %v5980 = vpack.c.b16 %v5924, %v5920
    %v5981 = vpack.c.b16 %v5925, %v5921
    %v5982 = vpack.c.b16 %v5930, %v5926
    %v5983 = vpack.c.b16 %v5931, %v5927
    %v5984 = vpack.c.b16 %v5932, %v5928
    %v5985 = vpack.c.b16 %v5933, %v5929
    %v5986 = vpack.c.b16 %v5938, %v5934
    %v5987 = vpack.c.b16 %v5939, %v5935
    %v5988 = vpack.c.b16 %v5940, %v5936
    %v5989 = vpack.c.b16 %v5941, %v5937
    %v5990 = vpack.c.b16 %v5946, %v5942
    %v5991 = vpack.c.b16 %v5947, %v5943
    %v5992 = vpack.c.b16 %v5948, %v5944
    %v5993 = vpack.c.b16 %v5949, %v5945
    %v5994 = vpack.c.b16 %v5954, %v5950
    %v5995 = vpack.c.b16 %v5955, %v5951
    %v5996 = vpack.c.b16 %v5956, %v5952
    %v5997 = vpack.c.b16 %v5957, %v5953
    %v5998 = vpack.c.b16 %v5962, %v5958
    %v5999 = vpack.c.b16 %v5963, %v5959
    %v6000 = vpack.c.b16 %v5964, %v5960
    %v6001 = vpack.c.b16 %v5965, %v5961
    %v6002 = vpack.c.b16 %v5970, %v5966
    %v6003 = vpack.c.b16 %v5971, %v5967
    %v6004 = vpack.c.b16 %v5972, %v5968
    %v6005 = vpack.c.b16 %v5973, %v5969
    %6038 = vmatprep.subr.bf16.mxu0 %v5975
    %6039 = vmatpush1.bf16.msra.mxu0 %v5974
    %6040 = vmatprep.subr.bf16.mxu0 %v5979
    %6041 = vmatpush1.bf16.msra.mxu0 %v5978
    %6042 = vmatprep.subr.bf16.mxu0 %v5983
    %6043 = vmatpush1.bf16.msra.mxu0 %v5982
    %6044 = vmatprep.subr.bf16.mxu0 %v5987
    %6045 = vmatpush1.bf16.msra.mxu0 %v5986
    %6046 = vmatprep.subr.bf16.mxu0 %v5991
    %6047 = vmatpush1.bf16.msra.mxu0 %v5990
    %6048 = vmatprep.subr.bf16.mxu0 %v5995
    %6049 = vmatpush1.bf16.msra.mxu0 %v5994
    %6050 = vmatprep.subr.bf16.mxu0 %v5999
    %6051 = vmatpush1.bf16.msra.mxu0 %v5998
    %6052 = vmatprep.subr.bf16.mxu0 %v6003
    %6053 = vmatpush1.bf16.msra.mxu0 %v6002
    %6054 = vmatprep.subr.bf16.mxu0 0
    %6055 = vmatpush1.bf16.msra.mxu0 0
    %6056 = vmatprep.subr.bf16.mxu0 0
    %6057 = vmatpush1.bf16.msra.mxu0 0
    %6058 = vmatprep.subr.bf16.mxu0 0
    %6059 = vmatpush1.bf16.msra.mxu0 0
    %6060 = vmatprep.subr.bf16.mxu0 0
    %6061 = vmatpush1.bf16.msra.mxu0 0
    %6062 = vmatprep.subr.bf16.mxu0 0
    %6063 = vmatpush1.bf16.msra.mxu0 0
    %6064 = vmatprep.subr.bf16.mxu0 0
    %6065 = vmatpush1.bf16.msra.mxu0 0
    %6066 = vmatprep.subr.bf16.mxu0 0
    %6067 = vmatpush1.bf16.msra.mxu0 0
    %6068 = vmatprep.subr.bf16.mxu0 0
    %6069 = vmatpush1.bf16.msra.mxu0 0
    %6070 = vmatprep.mubr.bf16.mxu0 0
    %6071 = vmatmul.mubr.bf16.gmra.mrb[0].mxu0 %v5845
    %v6072 = vpop.f32.mrb[0].mxu0
    %v6073 = vadd.f32 0.0, %v6072
    %v6074 = vpop.f32.mrb[0].mxu0
    %v6075 = vadd.f32 0.0, %v6074
    %v6076 = vpop.f32.mrb[0].mxu0
    %v6077 = vpop.f32.mrb[0].mxu0
    %6078 = vdwg.mxu0
    %6079 = vmatprep.subr.bf16.mxu0 %v5977
    %6080 = vmatpush1.bf16.msra.mxu0 %v5976
    %6081 = vmatprep.subr.bf16.mxu0 %v5981
    %6082 = vmatpush1.bf16.msra.mxu0 %v5980
    %6083 = vmatprep.subr.bf16.mxu0 %v5985
    %6084 = vmatpush1.bf16.msra.mxu0 %v5984
    %6085 = vmatprep.subr.bf16.mxu0 %v5989
    %6086 = vmatpush1.bf16.msra.mxu0 %v5988
    %6087 = vmatprep.subr.bf16.mxu0 %v5993
    %6088 = vmatpush1.bf16.msra.mxu0 %v5992
    %6089 = vmatprep.subr.bf16.mxu0 %v5997
    %6090 = vmatpush1.bf16.msra.mxu0 %v5996
    %6091 = vmatprep.subr.bf16.mxu0 %v6001
    %6092 = vmatpush1.bf16.msra.mxu0 %v6000
    %6093 = vmatprep.subr.bf16.mxu0 %v6005
    %6094 = vmatpush1.bf16.msra.mxu0 %v6004
    %6095 = vmatprep.subr.bf16.mxu0 0
    %6096 = vmatpush1.bf16.msra.mxu0 0
    %6097 = vmatprep.subr.bf16.mxu0 0
    %6098 = vmatpush1.bf16.msra.mxu0 0
    %6099 = vmatprep.subr.bf16.mxu0 0
    %6100 = vmatpush1.bf16.msra.mxu0 0
    %6101 = vmatprep.subr.bf16.mxu0 0
    %6102 = vmatpush1.bf16.msra.mxu0 0
    %6103 = vmatprep.subr.bf16.mxu0 0
    %6104 = vmatpush1.bf16.msra.mxu0 0
    %6105 = vmatprep.subr.bf16.mxu0 0
    %6106 = vmatpush1.bf16.msra.mxu0 0
    %6107 = vmatprep.subr.bf16.mxu0 0
    %6108 = vmatpush1.bf16.msra.mxu0 0
    %6109 = vmatprep.subr.bf16.mxu0 0
    %6110 = vmatpush1.bf16.msra.mxu0 0
    %6111 = vmatprep.mubr.bf16.mxu0 0
    %6112 = vmatmul.mubr.bf16.gmra.mrb[0].mxu0 %v5845
    %v6113 = vpop.f32.mrb[0].mxu0
    %v6114 = vadd.f32 0.0, %v6113
    %v6115 = vpop.f32.mrb[0].mxu0
    %v6116 = vadd.f32 0.0, %v6115
    %v6117 = vpop.f32.mrb[0].mxu0
    %v6118 = vpop.f32.mrb[0].mxu0
    %6119 = vdwg.mxu0
    %v6124 = vrot.slane %v6073, 6
    %v6125 = vrot.slane %v6075, 6
    %v6126 = vrot.slane %v6114, 6
    %v6127 = vrot.slane %v6116, 6
    %v6132 = vadd.f32 %v5841, %v6124
    %v6133 = vadd.f32 %v5842, %v6125
    %v6134 = vadd.f32 %v5843, %v6126
    %v6135 = vadd.f32 %v5844, %v6127
    %v6136 = vxor.u32 %v6132, 2147483648
    %v6137 = vmul.f32 %v6136, 1.442695
    %v6138 = vpow.pop %v6137
    %v6139 = vadd.f32 %v6138, 1.0
    %v6140 = vrcp.pop %v6139
    %v6141 = vmul.f32 1.0, %v6140
    %v6142 = vxor.u32 %v6133, 2147483648
    %v6143 = vmul.f32 %v6142, 1.442695
    %v6144 = vpow.pop %v6143
    %v6145 = vadd.f32 %v6144, 1.0
    %v6146 = vrcp.pop %v6145
    %v6147 = vmul.f32 1.0, %v6146
    %v6148 = vtanh.pop %v6134
    %v6149 = vxor.u32 %v6135, 2147483648
    %v6150 = vmul.f32 %v6149, 1.442695
    %v6151 = vpow.pop %v6150
    %v6152 = vadd.f32 %v6151, 1.0
    %v6153 = vrcp.pop %v6152
    %v6154 = vmul.f32 1.0, %v6153
    %v6156 = vrot.slane %v5816, 6
    %v6158 = vmul.f32 %v6147, %v6156
    %v6159 = vmul.f32 %v6141, %v6148
    %v6160 = vadd.f32 %v6158, %v6159
    %v6161 = vtanh.pop %v6160
    %v6162 = vmul.f32 %v6154, %v6161
    %6163 = vst [vmem:[#allocation6 + $0x8] sm:$0xc] %v6162
    %6164 = vst [vmem:[#allocation7 + $0x2] sm:$0xc] %v6162
    %v6165 = vld [vmem:[#allocation3 + $0x40] sm:$0x30]
    %v6166 = vld [vmem:[#allocation3 + $0x48] sm:$0x30]
    %v6167 = vld [vmem:[#allocation3 + $0x50] sm:$0x30]
    %v6168 = vld [vmem:[#allocation3 + $0x58] sm:$0x30]
    %v6169 = vld [vmem:[#allocation3 + $0x20] sm:$0xc]
    %v6170 = vld [vmem:[#allocation3 + $0x28] sm:$0xc]
    %v6171 = vld [vmem:[#allocation3 + $0x30] sm:$0xc]
    %v6172 = vld [vmem:[#allocation3 + $0x38] sm:$0xc]
    %v6177 = vrot.slane %v6169, 6
    %v6178 = vrot.slane %v6170, 6
    %v6179 = vrot.slane %v6171, 6
    %v6180 = vrot.slane %v6172, 6
    %v6185 = vadd.f32 %v6165, %v6177
    %v6186 = vadd.f32 %v6166, %v6178
    %v6187 = vadd.f32 %v6167, %v6179
    %v6188 = vadd.f32 %v6168, %v6180
    %v6189 = vpack.c.bf16 %v6162, %v6162
    %v6190 = vld [vmem:[#allocation13] sm:$0xff]
    %v6191 = vld [vmem:[#allocation13 + $0x8] sm:$0xff]
    %v6192 = vld [vmem:[#allocation13 + $0x10] sm:$0xff]
    %v6193 = vld [vmem:[#allocation13 + $0x18] sm:$0xff]
    %v6194 = vld [vmem:[#allocation13 + $0x20] sm:$0xff]
    %v6195 = vld [vmem:[#allocation13 + $0x28] sm:$0xff]
    %v6196 = vld [vmem:[#allocation13 + $0x30] sm:$0xff]
    %v6197 = vld [vmem:[#allocation13 + $0x38] sm:$0xff]
    %v6198 = vld [vmem:[#allocation13 + $0x40] sm:$0xff]
    %v6199 = vld [vmem:[#allocation13 + $0x48] sm:$0xff]
    %v6200 = vld [vmem:[#allocation13 + $0x50] sm:$0xff]
    %v6201 = vld [vmem:[#allocation13 + $0x58] sm:$0xff]
    %v6202 = vld [vmem:[#allocation13 + $0x60] sm:$0xff]
    %v6203 = vld [vmem:[#allocation13 + $0x68] sm:$0xff]
    %v6204 = vld [vmem:[#allocation13 + $0x70] sm:$0xff]
    %v6205 = vld [vmem:[#allocation13 + $0x78] sm:$0xff]
    %v6206 = vld [vmem:[#allocation13 + $0x80] sm:$0xff]
    %v6207 = vld [vmem:[#allocation13 + $0x88] sm:$0xff]
    %v6208 = vld [vmem:[#allocation13 + $0x90] sm:$0xff]
    %v6209 = vld [vmem:[#allocation13 + $0x98] sm:$0xff]
    %v6210 = vld [vmem:[#allocation13 + $0xa0] sm:$0xff]
    %v6211 = vld [vmem:[#allocation13 + $0xa8] sm:$0xff]
    %v6212 = vld [vmem:[#allocation13 + $0xb0] sm:$0xff]
    %v6213 = vld [vmem:[#allocation13 + $0xb8] sm:$0xff]
    %v6214 = vld [vmem:[#allocation13 + $0xc0] sm:$0xff]
    %v6215 = vld [vmem:[#allocation13 + $0xc8] sm:$0xff]
    %v6216 = vld [vmem:[#allocation13 + $0xd0] sm:$0xff]
    %v6217 = vld [vmem:[#allocation13 + $0xd8] sm:$0xff]
    %v6218 = vld [vmem:[#allocation13 + $0xe0] sm:$0xff]
    %v6219 = vld [vmem:[#allocation13 + $0xe8] sm:$0xff]
    %v6220 = vld [vmem:[#allocation13 + $0xf0] sm:$0xff]
    %v6221 = vld [vmem:[#allocation13 + $0xf8] sm:$0xff]
    %v6223 = vrot.slane %v6189, 1
    %v6257 = vunpack.c.l.b16 %v6190
    %v6258 = vunpack.c.h.b16 %v6190
    %v6259 = vunpack.c.l.b16 %v6191
    %v6260 = vunpack.c.h.b16 %v6191
    %v6261 = vunpack.c.l.b16 %v6192
    %v6262 = vunpack.c.h.b16 %v6192
    %v6263 = vunpack.c.l.b16 %v6193
    %v6264 = vunpack.c.h.b16 %v6193
    %v6265 = vunpack.c.l.b16 %v6194
    %v6266 = vunpack.c.h.b16 %v6194
    %v6267 = vunpack.c.l.b16 %v6195
    %v6268 = vunpack.c.h.b16 %v6195
    %v6269 = vunpack.c.l.b16 %v6196
    %v6270 = vunpack.c.h.b16 %v6196
    %v6271 = vunpack.c.l.b16 %v6197
    %v6272 = vunpack.c.h.b16 %v6197
    %v6273 = vunpack.c.l.b16 %v6198
    %v6274 = vunpack.c.h.b16 %v6198
    %v6275 = vunpack.c.l.b16 %v6199
    %v6276 = vunpack.c.h.b16 %v6199
    %v6277 = vunpack.c.l.b16 %v6200
    %v6278 = vunpack.c.h.b16 %v6200
    %v6279 = vunpack.c.l.b16 %v6201
    %v6280 = vunpack.c.h.b16 %v6201
    %v6281 = vunpack.c.l.b16 %v6202
    %v6282 = vunpack.c.h.b16 %v6202
    %v6283 = vunpack.c.l.b16 %v6203
    %v6284 = vunpack.c.h.b16 %v6203
    %v6285 = vunpack.c.l.b16 %v6204
    %v6286 = vunpack.c.h.b16 %v6204
    %v6287 = vunpack.c.l.b16 %v6205
    %v6288 = vunpack.c.h.b16 %v6205
    %v6289 = vunpack.c.l.b16 %v6206
    %v6290 = vunpack.c.h.b16 %v6206
    %v6291 = vunpack.c.l.b16 %v6207
    %v6292 = vunpack.c.h.b16 %v6207
    %v6293 = vunpack.c.l.b16 %v6208
    %v6294 = vunpack.c.h.b16 %v6208
    %v6295 = vunpack.c.l.b16 %v6209
    %v6296 = vunpack.c.h.b16 %v6209
    %v6297 = vunpack.c.l.b16 %v6210
    %v6298 = vunpack.c.h.b16 %v6210
    %v6299 = vunpack.c.l.b16 %v6211
    %v6300 = vunpack.c.h.b16 %v6211
    %v6301 = vunpack.c.l.b16 %v6212
    %v6302 = vunpack.c.h.b16 %v6212
    %v6303 = vunpack.c.l.b16 %v6213
    %v6304 = vunpack.c.h.b16 %v6213
    %v6305 = vunpack.c.l.b16 %v6214
    %v6306 = vunpack.c.h.b16 %v6214
    %v6307 = vunpack.c.l.b16 %v6215
    %v6308 = vunpack.c.h.b16 %v6215
    %v6309 = vunpack.c.l.b16 %v6216
    %v6310 = vunpack.c.h.b16 %v6216
    %v6311 = vunpack.c.l.b16 %v6217
    %v6312 = vunpack.c.h.b16 %v6217
    %v6313 = vunpack.c.l.b16 %v6218
    %v6314 = vunpack.c.h.b16 %v6218
    %v6315 = vunpack.c.l.b16 %v6219
    %v6316 = vunpack.c.h.b16 %v6219
    %v6317 = vunpack.c.l.b16 %v6220
    %v6318 = vunpack.c.h.b16 %v6220
    %v6319 = vunpack.c.l.b16 %v6221
    %v6320 = vunpack.c.h.b16 %v6221
    %v6321 = vpack.c.b16 %v6261, %v6257
    %v6322 = vpack.c.b16 %v6262, %v6258
    %v6323 = vpack.c.b16 %v6263, %v6259
    %v6324 = vpack.c.b16 %v6264, %v6260
    %v6325 = vpack.c.b16 %v6269, %v6265
    %v6326 = vpack.c.b16 %v6270, %v6266
    %v6327 = vpack.c.b16 %v6271, %v6267
    %v6328 = vpack.c.b16 %v6272, %v6268
    %v6329 = vpack.c.b16 %v6277, %v6273
    %v6330 = vpack.c.b16 %v6278, %v6274
    %v6331 = vpack.c.b16 %v6279, %v6275
    %v6332 = vpack.c.b16 %v6280, %v6276
    %v6333 = vpack.c.b16 %v6285, %v6281
    %v6334 = vpack.c.b16 %v6286, %v6282
    %v6335 = vpack.c.b16 %v6287, %v6283
    %v6336 = vpack.c.b16 %v6288, %v6284
    %v6337 = vpack.c.b16 %v6293, %v6289
    %v6338 = vpack.c.b16 %v6294, %v6290
    %v6339 = vpack.c.b16 %v6295, %v6291
    %v6340 = vpack.c.b16 %v6296, %v6292
    %v6341 = vpack.c.b16 %v6301, %v6297
    %v6342 = vpack.c.b16 %v6302, %v6298
    %v6343 = vpack.c.b16 %v6303, %v6299
    %v6344 = vpack.c.b16 %v6304, %v6300
    %v6345 = vpack.c.b16 %v6309, %v6305
    %v6346 = vpack.c.b16 %v6310, %v6306
    %v6347 = vpack.c.b16 %v6311, %v6307
    %v6348 = vpack.c.b16 %v6312, %v6308
    %v6349 = vpack.c.b16 %v6317, %v6313
    %v6350 = vpack.c.b16 %v6318, %v6314
    %v6351 = vpack.c.b16 %v6319, %v6315
    %v6352 = vpack.c.b16 %v6320, %v6316
    %6385 = vmatprep.subr.bf16.mxu0 %v6322
    %6386 = vmatpush1.bf16.msra.mxu0 %v6321
    %6387 = vmatprep.subr.bf16.mxu0 %v6326
    %6388 = vmatpush1.bf16.msra.mxu0 %v6325
    %6389 = vmatprep.subr.bf16.mxu0 %v6330
    %6390 = vmatpush1.bf16.msra.mxu0 %v6329
    %6391 = vmatprep.subr.bf16.mxu0 %v6334
    %6392 = vmatpush1.bf16.msra.mxu0 %v6333
    %6393 = vmatprep.subr.bf16.mxu0 %v6338
    %6394 = vmatpush1.bf16.msra.mxu0 %v6337
    %6395 = vmatprep.subr.bf16.mxu0 %v6342
    %6396 = vmatpush1.bf16.msra.mxu0 %v6341
    %6397 = vmatprep.subr.bf16.mxu0 %v6346
    %6398 = vmatpush1.bf16.msra.mxu0 %v6345
    %6399 = vmatprep.subr.bf16.mxu0 %v6350
    %6400 = vmatpush1.bf16.msra.mxu0 %v6349
    %6401 = vmatprep.subr.bf16.mxu0 0
    %6402 = vmatpush1.bf16.msra.mxu0 0
    %6403 = vmatprep.subr.bf16.mxu0 0
    %6404 = vmatpush1.bf16.msra.mxu0 0
    %6405 = vmatprep.subr.bf16.mxu0 0
    %6406 = vmatpush1.bf16.msra.mxu0 0
    %6407 = vmatprep.subr.bf16.mxu0 0
    %6408 = vmatpush1.bf16.msra.mxu0 0
    %6409 = vmatprep.subr.bf16.mxu0 0
    %6410 = vmatpush1.bf16.msra.mxu0 0
    %6411 = vmatprep.subr.bf16.mxu0 0
    %6412 = vmatpush1.bf16.msra.mxu0 0
    %6413 = vmatprep.subr.bf16.mxu0 0
    %6414 = vmatpush1.bf16.msra.mxu0 0
    %6415 = vmatprep.subr.bf16.mxu0 0
    %6416 = vmatpush1.bf16.msra.mxu0 0
    %6417 = vmatprep.mubr.bf16.mxu0 0
    %6418 = vmatmul.mubr.bf16.gmra.mrb[0].mxu0 %v6223
    %v6419 = vpop.f32.mrb[0].mxu0
    %v6420 = vadd.f32 0.0, %v6419
    %v6421 = vpop.f32.mrb[0].mxu0
    %v6422 = vadd.f32 0.0, %v6421
    %v6423 = vpop.f32.mrb[0].mxu0
    %v6424 = vpop.f32.mrb[0].mxu0
    %6425 = vdwg.mxu0
    %6426 = vmatprep.subr.bf16.mxu0 %v6324
    %6427 = vmatpush1.bf16.msra.mxu0 %v6323
    %6428 = vmatprep.subr.bf16.mxu0 %v6328
    %6429 = vmatpush1.bf16.msra.mxu0 %v6327
    %6430 = vmatprep.subr.bf16.mxu0 %v6332
    %6431 = vmatpush1.bf16.msra.mxu0 %v6331
    %6432 = vmatprep.subr.bf16.mxu0 %v6336
    %6433 = vmatpush1.bf16.msra.mxu0 %v6335
    %6434 = vmatprep.subr.bf16.mxu0 %v6340
    %6435 = vmatpush1.bf16.msra.mxu0 %v6339
    %6436 = vmatprep.subr.bf16.mxu0 %v6344
    %6437 = vmatpush1.bf16.msra.mxu0 %v6343
    %6438 = vmatprep.subr.bf16.mxu0 %v6348
    %6439 = vmatpush1.bf16.msra.mxu0 %v6347
    %6440 = vmatprep.subr.bf16.mxu0 %v6352
    %6441 = vmatpush1.bf16.msra.mxu0 %v6351
    %6442 = vmatprep.subr.bf16.mxu0 0
    %6443 = vmatpush1.bf16.msra.mxu0 0
    %6444 = vmatprep.subr.bf16.mxu0 0
    %6445 = vmatpush1.bf16.msra.mxu0 0
    %6446 = vmatprep.subr.bf16.mxu0 0
    %6447 = vmatpush1.bf16.msra.mxu0 0
    %6448 = vmatprep.subr.bf16.mxu0 0
    %6449 = vmatpush1.bf16.msra.mxu0 0
    %6450 = vmatprep.subr.bf16.mxu0 0
    %6451 = vmatpush1.bf16.msra.mxu0 0
    %6452 = vmatprep.subr.bf16.mxu0 0
    %6453 = vmatpush1.bf16.msra.mxu0 0
    %6454 = vmatprep.subr.bf16.mxu0 0
    %6455 = vmatpush1.bf16.msra.mxu0 0
    %6456 = vmatprep.subr.bf16.mxu0 0
    %6457 = vmatpush1.bf16.msra.mxu0 0
    %6458 = vmatprep.mubr.bf16.mxu0 0
    %6459 = vmatmul.mubr.bf16.gmra.mrb[0].mxu0 %v6223
    %v6460 = vpop.f32.mrb[0].mxu0
    %v6461 = vadd.f32 0.0, %v6460
    %v6462 = vpop.f32.mrb[0].mxu0
    %v6463 = vadd.f32 0.0, %v6462
    %v6464 = vpop.f32.mrb[0].mxu0
    %v6465 = vpop.f32.mrb[0].mxu0
    %6466 = vdwg.mxu0
    %v6471 = vrot.slane %v6420, 4
    %v6472 = vrot.slane %v6422, 4
    %v6473 = vrot.slane %v6461, 4
    %v6474 = vrot.slane %v6463, 4
    %v6479 = vadd.f32 %v6185, %v6471
    %v6480 = vadd.f32 %v6186, %v6472
    %v6481 = vadd.f32 %v6187, %v6473
    %v6482 = vadd.f32 %v6188, %v6474
    %v6483 = vxor.u32 %v6479, 2147483648
    %v6484 = vmul.f32 %v6483, 1.442695
    %v6485 = vpow.pop %v6484
    %v6486 = vadd.f32 %v6485, 1.0
    %v6487 = vrcp.pop %v6486
    %v6488 = vmul.f32 1.0, %v6487
    %v6489 = vxor.u32 %v6480, 2147483648
    %v6490 = vmul.f32 %v6489, 1.442695
    %v6491 = vpow.pop %v6490
    %v6492 = vadd.f32 %v6491, 1.0
    %v6493 = vrcp.pop %v6492
    %v6494 = vmul.f32 1.0, %v6493
    %v6495 = vtanh.pop %v6481
    %v6496 = vxor.u32 %v6482, 2147483648
    %v6497 = vmul.f32 %v6496, 1.442695
    %v6498 = vpow.pop %v6497
    %v6499 = vadd.f32 %v6498, 1.0
    %v6500 = vrcp.pop %v6499
    %v6501 = vmul.f32 1.0, %v6500
    %v6503 = vrot.slane %v6160, 6
    %v6505 = vmul.f32 %v6494, %v6503
    %v6506 = vmul.f32 %v6488, %v6495
    %v6507 = vadd.f32 %v6505, %v6506
    %v6508 = vtanh.pop %v6507
    %v6509 = vmul.f32 %v6501, %v6508
    %6510 = vst [vmem:[#allocation6 + $0x8] sm:$0x30] %v6509
    %6511 = vst [vmem:[#allocation7 - $0x2] sm:$0x30] %v6509
    %v6512 = vld [vmem:[#allocation3 + $0x40] sm:$0xc0]
    %v6513 = vld [vmem:[#allocation3 + $0x48] sm:$0xc0]
    %v6514 = vld [vmem:[#allocation3 + $0x50] sm:$0xc0]
    %v6515 = vld [vmem:[#allocation3 + $0x58] sm:$0xc0]
    %v6516 = vld [vmem:[#allocation3 + $0x20] sm:$0x3]
    %v6517 = vld [vmem:[#allocation3 + $0x28] sm:$0x3]
    %v6518 = vld [vmem:[#allocation3 + $0x30] sm:$0x3]
    %v6519 = vld [vmem:[#allocation3 + $0x38] sm:$0x3]
    %v6524 = vrot.slane %v6516, 2
    %v6525 = vrot.slane %v6517, 2
    %v6526 = vrot.slane %v6518, 2
    %v6527 = vrot.slane %v6519, 2
    %v6532 = vadd.f32 %v6512, %v6524
    %v6533 = vadd.f32 %v6513, %v6525
    %v6534 = vadd.f32 %v6514, %v6526
    %v6535 = vadd.f32 %v6515, %v6527
    %v6536 = vpack.c.bf16 %v6509, %v6509
    %v6537 = vld [vmem:[#allocation13] sm:$0xff]
    %v6538 = vld [vmem:[#allocation13 + $0x8] sm:$0xff]
    %v6539 = vld [vmem:[#allocation13 + $0x10] sm:$0xff]
    %v6540 = vld [vmem:[#allocation13 + $0x18] sm:$0xff]
    %v6541 = vld [vmem:[#allocation13 + $0x20] sm:$0xff]
    %v6542 = vld [vmem:[#allocation13 + $0x28] sm:$0xff]
    %v6543 = vld [vmem:[#allocation13 + $0x30] sm:$0xff]
    %v6544 = vld [vmem:[#allocation13 + $0x38] sm:$0xff]
    %v6545 = vld [vmem:[#allocation13 + $0x40] sm:$0xff]
    %v6546 = vld [vmem:[#allocation13 + $0x48] sm:$0xff]
    %v6547 = vld [vmem:[#allocation13 + $0x50] sm:$0xff]
    %v6548 = vld [vmem:[#allocation13 + $0x58] sm:$0xff]
    %v6549 = vld [vmem:[#allocation13 + $0x60] sm:$0xff]
    %v6550 = vld [vmem:[#allocation13 + $0x68] sm:$0xff]
    %v6551 = vld [vmem:[#allocation13 + $0x70] sm:$0xff]
    %v6552 = vld [vmem:[#allocation13 + $0x78] sm:$0xff]
    %v6553 = vld [vmem:[#allocation13 + $0x80] sm:$0xff]
    %v6554 = vld [vmem:[#allocation13 + $0x88] sm:$0xff]
    %v6555 = vld [vmem:[#allocation13 + $0x90] sm:$0xff]
    %v6556 = vld [vmem:[#allocation13 + $0x98] sm:$0xff]
    %v6557 = vld [vmem:[#allocation13 + $0xa0] sm:$0xff]
    %v6558 = vld [vmem:[#allocation13 + $0xa8] sm:$0xff]
    %v6559 = vld [vmem:[#allocation13 + $0xb0] sm:$0xff]
    %v6560 = vld [vmem:[#allocation13 + $0xb8] sm:$0xff]
    %v6561 = vld [vmem:[#allocation13 + $0xc0] sm:$0xff]
    %v6562 = vld [vmem:[#allocation13 + $0xc8] sm:$0xff]
    %v6563 = vld [vmem:[#allocation13 + $0xd0] sm:$0xff]
    %v6564 = vld [vmem:[#allocation13 + $0xd8] sm:$0xff]
    %v6565 = vld [vmem:[#allocation13 + $0xe0] sm:$0xff]
    %v6566 = vld [vmem:[#allocation13 + $0xe8] sm:$0xff]
    %v6567 = vld [vmem:[#allocation13 + $0xf0] sm:$0xff]
    %v6568 = vld [vmem:[#allocation13 + $0xf8] sm:$0xff]
    %v6570 = vrot.slane %v6536, 2
    %v6604 = vunpack.c.l.b16 %v6537
    %v6605 = vunpack.c.h.b16 %v6537
    %v6606 = vunpack.c.l.b16 %v6538
    %v6607 = vunpack.c.h.b16 %v6538
    %v6608 = vunpack.c.l.b16 %v6539
    %v6609 = vunpack.c.h.b16 %v6539
    %v6610 = vunpack.c.l.b16 %v6540
    %v6611 = vunpack.c.h.b16 %v6540
    %v6612 = vunpack.c.l.b16 %v6541
    %v6613 = vunpack.c.h.b16 %v6541
    %v6614 = vunpack.c.l.b16 %v6542
    %v6615 = vunpack.c.h.b16 %v6542
    %v6616 = vunpack.c.l.b16 %v6543
    %v6617 = vunpack.c.h.b16 %v6543
    %v6618 = vunpack.c.l.b16 %v6544
    %v6619 = vunpack.c.h.b16 %v6544
    %v6620 = vunpack.c.l.b16 %v6545
    %v6621 = vunpack.c.h.b16 %v6545
    %v6622 = vunpack.c.l.b16 %v6546
    %v6623 = vunpack.c.h.b16 %v6546
    %v6624 = vunpack.c.l.b16 %v6547
    %v6625 = vunpack.c.h.b16 %v6547
    %v6626 = vunpack.c.l.b16 %v6548
    %v6627 = vunpack.c.h.b16 %v6548
    %v6628 = vunpack.c.l.b16 %v6549
    %v6629 = vunpack.c.h.b16 %v6549
    %v6630 = vunpack.c.l.b16 %v6550
    %v6631 = vunpack.c.h.b16 %v6550
    %v6632 = vunpack.c.l.b16 %v6551
    %v6633 = vunpack.c.h.b16 %v6551
    %v6634 = vunpack.c.l.b16 %v6552
    %v6635 = vunpack.c.h.b16 %v6552
    %v6636 = vunpack.c.l.b16 %v6553
    %v6637 = vunpack.c.h.b16 %v6553
    %v6638 = vunpack.c.l.b16 %v6554
    %v6639 = vunpack.c.h.b16 %v6554
    %v6640 = vunpack.c.l.b16 %v6555
    %v6641 = vunpack.c.h.b16 %v6555
    %v6642 = vunpack.c.l.b16 %v6556
    %v6643 = vunpack.c.h.b16 %v6556
    %v6644 = vunpack.c.l.b16 %v6557
    %v6645 = vunpack.c.h.b16 %v6557
    %v6646 = vunpack.c.l.b16 %v6558
    %v6647 = vunpack.c.h.b16 %v6558
    %v6648 = vunpack.c.l.b16 %v6559
    %v6649 = vunpack.c.h.b16 %v6559
    %v6650 = vunpack.c.l.b16 %v6560
    %v6651 = vunpack.c.h.b16 %v6560
    %v6652 = vunpack.c.l.b16 %v6561
    %v6653 = vunpack.c.h.b16 %v6561
    %v6654 = vunpack.c.l.b16 %v6562
    %v6655 = vunpack.c.h.b16 %v6562
    %v6656 = vunpack.c.l.b16 %v6563
    %v6657 = vunpack.c.h.b16 %v6563
    %v6658 = vunpack.c.l.b16 %v6564
    %v6659 = vunpack.c.h.b16 %v6564
    %v6660 = vunpack.c.l.b16 %v6565
    %v6661 = vunpack.c.h.b16 %v6565
    %v6662 = vunpack.c.l.b16 %v6566
    %v6663 = vunpack.c.h.b16 %v6566
    %v6664 = vunpack.c.l.b16 %v6567
    %v6665 = vunpack.c.h.b16 %v6567
    %v6666 = vunpack.c.l.b16 %v6568
    %v6667 = vunpack.c.h.b16 %v6568
    %v6668 = vpack.c.b16 %v6608, %v6604
    %v6669 = vpack.c.b16 %v6609, %v6605
    %v6670 = vpack.c.b16 %v6610, %v6606
    %v6671 = vpack.c.b16 %v6611, %v6607
    %v6672 = vpack.c.b16 %v6616, %v6612
    %v6673 = vpack.c.b16 %v6617, %v6613
    %v6674 = vpack.c.b16 %v6618, %v6614
    %v6675 = vpack.c.b16 %v6619, %v6615
    %v6676 = vpack.c.b16 %v6624, %v6620
    %v6677 = vpack.c.b16 %v6625, %v6621
    %v6678 = vpack.c.b16 %v6626, %v6622
    %v6679 = vpack.c.b16 %v6627, %v6623
    %v6680 = vpack.c.b16 %v6632, %v6628
    %v6681 = vpack.c.b16 %v6633, %v6629
    %v6682 = vpack.c.b16 %v6634, %v6630
    %v6683 = vpack.c.b16 %v6635, %v6631
    %v6684 = vpack.c.b16 %v6640, %v6636
    %v6685 = vpack.c.b16 %v6641, %v6637
    %v6686 = vpack.c.b16 %v6642, %v6638
    %v6687 = vpack.c.b16 %v6643, %v6639
    %v6688 = vpack.c.b16 %v6648, %v6644
    %v6689 = vpack.c.b16 %v6649, %v6645
    %v6690 = vpack.c.b16 %v6650, %v6646
    %v6691 = vpack.c.b16 %v6651, %v6647
    %v6692 = vpack.c.b16 %v6656, %v6652
    %v6693 = vpack.c.b16 %v6657, %v6653
    %v6694 = vpack.c.b16 %v6658, %v6654
    %v6695 = vpack.c.b16 %v6659, %v6655
    %v6696 = vpack.c.b16 %v6664, %v6660
    %v6697 = vpack.c.b16 %v6665, %v6661
    %v6698 = vpack.c.b16 %v6666, %v6662
    %v6699 = vpack.c.b16 %v6667, %v6663
    %6732 = vmatprep.subr.bf16.mxu0 %v6669
    %6733 = vmatpush1.bf16.msra.mxu0 %v6668
    %6734 = vmatprep.subr.bf16.mxu0 %v6673
    %6735 = vmatpush1.bf16.msra.mxu0 %v6672
    %6736 = vmatprep.subr.bf16.mxu0 %v6677
    %6737 = vmatpush1.bf16.msra.mxu0 %v6676
    %6738 = vmatprep.subr.bf16.mxu0 %v6681
    %6739 = vmatpush1.bf16.msra.mxu0 %v6680
    %6740 = vmatprep.subr.bf16.mxu0 %v6685
    %6741 = vmatpush1.bf16.msra.mxu0 %v6684
    %6742 = vmatprep.subr.bf16.mxu0 %v6689
    %6743 = vmatpush1.bf16.msra.mxu0 %v6688
    %6744 = vmatprep.subr.bf16.mxu0 %v6693
    %6745 = vmatpush1.bf16.msra.mxu0 %v6692
    %6746 = vmatprep.subr.bf16.mxu0 %v6697
    %6747 = vmatpush1.bf16.msra.mxu0 %v6696
    %6748 = vmatprep.subr.bf16.mxu0 0
    %6749 = vmatpush1.bf16.msra.mxu0 0
    %6750 = vmatprep.subr.bf16.mxu0 0
    %6751 = vmatpush1.bf16.msra.mxu0 0
    %6752 = vmatprep.subr.bf16.mxu0 0
    %6753 = vmatpush1.bf16.msra.mxu0 0
    %6754 = vmatprep.subr.bf16.mxu0 0
    %6755 = vmatpush1.bf16.msra.mxu0 0
    %6756 = vmatprep.subr.bf16.mxu0 0
    %6757 = vmatpush1.bf16.msra.mxu0 0
    %6758 = vmatprep.subr.bf16.mxu0 0
    %6759 = vmatpush1.bf16.msra.mxu0 0
    %6760 = vmatprep.subr.bf16.mxu0 0
    %6761 = vmatpush1.bf16.msra.mxu0 0
    %6762 = vmatprep.subr.bf16.mxu0 0
    %6763 = vmatpush1.bf16.msra.mxu0 0
    %6764 = vmatprep.mubr.bf16.mxu0 0
    %6765 = vmatmul.mubr.bf16.gmra.mrb[0].mxu0 %v6570
    %v6766 = vpop.f32.mrb[0].mxu0
    %v6767 = vadd.f32 0.0, %v6766
    %v6768 = vpop.f32.mrb[0].mxu0
    %v6769 = vadd.f32 0.0, %v6768
    %v6770 = vpop.f32.mrb[0].mxu0
    %v6771 = vpop.f32.mrb[0].mxu0
    %6772 = vdwg.mxu0
    %6773 = vmatprep.subr.bf16.mxu0 %v6671
    %6774 = vmatpush1.bf16.msra.mxu0 %v6670
    %6775 = vmatprep.subr.bf16.mxu0 %v6675
    %6776 = vmatpush1.bf16.msra.mxu0 %v6674
    %6777 = vmatprep.subr.bf16.mxu0 %v6679
    %6778 = vmatpush1.bf16.msra.mxu0 %v6678
    %6779 = vmatprep.subr.bf16.mxu0 %v6683
    %6780 = vmatpush1.bf16.msra.mxu0 %v6682
    %6781 = vmatprep.subr.bf16.mxu0 %v6687
    %6782 = vmatpush1.bf16.msra.mxu0 %v6686
    %6783 = vmatprep.subr.bf16.mxu0 %v6691
    %6784 = vmatpush1.bf16.msra.mxu0 %v6690
    %6785 = vmatprep.subr.bf16.mxu0 %v6695
    %6786 = vmatpush1.bf16.msra.mxu0 %v6694
    %6787 = vmatprep.subr.bf16.mxu0 %v6699
    %6788 = vmatpush1.bf16.msra.mxu0 %v6698
    %6789 = vmatprep.subr.bf16.mxu0 0
    %6790 = vmatpush1.bf16.msra.mxu0 0
    %6791 = vmatprep.subr.bf16.mxu0 0
    %6792 = vmatpush1.bf16.msra.mxu0 0
    %6793 = vmatprep.subr.bf16.mxu0 0
    %6794 = vmatpush1.bf16.msra.mxu0 0
    %6795 = vmatprep.subr.bf16.mxu0 0
    %6796 = vmatpush1.bf16.msra.mxu0 0
    %6797 = vmatprep.subr.bf16.mxu0 0
    %6798 = vmatpush1.bf16.msra.mxu0 0
    %6799 = vmatprep.subr.bf16.mxu0 0
    %6800 = vmatpush1.bf16.msra.mxu0 0
    %6801 = vmatprep.subr.bf16.mxu0 0
    %6802 = vmatpush1.bf16.msra.mxu0 0
    %6803 = vmatprep.subr.bf16.mxu0 0
    %6804 = vmatpush1.bf16.msra.mxu0 0
    %6805 = vmatprep.mubr.bf16.mxu0 0
    %6806 = vmatmul.mubr.bf16.gmra.mrb[0].mxu0 %v6570
    %v6807 = vpop.f32.mrb[0].mxu0
    %v6808 = vadd.f32 0.0, %v6807
    %v6809 = vpop.f32.mrb[0].mxu0
    %v6810 = vadd.f32 0.0, %v6809
    %v6811 = vpop.f32.mrb[0].mxu0
    %v6812 = vpop.f32.mrb[0].mxu0
    %6813 = vdwg.mxu0
    %v6818 = vrot.slane %v6767, 2
    %v6819 = vrot.slane %v6769, 2
    %v6820 = vrot.slane %v6808, 2
    %v6821 = vrot.slane %v6810, 2
    %v6826 = vadd.f32 %v6532, %v6818
    %v6827 = vadd.f32 %v6533, %v6819
    %v6828 = vadd.f32 %v6534, %v6820
    %v6829 = vadd.f32 %v6535, %v6821
    %v6830 = vxor.u32 %v6826, 2147483648
    %v6831 = vmul.f32 %v6830, 1.442695
    %v6832 = vpow.pop %v6831
    %v6833 = vadd.f32 %v6832, 1.0
    %v6834 = vrcp.pop %v6833
    %v6835 = vmul.f32 1.0, %v6834
    %v6836 = vxor.u32 %v6827, 2147483648
    %v6837 = vmul.f32 %v6836, 1.442695
    %v6838 = vpow.pop %v6837
    %v6839 = vadd.f32 %v6838, 1.0
    %v6840 = vrcp.pop %v6839
    %v6841 = vmul.f32 1.0, %v6840
    %v6842 = vtanh.pop %v6828
    %v6843 = vxor.u32 %v6829, 2147483648
    %v6844 = vmul.f32 %v6843, 1.442695
    %v6845 = vpow.pop %v6844
    %v6846 = vadd.f32 %v6845, 1.0
    %v6847 = vrcp.pop %v6846
    %v6848 = vmul.f32 1.0, %v6847
    %v6850 = vrot.slane %v6507, 6
    %v6852 = vmul.f32 %v6841, %v6850
    %v6853 = vmul.f32 %v6835, %v6842
    %v6854 = vadd.f32 %v6852, %v6853
    %v6855 = vtanh.pop %v6854
    %v6856 = vmul.f32 %v6848, %v6855
    %6857 = vst [vmem:[#allocation6 + $0x8] sm:$0xc0] %v6856
    %6858 = vst [vmem:[#allocation7 - $0x6] sm:$0xc0] %v6856
    %v6859 = vld [vmem:[#allocation6] sm:$0xff]
    %v6860 = vld [vmem:[#allocation6 + $0x8] sm:$0xff]
    %v6861 = vld [vmem:[#allocation7] sm:$0xff]
    %v6862 = vld [vmem:[#allocation7 + $0x8] sm:$0xff]
    %v6863 = vsel %vm759, %v6859, %v6861
    %v6864 = vsel %vm759, %v6860, %v6862
    %v6865 = vld [vmem:[#allocation15] sm:$0xff]
    %v6866 = vld [vmem:[#allocation15 + $0x8] sm:$0xff]
    %v6867 = vld [vmem:[#allocation15 + $0x10] sm:$0xff]
    %v6868 = vld [vmem:[#allocation15 + $0x18] sm:$0xff]
    %v6869 = vld [vmem:[#allocation15 + $0x20] sm:$0xff]
    %v6870 = vld [vmem:[#allocation15 + $0x28] sm:$0xff]
    %v6871 = vld [vmem:[#allocation15 + $0x30] sm:$0xff]
    %v6872 = vld [vmem:[#allocation15 + $0x38] sm:$0xff]
    %v6873 = vld [vmem:[#allocation15 + $0x40] sm:$0xff]
    %v6874 = vld [vmem:[#allocation15 + $0x48] sm:$0xff]
    %v6875 = vld [vmem:[#allocation15 + $0x50] sm:$0xff]
    %v6876 = vld [vmem:[#allocation15 + $0x58] sm:$0xff]
    %v6877 = vld [vmem:[#allocation15 + $0x60] sm:$0xff]
    %v6878 = vld [vmem:[#allocation15 + $0x68] sm:$0xff]
    %v6879 = vld [vmem:[#allocation15 + $0x70] sm:$0xff]
    %v6880 = vld [vmem:[#allocation15 + $0x78] sm:$0xff]
    %v6881 = vld [vmem:[%s8] sm:$0x1]
    %v6883 = vlaneseq
    %v6884 = vshrl.u32 %v6883, 7
    %v6885 = vsub.s32 0, %v6884
    %v6886 = vrot.slane %v6881, %v6885
    %6888 = vmatprep.subr.mxu0 0.0
    %6889 = vmatpush1.msra.mxu0 %v6865
    %6890 = vmatprep.subr.mxu0 0.0
    %6891 = vmatpush1.msra.mxu0 %v6866
    %6892 = vmatprep.subr.mxu0 0.0
    %6893 = vmatpush1.msra.mxu0 %v6867
    %6894 = vmatprep.subr.mxu0 0.0
    %6895 = vmatpush1.msra.mxu0 %v6868
    %6896 = vmatprep.subr.mxu0 0.0
    %6897 = vmatpush1.msra.mxu0 %v6869
    %6898 = vmatprep.subr.mxu0 0.0
    %6899 = vmatpush1.msra.mxu0 %v6870
    %6900 = vmatprep.subr.mxu0 0.0
    %6901 = vmatpush1.msra.mxu0 %v6871
    %6902 = vmatprep.subr.mxu0 0.0
    %6903 = vmatpush1.msra.mxu0 %v6872
    %6904 = vmatprep.subr.mxu0 0.0
    %6905 = vmatpush1.msra.mxu0 %v6873
    %6906 = vmatprep.subr.mxu0 0.0
    %6907 = vmatpush1.msra.mxu0 %v6874
    %6908 = vmatprep.subr.mxu0 0.0
    %6909 = vmatpush1.msra.mxu0 %v6875
    %6910 = vmatprep.subr.mxu0 0.0
    %6911 = vmatpush1.msra.mxu0 %v6876
    %6912 = vmatprep.subr.mxu0 0.0
    %6913 = vmatpush1.msra.mxu0 %v6877
    %6914 = vmatprep.subr.mxu0 0.0
    %6915 = vmatpush1.msra.mxu0 %v6878
    %6916 = vmatprep.subr.mxu0 0.0
    %6917 = vmatpush1.msra.mxu0 %v6879
    %6918 = vmatprep.subr.mxu0 0.0
    %6919 = vmatpush1.msra.mxu0 %v6880
    %6920 = vmatprep.subr.mxu0 0.0
    %6921 = vmatpush1.msra.mxu0 0.0
    %6922 = vmatprep.subr.mxu0 0.0
    %6923 = vmatpush1.msra.mxu0 0.0
    %6924 = vmatprep.subr.mxu0 0.0
    %6925 = vmatpush1.msra.mxu0 0.0
    %6926 = vmatprep.subr.mxu0 0.0
    %6927 = vmatpush1.msra.mxu0 0.0
    %6928 = vmatprep.subr.mxu0 0.0
    %6929 = vmatpush1.msra.mxu0 0.0
    %6930 = vmatprep.subr.mxu0 0.0
    %6931 = vmatpush1.msra.mxu0 0.0
    %6932 = vmatprep.subr.mxu0 0.0
    %6933 = vmatpush1.msra.mxu0 0.0
    %6934 = vmatprep.subr.mxu0 0.0
    %6935 = vmatpush1.msra.mxu0 0.0
    %6936 = vmatprep.subr.mxu0 0.0
    %6937 = vmatpush1.msra.mxu0 0.0
    %6938 = vmatprep.subr.mxu0 0.0
    %6939 = vmatpush1.msra.mxu0 0.0
    %6940 = vmatprep.subr.mxu0 0.0
    %6941 = vmatpush1.msra.mxu0 0.0
    %6942 = vmatprep.subr.mxu0 0.0
    %6943 = vmatpush1.msra.mxu0 0.0
    %6944 = vmatprep.subr.mxu0 0.0
    %6945 = vmatpush1.msra.mxu0 0.0
    %6946 = vmatprep.subr.mxu0 0.0
    %6947 = vmatpush1.msra.mxu0 0.0
    %6948 = vmatprep.subr.mxu0 0.0
    %6949 = vmatpush1.msra.mxu0 0.0
    %6950 = vmatprep.subr.mxu0 0.0
    %6951 = vmatpush1.msra.mxu0 0.0
    %6952 = vmatprep.mubr.f32.mxu0 0.0
    %6953 = vmatmul.mubr.f32.gmra.mrb[0].mxu0 %v3503
    %v6954 = vpop.f32.mrb[0].mxu0
    %v6955 = vadd.f32 %v6886, %v6954
    %v6956 = vpop.f32.mrb[0].mxu0
    %6957 = vmatprep.mubr.f32.mxu0 0.0
    %6958 = vmatmul.mubr.f32.gmra.mrb[0].mxu0 %v3504
    %v6959 = vpop.f32.mrb[0].mxu0
    %v6960 = vadd.f32 %v6886, %v6959
    %v6961 = vpop.f32.mrb[0].mxu0
    %6962 = vdwg.mxu0
    %v6963 = vmax.f32 %v6955, 0.0
    %v6964 = vmax.f32 %v6960, 0.0
    %v6965 = vld [vmem:[#allocation16] sm:$0xff]
    %v6966 = vld [vmem:[#allocation16 + $0x8] sm:$0xff]
    %v6967 = vld [vmem:[#allocation16 + $0x10] sm:$0xff]
    %v6968 = vld [vmem:[#allocation16 + $0x18] sm:$0xff]
    %v6969 = vld [vmem:[#allocation16 + $0x20] sm:$0xff]
    %v6970 = vld [vmem:[#allocation16 + $0x28] sm:$0xff]
    %v6971 = vld [vmem:[#allocation16 + $0x30] sm:$0xff]
    %v6972 = vld [vmem:[#allocation16 + $0x38] sm:$0xff]
    %v6973 = vld [vmem:[#allocation16 + $0x40] sm:$0xff]
    %v6974 = vld [vmem:[#allocation16 + $0x48] sm:$0xff]
    %v6975 = vld [vmem:[#allocation16 + $0x50] sm:$0xff]
    %v6976 = vld [vmem:[#allocation16 + $0x58] sm:$0xff]
    %v6977 = vld [vmem:[#allocation16 + $0x60] sm:$0xff]
    %v6978 = vld [vmem:[#allocation16 + $0x68] sm:$0xff]
    %v6979 = vld [vmem:[#allocation16 + $0x70] sm:$0xff]
    %v6980 = vld [vmem:[#allocation16 + $0x78] sm:$0xff]
    %v6981 = vld [vmem:[%s10] sm:$0x1]
    %v6983 = vlaneseq
    %v6984 = vshrl.u32 %v6983, 7
    %v6985 = vsub.s32 0, %v6984
    %v6986 = vrot.slane %v6981, %v6985
    %6988 = vmatprep.subr.mxu0 0.0
    %6989 = vmatpush1.msra.mxu0 %v6965
    %6990 = vmatprep.subr.mxu0 0.0
    %6991 = vmatpush1.msra.mxu0 %v6966
    %6992 = vmatprep.subr.mxu0 0.0
    %6993 = vmatpush1.msra.mxu0 %v6967
    %6994 = vmatprep.subr.mxu0 0.0
    %6995 = vmatpush1.msra.mxu0 %v6968
    %6996 = vmatprep.subr.mxu0 0.0
    %6997 = vmatpush1.msra.mxu0 %v6969
    %6998 = vmatprep.subr.mxu0 0.0
    %6999 = vmatpush1.msra.mxu0 %v6970
    %7000 = vmatprep.subr.mxu0 0.0
    %7001 = vmatpush1.msra.mxu0 %v6971
    %7002 = vmatprep.subr.mxu0 0.0
    %7003 = vmatpush1.msra.mxu0 %v6972
    %7004 = vmatprep.subr.mxu0 0.0
    %7005 = vmatpush1.msra.mxu0 %v6973
    %7006 = vmatprep.subr.mxu0 0.0
    %7007 = vmatpush1.msra.mxu0 %v6974
    %7008 = vmatprep.subr.mxu0 0.0
    %7009 = vmatpush1.msra.mxu0 %v6975
    %7010 = vmatprep.subr.mxu0 0.0
    %7011 = vmatpush1.msra.mxu0 %v6976
    %7012 = vmatprep.subr.mxu0 0.0
    %7013 = vmatpush1.msra.mxu0 %v6977
    %7014 = vmatprep.subr.mxu0 0.0
    %7015 = vmatpush1.msra.mxu0 %v6978
    %7016 = vmatprep.subr.mxu0 0.0
    %7017 = vmatpush1.msra.mxu0 %v6979
    %7018 = vmatprep.subr.mxu0 0.0
    %7019 = vmatpush1.msra.mxu0 %v6980
    %7020 = vmatprep.subr.mxu0 0.0
    %7021 = vmatpush1.msra.mxu0 0.0
    %7022 = vmatprep.subr.mxu0 0.0
    %7023 = vmatpush1.msra.mxu0 0.0
    %7024 = vmatprep.subr.mxu0 0.0
    %7025 = vmatpush1.msra.mxu0 0.0
    %7026 = vmatprep.subr.mxu0 0.0
    %7027 = vmatpush1.msra.mxu0 0.0
    %7028 = vmatprep.subr.mxu0 0.0
    %7029 = vmatpush1.msra.mxu0 0.0
    %7030 = vmatprep.subr.mxu0 0.0
    %7031 = vmatpush1.msra.mxu0 0.0
    %7032 = vmatprep.subr.mxu0 0.0
    %7033 = vmatpush1.msra.mxu0 0.0
    %7034 = vmatprep.subr.mxu0 0.0
    %7035 = vmatpush1.msra.mxu0 0.0
    %7036 = vmatprep.subr.mxu0 0.0
    %7037 = vmatpush1.msra.mxu0 0.0
    %7038 = vmatprep.subr.mxu0 0.0
    %7039 = vmatpush1.msra.mxu0 0.0
    %7040 = vmatprep.subr.mxu0 0.0
    %7041 = vmatpush1.msra.mxu0 0.0
    %7042 = vmatprep.subr.mxu0 0.0
    %7043 = vmatpush1.msra.mxu0 0.0
    %7044 = vmatprep.subr.mxu0 0.0
    %7045 = vmatpush1.msra.mxu0 0.0
    %7046 = vmatprep.subr.mxu0 0.0
    %7047 = vmatpush1.msra.mxu0 0.0
    %7048 = vmatprep.subr.mxu0 0.0
    %7049 = vmatpush1.msra.mxu0 0.0
    %7050 = vmatprep.subr.mxu0 0.0
    %7051 = vmatpush1.msra.mxu0 0.0
    %7052 = vmatprep.mubr.f32.mxu0 0.0
    %7053 = vmatmul.mubr.f32.gmra.mrb[0].mxu0 %v6863
    %v7054 = vpop.f32.mrb[0].mxu0
    %v7055 = vadd.f32 %v6986, %v7054
    %v7056 = vpop.f32.mrb[0].mxu0
    %7057 = vmatprep.mubr.f32.mxu0 0.0
    %7058 = vmatmul.mubr.f32.gmra.mrb[0].mxu0 %v6864
    %v7059 = vpop.f32.mrb[0].mxu0
    %v7060 = vadd.f32 %v6986, %v7059
    %v7061 = vpop.f32.mrb[0].mxu0
    %7062 = vdwg.mxu0
    %v7063 = vmax.f32 %v7055, 0.0
    %v7064 = vmax.f32 %v7060, 0.0
    %v7065 = vadd.f32 %v3503, %v6863
    %v7066 = vadd.f32 %v3504, %v6864
    %v7067 = vadd.f32 %v7065, %v6963
    %v7068 = vadd.f32 %v7066, %v6964
    %v7069 = vadd.f32 %v7067, %v7063
    %v7070 = vadd.f32 %v7068, %v7064
    %v7071 = vld [vmem:[#allocation18] sm:$0xff]
    %v7072 = vld [vmem:[#allocation18 + $0x8] sm:$0xff]
    %v7073 = vld [vmem:[#allocation18 + $0x10] sm:$0xff]
    %v7074 = vld [vmem:[#allocation18 + $0x18] sm:$0xff]
    %v7075 = vld [vmem:[#allocation18 + $0x20] sm:$0xff]
    %v7076 = vld [vmem:[#allocation18 + $0x28] sm:$0xff]
    %v7077 = vld [vmem:[#allocation18 + $0x30] sm:$0xff]
    %v7078 = vld [vmem:[#allocation18 + $0x38] sm:$0xff]
    %v7079 = vld [vmem:[#allocation18 + $0x40] sm:$0xff]
    %v7080 = vld [vmem:[#allocation18 + $0x48] sm:$0xff]
    %v7081 = vld [vmem:[#allocation18 + $0x50] sm:$0xff]
    %v7082 = vld [vmem:[#allocation18 + $0x58] sm:$0xff]
    %v7083 = vld [vmem:[#allocation18 + $0x60] sm:$0xff]
    %v7084 = vld [vmem:[#allocation18 + $0x68] sm:$0xff]
    %v7085 = vld [vmem:[#allocation18 + $0x70] sm:$0xff]
    %v7086 = vld [vmem:[#allocation18 + $0x78] sm:$0xff]
    %v7087 = vld [vmem:[%s12] sm:$0x1]
    %v7089 = vlaneseq
    %v7090 = vshrl.u32 %v7089, 7
    %v7091 = vsub.s32 0, %v7090
    %v7092 = vrot.slane %v7087, %v7091
    %7094 = vmatprep.subr.mxu0 0.0
    %7095 = vmatpush1.msra.mxu0 %v7071
    %7096 = vmatprep.subr.mxu0 0.0
    %7097 = vmatpush1.msra.mxu0 %v7072
    %7098 = vmatprep.subr.mxu0 0.0
    %7099 = vmatpush1.msra.mxu0 %v7073
    %7100 = vmatprep.subr.mxu0 0.0
    %7101 = vmatpush1.msra.mxu0 %v7074
    %7102 = vmatprep.subr.mxu0 0.0
    %7103 = vmatpush1.msra.mxu0 %v7075
    %7104 = vmatprep.subr.mxu0 0.0
    %7105 = vmatpush1.msra.mxu0 %v7076
    %7106 = vmatprep.subr.mxu0 0.0
    %7107 = vmatpush1.msra.mxu0 %v7077
    %7108 = vmatprep.subr.mxu0 0.0
    %7109 = vmatpush1.msra.mxu0 %v7078
    %7110 = vmatprep.subr.mxu0 0.0
    %7111 = vmatpush1.msra.mxu0 %v7079
    %7112 = vmatprep.subr.mxu0 0.0
    %7113 = vmatpush1.msra.mxu0 %v7080
    %7114 = vmatprep.subr.mxu0 0.0
    %7115 = vmatpush1.msra.mxu0 %v7081
    %7116 = vmatprep.subr.mxu0 0.0
    %7117 = vmatpush1.msra.mxu0 %v7082
    %7118 = vmatprep.subr.mxu0 0.0
    %7119 = vmatpush1.msra.mxu0 %v7083
    %7120 = vmatprep.subr.mxu0 0.0
    %7121 = vmatpush1.msra.mxu0 %v7084
    %7122 = vmatprep.subr.mxu0 0.0
    %7123 = vmatpush1.msra.mxu0 %v7085
    %7124 = vmatprep.subr.mxu0 0.0
    %7125 = vmatpush1.msra.mxu0 %v7086
    %7126 = vmatprep.subr.mxu0 0.0
    %7127 = vmatpush1.msra.mxu0 0.0
    %7128 = vmatprep.subr.mxu0 0.0
    %7129 = vmatpush1.msra.mxu0 0.0
    %7130 = vmatprep.subr.mxu0 0.0
    %7131 = vmatpush1.msra.mxu0 0.0
    %7132 = vmatprep.subr.mxu0 0.0
    %7133 = vmatpush1.msra.mxu0 0.0
    %7134 = vmatprep.subr.mxu0 0.0
    %7135 = vmatpush1.msra.mxu0 0.0
    %7136 = vmatprep.subr.mxu0 0.0
    %7137 = vmatpush1.msra.mxu0 0.0
    %7138 = vmatprep.subr.mxu0 0.0
    %7139 = vmatpush1.msra.mxu0 0.0
    %7140 = vmatprep.subr.mxu0 0.0
    %7141 = vmatpush1.msra.mxu0 0.0
    %7142 = vmatprep.subr.mxu0 0.0
    %7143 = vmatpush1.msra.mxu0 0.0
    %7144 = vmatprep.subr.mxu0 0.0
    %7145 = vmatpush1.msra.mxu0 0.0
    %7146 = vmatprep.subr.mxu0 0.0
    %7147 = vmatpush1.msra.mxu0 0.0
    %7148 = vmatprep.subr.mxu0 0.0
    %7149 = vmatpush1.msra.mxu0 0.0
    %7150 = vmatprep.subr.mxu0 0.0
    %7151 = vmatpush1.msra.mxu0 0.0
    %7152 = vmatprep.subr.mxu0 0.0
    %7153 = vmatpush1.msra.mxu0 0.0
    %7154 = vmatprep.subr.mxu0 0.0
    %7155 = vmatpush1.msra.mxu0 0.0
    %7156 = vmatprep.subr.mxu0 0.0
    %7157 = vmatpush1.msra.mxu0 0.0
    %7158 = vmatprep.mubr.f32.mxu0 0.0
    %7159 = vmatmul.mubr.f32.gmra.mrb[0].mxu0 %v7069
    %v7160 = vpop.f32.mrb[0].mxu0
    %v7161 = vadd.f32 %v7092, %v7160
    %v7162 = vpop.f32.mrb[0].mxu0
    %7163 = vmatprep.mubr.f32.mxu0 0.0
    %7164 = vmatmul.mubr.f32.gmra.mrb[0].mxu0 %v7070
    %v7165 = vpop.f32.mrb[0].mxu0
    %v7166 = vadd.f32 %v7092, %v7165
    %v7167 = vpop.f32.mrb[0].mxu0
    %7168 = vdwg.mxu0
    %7169 = vst [vmem:[%s13] sm:$0xff] %v7161
    %7170 = vst [vmem:[%s13 + $0x8] sm:$0xff] %v7166
    // Predicated region
    $region82: #{hemo_forward.1} parent=1 // pred_check
      _
    $region83: #{hemo_forward.1} parent=1 // pred_check_branch
      %7172 = sbr.rel (0) target = $region85
    $region84: #{hemo_forward.1} parent=1 // pred_region
      _
    $region85: #{hemo_forward.1} parent=1 // pred_fallthru
      _
    // Predicated region
    $region86: #{hemo_forward.1} parent=1 // pred_check
      _
    $region87: #{hemo_forward.1} parent=1 // pred_check_branch
      %7174 = sbr.rel (0) target = $region89
    $region88: #{hemo_forward.1} parent=1 // pred_region
      _
    $region89: #{hemo_forward.1} parent=1 // pred_fallthru
      _
    %7175 = vsyncpa [#allocation9], 1
    %7176 = vsyncpa [#allocation11], 1
    %7177 = vsyncpa [#allocation14], 1
    %7178 = vsyncpa [#allocation17], 1

</llo_original>
